<compile_context>
chip_gen: v7x
topology: tpu7x:2x2x1
jax: 0.10.0
libtpu: 0.0.40
codegen_flags: <defaults>
</compile_context>

<pallas_src>
import functools

import jax
import jax.numpy as jnp
from jax.experimental import pallas as pl
from jax.experimental.pallas import tpu as pltpu


def _layernorm_cm(x, gamma, beta, eps=1e-5):
    """LayerNorm over the channel axis of a channel-major (C, T) slab (f32)."""
    mu = jnp.mean(x, axis=0, keepdims=True)
    var = jnp.mean((x - mu) ** 2, axis=0, keepdims=True)
    return (x - mu) * jax.lax.rsqrt(var + eps) * gamma + beta


def _cross_attn_kernel(
    # activations (channel-major, bf16)
    q_ref, qpe_ref,                      # (C, Nq)
    k_ref, kpe_ref, v_ref,               # (N, C, S)
    # layernorm params, (C, 1) f32
    lnq_g_ref, lnq_b_ref, lnk_g_ref, lnk_b_ref, lnv_g_ref, lnv_b_ref,
    # projections: transposed weights (C_out, C_in) bf16, biases (C, 1) f32
    wqT_ref, bq_ref, wkT_ref, bk_ref, wvT_ref, bv_ref,
    # output projection: head-major transposed weight (H, C_out, hd) bf16 + bias
    woT3_ref, bo_ref,
    # output (C, Nq) f32
    out_ref,
    *, num_heads, mxu_dtype,
):
    f32 = jnp.float32
    C, Nq = q_ref.shape
    N, _, S = k_ref.shape
    hd = C // num_heads

    def split_heads(x):
        # (C, T) -> (H, hd, T): sublane slices stacked on a new leading dim.
        return jnp.stack([x[h * hd:(h + 1) * hd, :] for h in range(num_heads)],
                         axis=0)

    # ---------------- query path (channel-major) ----------------------------
    q_raw = q_ref[...].astype(f32) + qpe_ref[...].astype(f32)            # (C, Nq)
    qn = _layernorm_cm(q_raw, lnq_g_ref[...], lnq_b_ref[...])
    # softmax scale already folded into wqT / bq by the wrapper.
    qp = jnp.dot(wqT_ref[...], qn.astype(mxu_dtype),
                 preferred_element_type=f32) + bq_ref[...]               # (C, Nq)
    # per-head token-major queries (H, Nq, hd); the per-head 2-D transposes are
    # the only relayout in the kernel — everything else stays channel-major.
    qh = jnp.stack([qp[h * hd:(h + 1) * hd, :].T for h in range(num_heads)],
                   axis=0).astype(mxu_dtype)

    # ------------- key/value path, per camera n (in-kernel permute) ----------
    s_blocks = []
    v_blocks = []
    for n in range(N):
        k_raw = k_ref[n].astype(f32) + kpe_ref[n].astype(f32)            # (C, S)
        kn = _layernorm_cm(k_raw, lnk_g_ref[...], lnk_b_ref[...])
        kp = jnp.dot(wkT_ref[...], kn.astype(mxu_dtype),
                     preferred_element_type=f32) + bk_ref[...]           # (C, S)
        kh = split_heads(kp.astype(mxu_dtype))                           # (H, hd, S)
        s_blocks.append(
            jnp.einsum('hqd,hdk->hqk', qh, kh,
                       preferred_element_type=f32))                      # (H, Nq, S)

        vn = _layernorm_cm(v_ref[n].astype(f32),
                           lnv_g_ref[...], lnv_b_ref[...])
        vp = jnp.dot(wvT_ref[...], vn.astype(mxu_dtype),
                     preferred_element_type=f32) + bv_ref[...]           # (C, S)
        v_blocks.append(split_heads(vp.astype(mxu_dtype)))               # (H, hd, S)

    # -------- softmax over all Nk = N*S keys (blockwise but exact) -----------
    m = s_blocks[0].max(axis=-1, keepdims=True)                          # (H, Nq, 1)
    for s_n in s_blocks[1:]:
        m = jnp.maximum(m, s_n.max(axis=-1, keepdims=True))
    e_blocks = [jnp.exp(s_n - m) for s_n in s_blocks]
    denom = e_blocks[0].sum(axis=-1, keepdims=True)
    for e_n in e_blocks[1:]:
        denom = denom + e_n.sum(axis=-1, keepdims=True)                  # (H, Nq, 1)
    inv = pl.reciprocal(denom, approx=True)

    # -------- attention-weighted values, channel-major per head --------------
    o = None
    for e_n, vh_n in zip(e_blocks, v_blocks):
        p_n = (e_n * inv).astype(mxu_dtype)                              # (H, Nq, S)
        contrib = jnp.einsum('hdk,hqk->hdq', vh_n, p_n,
                             preferred_element_type=f32)                 # (H, hd, Nq)
        o = contrib if o is None else o + contrib
    o = o.astype(mxu_dtype)

    # -------- output projection + residual, channel-major --------------------
    # proj[c, q] = sum_h sum_d wo[h*hd + d, c] * o[h, d, q]
    proj_h = jnp.einsum('hcd,hdq->hcq', woT3_ref[...], o,
                        preferred_element_type=f32)                      # (H, C, Nq)
    proj = jnp.sum(proj_h, axis=0) + bo_ref[...]                         # (C, Nq)

    out_ref[...] = (q_ref[...].astype(f32) + qpe_ref[...].astype(f32)
                    + proj).astype(out_ref.dtype)


def basic_cross_attn_layer(query, key, value, query_pos_embed, key_pos_embed,
                           params, num_heads, reshape_back=True,
                           mxu_dtype=jnp.bfloat16, act_dtype=jnp.bfloat16):
    """Pallas implementation of BasicCrossAttnLayer.forward (default cfg, eval)."""
    B, C, qH, qW = query.shape
    _, N, _, kH, kW = key.shape
    Nq = qH * qW
    S = kH * kW
    Nk = N * S
    assert C % num_heads == 0
    hd = C // num_heads
    assert C % 8 == 0 and hd % 8 == 0, "channel / head dims must be sublane aligned"
    scale = hd ** (-0.5)
    f32 = jnp.float32

    # Metadata-only reshapes; the token-major permutes of the PyTorch forward
    # happen inside the kernel.  bf16 activations halve the kernel's input DMA
    # (in a full model the cast fuses into the producing op).
    q_in = query.reshape(B, C, Nq).astype(act_dtype)
    qpe_in = query_pos_embed.reshape(B, C, Nq).astype(act_dtype)
    k_in = key.reshape(B, N, C, S).astype(act_dtype)
    kpe_in = key_pos_embed.reshape(B, N, C, S).astype(act_dtype)
    v_in = value.reshape(B, N, C, S).astype(act_dtype)

    col = lambda p: p.reshape(C, 1).astype(f32)
    # Channel-major projections use transposed weights (out, in); the softmax
    # 1/sqrt(head_dim) scale is folded into wq / bq once at trace time.
    wqT = (params['wq'].astype(f32) * scale).T.astype(mxu_dtype)
    wkT = params['wk'].astype(f32).T.astype(mxu_dtype)
    wvT = params['wv'].astype(f32).T.astype(mxu_dtype)
    # Output projection, head-major: woT3[h, c_out, d] = wo[h*hd + d, c_out].
    woT3 = jnp.transpose(params['wo'].astype(f32).reshape(num_heads, hd, C),
                         (0, 2, 1)).astype(mxu_dtype)

    param_arrays = [
        col(params['lnq_g']), col(params['lnq_b']),
        col(params['lnk_g']), col(params['lnk_b']),
        col(params['lnv_g']), col(params['lnv_b']),
        wqT, col(params['bq']) * scale,
        wkT, col(params['bk']),
        wvT, col(params['bv']),
        woT3, col(params['bo']),
    ]

    q_spec = pl.BlockSpec((None, C, Nq), lambda b: (b, 0, 0))
    kv_spec = pl.BlockSpec((None, N, C, S), lambda b: (b, 0, 0, 0))
    # Constant index maps => params are DMA'd once and stay VMEM resident.
    mat_spec = pl.BlockSpec((C, C), lambda b: (0, 0))
    col_spec = pl.BlockSpec((C, 1), lambda b: (0, 0))
    wo_spec = pl.BlockSpec((num_heads, C, hd), lambda b: (0, 0, 0))

    in_specs = ([q_spec, q_spec, kv_spec, kv_spec, kv_spec]
                + [col_spec] * 6
                + [mat_spec, col_spec, mat_spec, col_spec, mat_spec, col_spec,
                   wo_spec, col_spec])

    act_bytes = jnp.dtype(act_dtype).itemsize
    w_bytes = jnp.dtype(mxu_dtype).itemsize
    flops_per_b = (2 * C * C * (Nq + 2 * Nk)      # q/k/v projections
                   + 4 * Nq * Nk * C              # QK^T + PV across heads
                   + 2 * Nq * C * C)              # output projection
    cost = pl.CostEstimate(
        flops=B * flops_per_b,
        transcendentals=B * num_heads * Nq * Nk,
        bytes_accessed=(B * (2 * C * Nq + 3 * N * C * S) * act_bytes
                        + 4 * C * C * w_bytes + 10 * C * 4
                        + B * C * Nq * 4),
    )

    out = pl.pallas_call(
        functools.partial(_cross_attn_kernel, num_heads=num_heads,
                          mxu_dtype=mxu_dtype),
        out_shape=jax.ShapeDtypeStruct((B, C, Nq), jnp.float32),
        grid_spec=pltpu.PrefetchScalarGridSpec(
            num_scalar_prefetch=0,
            grid=(B,),   # batch elements are independent -> sharded across TCs
            in_specs=in_specs,
            out_specs=pl.BlockSpec((None, C, Nq), lambda b: (b, 0, 0)),
        ),
        compiler_params=pltpu.CompilerParams(
            dimension_semantics=("parallel",),
            vmem_limit_bytes=32 * 1024 * 1024,
        ),
        cost_estimate=cost,
    )(q_in, qpe_in, k_in, kpe_in, v_in, *param_arrays)

    if reshape_back:
        return out.reshape(B, C, qH, qW)      # free reshape, channel-major output
    return jnp.transpose(out, (0, 2, 1))      # token-major (B, Nq, C)


def _reference(query, key, value, query_pos_embed, key_pos_embed,
               params, num_heads, reshape_back=True):
    """Pure-JAX f32 reference mirroring the PyTorch forward (eval mode)."""
    B, C, qH, qW = query.shape
    _, N, _, kH, kW = key.shape
    Nq, Nk = qH * qW, N * kH * kW
    head_dim = C // num_heads
    scale = head_dim ** (-0.5)

    _q = jnp.transpose(query + query_pos_embed, (0, 2, 3, 1)).reshape(B, Nq, C)
    _k = jnp.transpose(key + key_pos_embed, (0, 1, 3, 4, 2)).reshape(B, Nk, C)
    _v = jnp.transpose(value, (0, 1, 3, 4, 2)).reshape(B, Nk, C)

    def ln(x, g, b, eps=1e-5):
        mu = jnp.mean(x, axis=-1, keepdims=True)
        var = jnp.mean((x - mu) ** 2, axis=-1, keepdims=True)
        return (x - mu) / jnp.sqrt(var + eps) * g + b

    qn = ln(_q, params['lnq_g'], params['lnq_b'])
    kn = ln(_k, params['lnk_g'], params['lnk_b'])
    vn = ln(_v, params['lnv_g'], params['lnv_b'])

    qp = qn @ params['wq'] + params['bq']
    kp = kn @ params['wk'] + params['bk']
    vp = vn @ params['wv'] + params['bv']

    def split(x, n_tok):
        return x.reshape(B, n_tok, num_heads, head_dim).transpose(0, 2, 1, 3)

    qh, kh, vh = split(qp, Nq), split(kp, Nk), split(vp, Nk)
    attn = jnp.einsum('bhqd,bhkd->bhqk', qh, kh) * scale
    attn = jax.nn.softmax(attn, axis=-1)
    o = jnp.einsum('bhqk,bhkd->bhqd', attn, vh)
    o = o.transpose(0, 2, 1, 3).reshape(B, Nq, C)
    o = o @ params['wo'] + params['bo']
    out = _q + o
    if reshape_back:
        out = jnp.transpose(out, (0, 2, 1)).reshape(B, C, qH, qW)
    return out


def _init_params(key, C):
    ks = jax.random.split(key, 8)
    s = 0.05
    return {
        'lnq_g': jnp.ones((C,), jnp.float32),
        'lnq_b': jnp.zeros((C,), jnp.float32),
        'lnk_g': jnp.ones((C,), jnp.float32) * 1.1,
        'lnk_b': jnp.zeros((C,), jnp.float32) + 0.01,
        'lnv_g': jnp.ones((C,), jnp.float32) * 0.9,
        'lnv_b': jnp.zeros((C,), jnp.float32) - 0.01,
        'wq': s * jax.random.normal(ks[0], (C, C), jnp.float32),
        'bq': s * jax.random.normal(ks[1], (C,), jnp.float32),
        'wk': s * jax.random.normal(ks[2], (C, C), jnp.float32),
        'bk': s * jax.random.normal(ks[3], (C,), jnp.float32),
        'wv': s * jax.random.normal(ks[4], (C, C), jnp.float32),
        'bv': s * jax.random.normal(ks[5], (C,), jnp.float32),
        'wo': s * jax.random.normal(ks[6], (C, C), jnp.float32),
        'bo': s * jax.random.normal(ks[7], (C,), jnp.float32),
    }


if __name__ == "__main__":
    # Shapes per the forward's contract: query (B, C, qH, qW),
    # key/value (B, N, C, kH, kW).
    B, C, num_heads = 2, 128, 4
    qH = qW = 16
    N, kH, kW = 2, 8, 8

    root = jax.random.PRNGKey(0)
    kq, kk, kv, kqp, kkp, kparam = jax.random.split(root, 6)

    query = jax.random.normal(kq, (B, C, qH, qW), jnp.float32)
    key = jax.random.normal(kk, (B, N, C, kH, kW), jnp.float32)
    value = jax.random.normal(kv, (B, N, C, kH, kW), jnp.float32)
    query_pos_embed = 0.1 * jax.random.normal(kqp, (B, C, qH, qW), jnp.float32)
    key_pos_embed = 0.1 * jax.random.normal(kkp, (B, N, C, kH, kW), jnp.float32)

    params = _init_params(kparam, C)

    out = basic_cross_attn_layer(query, key, value, query_pos_embed,
                                 key_pos_embed, params, num_heads,
                                 reshape_back=True)
    out = jax.block_until_ready(out)

    ref = _reference(query, key, value, query_pos_embed, key_pos_embed,
                     params, num_heads, reshape_back=True)
    ref = jax.block_until_ready(ref)

    assert out.shape == (B, C, qH, qW)
    # bf16 activations/weights + approx reciprocal vs. pure-f32 reference.
    max_err = float(jnp.max(jnp.abs(out - ref)))
    assert jnp.allclose(out, ref, rtol=3e-2, atol=3e-2), \
        f"max abs err = {max_err}"

    # TODO(synk): ffn_dim=0 default => no FFN / CFFN branch; the Conv2d+BN CFFN
    # path of nonzero-ffn_dim configs would need a separate conv kernel.
    print("KERNEL_OK")
</pallas_src>

<mosaic_0001>
module attributes {stable_mosaic.version = 11 : i64} {
  func.func @_cross_attn_kernel(%arg0: i32, %arg1: memref<1x128x256xbf16, #tpu.memory_space<vmem>>, %arg2: memref<1x128x256xbf16, #tpu.memory_space<vmem>>, %arg3: memref<1x2x128x64xbf16, #tpu.memory_space<vmem>>, %arg4: memref<1x2x128x64xbf16, #tpu.memory_space<vmem>>, %arg5: memref<1x2x128x64xbf16, #tpu.memory_space<vmem>>, %arg6: memref<128x1xf32, #tpu.memory_space<vmem>>, %arg7: memref<128x1xf32, #tpu.memory_space<vmem>>, %arg8: memref<128x1xf32, #tpu.memory_space<vmem>>, %arg9: memref<128x1xf32, #tpu.memory_space<vmem>>, %arg10: memref<128x1xf32, #tpu.memory_space<vmem>>, %arg11: memref<128x1xf32, #tpu.memory_space<vmem>>, %arg12: memref<128x128xbf16, #tpu.memory_space<vmem>>, %arg13: memref<128x1xf32, #tpu.memory_space<vmem>>, %arg14: memref<128x128xbf16, #tpu.memory_space<vmem>>, %arg15: memref<128x1xf32, #tpu.memory_space<vmem>>, %arg16: memref<128x128xbf16, #tpu.memory_space<vmem>>, %arg17: memref<128x1xf32, #tpu.memory_space<vmem>>, %arg18: memref<4x128x32xbf16, #tpu.memory_space<vmem>>, %arg19: memref<128x1xf32, #tpu.memory_space<vmem>>, %arg20: memref<1x128x256xf32, #tpu.memory_space<vmem>>) attributes {dimension_semantics = [#tpu.dimension_semantics<parallel>], iteration_bounds = array<i64: 2>, scalar_prefetch = 0 : i64, scratch_operands = 0 : i64, tpu.core_type = #tpu.core_type<tc>, window_params = [{transform_indices = @transform_0, window_bounds = array<i64: 1, 128, 256>}, {transform_indices = @transform_1, window_bounds = array<i64: 1, 128, 256>}, {transform_indices = @transform_2, window_bounds = array<i64: 1, 2, 128, 64>}, {transform_indices = @transform_3, window_bounds = array<i64: 1, 2, 128, 64>}, {transform_indices = @transform_4, window_bounds = array<i64: 1, 2, 128, 64>}, {pipeline_mode = #tpu.pipeline_mode<synchronous>, transform_indices = @transform_5, window_bounds = array<i64: 128, 1>}, {pipeline_mode = #tpu.pipeline_mode<synchronous>, transform_indices = @transform_6, window_bounds = array<i64: 128, 1>}, {pipeline_mode = #tpu.pipeline_mode<synchronous>, transform_indices = @transform_7, window_bounds = array<i64: 128, 1>}, {pipeline_mode = #tpu.pipeline_mode<synchronous>, transform_indices = @transform_8, window_bounds = array<i64: 128, 1>}, {pipeline_mode = #tpu.pipeline_mode<synchronous>, transform_indices = @transform_9, window_bounds = array<i64: 128, 1>}, {pipeline_mode = #tpu.pipeline_mode<synchronous>, transform_indices = @transform_10, window_bounds = array<i64: 128, 1>}, {pipeline_mode = #tpu.pipeline_mode<synchronous>, transform_indices = @transform_11, window_bounds = array<i64: 128, 128>}, {pipeline_mode = #tpu.pipeline_mode<synchronous>, transform_indices = @transform_12, window_bounds = array<i64: 128, 1>}, {pipeline_mode = #tpu.pipeline_mode<synchronous>, transform_indices = @transform_13, window_bounds = array<i64: 128, 128>}, {pipeline_mode = #tpu.pipeline_mode<synchronous>, transform_indices = @transform_14, window_bounds = array<i64: 128, 1>}, {pipeline_mode = #tpu.pipeline_mode<synchronous>, transform_indices = @transform_15, window_bounds = array<i64: 128, 128>}, {pipeline_mode = #tpu.pipeline_mode<synchronous>, transform_indices = @transform_16, window_bounds = array<i64: 128, 1>}, {pipeline_mode = #tpu.pipeline_mode<synchronous>, transform_indices = @transform_17, window_bounds = array<i64: 4, 128, 32>}, {pipeline_mode = #tpu.pipeline_mode<synchronous>, transform_indices = @transform_18, window_bounds = array<i64: 128, 1>}, {transform_indices = @transform_19, window_bounds = array<i64: 1, 128, 256>}]} {
    %c0 = arith.constant 0 : index
    %c0_0 = arith.constant 0 : index
    %c0_1 = arith.constant 0 : index
    %0 = vector.load %arg1[%c0, %c0_0, %c0_1] : memref<1x128x256xbf16, #tpu.memory_space<vmem>>, vector<1x128x256xbf16>
    %1 = vector.shape_cast %0 : vector<1x128x256xbf16> to vector<128x256xbf16>
    %2 = arith.extf %1 : vector<128x256xbf16> to vector<128x256xf32>
    %c0_2 = arith.constant 0 : index
    %c0_3 = arith.constant 0 : index
    %c0_4 = arith.constant 0 : index
    %3 = vector.load %arg2[%c0_2, %c0_3, %c0_4] : memref<1x128x256xbf16, #tpu.memory_space<vmem>>, vector<1x128x256xbf16>
    %4 = vector.shape_cast %3 : vector<1x128x256xbf16> to vector<128x256xbf16>
    %5 = arith.extf %4 : vector<128x256xbf16> to vector<128x256xf32>
    %6 = arith.addf %2, %5 : vector<128x256xf32>
    %c0_5 = arith.constant 0 : index
    %c0_6 = arith.constant 0 : index
    %7 = vector.load %arg6[%c0_5, %c0_6] : memref<128x1xf32, #tpu.memory_space<vmem>>, vector<128x1xf32>
    %c0_7 = arith.constant 0 : index
    %c0_8 = arith.constant 0 : index
    %8 = vector.load %arg7[%c0_7, %c0_8] : memref<128x1xf32, #tpu.memory_space<vmem>>, vector<128x1xf32>
    %cst = arith.constant dense<0.000000e+00> : vector<256xf32>
    %9 = vector.multi_reduction <add>, %6, %cst [0] : vector<128x256xf32> to vector<256xf32>
    %10 = vector.shape_cast %9 : vector<256xf32> to vector<1x256xf32>
    %cst_9 = arith.constant 1.280000e+02 : f32
    %11 = vector.broadcast %cst_9 : f32 to vector<1x256xf32>
    %12 = arith.divf %10, %11 : vector<1x256xf32>
    %13 = vector.broadcast %12 : vector<1x256xf32> to vector<128x256xf32>
    %14 = arith.subf %6, %13 : vector<128x256xf32>
    %15 = arith.mulf %14, %14 : vector<128x256xf32>
    %cst_10 = arith.constant dense<0.000000e+00> : vector<256xf32>
    %16 = vector.multi_reduction <add>, %15, %cst_10 [0] : vector<128x256xf32> to vector<256xf32>
    %17 = vector.shape_cast %16 : vector<256xf32> to vector<1x256xf32>
    %cst_11 = arith.constant 1.280000e+02 : f32
    %18 = vector.broadcast %cst_11 : f32 to vector<1x256xf32>
    %19 = arith.divf %17, %18 : vector<1x256xf32>
    %20 = vector.broadcast %12 : vector<1x256xf32> to vector<128x256xf32>
    %21 = arith.subf %6, %20 : vector<128x256xf32>
    %cst_12 = arith.constant 9.99999974E-6 : f32
    %22 = vector.broadcast %cst_12 : f32 to vector<1x256xf32>
    %23 = arith.addf %19, %22 : vector<1x256xf32>
    %24 = math.rsqrt %23 : vector<1x256xf32>
    %25 = vector.broadcast %24 : vector<1x256xf32> to vector<128x256xf32>
    %26 = arith.mulf %21, %25 : vector<128x256xf32>
    %27 = vector.broadcast %7 : vector<128x1xf32> to vector<128x256xf32>
    %28 = arith.mulf %26, %27 : vector<128x256xf32>
    %29 = vector.broadcast %8 : vector<128x1xf32> to vector<128x256xf32>
    %30 = arith.addf %28, %29 : vector<128x256xf32>
    %c0_13 = arith.constant 0 : index
    %c0_14 = arith.constant 0 : index
    %31 = vector.load %arg12[%c0_13, %c0_14] : memref<128x128xbf16, #tpu.memory_space<vmem>>, vector<128x128xbf16>
    %32 = arith.truncf %30 : vector<128x256xf32> to vector<128x256xbf16>
    %cst_15 = arith.constant dense<0.000000e+00> : vector<128x256xf32>
    %33 = tpu.matmul %31, %32, %cst_15 {dimension_numbers = #tpu.dot_dimension_numbers<[1], [0], [0], [1], [0, 0, 1, 1], [], []>} : vector<128x128xbf16>, vector<128x256xbf16>, vector<128x256xf32> -> vector<128x256xf32>
    %c0_16 = arith.constant 0 : index
    %c0_17 = arith.constant 0 : index
    %34 = vector.load %arg13[%c0_16, %c0_17] : memref<128x1xf32, #tpu.memory_space<vmem>>, vector<128x1xf32>
    %35 = vector.broadcast %34 : vector<128x1xf32> to vector<128x256xf32>
    %36 = arith.addf %33, %35 : vector<128x256xf32>
    %37 = vector.extract_strided_slice %36 {offsets = [0, 0], sizes = [32, 256], strides = [1, 1]} : vector<128x256xf32> to vector<32x256xf32>
    %38 = tpu.transpose %37, [1, 0] : vector<32x256xf32> -> vector<256x32xf32>
    %39 = vector.extract_strided_slice %36 {offsets = [32, 0], sizes = [32, 256], strides = [1, 1]} : vector<128x256xf32> to vector<32x256xf32>
    %40 = tpu.transpose %39, [1, 0] : vector<32x256xf32> -> vector<256x32xf32>
    %41 = vector.extract_strided_slice %36 {offsets = [64, 0], sizes = [32, 256], strides = [1, 1]} : vector<128x256xf32> to vector<32x256xf32>
    %42 = tpu.transpose %41, [1, 0] : vector<32x256xf32> -> vector<256x32xf32>
    %43 = vector.extract_strided_slice %36 {offsets = [96, 0], sizes = [32, 256], strides = [1, 1]} : vector<128x256xf32> to vector<32x256xf32>
    %44 = tpu.transpose %43, [1, 0] : vector<32x256xf32> -> vector<256x32xf32>
    %45 = vector.shape_cast %38 : vector<256x32xf32> to vector<1x256x32xf32>
    %46 = vector.shape_cast %40 : vector<256x32xf32> to vector<1x256x32xf32>
    %47 = vector.shape_cast %42 : vector<256x32xf32> to vector<1x256x32xf32>
    %48 = vector.shape_cast %44 : vector<256x32xf32> to vector<1x256x32xf32>
    %49 = tpu.concatenate %45, %46, %47, %48 in 0 : vector<1x256x32xf32>, vector<1x256x32xf32>, vector<1x256x32xf32>, vector<1x256x32xf32> -> vector<4x256x32xf32>
    %50 = arith.truncf %49 : vector<4x256x32xf32> to vector<4x256x32xbf16>
    %c0_18 = arith.constant 0 : index
    %c0_19 = arith.constant 0 : index
    %c0_20 = arith.constant 0 : index
    %c0_21 = arith.constant 0 : index
    %51 = vector.load %arg3[%c0_18, %c0_19, %c0_20, %c0_21] : memref<1x2x128x64xbf16, #tpu.memory_space<vmem>>, vector<1x1x128x64xbf16>
    %52 = vector.shape_cast %51 : vector<1x1x128x64xbf16> to vector<128x64xbf16>
    %53 = arith.extf %52 : vector<128x64xbf16> to vector<128x64xf32>
    %c0_22 = arith.constant 0 : index
    %c0_23 = arith.constant 0 : index
    %c0_24 = arith.constant 0 : index
    %c0_25 = arith.constant 0 : index
    %54 = vector.load %arg4[%c0_22, %c0_23, %c0_24, %c0_25] : memref<1x2x128x64xbf16, #tpu.memory_space<vmem>>, vector<1x1x128x64xbf16>
    %55 = vector.shape_cast %54 : vector<1x1x128x64xbf16> to vector<128x64xbf16>
    %56 = arith.extf %55 : vector<128x64xbf16> to vector<128x64xf32>
    %57 = arith.addf %53, %56 : vector<128x64xf32>
    %c0_26 = arith.constant 0 : index
    %c0_27 = arith.constant 0 : index
    %58 = vector.load %arg8[%c0_26, %c0_27] : memref<128x1xf32, #tpu.memory_space<vmem>>, vector<128x1xf32>
    %c0_28 = arith.constant 0 : index
    %c0_29 = arith.constant 0 : index
    %59 = vector.load %arg9[%c0_28, %c0_29] : memref<128x1xf32, #tpu.memory_space<vmem>>, vector<128x1xf32>
    %cst_30 = arith.constant dense<0.000000e+00> : vector<64xf32>
    %60 = vector.multi_reduction <add>, %57, %cst_30 [0] : vector<128x64xf32> to vector<64xf32>
    %61 = vector.shape_cast %60 : vector<64xf32> to vector<1x64xf32>
    %cst_31 = arith.constant 1.280000e+02 : f32
    %62 = vector.broadcast %cst_31 : f32 to vector<1x64xf32>
    %63 = arith.divf %61, %62 : vector<1x64xf32>
    %64 = vector.broadcast %63 : vector<1x64xf32> to vector<128x64xf32>
    %65 = arith.subf %57, %64 : vector<128x64xf32>
    %66 = arith.mulf %65, %65 : vector<128x64xf32>
    %cst_32 = arith.constant dense<0.000000e+00> : vector<64xf32>
    %67 = vector.multi_reduction <add>, %66, %cst_32 [0] : vector<128x64xf32> to vector<64xf32>
    %68 = vector.shape_cast %67 : vector<64xf32> to vector<1x64xf32>
    %cst_33 = arith.constant 1.280000e+02 : f32
    %69 = vector.broadcast %cst_33 : f32 to vector<1x64xf32>
    %70 = arith.divf %68, %69 : vector<1x64xf32>
    %71 = vector.broadcast %63 : vector<1x64xf32> to vector<128x64xf32>
    %72 = arith.subf %57, %71 : vector<128x64xf32>
    %cst_34 = arith.constant 9.99999974E-6 : f32
    %73 = vector.broadcast %cst_34 : f32 to vector<1x64xf32>
    %74 = arith.addf %70, %73 : vector<1x64xf32>
    %75 = math.rsqrt %74 : vector<1x64xf32>
    %76 = vector.broadcast %75 : vector<1x64xf32> to vector<128x64xf32>
    %77 = arith.mulf %72, %76 : vector<128x64xf32>
    %78 = vector.broadcast %58 : vector<128x1xf32> to vector<128x64xf32>
    %79 = arith.mulf %77, %78 : vector<128x64xf32>
    %80 = vector.broadcast %59 : vector<128x1xf32> to vector<128x64xf32>
    %81 = arith.addf %79, %80 : vector<128x64xf32>
    %c0_35 = arith.constant 0 : index
    %c0_36 = arith.constant 0 : index
    %82 = vector.load %arg14[%c0_35, %c0_36] : memref<128x128xbf16, #tpu.memory_space<vmem>>, vector<128x128xbf16>
    %83 = arith.truncf %81 : vector<128x64xf32> to vector<128x64xbf16>
    %cst_37 = arith.constant dense<0.000000e+00> : vector<128x64xf32>
    %84 = tpu.matmul %82, %83, %cst_37 {dimension_numbers = #tpu.dot_dimension_numbers<[1], [0], [0], [1], [0, 0, 1, 1], [], []>} : vector<128x128xbf16>, vector<128x64xbf16>, vector<128x64xf32> -> vector<128x64xf32>
    %c0_38 = arith.constant 0 : index
    %c0_39 = arith.constant 0 : index
    %85 = vector.load %arg15[%c0_38, %c0_39] : memref<128x1xf32, #tpu.memory_space<vmem>>, vector<128x1xf32>
    %86 = vector.broadcast %85 : vector<128x1xf32> to vector<128x64xf32>
    %87 = arith.addf %84, %86 : vector<128x64xf32>
    %88 = arith.truncf %87 : vector<128x64xf32> to vector<128x64xbf16>
    %89 = vector.extract_strided_slice %88 {offsets = [0, 0], sizes = [32, 64], strides = [1, 1]} : vector<128x64xbf16> to vector<32x64xbf16>
    %90 = vector.extract_strided_slice %88 {offsets = [32, 0], sizes = [32, 64], strides = [1, 1]} : vector<128x64xbf16> to vector<32x64xbf16>
    %91 = vector.extract_strided_slice %88 {offsets = [64, 0], sizes = [32, 64], strides = [1, 1]} : vector<128x64xbf16> to vector<32x64xbf16>
    %92 = vector.extract_strided_slice %88 {offsets = [96, 0], sizes = [32, 64], strides = [1, 1]} : vector<128x64xbf16> to vector<32x64xbf16>
    %93 = vector.shape_cast %89 : vector<32x64xbf16> to vector<1x32x64xbf16>
    %94 = vector.shape_cast %90 : vector<32x64xbf16> to vector<1x32x64xbf16>
    %95 = vector.shape_cast %91 : vector<32x64xbf16> to vector<1x32x64xbf16>
    %96 = vector.shape_cast %92 : vector<32x64xbf16> to vector<1x32x64xbf16>
    %97 = tpu.concatenate %93, %94, %95, %96 in 0 : vector<1x32x64xbf16>, vector<1x32x64xbf16>, vector<1x32x64xbf16>, vector<1x32x64xbf16> -> vector<4x32x64xbf16>
    "tpu.trace_start"() <{level = 10 : i32, message = "hqd,hdk->hqk"}> : () -> ()
    %cst_40 = arith.constant dense<0.000000e+00> : vector<4x256x64xf32>
    %98 = tpu.matmul %50, %97, %cst_40 {dimension_numbers = #tpu.dot_dimension_numbers<[2], [1], [1], [2], [0, 0, 0, 1, 1, 2], [0], [0]>} : vector<4x256x32xbf16>, vector<4x32x64xbf16>, vector<4x256x64xf32> -> vector<4x256x64xf32>
    "tpu.trace_stop"() : () -> ()
    %c0_41 = arith.constant 0 : index
    %c0_42 = arith.constant 0 : index
    %c0_43 = arith.constant 0 : index
    %c0_44 = arith.constant 0 : index
    %99 = vector.load %arg5[%c0_41, %c0_42, %c0_43, %c0_44] : memref<1x2x128x64xbf16, #tpu.memory_space<vmem>>, vector<1x1x128x64xbf16>
    %100 = vector.shape_cast %99 : vector<1x1x128x64xbf16> to vector<128x64xbf16>
    %101 = arith.extf %100 : vector<128x64xbf16> to vector<128x64xf32>
    %c0_45 = arith.constant 0 : index
    %c0_46 = arith.constant 0 : index
    %102 = vector.load %arg10[%c0_45, %c0_46] : memref<128x1xf32, #tpu.memory_space<vmem>>, vector<128x1xf32>
    %c0_47 = arith.constant 0 : index
    %c0_48 = arith.constant 0 : index
    %103 = vector.load %arg11[%c0_47, %c0_48] : memref<128x1xf32, #tpu.memory_space<vmem>>, vector<128x1xf32>
    %cst_49 = arith.constant dense<0.000000e+00> : vector<64xf32>
    %104 = vector.multi_reduction <add>, %101, %cst_49 [0] : vector<128x64xf32> to vector<64xf32>
    %105 = vector.shape_cast %104 : vector<64xf32> to vector<1x64xf32>
    %cst_50 = arith.constant 1.280000e+02 : f32
    %106 = vector.broadcast %cst_50 : f32 to vector<1x64xf32>
    %107 = arith.divf %105, %106 : vector<1x64xf32>
    %108 = vector.broadcast %107 : vector<1x64xf32> to vector<128x64xf32>
    %109 = arith.subf %101, %108 : vector<128x64xf32>
    %110 = arith.mulf %109, %109 : vector<128x64xf32>
    %cst_51 = arith.constant dense<0.000000e+00> : vector<64xf32>
    %111 = vector.multi_reduction <add>, %110, %cst_51 [0] : vector<128x64xf32> to vector<64xf32>
    %112 = vector.shape_cast %111 : vector<64xf32> to vector<1x64xf32>
    %cst_52 = arith.constant 1.280000e+02 : f32
    %113 = vector.broadcast %cst_52 : f32 to vector<1x64xf32>
    %114 = arith.divf %112, %113 : vector<1x64xf32>
    %115 = vector.broadcast %107 : vector<1x64xf32> to vector<128x64xf32>
    %116 = arith.subf %101, %115 : vector<128x64xf32>
    %cst_53 = arith.constant 9.99999974E-6 : f32
    %117 = vector.broadcast %cst_53 : f32 to vector<1x64xf32>
    %118 = arith.addf %114, %117 : vector<1x64xf32>
    %119 = math.rsqrt %118 : vector<1x64xf32>
    %120 = vector.broadcast %119 : vector<1x64xf32> to vector<128x64xf32>
    %121 = arith.mulf %116, %120 : vector<128x64xf32>
    %122 = vector.broadcast %102 : vector<128x1xf32> to vector<128x64xf32>
    %123 = arith.mulf %121, %122 : vector<128x64xf32>
    %124 = vector.broadcast %103 : vector<128x1xf32> to vector<128x64xf32>
    %125 = arith.addf %123, %124 : vector<128x64xf32>
    %c0_54 = arith.constant 0 : index
    %c0_55 = arith.constant 0 : index
    %126 = vector.load %arg16[%c0_54, %c0_55] : memref<128x128xbf16, #tpu.memory_space<vmem>>, vector<128x128xbf16>
    %127 = arith.truncf %125 : vector<128x64xf32> to vector<128x64xbf16>
    %cst_56 = arith.constant dense<0.000000e+00> : vector<128x64xf32>
    %128 = tpu.matmul %126, %127, %cst_56 {dimension_numbers = #tpu.dot_dimension_numbers<[1], [0], [0], [1], [0, 0, 1, 1], [], []>} : vector<128x128xbf16>, vector<128x64xbf16>, vector<128x64xf32> -> vector<128x64xf32>
    %c0_57 = arith.constant 0 : index
    %c0_58 = arith.constant 0 : index
    %129 = vector.load %arg17[%c0_57, %c0_58] : memref<128x1xf32, #tpu.memory_space<vmem>>, vector<128x1xf32>
    %130 = vector.broadcast %129 : vector<128x1xf32> to vector<128x64xf32>
    %131 = arith.addf %128, %130 : vector<128x64xf32>
    %132 = arith.truncf %131 : vector<128x64xf32> to vector<128x64xbf16>
    %133 = vector.extract_strided_slice %132 {offsets = [0, 0], sizes = [32, 64], strides = [1, 1]} : vector<128x64xbf16> to vector<32x64xbf16>
    %134 = vector.extract_strided_slice %132 {offsets = [32, 0], sizes = [32, 64], strides = [1, 1]} : vector<128x64xbf16> to vector<32x64xbf16>
    %135 = vector.extract_strided_slice %132 {offsets = [64, 0], sizes = [32, 64], strides = [1, 1]} : vector<128x64xbf16> to vector<32x64xbf16>
    %136 = vector.extract_strided_slice %132 {offsets = [96, 0], sizes = [32, 64], strides = [1, 1]} : vector<128x64xbf16> to vector<32x64xbf16>
    %137 = vector.shape_cast %133 : vector<32x64xbf16> to vector<1x32x64xbf16>
    %138 = vector.shape_cast %134 : vector<32x64xbf16> to vector<1x32x64xbf16>
    %139 = vector.shape_cast %135 : vector<32x64xbf16> to vector<1x32x64xbf16>
    %140 = vector.shape_cast %136 : vector<32x64xbf16> to vector<1x32x64xbf16>
    %141 = tpu.concatenate %137, %138, %139, %140 in 0 : vector<1x32x64xbf16>, vector<1x32x64xbf16>, vector<1x32x64xbf16>, vector<1x32x64xbf16> -> vector<4x32x64xbf16>
    %c0_59 = arith.constant 0 : index
    %c1 = arith.constant 1 : index
    %c0_60 = arith.constant 0 : index
    %c0_61 = arith.constant 0 : index
    %142 = vector.load %arg3[%c0_59, %c1, %c0_60, %c0_61] : memref<1x2x128x64xbf16, #tpu.memory_space<vmem>>, vector<1x1x128x64xbf16>
    %143 = vector.shape_cast %142 : vector<1x1x128x64xbf16> to vector<128x64xbf16>
    %144 = arith.extf %143 : vector<128x64xbf16> to vector<128x64xf32>
    %c0_62 = arith.constant 0 : index
    %c1_63 = arith.constant 1 : index
    %c0_64 = arith.constant 0 : index
    %c0_65 = arith.constant 0 : index
    %145 = vector.load %arg4[%c0_62, %c1_63, %c0_64, %c0_65] : memref<1x2x128x64xbf16, #tpu.memory_space<vmem>>, vector<1x1x128x64xbf16>
    %146 = vector.shape_cast %145 : vector<1x1x128x64xbf16> to vector<128x64xbf16>
    %147 = arith.extf %146 : vector<128x64xbf16> to vector<128x64xf32>
    %148 = arith.addf %144, %147 : vector<128x64xf32>
    %c0_66 = arith.constant 0 : index
    %c0_67 = arith.constant 0 : index
    %149 = vector.load %arg8[%c0_66, %c0_67] : memref<128x1xf32, #tpu.memory_space<vmem>>, vector<128x1xf32>
    %c0_68 = arith.constant 0 : index
    %c0_69 = arith.constant 0 : index
    %150 = vector.load %arg9[%c0_68, %c0_69] : memref<128x1xf32, #tpu.memory_space<vmem>>, vector<128x1xf32>
    %cst_70 = arith.constant dense<0.000000e+00> : vector<64xf32>
    %151 = vector.multi_reduction <add>, %148, %cst_70 [0] : vector<128x64xf32> to vector<64xf32>
    %152 = vector.shape_cast %151 : vector<64xf32> to vector<1x64xf32>
    %cst_71 = arith.constant 1.280000e+02 : f32
    %153 = vector.broadcast %cst_71 : f32 to vector<1x64xf32>
    %154 = arith.divf %152, %153 : vector<1x64xf32>
    %155 = vector.broadcast %154 : vector<1x64xf32> to vector<128x64xf32>
    %156 = arith.subf %148, %155 : vector<128x64xf32>
    %157 = arith.mulf %156, %156 : vector<128x64xf32>
    %cst_72 = arith.constant dense<0.000000e+00> : vector<64xf32>
    %158 = vector.multi_reduction <add>, %157, %cst_72 [0] : vector<128x64xf32> to vector<64xf32>
    %159 = vector.shape_cast %158 : vector<64xf32> to vector<1x64xf32>
    %cst_73 = arith.constant 1.280000e+02 : f32
    %160 = vector.broadcast %cst_73 : f32 to vector<1x64xf32>
    %161 = arith.divf %159, %160 : vector<1x64xf32>
    %162 = vector.broadcast %154 : vector<1x64xf32> to vector<128x64xf32>
    %163 = arith.subf %148, %162 : vector<128x64xf32>
    %cst_74 = arith.constant 9.99999974E-6 : f32
    %164 = vector.broadcast %cst_74 : f32 to vector<1x64xf32>
    %165 = arith.addf %161, %164 : vector<1x64xf32>
    %166 = math.rsqrt %165 : vector<1x64xf32>
    %167 = vector.broadcast %166 : vector<1x64xf32> to vector<128x64xf32>
    %168 = arith.mulf %163, %167 : vector<128x64xf32>
    %169 = vector.broadcast %149 : vector<128x1xf32> to vector<128x64xf32>
    %170 = arith.mulf %168, %169 : vector<128x64xf32>
    %171 = vector.broadcast %150 : vector<128x1xf32> to vector<128x64xf32>
    %172 = arith.addf %170, %171 : vector<128x64xf32>
    %c0_75 = arith.constant 0 : index
    %c0_76 = arith.constant 0 : index
    %173 = vector.load %arg14[%c0_75, %c0_76] : memref<128x128xbf16, #tpu.memory_space<vmem>>, vector<128x128xbf16>
    %174 = arith.truncf %172 : vector<128x64xf32> to vector<128x64xbf16>
    %cst_77 = arith.constant dense<0.000000e+00> : vector<128x64xf32>
    %175 = tpu.matmul %173, %174, %cst_77 {dimension_numbers = #tpu.dot_dimension_numbers<[1], [0], [0], [1], [0, 0, 1, 1], [], []>} : vector<128x128xbf16>, vector<128x64xbf16>, vector<128x64xf32> -> vector<128x64xf32>
    %c0_78 = arith.constant 0 : index
    %c0_79 = arith.constant 0 : index
    %176 = vector.load %arg15[%c0_78, %c0_79] : memref<128x1xf32, #tpu.memory_space<vmem>>, vector<128x1xf32>
    %177 = vector.broadcast %176 : vector<128x1xf32> to vector<128x64xf32>
    %178 = arith.addf %175, %177 : vector<128x64xf32>
    %179 = arith.truncf %178 : vector<128x64xf32> to vector<128x64xbf16>
    %180 = vector.extract_strided_slice %179 {offsets = [0, 0], sizes = [32, 64], strides = [1, 1]} : vector<128x64xbf16> to vector<32x64xbf16>
    %181 = vector.extract_strided_slice %179 {offsets = [32, 0], sizes = [32, 64], strides = [1, 1]} : vector<128x64xbf16> to vector<32x64xbf16>
    %182 = vector.extract_strided_slice %179 {offsets = [64, 0], sizes = [32, 64], strides = [1, 1]} : vector<128x64xbf16> to vector<32x64xbf16>
    %183 = vector.extract_strided_slice %179 {offsets = [96, 0], sizes = [32, 64], strides = [1, 1]} : vector<128x64xbf16> to vector<32x64xbf16>
    %184 = vector.shape_cast %180 : vector<32x64xbf16> to vector<1x32x64xbf16>
    %185 = vector.shape_cast %181 : vector<32x64xbf16> to vector<1x32x64xbf16>
    %186 = vector.shape_cast %182 : vector<32x64xbf16> to vector<1x32x64xbf16>
    %187 = vector.shape_cast %183 : vector<32x64xbf16> to vector<1x32x64xbf16>
    %188 = tpu.concatenate %184, %185, %186, %187 in 0 : vector<1x32x64xbf16>, vector<1x32x64xbf16>, vector<1x32x64xbf16>, vector<1x32x64xbf16> -> vector<4x32x64xbf16>
    "tpu.trace_start"() <{level = 10 : i32, message = "hqd,hdk->hqk"}> : () -> ()
    %cst_80 = arith.constant dense<0.000000e+00> : vector<4x256x64xf32>
    %189 = tpu.matmul %50, %188, %cst_80 {dimension_numbers = #tpu.dot_dimension_numbers<[2], [1], [1], [2], [0, 0, 0, 1, 1, 2], [0], [0]>} : vector<4x256x32xbf16>, vector<4x32x64xbf16>, vector<4x256x64xf32> -> vector<4x256x64xf32>
    "tpu.trace_stop"() : () -> ()
    %c0_81 = arith.constant 0 : index
    %c1_82 = arith.constant 1 : index
    %c0_83 = arith.constant 0 : index
    %c0_84 = arith.constant 0 : index
    %190 = vector.load %arg5[%c0_81, %c1_82, %c0_83, %c0_84] : memref<1x2x128x64xbf16, #tpu.memory_space<vmem>>, vector<1x1x128x64xbf16>
    %191 = vector.shape_cast %190 : vector<1x1x128x64xbf16> to vector<128x64xbf16>
    %192 = arith.extf %191 : vector<128x64xbf16> to vector<128x64xf32>
    %c0_85 = arith.constant 0 : index
    %c0_86 = arith.constant 0 : index
    %193 = vector.load %arg10[%c0_85, %c0_86] : memref<128x1xf32, #tpu.memory_space<vmem>>, vector<128x1xf32>
    %c0_87 = arith.constant 0 : index
    %c0_88 = arith.constant 0 : index
    %194 = vector.load %arg11[%c0_87, %c0_88] : memref<128x1xf32, #tpu.memory_space<vmem>>, vector<128x1xf32>
    %cst_89 = arith.constant dense<0.000000e+00> : vector<64xf32>
    %195 = vector.multi_reduction <add>, %192, %cst_89 [0] : vector<128x64xf32> to vector<64xf32>
    %196 = vector.shape_cast %195 : vector<64xf32> to vector<1x64xf32>
    %cst_90 = arith.constant 1.280000e+02 : f32
    %197 = vector.broadcast %cst_90 : f32 to vector<1x64xf32>
    %198 = arith.divf %196, %197 : vector<1x64xf32>
    %199 = vector.broadcast %198 : vector<1x64xf32> to vector<128x64xf32>
    %200 = arith.subf %192, %199 : vector<128x64xf32>
    %201 = arith.mulf %200, %200 : vector<128x64xf32>
    %cst_91 = arith.constant dense<0.000000e+00> : vector<64xf32>
    %202 = vector.multi_reduction <add>, %201, %cst_91 [0] : vector<128x64xf32> to vector<64xf32>
    %203 = vector.shape_cast %202 : vector<64xf32> to vector<1x64xf32>
    %cst_92 = arith.constant 1.280000e+02 : f32
    %204 = vector.broadcast %cst_92 : f32 to vector<1x64xf32>
    %205 = arith.divf %203, %204 : vector<1x64xf32>
    %206 = vector.broadcast %198 : vector<1x64xf32> to vector<128x64xf32>
    %207 = arith.subf %192, %206 : vector<128x64xf32>
    %cst_93 = arith.constant 9.99999974E-6 : f32
    %208 = vector.broadcast %cst_93 : f32 to vector<1x64xf32>
    %209 = arith.addf %205, %208 : vector<1x64xf32>
    %210 = math.rsqrt %209 : vector<1x64xf32>
    %211 = vector.broadcast %210 : vector<1x64xf32> to vector<128x64xf32>
    %212 = arith.mulf %207, %211 : vector<128x64xf32>
    %213 = vector.broadcast %193 : vector<128x1xf32> to vector<128x64xf32>
    %214 = arith.mulf %212, %213 : vector<128x64xf32>
    %215 = vector.broadcast %194 : vector<128x1xf32> to vector<128x64xf32>
    %216 = arith.addf %214, %215 : vector<128x64xf32>
    %c0_94 = arith.constant 0 : index
    %c0_95 = arith.constant 0 : index
    %217 = vector.load %arg16[%c0_94, %c0_95] : memref<128x128xbf16, #tpu.memory_space<vmem>>, vector<128x128xbf16>
    %218 = arith.truncf %216 : vector<128x64xf32> to vector<128x64xbf16>
    %cst_96 = arith.constant dense<0.000000e+00> : vector<128x64xf32>
    %219 = tpu.matmul %217, %218, %cst_96 {dimension_numbers = #tpu.dot_dimension_numbers<[1], [0], [0], [1], [0, 0, 1, 1], [], []>} : vector<128x128xbf16>, vector<128x64xbf16>, vector<128x64xf32> -> vector<128x64xf32>
    %c0_97 = arith.constant 0 : index
    %c0_98 = arith.constant 0 : index
    %220 = vector.load %arg17[%c0_97, %c0_98] : memref<128x1xf32, #tpu.memory_space<vmem>>, vector<128x1xf32>
    %221 = vector.broadcast %220 : vector<128x1xf32> to vector<128x64xf32>
    %222 = arith.addf %219, %221 : vector<128x64xf32>
    %223 = arith.truncf %222 : vector<128x64xf32> to vector<128x64xbf16>
    %224 = vector.extract_strided_slice %223 {offsets = [0, 0], sizes = [32, 64], strides = [1, 1]} : vector<128x64xbf16> to vector<32x64xbf16>
    %225 = vector.extract_strided_slice %223 {offsets = [32, 0], sizes = [32, 64], strides = [1, 1]} : vector<128x64xbf16> to vector<32x64xbf16>
    %226 = vector.extract_strided_slice %223 {offsets = [64, 0], sizes = [32, 64], strides = [1, 1]} : vector<128x64xbf16> to vector<32x64xbf16>
    %227 = vector.extract_strided_slice %223 {offsets = [96, 0], sizes = [32, 64], strides = [1, 1]} : vector<128x64xbf16> to vector<32x64xbf16>
    %228 = vector.shape_cast %224 : vector<32x64xbf16> to vector<1x32x64xbf16>
    %229 = vector.shape_cast %225 : vector<32x64xbf16> to vector<1x32x64xbf16>
    %230 = vector.shape_cast %226 : vector<32x64xbf16> to vector<1x32x64xbf16>
    %231 = vector.shape_cast %227 : vector<32x64xbf16> to vector<1x32x64xbf16>
    %232 = tpu.concatenate %228, %229, %230, %231 in 0 : vector<1x32x64xbf16>, vector<1x32x64xbf16>, vector<1x32x64xbf16>, vector<1x32x64xbf16> -> vector<4x32x64xbf16>
    %cst_99 = arith.constant dense<0xFF800000> : vector<4x256xf32>
    %233 = vector.multi_reduction <maximumf>, %98, %cst_99 [2] : vector<4x256x64xf32> to vector<4x256xf32>
    %234 = vector.shape_cast %233 : vector<4x256xf32> to vector<4x256x1xf32>
    %cst_100 = arith.constant dense<0xFF800000> : vector<4x256xf32>
    %235 = vector.multi_reduction <maximumf>, %189, %cst_100 [2] : vector<4x256x64xf32> to vector<4x256xf32>
    %236 = vector.shape_cast %235 : vector<4x256xf32> to vector<4x256x1xf32>
    %237 = arith.maximumf %234, %236 : vector<4x256x1xf32>
    %238 = vector.broadcast %237 : vector<4x256x1xf32> to vector<4x256x64xf32>
    %239 = arith.subf %98, %238 : vector<4x256x64xf32>
    %240 = math.exp %239 : vector<4x256x64xf32>
    %241 = vector.broadcast %237 : vector<4x256x1xf32> to vector<4x256x64xf32>
    %242 = arith.subf %189, %241 : vector<4x256x64xf32>
    %243 = math.exp %242 : vector<4x256x64xf32>
    %cst_101 = arith.constant dense<0.000000e+00> : vector<4x256xf32>
    %244 = vector.multi_reduction <add>, %240, %cst_101 [2] : vector<4x256x64xf32> to vector<4x256xf32>
    %245 = vector.shape_cast %244 : vector<4x256xf32> to vector<4x256x1xf32>
    %cst_102 = arith.constant dense<0.000000e+00> : vector<4x256xf32>
    %246 = vector.multi_reduction <add>, %243, %cst_102 [2] : vector<4x256x64xf32> to vector<4x256xf32>
    %247 = vector.shape_cast %246 : vector<4x256xf32> to vector<4x256x1xf32>
    %248 = arith.addf %245, %247 : vector<4x256x1xf32>
    %249 = tpu.reciprocal %248 {approx = true} : vector<4x256x1xf32> -> vector<4x256x1xf32>
    %250 = vector.broadcast %249 : vector<4x256x1xf32> to vector<4x256x64xf32>
    %251 = arith.mulf %240, %250 : vector<4x256x64xf32>
    %252 = arith.truncf %251 : vector<4x256x64xf32> to vector<4x256x64xbf16>
    "tpu.trace_start"() <{level = 10 : i32, message = "hdk,hqk->hdq"}> : () -> ()
    %cst_103 = arith.constant dense<0.000000e+00> : vector<4x32x256xf32>
    %253 = tpu.matmul %141, %252, %cst_103 {dimension_numbers = #tpu.dot_dimension_numbers<[2], [2], [1], [1], [0, 0, 0, 1, 1, 1], [0], [0]>} : vector<4x32x64xbf16>, vector<4x256x64xbf16>, vector<4x32x256xf32> -> vector<4x32x256xf32>
    "tpu.trace_stop"() : () -> ()
    %254 = vector.broadcast %249 : vector<4x256x1xf32> to vector<4x256x64xf32>
    %255 = arith.mulf %243, %254 : vector<4x256x64xf32>
    %256 = arith.truncf %255 : vector<4x256x64xf32> to vector<4x256x64xbf16>
    "tpu.trace_start"() <{level = 10 : i32, message = "hdk,hqk->hdq"}> : () -> ()
    %cst_104 = arith.constant dense<0.000000e+00> : vector<4x32x256xf32>
    %257 = tpu.matmul %232, %256, %cst_104 {dimension_numbers = #tpu.dot_dimension_numbers<[2], [2], [1], [1], [0, 0, 0, 1, 1, 1], [0], [0]>} : vector<4x32x64xbf16>, vector<4x256x64xbf16>, vector<4x32x256xf32> -> vector<4x32x256xf32>
    "tpu.trace_stop"() : () -> ()
    %258 = arith.addf %253, %257 : vector<4x32x256xf32>
    %259 = arith.truncf %258 : vector<4x32x256xf32> to vector<4x32x256xbf16>
    %c0_105 = arith.constant 0 : index
    %c0_106 = arith.constant 0 : index
    %c0_107 = arith.constant 0 : index
    %260 = vector.load %arg18[%c0_105, %c0_106, %c0_107] : memref<4x128x32xbf16, #tpu.memory_space<vmem>>, vector<4x128x32xbf16>
    "tpu.trace_start"() <{level = 10 : i32, message = "hcd,hdq->hcq"}> : () -> ()
    %cst_108 = arith.constant dense<0.000000e+00> : vector<4x128x256xf32>
    %261 = tpu.matmul %260, %259, %cst_108 {dimension_numbers = #tpu.dot_dimension_numbers<[2], [1], [1], [2], [0, 0, 0, 1, 1, 2], [0], [0]>} : vector<4x128x32xbf16>, vector<4x32x256xbf16>, vector<4x128x256xf32> -> vector<4x128x256xf32>
    "tpu.trace_stop"() : () -> ()
    %cst_109 = arith.constant dense<0.000000e+00> : vector<128x256xf32>
    %262 = vector.multi_reduction <add>, %261, %cst_109 [0] : vector<4x128x256xf32> to vector<128x256xf32>
    %c0_110 = arith.constant 0 : index
    %c0_111 = arith.constant 0 : index
    %263 = vector.load %arg19[%c0_110, %c0_111] : memref<128x1xf32, #tpu.memory_space<vmem>>, vector<128x1xf32>
    %264 = vector.broadcast %263 : vector<128x1xf32> to vector<128x256xf32>
    %265 = arith.addf %262, %264 : vector<128x256xf32>
    %c0_112 = arith.constant 0 : index
    %c0_113 = arith.constant 0 : index
    %c0_114 = arith.constant 0 : index
    %266 = vector.load %arg1[%c0_112, %c0_113, %c0_114] : memref<1x128x256xbf16, #tpu.memory_space<vmem>>, vector<1x128x256xbf16>
    %267 = vector.shape_cast %266 : vector<1x128x256xbf16> to vector<128x256xbf16>
    %268 = arith.extf %267 : vector<128x256xbf16> to vector<128x256xf32>
    %c0_115 = arith.constant 0 : index
    %c0_116 = arith.constant 0 : index
    %c0_117 = arith.constant 0 : index
    %269 = vector.load %arg2[%c0_115, %c0_116, %c0_117] : memref<1x128x256xbf16, #tpu.memory_space<vmem>>, vector<1x128x256xbf16>
    %270 = vector.shape_cast %269 : vector<1x128x256xbf16> to vector<128x256xbf16>
    %271 = arith.extf %270 : vector<128x256xbf16> to vector<128x256xf32>
    %272 = arith.addf %268, %271 : vector<128x256xf32>
    %273 = arith.addf %272, %265 : vector<128x256xf32>
    %c0_118 = arith.constant 0 : index
    %c0_119 = arith.constant 0 : index
    %c0_120 = arith.constant 0 : index
    %274 = vector.load %arg20[%c0_118, %c0_119, %c0_120] : memref<1x128x256xf32, #tpu.memory_space<vmem>>, vector<1x128x256xf32>
    %275 = vector.shape_cast %274 : vector<1x128x256xf32> to vector<128x256xf32>
    %276 = vector.shape_cast %273 : vector<128x256xf32> to vector<1x128x256xf32>
    tpu.vector_store %arg20[%c0_118, %c0_119, %c0_120], %276 {strides = array<i32>} : memref<1x128x256xf32, #tpu.memory_space<vmem>>, vector<1x128x256xf32>,
    return
  }
  func.func @transform_0(%arg0: i32) -> (i32, i32, i32) {
    %c0_i32 = arith.constant 0 : i32
    %c0_i32_0 = arith.constant 0 : i32
    %c0_i32_1 = arith.constant 0 : i32
    return %arg0, %c0_i32, %c0_i32_0 : i32, i32, i32
  }
  func.func @transform_1(%arg0: i32) -> (i32, i32, i32) {
    %c0_i32 = arith.constant 0 : i32
    %c0_i32_0 = arith.constant 0 : i32
    %c0_i32_1 = arith.constant 0 : i32
    return %arg0, %c0_i32, %c0_i32_0 : i32, i32, i32
  }
  func.func @transform_2(%arg0: i32) -> (i32, i32, i32, i32) {
    %c0_i32 = arith.constant 0 : i32
    %c0_i32_0 = arith.constant 0 : i32
    %c0_i32_1 = arith.constant 0 : i32
    %c0_i32_2 = arith.constant 0 : i32
    return %arg0, %c0_i32, %c0_i32_0, %c0_i32_1 : i32, i32, i32, i32
  }
  func.func @transform_3(%arg0: i32) -> (i32, i32, i32, i32) {
    %c0_i32 = arith.constant 0 : i32
    %c0_i32_0 = arith.constant 0 : i32
    %c0_i32_1 = arith.constant 0 : i32
    %c0_i32_2 = arith.constant 0 : i32
    return %arg0, %c0_i32, %c0_i32_0, %c0_i32_1 : i32, i32, i32, i32
  }
  func.func @transform_4(%arg0: i32) -> (i32, i32, i32, i32) {
    %c0_i32 = arith.constant 0 : i32
    %c0_i32_0 = arith.constant 0 : i32
    %c0_i32_1 = arith.constant 0 : i32
    %c0_i32_2 = arith.constant 0 : i32
    return %arg0, %c0_i32, %c0_i32_0, %c0_i32_1 : i32, i32, i32, i32
  }
  func.func @transform_5(%arg0: i32) -> (i32, i32) {
    %c0_i32 = arith.constant 0 : i32
    %c0_i32_0 = arith.constant 0 : i32
    %c0_i32_1 = arith.constant 0 : i32
    return %c0_i32, %c0_i32_0 : i32, i32
  }
  func.func @transform_6(%arg0: i32) -> (i32, i32) {
    %c0_i32 = arith.constant 0 : i32
    %c0_i32_0 = arith.constant 0 : i32
    %c0_i32_1 = arith.constant 0 : i32
    return %c0_i32, %c0_i32_0 : i32, i32
  }
  func.func @transform_7(%arg0: i32) -> (i32, i32) {
    %c0_i32 = arith.constant 0 : i32
    %c0_i32_0 = arith.constant 0 : i32
    %c0_i32_1 = arith.constant 0 : i32
    return %c0_i32, %c0_i32_0 : i32, i32
  }
  func.func @transform_8(%arg0: i32) -> (i32, i32) {
    %c0_i32 = arith.constant 0 : i32
    %c0_i32_0 = arith.constant 0 : i32
    %c0_i32_1 = arith.constant 0 : i32
    return %c0_i32, %c0_i32_0 : i32, i32
  }
  func.func @transform_9(%arg0: i32) -> (i32, i32) {
    %c0_i32 = arith.constant 0 : i32
    %c0_i32_0 = arith.constant 0 : i32
    %c0_i32_1 = arith.constant 0 : i32
    return %c0_i32, %c0_i32_0 : i32, i32
  }
  func.func @transform_10(%arg0: i32) -> (i32, i32) {
    %c0_i32 = arith.constant 0 : i32
    %c0_i32_0 = arith.constant 0 : i32
    %c0_i32_1 = arith.constant 0 : i32
    return %c0_i32, %c0_i32_0 : i32, i32
  }
  func.func @transform_11(%arg0: i32) -> (i32, i32) {
    %c0_i32 = arith.constant 0 : i32
    %c0_i32_0 = arith.constant 0 : i32
    %c0_i32_1 = arith.constant 0 : i32
    return %c0_i32, %c0_i32_0 : i32, i32
  }
  func.func @transform_12(%arg0: i32) -> (i32, i32) {
    %c0_i32 = arith.constant 0 : i32
    %c0_i32_0 = arith.constant 0 : i32
    %c0_i32_1 = arith.constant 0 : i32
    return %c0_i32, %c0_i32_0 : i32, i32
  }
  func.func @transform_13(%arg0: i32) -> (i32, i32) {
    %c0_i32 = arith.constant 0 : i32
    %c0_i32_0 = arith.constant 0 : i32
    %c0_i32_1 = arith.constant 0 : i32
    return %c0_i32, %c0_i32_0 : i32, i32
  }
  func.func @transform_14(%arg0: i32) -> (i32, i32) {
    %c0_i32 = arith.constant 0 : i32
    %c0_i32_0 = arith.constant 0 : i32
    %c0_i32_1 = arith.constant 0 : i32
    return %c0_i32, %c0_i32_0 : i32, i32
  }
  func.func @transform_15(%arg0: i32) -> (i32, i32) {
    %c0_i32 = arith.constant 0 : i32
    %c0_i32_0 = arith.constant 0 : i32
    %c0_i32_1 = arith.constant 0 : i32
    return %c0_i32, %c0_i32_0 : i32, i32
  }
  func.func @transform_16(%arg0: i32) -> (i32, i32) {
    %c0_i32 = arith.constant 0 : i32
    %c0_i32_0 = arith.constant 0 : i32
    %c0_i32_1 = arith.constant 0 : i32
    return %c0_i32, %c0_i32_0 : i32, i32
  }
  func.func @transform_17(%arg0: i32) -> (i32, i32, i32) {
    %c0_i32 = arith.constant 0 : i32
    %c0_i32_0 = arith.constant 0 : i32
    %c0_i32_1 = arith.constant 0 : i32
    %c0_i32_2 = arith.constant 0 : i32
    return %c0_i32, %c0_i32_0, %c0_i32_1 : i32, i32, i32
  }
  func.func @transform_18(%arg0: i32) -> (i32, i32) {
    %c0_i32 = arith.constant 0 : i32
    %c0_i32_0 = arith.constant 0 : i32
    %c0_i32_1 = arith.constant 0 : i32
    return %c0_i32, %c0_i32_0 : i32, i32
  }
  func.func @transform_19(%arg0: i32) -> (i32, i32, i32) {
    %c0_i32 = arith.constant 0 : i32
    %c0_i32_0 = arith.constant 0 : i32
    %c0_i32_1 = arith.constant 0 : i32
    return %arg0, %c0_i32, %c0_i32_0 : i32, i32, i32
  }
}

</mosaic_0001>

<llo_original>
// kernel: tpu_custom_call.1
$region0: #{tpu_custom_call.1}
  #allocation0 [shape = 'u32[]', space=smem, size = 0x4, offset = 0x4, fixed_abs, tag = 'smem constant byte address 0x4 - core index']
  #allocation1 [shape = 'u32[144,128]{1,0:T(1,128)}', space=vmem, size = 0x12000, scoped, tag = 'internal scratch']
  %s0 = inlined_call_operand.vmem [shape: bf16[2,128,256], index: 0, kind: input, shape index: {}]
  %s1 = inlined_call_operand.vmem [shape: bf16[2,128,256], index: 1, kind: input, shape index: {}]
  %s2 = inlined_call_operand.vmem [shape: bf16[2,2,128,64], index: 2, kind: input, shape index: {}]
  %s3 = inlined_call_operand.vmem [shape: bf16[2,2,128,64], index: 3, kind: input, shape index: {}]
  %s4 = inlined_call_operand.vmem [shape: bf16[2,2,128,64], index: 4, kind: input, shape index: {}]
  %s5 = inlined_call_operand.vmem [shape: f32[128,1], index: 5, kind: input, shape index: {}]
  %s6 = inlined_call_operand.vmem [shape: f32[128,1], index: 6, kind: input, shape index: {}]
  %s7 = inlined_call_operand.vmem [shape: f32[128,1], index: 7, kind: input, shape index: {}]
  %s8 = inlined_call_operand.vmem [shape: f32[128,1], index: 8, kind: input, shape index: {}]
  %s9 = inlined_call_operand.vmem [shape: f32[128,1], index: 9, kind: input, shape index: {}]
  %s10 = inlined_call_operand.vmem [shape: f32[128,1], index: 10, kind: input, shape index: {}]
  %s11 = inlined_call_operand.vmem [shape: bf16[128,128], index: 11, kind: input, shape index: {}]
  %s12 = inlined_call_operand.vmem [shape: f32[128,1], index: 12, kind: input, shape index: {}]
  %s13 = inlined_call_operand.vmem [shape: bf16[128,128], index: 13, kind: input, shape index: {}]
  %s14 = inlined_call_operand.vmem [shape: f32[128,1], index: 14, kind: input, shape index: {}]
  %s15 = inlined_call_operand.vmem [shape: bf16[128,128], index: 15, kind: input, shape index: {}]
  %s16 = inlined_call_operand.vmem [shape: f32[128,1], index: 16, kind: input, shape index: {}]
  %s17 = inlined_call_operand.vmem [shape: bf16[4,128,32], index: 17, kind: input, shape index: {}]
  %s18 = inlined_call_operand.vmem [shape: f32[128,1], index: 18, kind: input, shape index: {}]
  %s19 = inlined_call_operand.hbm [shape: f32[2,128,256], index: 19, kind: output, shape index: {}]
  %s20 = sld [smem:[#allocation0]]
  $region109: #{tpu_custom_call.1} parent=0
    _
  %s22 = ssub.s32 1, %s20
  %s23 = scalar_select 0, %s22, %s20
  $region1: #{tpu_custom_call.1} parent=0
    #allocation2 [shape = 'u8[262144]{0}', space=vmem, size = 0x40000, scoped, tag = 'output window, operand 0']
    #allocation3 [shape = 's32[2]{0}', space=sflag, size = 0x8, scoped, tag = 'scoped memory for tpu_custom_call.1']
    %24 = vsyncpa [#allocation3], 0
    %s25 = scalar_lea.sflag [#allocation3], 1
    %26 = vsyncpa %s25, 0
    loop: start=0, step=1, limit=4
    $region2: #{tpu_custom_call.1} parent=1 // loop_pre_header
      _
    $region3: #{tpu_custom_call.1} parent=1 // loop_header
      %s28 = sphi 0, %s32
      %p29 = scmp.ge.s32.totalorder %s28, 4
      %s38 = sphi 0, %s40
      %s41 = sphi 0, %s38
      %s42 = sphi 0, %s41
      %s58 = sphi 0, %s42
      %s64 = sphi 0, %s66
      %s67 = sphi 0, %s64
      %s68 = sphi 0, %s67
      %s84 = sphi 0, %s68
      %s90 = sphi 0, %s92
      %s93 = sphi 0, %s90
      %s94 = sphi 0, %s93
      %s110 = sphi 0, %s94
      %s116 = sphi 0, %s118
      %s119 = sphi 0, %s116
      %s120 = sphi 0, %s119
      %s136 = sphi 0, %s120
      %s142 = sphi 0, %s144
      %s145 = sphi 0, %s142
      %s146 = sphi 0, %s145
      %s162 = sphi 0, %s146
      %s166 = sphi 0, %s166
      %s168 = sphi 0, %s166
      %s169 = sphi 0, %s168
      %s183 = sphi 0, %s169
      %s187 = sphi 0, %s187
      %s189 = sphi 0, %s187
      %s190 = sphi 0, %s189
      %s204 = sphi 0, %s190
      %s208 = sphi 0, %s208
      %s210 = sphi 0, %s208
      %s211 = sphi 0, %s210
      %s225 = sphi 0, %s211
      %s229 = sphi 0, %s229
      %s231 = sphi 0, %s229
      %s232 = sphi 0, %s231
      %s246 = sphi 0, %s232
      %s250 = sphi 0, %s250
      %s252 = sphi 0, %s250
      %s253 = sphi 0, %s252
      %s267 = sphi 0, %s253
      %s271 = sphi 0, %s271
      %s273 = sphi 0, %s271
      %s274 = sphi 0, %s273
      %s288 = sphi 0, %s274
      %s292 = sphi 0, %s292
      %s294 = sphi 0, %s292
      %s295 = sphi 0, %s294
      %s309 = sphi 0, %s295
      %s313 = sphi 0, %s313
      %s315 = sphi 0, %s313
      %s316 = sphi 0, %s315
      %s330 = sphi 0, %s316
      %s334 = sphi 0, %s334
      %s336 = sphi 0, %s334
      %s337 = sphi 0, %s336
      %s351 = sphi 0, %s337
      %s355 = sphi 0, %s355
      %s357 = sphi 0, %s355
      %s358 = sphi 0, %s357
      %s372 = sphi 0, %s358
      %s376 = sphi 0, %s376
      %s378 = sphi 0, %s376
      %s379 = sphi 0, %s378
      %s393 = sphi 0, %s379
      %s397 = sphi 0, %s397
      %s399 = sphi 0, %s397
      %s400 = sphi 0, %s399
      %s414 = sphi 0, %s400
      %s418 = sphi 0, %s418
      %s420 = sphi 0, %s418
      %s421 = sphi 0, %s420
      %s435 = sphi 0, %s421
      %s439 = sphi 0, %s439
      %s441 = sphi 0, %s439
      %s442 = sphi 0, %s441
      %s456 = sphi 0, %s442
      %s462 = sphi 0, %s464
      %s465 = sphi 0, %s462
      %s466 = sphi 0, %s465
      %s482 = sphi 0, %s466
    $region4: #{tpu_custom_call.1} parent=1 // loop_header_branch
      %31 = sbr.rel (%p29) target = $region8
    $region5: #{tpu_custom_call.1} parent=1 // loop_body
      %s33 = ssub.s32 %s28, 1
      %s34 = ssub.s32 %s28, 2
      %s35 = sadd.s32 %s28, 1
      %s36 = ssub.s32 %s28, %s35
      %p37 = scmp.eq.s32.totalorder %s36, 0
      %s39 = sadd.s32 %s38, 1
      %s40 = scalar_select %p37, %s38, %s39
      %p43 = pneg %p37
      %p44 = scmp.eq.s32.totalorder %s28, 1
      %p45 = por %p43, %p44
      %p46 = scmp.ne.s32.totalorder %s38, %s41
      %p47 = scmp.eq.s32.totalorder %s28, 0
      %p48 = por %p46, %p47
      %p49 = scmp.ne.s32.totalorder %s38, %s41
      %p50 = scmp.eq.s32.totalorder %s33, 1
      %p51 = por %p49, %p50
      %p52 = scmp.ne.s32.totalorder %s41, %s42
      %p53 = scmp.eq.s32.totalorder %s33, 0
      %p54 = por %p52, %p53
      %p55 = scmp.ne.s32.totalorder %s41, %s42
      %p56 = scmp.eq.s32.totalorder %s34, 1
      %p57 = por %p55, %p56
      %p59 = scmp.ne.s32.totalorder %s42, %s58
      %p60 = scmp.eq.s32.totalorder %s34, 0
      %p61 = por %p59, %p60
      %s62 = ssub.s32 %s28, %s35
      %p63 = scmp.eq.s32.totalorder %s62, 0
      %s65 = sadd.s32 %s64, 1
      %s66 = scalar_select %p63, %s64, %s65
      %p69 = pneg %p63
      %p70 = scmp.eq.s32.totalorder %s28, 1
      %p71 = por %p69, %p70
      %p72 = scmp.ne.s32.totalorder %s64, %s67
      %p73 = scmp.eq.s32.totalorder %s28, 0
      %p74 = por %p72, %p73
      %p75 = scmp.ne.s32.totalorder %s64, %s67
      %p76 = scmp.eq.s32.totalorder %s33, 1
      %p77 = por %p75, %p76
      %p78 = scmp.ne.s32.totalorder %s67, %s68
      %p79 = scmp.eq.s32.totalorder %s33, 0
      %p80 = por %p78, %p79
      %p81 = scmp.ne.s32.totalorder %s67, %s68
      %p82 = scmp.eq.s32.totalorder %s34, 1
      %p83 = por %p81, %p82
      %p85 = scmp.ne.s32.totalorder %s68, %s84
      %p86 = scmp.eq.s32.totalorder %s34, 0
      %p87 = por %p85, %p86
      %s88 = ssub.s32 %s28, %s35
      %p89 = scmp.eq.s32.totalorder %s88, 0
      %s91 = sadd.s32 %s90, 1
      %s92 = scalar_select %p89, %s90, %s91
      %p95 = pneg %p89
      %p96 = scmp.eq.s32.totalorder %s28, 1
      %p97 = por %p95, %p96
      %p98 = scmp.ne.s32.totalorder %s90, %s93
      %p99 = scmp.eq.s32.totalorder %s28, 0
      %p100 = por %p98, %p99
      %p101 = scmp.ne.s32.totalorder %s90, %s93
      %p102 = scmp.eq.s32.totalorder %s33, 1
      %p103 = por %p101, %p102
      %p104 = scmp.ne.s32.totalorder %s93, %s94
      %p105 = scmp.eq.s32.totalorder %s33, 0
      %p106 = por %p104, %p105
      %p107 = scmp.ne.s32.totalorder %s93, %s94
      %p108 = scmp.eq.s32.totalorder %s34, 1
      %p109 = por %p107, %p108
      %p111 = scmp.ne.s32.totalorder %s94, %s110
      %p112 = scmp.eq.s32.totalorder %s34, 0
      %p113 = por %p111, %p112
      %s114 = ssub.s32 %s28, %s35
      %p115 = scmp.eq.s32.totalorder %s114, 0
      %s117 = sadd.s32 %s116, 1
      %s118 = scalar_select %p115, %s116, %s117
      %p121 = pneg %p115
      %p122 = scmp.eq.s32.totalorder %s28, 1
      %p123 = por %p121, %p122
      %p124 = scmp.ne.s32.totalorder %s116, %s119
      %p125 = scmp.eq.s32.totalorder %s28, 0
      %p126 = por %p124, %p125
      %p127 = scmp.ne.s32.totalorder %s116, %s119
      %p128 = scmp.eq.s32.totalorder %s33, 1
      %p129 = por %p127, %p128
      %p130 = scmp.ne.s32.totalorder %s119, %s120
      %p131 = scmp.eq.s32.totalorder %s33, 0
      %p132 = por %p130, %p131
      %p133 = scmp.ne.s32.totalorder %s119, %s120
      %p134 = scmp.eq.s32.totalorder %s34, 1
      %p135 = por %p133, %p134
      %p137 = scmp.ne.s32.totalorder %s120, %s136
      %p138 = scmp.eq.s32.totalorder %s34, 0
      %p139 = por %p137, %p138
      %s140 = ssub.s32 %s28, %s35
      %p141 = scmp.eq.s32.totalorder %s140, 0
      %s143 = sadd.s32 %s142, 1
      %s144 = scalar_select %p141, %s142, %s143
      %p147 = pneg %p141
      %p148 = scmp.eq.s32.totalorder %s28, 1
      %p149 = por %p147, %p148
      %p150 = scmp.ne.s32.totalorder %s142, %s145
      %p151 = scmp.eq.s32.totalorder %s28, 0
      %p152 = por %p150, %p151
      %p153 = scmp.ne.s32.totalorder %s142, %s145
      %p154 = scmp.eq.s32.totalorder %s33, 1
      %p155 = por %p153, %p154
      %p156 = scmp.ne.s32.totalorder %s145, %s146
      %p157 = scmp.eq.s32.totalorder %s33, 0
      %p158 = por %p156, %p157
      %p159 = scmp.ne.s32.totalorder %s145, %s146
      %p160 = scmp.eq.s32.totalorder %s34, 1
      %p161 = por %p159, %p160
      %p163 = scmp.ne.s32.totalorder %s146, %s162
      %p164 = scmp.eq.s32.totalorder %s34, 0
      %p165 = por %p163, %p164
      %s167 = sadd.s32 %s166, 1
      %p170 = scmp.eq.s32.totalorder %s28, 1
      %p171 = scmp.ne.s32.totalorder %s166, %s168
      %p172 = scmp.eq.s32.totalorder %s28, 0
      %p173 = por %p171, %p172
      %p174 = scmp.ne.s32.totalorder %s166, %s168
      %p175 = scmp.eq.s32.totalorder %s33, 1
      %p176 = por %p174, %p175
      %p177 = scmp.ne.s32.totalorder %s168, %s169
      %p178 = scmp.eq.s32.totalorder %s33, 0
      %p179 = por %p177, %p178
      %p180 = scmp.ne.s32.totalorder %s168, %s169
      %p181 = scmp.eq.s32.totalorder %s34, 1
      %p182 = por %p180, %p181
      %p184 = scmp.ne.s32.totalorder %s169, %s183
      %p185 = scmp.eq.s32.totalorder %s34, 0
      %p186 = por %p184, %p185
      %s188 = sadd.s32 %s187, 1
      %p191 = scmp.eq.s32.totalorder %s28, 1
      %p192 = scmp.ne.s32.totalorder %s187, %s189
      %p193 = scmp.eq.s32.totalorder %s28, 0
      %p194 = por %p192, %p193
      %p195 = scmp.ne.s32.totalorder %s187, %s189
      %p196 = scmp.eq.s32.totalorder %s33, 1
      %p197 = por %p195, %p196
      %p198 = scmp.ne.s32.totalorder %s189, %s190
      %p199 = scmp.eq.s32.totalorder %s33, 0
      %p200 = por %p198, %p199
      %p201 = scmp.ne.s32.totalorder %s189, %s190
      %p202 = scmp.eq.s32.totalorder %s34, 1
      %p203 = por %p201, %p202
      %p205 = scmp.ne.s32.totalorder %s190, %s204
      %p206 = scmp.eq.s32.totalorder %s34, 0
      %p207 = por %p205, %p206
      %s209 = sadd.s32 %s208, 1
      %p212 = scmp.eq.s32.totalorder %s28, 1
      %p213 = scmp.ne.s32.totalorder %s208, %s210
      %p214 = scmp.eq.s32.totalorder %s28, 0
      %p215 = por %p213, %p214
      %p216 = scmp.ne.s32.totalorder %s208, %s210
      %p217 = scmp.eq.s32.totalorder %s33, 1
      %p218 = por %p216, %p217
      %p219 = scmp.ne.s32.totalorder %s210, %s211
      %p220 = scmp.eq.s32.totalorder %s33, 0
      %p221 = por %p219, %p220
      %p222 = scmp.ne.s32.totalorder %s210, %s211
      %p223 = scmp.eq.s32.totalorder %s34, 1
      %p224 = por %p222, %p223
      %p226 = scmp.ne.s32.totalorder %s211, %s225
      %p227 = scmp.eq.s32.totalorder %s34, 0
      %p228 = por %p226, %p227
      %s230 = sadd.s32 %s229, 1
      %p233 = scmp.eq.s32.totalorder %s28, 1
      %p234 = scmp.ne.s32.totalorder %s229, %s231
      %p235 = scmp.eq.s32.totalorder %s28, 0
      %p236 = por %p234, %p235
      %p237 = scmp.ne.s32.totalorder %s229, %s231
      %p238 = scmp.eq.s32.totalorder %s33, 1
      %p239 = por %p237, %p238
      %p240 = scmp.ne.s32.totalorder %s231, %s232
      %p241 = scmp.eq.s32.totalorder %s33, 0
      %p242 = por %p240, %p241
      %p243 = scmp.ne.s32.totalorder %s231, %s232
      %p244 = scmp.eq.s32.totalorder %s34, 1
      %p245 = por %p243, %p244
      %p247 = scmp.ne.s32.totalorder %s232, %s246
      %p248 = scmp.eq.s32.totalorder %s34, 0
      %p249 = por %p247, %p248
      %s251 = sadd.s32 %s250, 1
      %p254 = scmp.eq.s32.totalorder %s28, 1
      %p255 = scmp.ne.s32.totalorder %s250, %s252
      %p256 = scmp.eq.s32.totalorder %s28, 0
      %p257 = por %p255, %p256
      %p258 = scmp.ne.s32.totalorder %s250, %s252
      %p259 = scmp.eq.s32.totalorder %s33, 1
      %p260 = por %p258, %p259
      %p261 = scmp.ne.s32.totalorder %s252, %s253
      %p262 = scmp.eq.s32.totalorder %s33, 0
      %p263 = por %p261, %p262
      %p264 = scmp.ne.s32.totalorder %s252, %s253
      %p265 = scmp.eq.s32.totalorder %s34, 1
      %p266 = por %p264, %p265
      %p268 = scmp.ne.s32.totalorder %s253, %s267
      %p269 = scmp.eq.s32.totalorder %s34, 0
      %p270 = por %p268, %p269
      %s272 = sadd.s32 %s271, 1
      %p275 = scmp.eq.s32.totalorder %s28, 1
      %p276 = scmp.ne.s32.totalorder %s271, %s273
      %p277 = scmp.eq.s32.totalorder %s28, 0
      %p278 = por %p276, %p277
      %p279 = scmp.ne.s32.totalorder %s271, %s273
      %p280 = scmp.eq.s32.totalorder %s33, 1
      %p281 = por %p279, %p280
      %p282 = scmp.ne.s32.totalorder %s273, %s274
      %p283 = scmp.eq.s32.totalorder %s33, 0
      %p284 = por %p282, %p283
      %p285 = scmp.ne.s32.totalorder %s273, %s274
      %p286 = scmp.eq.s32.totalorder %s34, 1
      %p287 = por %p285, %p286
      %p289 = scmp.ne.s32.totalorder %s274, %s288
      %p290 = scmp.eq.s32.totalorder %s34, 0
      %p291 = por %p289, %p290
      %s293 = sadd.s32 %s292, 1
      %p296 = scmp.eq.s32.totalorder %s28, 1
      %p297 = scmp.ne.s32.totalorder %s292, %s294
      %p298 = scmp.eq.s32.totalorder %s28, 0
      %p299 = por %p297, %p298
      %p300 = scmp.ne.s32.totalorder %s292, %s294
      %p301 = scmp.eq.s32.totalorder %s33, 1
      %p302 = por %p300, %p301
      %p303 = scmp.ne.s32.totalorder %s294, %s295
      %p304 = scmp.eq.s32.totalorder %s33, 0
      %p305 = por %p303, %p304
      %p306 = scmp.ne.s32.totalorder %s294, %s295
      %p307 = scmp.eq.s32.totalorder %s34, 1
      %p308 = por %p306, %p307
      %p310 = scmp.ne.s32.totalorder %s295, %s309
      %p311 = scmp.eq.s32.totalorder %s34, 0
      %p312 = por %p310, %p311
      %s314 = sadd.s32 %s313, 1
      %p317 = scmp.eq.s32.totalorder %s28, 1
      %p318 = scmp.ne.s32.totalorder %s313, %s315
      %p319 = scmp.eq.s32.totalorder %s28, 0
      %p320 = por %p318, %p319
      %p321 = scmp.ne.s32.totalorder %s313, %s315
      %p322 = scmp.eq.s32.totalorder %s33, 1
      %p323 = por %p321, %p322
      %p324 = scmp.ne.s32.totalorder %s315, %s316
      %p325 = scmp.eq.s32.totalorder %s33, 0
      %p326 = por %p324, %p325
      %p327 = scmp.ne.s32.totalorder %s315, %s316
      %p328 = scmp.eq.s32.totalorder %s34, 1
      %p329 = por %p327, %p328
      %p331 = scmp.ne.s32.totalorder %s316, %s330
      %p332 = scmp.eq.s32.totalorder %s34, 0
      %p333 = por %p331, %p332
      %s335 = sadd.s32 %s334, 1
      %p338 = scmp.eq.s32.totalorder %s28, 1
      %p339 = scmp.ne.s32.totalorder %s334, %s336
      %p340 = scmp.eq.s32.totalorder %s28, 0
      %p341 = por %p339, %p340
      %p342 = scmp.ne.s32.totalorder %s334, %s336
      %p343 = scmp.eq.s32.totalorder %s33, 1
      %p344 = por %p342, %p343
      %p345 = scmp.ne.s32.totalorder %s336, %s337
      %p346 = scmp.eq.s32.totalorder %s33, 0
      %p347 = por %p345, %p346
      %p348 = scmp.ne.s32.totalorder %s336, %s337
      %p349 = scmp.eq.s32.totalorder %s34, 1
      %p350 = por %p348, %p349
      %p352 = scmp.ne.s32.totalorder %s337, %s351
      %p353 = scmp.eq.s32.totalorder %s34, 0
      %p354 = por %p352, %p353
      %s356 = sadd.s32 %s355, 1
      %p359 = scmp.eq.s32.totalorder %s28, 1
      %p360 = scmp.ne.s32.totalorder %s355, %s357
      %p361 = scmp.eq.s32.totalorder %s28, 0
      %p362 = por %p360, %p361
      %p363 = scmp.ne.s32.totalorder %s355, %s357
      %p364 = scmp.eq.s32.totalorder %s33, 1
      %p365 = por %p363, %p364
      %p366 = scmp.ne.s32.totalorder %s357, %s358
      %p367 = scmp.eq.s32.totalorder %s33, 0
      %p368 = por %p366, %p367
      %p369 = scmp.ne.s32.totalorder %s357, %s358
      %p370 = scmp.eq.s32.totalorder %s34, 1
      %p371 = por %p369, %p370
      %p373 = scmp.ne.s32.totalorder %s358, %s372
      %p374 = scmp.eq.s32.totalorder %s34, 0
      %p375 = por %p373, %p374
      %s377 = sadd.s32 %s376, 1
      %p380 = scmp.eq.s32.totalorder %s28, 1
      %p381 = scmp.ne.s32.totalorder %s376, %s378
      %p382 = scmp.eq.s32.totalorder %s28, 0
      %p383 = por %p381, %p382
      %p384 = scmp.ne.s32.totalorder %s376, %s378
      %p385 = scmp.eq.s32.totalorder %s33, 1
      %p386 = por %p384, %p385
      %p387 = scmp.ne.s32.totalorder %s378, %s379
      %p388 = scmp.eq.s32.totalorder %s33, 0
      %p389 = por %p387, %p388
      %p390 = scmp.ne.s32.totalorder %s378, %s379
      %p391 = scmp.eq.s32.totalorder %s34, 1
      %p392 = por %p390, %p391
      %p394 = scmp.ne.s32.totalorder %s379, %s393
      %p395 = scmp.eq.s32.totalorder %s34, 0
      %p396 = por %p394, %p395
      %s398 = sadd.s32 %s397, 1
      %p401 = scmp.eq.s32.totalorder %s28, 1
      %p402 = scmp.ne.s32.totalorder %s397, %s399
      %p403 = scmp.eq.s32.totalorder %s28, 0
      %p404 = por %p402, %p403
      %p405 = scmp.ne.s32.totalorder %s397, %s399
      %p406 = scmp.eq.s32.totalorder %s33, 1
      %p407 = por %p405, %p406
      %p408 = scmp.ne.s32.totalorder %s399, %s400
      %p409 = scmp.eq.s32.totalorder %s33, 0
      %p410 = por %p408, %p409
      %p411 = scmp.ne.s32.totalorder %s399, %s400
      %p412 = scmp.eq.s32.totalorder %s34, 1
      %p413 = por %p411, %p412
      %p415 = scmp.ne.s32.totalorder %s400, %s414
      %p416 = scmp.eq.s32.totalorder %s34, 0
      %p417 = por %p415, %p416
      %s419 = sadd.s32 %s418, 1
      %p422 = scmp.eq.s32.totalorder %s28, 1
      %p423 = scmp.ne.s32.totalorder %s418, %s420
      %p424 = scmp.eq.s32.totalorder %s28, 0
      %p425 = por %p423, %p424
      %p426 = scmp.ne.s32.totalorder %s418, %s420
      %p427 = scmp.eq.s32.totalorder %s33, 1
      %p428 = por %p426, %p427
      %p429 = scmp.ne.s32.totalorder %s420, %s421
      %p430 = scmp.eq.s32.totalorder %s33, 0
      %p431 = por %p429, %p430
      %p432 = scmp.ne.s32.totalorder %s420, %s421
      %p433 = scmp.eq.s32.totalorder %s34, 1
      %p434 = por %p432, %p433
      %p436 = scmp.ne.s32.totalorder %s421, %s435
      %p437 = scmp.eq.s32.totalorder %s34, 0
      %p438 = por %p436, %p437
      %s440 = sadd.s32 %s439, 1
      %p443 = scmp.eq.s32.totalorder %s28, 1
      %p444 = scmp.ne.s32.totalorder %s439, %s441
      %p445 = scmp.eq.s32.totalorder %s28, 0
      %p446 = por %p444, %p445
      %p447 = scmp.ne.s32.totalorder %s439, %s441
      %p448 = scmp.eq.s32.totalorder %s33, 1
      %p449 = por %p447, %p448
      %p450 = scmp.ne.s32.totalorder %s441, %s442
      %p451 = scmp.eq.s32.totalorder %s33, 0
      %p452 = por %p450, %p451
      %p453 = scmp.ne.s32.totalorder %s441, %s442
      %p454 = scmp.eq.s32.totalorder %s34, 1
      %p455 = por %p453, %p454
      %p457 = scmp.ne.s32.totalorder %s442, %s456
      %p458 = scmp.eq.s32.totalorder %s34, 0
      %p459 = por %p457, %p458
      %s460 = ssub.s32 %s28, %s35
      %p461 = scmp.eq.s32.totalorder %s460, 0
      %s463 = sadd.s32 %s462, 1
      %s464 = scalar_select %p461, %s462, %s463
      %p467 = pneg %p461
      %p468 = scmp.eq.s32.totalorder %s28, 1
      %p469 = por %p467, %p468
      %p470 = scmp.ne.s32.totalorder %s462, %s465
      %p471 = scmp.eq.s32.totalorder %s28, 0
      %p472 = por %p470, %p471
      %p473 = scmp.ne.s32.totalorder %s462, %s465
      %p474 = scmp.eq.s32.totalorder %s33, 1
      %p475 = por %p473, %p474
      %p476 = scmp.ne.s32.totalorder %s465, %s466
      %p477 = scmp.eq.s32.totalorder %s33, 0
      %p478 = por %p476, %p477
      %p479 = scmp.ne.s32.totalorder %s465, %s466
      %p480 = scmp.eq.s32.totalorder %s34, 1
      %p481 = por %p479, %p480
      %p483 = scmp.ne.s32.totalorder %s466, %s482
      %p484 = scmp.eq.s32.totalorder %s34, 0
      %p485 = por %p483, %p484
      %p486 = scmp.le.s32.totalorder 1, %s28
      %p487 = scmp.lt.s32.totalorder %s28, 3
      %p488 = pnand %p486, %p487
      %p489 = pneg %p488
      // Predicated region
      $region9: #{tpu_custom_call.1} parent=5 // pred_check
        _
      $region10: #{tpu_custom_call.1} parent=5 // pred_check_branch
        %491 = sbr.rel (%p488) target = $region12
      $region11: #{tpu_custom_call.1} parent=5 // pred_region
        %s492 = ssub.s32 %s28, 1
        // Predicated region
        $region13: #{tpu_custom_call.1} parent=11 // pred_check
          %p493 = pneg %p179
        $region14: #{tpu_custom_call.1} parent=11 // pred_check_branch
          %495 = sbr.rel (%p493) target = $region16
        $region15: #{tpu_custom_call.1} parent=11 // pred_region
          _
        $region16: #{tpu_custom_call.1} parent=11 // pred_fallthru
          _
        // Predicated region
        $region17: #{tpu_custom_call.1} parent=11 // pred_check
          %p496 = pneg %p200
        $region18: #{tpu_custom_call.1} parent=11 // pred_check_branch
          %498 = sbr.rel (%p496) target = $region20
        $region19: #{tpu_custom_call.1} parent=11 // pred_region
          _
        $region20: #{tpu_custom_call.1} parent=11 // pred_fallthru
          _
        // Predicated region
        $region21: #{tpu_custom_call.1} parent=11 // pred_check
          %p499 = pneg %p221
        $region22: #{tpu_custom_call.1} parent=11 // pred_check_branch
          %501 = sbr.rel (%p499) target = $region24
        $region23: #{tpu_custom_call.1} parent=11 // pred_region
          _
        $region24: #{tpu_custom_call.1} parent=11 // pred_fallthru
          _
        // Predicated region
        $region25: #{tpu_custom_call.1} parent=11 // pred_check
          %p502 = pneg %p242
        $region26: #{tpu_custom_call.1} parent=11 // pred_check_branch
          %504 = sbr.rel (%p502) target = $region28
        $region27: #{tpu_custom_call.1} parent=11 // pred_region
          _
        $region28: #{tpu_custom_call.1} parent=11 // pred_fallthru
          _
        // Predicated region
        $region29: #{tpu_custom_call.1} parent=11 // pred_check
          %p505 = pneg %p263
        $region30: #{tpu_custom_call.1} parent=11 // pred_check_branch
          %507 = sbr.rel (%p505) target = $region32
        $region31: #{tpu_custom_call.1} parent=11 // pred_region
          _
        $region32: #{tpu_custom_call.1} parent=11 // pred_fallthru
          _
        // Predicated region
        $region33: #{tpu_custom_call.1} parent=11 // pred_check
          %p508 = pneg %p284
        $region34: #{tpu_custom_call.1} parent=11 // pred_check_branch
          %510 = sbr.rel (%p508) target = $region36
        $region35: #{tpu_custom_call.1} parent=11 // pred_region
          _
        $region36: #{tpu_custom_call.1} parent=11 // pred_fallthru
          _
        // Predicated region
        $region37: #{tpu_custom_call.1} parent=11 // pred_check
          %p511 = pneg %p305
        $region38: #{tpu_custom_call.1} parent=11 // pred_check_branch
          %513 = sbr.rel (%p511) target = $region40
        $region39: #{tpu_custom_call.1} parent=11 // pred_region
          _
        $region40: #{tpu_custom_call.1} parent=11 // pred_fallthru
          _
        // Predicated region
        $region41: #{tpu_custom_call.1} parent=11 // pred_check
          %p514 = pneg %p326
        $region42: #{tpu_custom_call.1} parent=11 // pred_check_branch
          %516 = sbr.rel (%p514) target = $region44
        $region43: #{tpu_custom_call.1} parent=11 // pred_region
          _
        $region44: #{tpu_custom_call.1} parent=11 // pred_fallthru
          _
        // Predicated region
        $region45: #{tpu_custom_call.1} parent=11 // pred_check
          %p517 = pneg %p347
        $region46: #{tpu_custom_call.1} parent=11 // pred_check_branch
          %519 = sbr.rel (%p517) target = $region48
        $region47: #{tpu_custom_call.1} parent=11 // pred_region
          _
        $region48: #{tpu_custom_call.1} parent=11 // pred_fallthru
          _
        // Predicated region
        $region49: #{tpu_custom_call.1} parent=11 // pred_check
          %p520 = pneg %p368
        $region50: #{tpu_custom_call.1} parent=11 // pred_check_branch
          %522 = sbr.rel (%p520) target = $region52
        $region51: #{tpu_custom_call.1} parent=11 // pred_region
          _
        $region52: #{tpu_custom_call.1} parent=11 // pred_fallthru
          _
        // Predicated region
        $region53: #{tpu_custom_call.1} parent=11 // pred_check
          %p523 = pneg %p389
        $region54: #{tpu_custom_call.1} parent=11 // pred_check_branch
          %525 = sbr.rel (%p523) target = $region56
        $region55: #{tpu_custom_call.1} parent=11 // pred_region
          _
        $region56: #{tpu_custom_call.1} parent=11 // pred_fallthru
          _
        // Predicated region
        $region57: #{tpu_custom_call.1} parent=11 // pred_check
          %p526 = pneg %p410
        $region58: #{tpu_custom_call.1} parent=11 // pred_check_branch
          %528 = sbr.rel (%p526) target = $region60
        $region59: #{tpu_custom_call.1} parent=11 // pred_region
          _
        $region60: #{tpu_custom_call.1} parent=11 // pred_fallthru
          _
        // Predicated region
        $region61: #{tpu_custom_call.1} parent=11 // pred_check
          %p529 = pneg %p431
        $region62: #{tpu_custom_call.1} parent=11 // pred_check_branch
          %531 = sbr.rel (%p529) target = $region64
        $region63: #{tpu_custom_call.1} parent=11 // pred_region
          _
        $region64: #{tpu_custom_call.1} parent=11 // pred_fallthru
          _
        // Predicated region
        $region65: #{tpu_custom_call.1} parent=11 // pred_check
          %p532 = pneg %p452
        $region66: #{tpu_custom_call.1} parent=11 // pred_check_branch
          %534 = sbr.rel (%p532) target = $region68
        $region67: #{tpu_custom_call.1} parent=11 // pred_region
          _
        $region68: #{tpu_custom_call.1} parent=11 // pred_fallthru
          _
      $region12: #{tpu_custom_call.1} parent=5 // pred_fallthru
        _
      %p535 = scmp.lt.s32.totalorder %s28, 2
      // Predicated region
      $region69: #{tpu_custom_call.1} parent=5 // pred_check
        %p536 = pneg %p535
      $region70: #{tpu_custom_call.1} parent=5 // pred_check_branch
        %538 = sbr.rel (%p536) target = $region72
      $region71: #{tpu_custom_call.1} parent=5 // pred_region
        // Predicated region
        $region73: #{tpu_custom_call.1} parent=71 // pred_check
          %p539 = pneg %p48
        $region74: #{tpu_custom_call.1} parent=71 // pred_check_branch
          %541 = sbr.rel (%p539) target = $region76
        $region75: #{tpu_custom_call.1} parent=71 // pred_region
          %p542 = scmp.lt.s32.totalorder %s28, 1
          %s543 = scalar_select %p542, %s28, 1
          %s544 = smul.addr %s543, 32
          %s545 = smul.addr %s544, 4
          %s546 = scalar_lea.vmem %s0, %s545
        $region76: #{tpu_custom_call.1} parent=71 // pred_fallthru
          _
        // Predicated region
        $region77: #{tpu_custom_call.1} parent=71 // pred_check
          %p547 = pneg %p74
        $region78: #{tpu_custom_call.1} parent=71 // pred_check_branch
          %549 = sbr.rel (%p547) target = $region80
        $region79: #{tpu_custom_call.1} parent=71 // pred_region
          %p550 = scmp.lt.s32.totalorder %s28, 1
          %s551 = scalar_select %p550, %s28, 1
          %s552 = smul.addr %s551, 32
          %s553 = smul.addr %s552, 4
          %s554 = scalar_lea.vmem %s1, %s553
        $region80: #{tpu_custom_call.1} parent=71 // pred_fallthru
          _
        // Predicated region
        $region81: #{tpu_custom_call.1} parent=71 // pred_check
          %p555 = pneg %p100
        $region82: #{tpu_custom_call.1} parent=71 // pred_check_branch
          %557 = sbr.rel (%p555) target = $region84
        $region83: #{tpu_custom_call.1} parent=71 // pred_region
          %p558 = scmp.lt.s32.totalorder %s28, 1
          %s559 = scalar_select %p558, %s28, 1
          %s560 = smul.addr %s559, 32
          %s561 = smul.addr %s560, 4
          %s562 = scalar_lea.vmem %s2, %s561
        $region84: #{tpu_custom_call.1} parent=71 // pred_fallthru
          _
        // Predicated region
        $region85: #{tpu_custom_call.1} parent=71 // pred_check
          %p563 = pneg %p126
        $region86: #{tpu_custom_call.1} parent=71 // pred_check_branch
          %565 = sbr.rel (%p563) target = $region88
        $region87: #{tpu_custom_call.1} parent=71 // pred_region
          %p566 = scmp.lt.s32.totalorder %s28, 1
          %s567 = scalar_select %p566, %s28, 1
          %s568 = smul.addr %s567, 32
          %s569 = smul.addr %s568, 4
          %s570 = scalar_lea.vmem %s3, %s569
        $region88: #{tpu_custom_call.1} parent=71 // pred_fallthru
          _
        // Predicated region
        $region89: #{tpu_custom_call.1} parent=71 // pred_check
          %p571 = pneg %p152
        $region90: #{tpu_custom_call.1} parent=71 // pred_check_branch
          %573 = sbr.rel (%p571) target = $region92
        $region91: #{tpu_custom_call.1} parent=71 // pred_region
          %p574 = scmp.lt.s32.totalorder %s28, 1
          %s575 = scalar_select %p574, %s28, 1
          %s576 = smul.addr %s575, 32
          %s577 = smul.addr %s576, 4
          %s578 = scalar_lea.vmem %s4, %s577
        $region92: #{tpu_custom_call.1} parent=71 // pred_fallthru
          _
      $region72: #{tpu_custom_call.1} parent=5 // pred_fallthru
        _
      %p579 = scmp.le.s32.totalorder 1, %s28
      %p580 = scmp.lt.s32.totalorder %s28, 3
      %p581 = pnand %p579, %p580
      %p582 = pneg %p581
      // Predicated region
      $region93: #{tpu_custom_call.1} parent=5 // pred_check
        _
      $region94: #{tpu_custom_call.1} parent=5 // pred_check_branch
        %584 = sbr.rel (%p581) target = $region96
      $region95: #{tpu_custom_call.1} parent=5 // pred_region
        %s585 = ssub.s32 %s28, 1
        %p586 = scmp.lt.s32.totalorder %s33, 1
        %s587 = scalar_select %p586, %s33, 1
        %s588 = smul.addr %s587, 32
        %s589 = smul.addr %s588, 4
        %s590 = scalar_lea.vmem %s0, %s589
        %p591 = pneg %p54
        %p592 = pneg %p51
        %p593 = scmp.lt.s32.totalorder %s33, 1
        %s594 = scalar_select %p593, %s33, 1
        %s595 = smul.addr %s594, 32
        %s596 = smul.addr %s595, 4
        %s597 = scalar_lea.vmem %s1, %s596
        %p598 = pneg %p80
        %p599 = pneg %p77
        %p600 = scmp.lt.s32.totalorder %s33, 1
        %s601 = scalar_select %p600, %s33, 1
        %s602 = smul.addr %s601, 32
        %s603 = smul.addr %s602, 4
        %s604 = scalar_lea.vmem %s2, %s603
        %p605 = pneg %p106
        %p606 = pneg %p103
        %p607 = scmp.lt.s32.totalorder %s33, 1
        %s608 = scalar_select %p607, %s33, 1
        %s609 = smul.addr %s608, 32
        %s610 = smul.addr %s609, 4
        %s611 = scalar_lea.vmem %s3, %s610
        %p612 = pneg %p132
        %p613 = pneg %p129
        %p614 = scmp.lt.s32.totalorder %s33, 1
        %s615 = scalar_select %p614, %s33, 1
        %s616 = smul.addr %s615, 32
        %s617 = smul.addr %s616, 4
        %s618 = scalar_lea.vmem %s4, %s617
        %p619 = pneg %p158
        %p620 = pneg %p155
        %p621 = pneg %p179
        %p622 = pneg %p176
        %p623 = pneg %p200
        %p624 = pneg %p197
        %p625 = pneg %p221
        %p626 = pneg %p218
        %p627 = pneg %p242
        %p628 = pneg %p239
        %p629 = pneg %p263
        %p630 = pneg %p260
        %p631 = pneg %p284
        %p632 = pneg %p281
        %p633 = pneg %p305
        %p634 = pneg %p302
        %p635 = pneg %p326
        %p636 = pneg %p323
        %p637 = pneg %p347
        %p638 = pneg %p344
        %p639 = pneg %p368
        %p640 = pneg %p365
        %p641 = pneg %p389
        %p642 = pneg %p386
        %p643 = pneg %p410
        %p644 = pneg %p407
        %p645 = pneg %p431
        %p646 = pneg %p428
        %p647 = pneg %p452
        %p648 = pneg %p449
        %p649 = pneg %p478
        %p650 = pneg %p475
        %s651 = sand.u32 %s465, 1
        %s652 = scalar_lea.sflag [#allocation3], %s651
        %s653 = sand.u32 %s465, 1
        %s654 = smul.addr %s653, 256
        %s655 = scalar_lea.vmem [#allocation2], %s654
        %p656 = scmp.lt.s32.totalorder %s33, 1
        %s657 = scalar_select %p656, %s33, 1
        %s658 = smul.addr %s657, 32
        %s659 = smul.addr %s658, 4
        %s660 = scalar_lea.vmem %s0, %s659
        %p661 = scmp.lt.s32.totalorder %s33, 1
        %s662 = scalar_select %p661, %s33, 1
        %s663 = smul.addr %s662, 32
        %s664 = smul.addr %s663, 4
        %s665 = scalar_lea.vmem %s1, %s664
        %p666 = scmp.lt.s32.totalorder %s33, 1
        %s667 = scalar_select %p666, %s33, 1
        %s668 = smul.addr %s667, 32
        %s669 = smul.addr %s668, 4
        %s670 = scalar_lea.vmem %s2, %s669
        %p671 = scmp.lt.s32.totalorder %s33, 1
        %s672 = scalar_select %p671, %s33, 1
        %s673 = smul.addr %s672, 32
        %s674 = smul.addr %s673, 4
        %s675 = scalar_lea.vmem %s3, %s674
        %p676 = scmp.lt.s32.totalorder %s33, 1
        %s677 = scalar_select %p676, %s33, 1
        %s678 = smul.addr %s677, 32
        %s679 = smul.addr %s678, 4
        %s680 = scalar_lea.vmem %s4, %s679
        %v682 = vld [vmem:[%s660] sm:$0xff]
        %v683 = vld [vmem:[%s660 + $0x8] sm:$0xff]
        %v684 = vld [vmem:[%s660 + $0x10] sm:$0xff]
        %v685 = vld [vmem:[%s660 + $0x18] sm:$0xff]
        %v686 = vld [vmem:[%s660 + $0x20] sm:$0xff]
        %v687 = vld [vmem:[%s660 + $0x28] sm:$0xff]
        %v688 = vld [vmem:[%s660 + $0x30] sm:$0xff]
        %v689 = vld [vmem:[%s660 + $0x38] sm:$0xff]
        %v690 = vld [vmem:[%s660 + $0x40] sm:$0xff]
        %v691 = vld [vmem:[%s660 + $0x48] sm:$0xff]
        %v692 = vld [vmem:[%s660 + $0x50] sm:$0xff]
        %v693 = vld [vmem:[%s660 + $0x58] sm:$0xff]
        %v694 = vld [vmem:[%s660 + $0x60] sm:$0xff]
        %v695 = vld [vmem:[%s660 + $0x68] sm:$0xff]
        %v696 = vld [vmem:[%s660 + $0x70] sm:$0xff]
        %v697 = vld [vmem:[%s660 + $0x78] sm:$0xff]
        %v698 = vunpack.c.l.bf16 %v682
        %v699 = vunpack.c.h.bf16 %v682
        %v700 = vunpack.c.l.bf16 %v683
        %v701 = vunpack.c.h.bf16 %v683
        %v702 = vunpack.c.l.bf16 %v684
        %v703 = vunpack.c.h.bf16 %v684
        %v704 = vunpack.c.l.bf16 %v685
        %v705 = vunpack.c.h.bf16 %v685
        %v706 = vunpack.c.l.bf16 %v686
        %v707 = vunpack.c.h.bf16 %v686
        %v708 = vunpack.c.l.bf16 %v687
        %v709 = vunpack.c.h.bf16 %v687
        %v710 = vunpack.c.l.bf16 %v688
        %v711 = vunpack.c.h.bf16 %v688
        %v712 = vunpack.c.l.bf16 %v689
        %v713 = vunpack.c.h.bf16 %v689
        %v714 = vunpack.c.l.bf16 %v690
        %v715 = vunpack.c.h.bf16 %v690
        %v716 = vunpack.c.l.bf16 %v691
        %v717 = vunpack.c.h.bf16 %v691
        %v718 = vunpack.c.l.bf16 %v692
        %v719 = vunpack.c.h.bf16 %v692
        %v720 = vunpack.c.l.bf16 %v693
        %v721 = vunpack.c.h.bf16 %v693
        %v722 = vunpack.c.l.bf16 %v694
        %v723 = vunpack.c.h.bf16 %v694
        %v724 = vunpack.c.l.bf16 %v695
        %v725 = vunpack.c.h.bf16 %v695
        %v726 = vunpack.c.l.bf16 %v696
        %v727 = vunpack.c.h.bf16 %v696
        %v728 = vunpack.c.l.bf16 %v697
        %v729 = vunpack.c.h.bf16 %v697
        %v730 = vld [vmem:[%s665] sm:$0xff]
        %v731 = vld [vmem:[%s665 + $0x8] sm:$0xff]
        %v732 = vld [vmem:[%s665 + $0x10] sm:$0xff]
        %v733 = vld [vmem:[%s665 + $0x18] sm:$0xff]
        %v734 = vld [vmem:[%s665 + $0x20] sm:$0xff]
        %v735 = vld [vmem:[%s665 + $0x28] sm:$0xff]
        %v736 = vld [vmem:[%s665 + $0x30] sm:$0xff]
        %v737 = vld [vmem:[%s665 + $0x38] sm:$0xff]
        %v738 = vld [vmem:[%s665 + $0x40] sm:$0xff]
        %v739 = vld [vmem:[%s665 + $0x48] sm:$0xff]
        %v740 = vld [vmem:[%s665 + $0x50] sm:$0xff]
        %v741 = vld [vmem:[%s665 + $0x58] sm:$0xff]
        %v742 = vld [vmem:[%s665 + $0x60] sm:$0xff]
        %v743 = vld [vmem:[%s665 + $0x68] sm:$0xff]
        %v744 = vld [vmem:[%s665 + $0x70] sm:$0xff]
        %v745 = vld [vmem:[%s665 + $0x78] sm:$0xff]
        %v746 = vunpack.c.l.bf16 %v730
        %v747 = vunpack.c.h.bf16 %v730
        %v748 = vunpack.c.l.bf16 %v731
        %v749 = vunpack.c.h.bf16 %v731
        %v750 = vunpack.c.l.bf16 %v732
        %v751 = vunpack.c.h.bf16 %v732
        %v752 = vunpack.c.l.bf16 %v733
        %v753 = vunpack.c.h.bf16 %v733
        %v754 = vunpack.c.l.bf16 %v734
        %v755 = vunpack.c.h.bf16 %v734
        %v756 = vunpack.c.l.bf16 %v735
        %v757 = vunpack.c.h.bf16 %v735
        %v758 = vunpack.c.l.bf16 %v736
        %v759 = vunpack.c.h.bf16 %v736
        %v760 = vunpack.c.l.bf16 %v737
        %v761 = vunpack.c.h.bf16 %v737
        %v762 = vunpack.c.l.bf16 %v738
        %v763 = vunpack.c.h.bf16 %v738
        %v764 = vunpack.c.l.bf16 %v739
        %v765 = vunpack.c.h.bf16 %v739
        %v766 = vunpack.c.l.bf16 %v740
        %v767 = vunpack.c.h.bf16 %v740
        %v768 = vunpack.c.l.bf16 %v741
        %v769 = vunpack.c.h.bf16 %v741
        %v770 = vunpack.c.l.bf16 %v742
        %v771 = vunpack.c.h.bf16 %v742
        %v772 = vunpack.c.l.bf16 %v743
        %v773 = vunpack.c.h.bf16 %v743
        %v774 = vunpack.c.l.bf16 %v744
        %v775 = vunpack.c.h.bf16 %v744
        %v776 = vunpack.c.l.bf16 %v745
        %v777 = vunpack.c.h.bf16 %v745
        %v778 = vadd.f32 %v698, %v746
        %v779 = vadd.f32 %v699, %v747
        %v780 = vadd.f32 %v700, %v748
        %v781 = vadd.f32 %v701, %v749
        %v782 = vadd.f32 %v702, %v750
        %v783 = vadd.f32 %v703, %v751
        %v784 = vadd.f32 %v704, %v752
        %v785 = vadd.f32 %v705, %v753
        %v786 = vadd.f32 %v706, %v754
        %v787 = vadd.f32 %v707, %v755
        %v788 = vadd.f32 %v708, %v756
        %v789 = vadd.f32 %v709, %v757
        %v790 = vadd.f32 %v710, %v758
        %v791 = vadd.f32 %v711, %v759
        %v792 = vadd.f32 %v712, %v760
        %v793 = vadd.f32 %v713, %v761
        %v794 = vadd.f32 %v714, %v762
        %v795 = vadd.f32 %v715, %v763
        %v796 = vadd.f32 %v716, %v764
        %v797 = vadd.f32 %v717, %v765
        %v798 = vadd.f32 %v718, %v766
        %v799 = vadd.f32 %v719, %v767
        %v800 = vadd.f32 %v720, %v768
        %v801 = vadd.f32 %v721, %v769
        %v802 = vadd.f32 %v722, %v770
        %v803 = vadd.f32 %v723, %v771
        %v804 = vadd.f32 %v724, %v772
        %v805 = vadd.f32 %v725, %v773
        %v806 = vadd.f32 %v726, %v774
        %v807 = vadd.f32 %v727, %v775
        %v808 = vadd.f32 %v728, %v776
        %v809 = vadd.f32 %v729, %v777
        %v810 = vld [vmem:[%s5] sm:$0xff]
        %v811 = vld [vmem:[%s5 + $0x8] sm:$0xff]
        %v812 = vld [vmem:[%s5 + $0x10] sm:$0xff]
        %v813 = vld [vmem:[%s5 + $0x18] sm:$0xff]
        %v814 = vld [vmem:[%s5 + $0x20] sm:$0xff]
        %v815 = vld [vmem:[%s5 + $0x28] sm:$0xff]
        %v816 = vld [vmem:[%s5 + $0x30] sm:$0xff]
        %v817 = vld [vmem:[%s5 + $0x38] sm:$0xff]
        %v818 = vld [vmem:[%s5 + $0x40] sm:$0xff]
        %v819 = vld [vmem:[%s5 + $0x48] sm:$0xff]
        %v820 = vld [vmem:[%s5 + $0x50] sm:$0xff]
        %v821 = vld [vmem:[%s5 + $0x58] sm:$0xff]
        %v822 = vld [vmem:[%s5 + $0x60] sm:$0xff]
        %v823 = vld [vmem:[%s5 + $0x68] sm:$0xff]
        %v824 = vld [vmem:[%s5 + $0x70] sm:$0xff]
        %v825 = vld [vmem:[%s5 + $0x78] sm:$0xff]
        %v826 = vld [vmem:[%s6] sm:$0xff]
        %v827 = vld [vmem:[%s6 + $0x8] sm:$0xff]
        %v828 = vld [vmem:[%s6 + $0x10] sm:$0xff]
        %v829 = vld [vmem:[%s6 + $0x18] sm:$0xff]
        %v830 = vld [vmem:[%s6 + $0x20] sm:$0xff]
        %v831 = vld [vmem:[%s6 + $0x28] sm:$0xff]
        %v832 = vld [vmem:[%s6 + $0x30] sm:$0xff]
        %v833 = vld [vmem:[%s6 + $0x38] sm:$0xff]
        %v834 = vld [vmem:[%s6 + $0x40] sm:$0xff]
        %v835 = vld [vmem:[%s6 + $0x48] sm:$0xff]
        %v836 = vld [vmem:[%s6 + $0x50] sm:$0xff]
        %v837 = vld [vmem:[%s6 + $0x58] sm:$0xff]
        %v838 = vld [vmem:[%s6 + $0x60] sm:$0xff]
        %v839 = vld [vmem:[%s6 + $0x68] sm:$0xff]
        %v840 = vld [vmem:[%s6 + $0x70] sm:$0xff]
        %v841 = vld [vmem:[%s6 + $0x78] sm:$0xff]
        %v842 = vadd.f32 %v778, %v780
        %v843 = vadd.f32 %v842, %v782
        %v844 = vadd.f32 %v843, %v784
        %v845 = vadd.f32 %v844, %v786
        %v846 = vadd.f32 %v845, %v788
        %v847 = vadd.f32 %v846, %v790
        %v848 = vadd.f32 %v847, %v792
        %v849 = vadd.f32 %v848, %v794
        %v850 = vadd.f32 %v849, %v796
        %v851 = vadd.f32 %v850, %v798
        %v852 = vadd.f32 %v851, %v800
        %v853 = vadd.f32 %v852, %v802
        %v854 = vadd.f32 %v853, %v804
        %v855 = vadd.f32 %v854, %v806
        %v856 = vadd.f32 %v855, %v808
        %v857 = vrot.slane %v856, 4
        %v858 = vadd.f32 %v856, %v857
        %v859 = vrot.slane %v858, 2
        %v860 = vadd.f32 %v858, %v859
        %v861 = vrot.slane %v860, 1
        %v862 = vadd.f32 %v860, %v861
        %v863 = vadd.f32 %v779, %v781
        %v864 = vadd.f32 %v863, %v783
        %v865 = vadd.f32 %v864, %v785
        %v866 = vadd.f32 %v865, %v787
        %v867 = vadd.f32 %v866, %v789
        %v868 = vadd.f32 %v867, %v791
        %v869 = vadd.f32 %v868, %v793
        %v870 = vadd.f32 %v869, %v795
        %v871 = vadd.f32 %v870, %v797
        %v872 = vadd.f32 %v871, %v799
        %v873 = vadd.f32 %v872, %v801
        %v874 = vadd.f32 %v873, %v803
        %v875 = vadd.f32 %v874, %v805
        %v876 = vadd.f32 %v875, %v807
        %v877 = vadd.f32 %v876, %v809
        %v878 = vrot.slane %v877, 4
        %v879 = vadd.f32 %v877, %v878
        %v880 = vrot.slane %v879, 2
        %v881 = vadd.f32 %v879, %v880
        %v882 = vrot.slane %v881, 1
        %v883 = vadd.f32 %v881, %v882
        %v884 = vrcp.pop 128.0
        %v885 = vmul.f32 %v862, %v884
        %v886 = vmul.f32 %v883, %v884
        %v887 = vsub.f32 %v778, %v885
        %v888 = vsub.f32 %v779, %v886
        %v889 = vsub.f32 %v780, %v885
        %v890 = vsub.f32 %v781, %v886
        %v891 = vsub.f32 %v782, %v885
        %v892 = vsub.f32 %v783, %v886
        %v893 = vsub.f32 %v784, %v885
        %v894 = vsub.f32 %v785, %v886
        %v895 = vsub.f32 %v786, %v885
        %v896 = vsub.f32 %v787, %v886
        %v897 = vsub.f32 %v788, %v885
        %v898 = vsub.f32 %v789, %v886
        %v899 = vsub.f32 %v790, %v885
        %v900 = vsub.f32 %v791, %v886
        %v901 = vsub.f32 %v792, %v885
        %v902 = vsub.f32 %v793, %v886
        %v903 = vsub.f32 %v794, %v885
        %v904 = vsub.f32 %v795, %v886
        %v905 = vsub.f32 %v796, %v885
        %v906 = vsub.f32 %v797, %v886
        %v907 = vsub.f32 %v798, %v885
        %v908 = vsub.f32 %v799, %v886
        %v909 = vsub.f32 %v800, %v885
        %v910 = vsub.f32 %v801, %v886
        %v911 = vsub.f32 %v802, %v885
        %v912 = vsub.f32 %v803, %v886
        %v913 = vsub.f32 %v804, %v885
        %v914 = vsub.f32 %v805, %v886
        %v915 = vsub.f32 %v806, %v885
        %v916 = vsub.f32 %v807, %v886
        %v917 = vsub.f32 %v808, %v885
        %v918 = vsub.f32 %v809, %v886
        %v919 = vmul.f32 %v887, %v887
        %v920 = vmul.f32 %v888, %v888
        %v921 = vmul.f32 %v889, %v889
        %v922 = vmul.f32 %v890, %v890
        %v923 = vmul.f32 %v891, %v891
        %v924 = vmul.f32 %v892, %v892
        %v925 = vmul.f32 %v893, %v893
        %v926 = vmul.f32 %v894, %v894
        %v927 = vmul.f32 %v895, %v895
        %v928 = vmul.f32 %v896, %v896
        %v929 = vmul.f32 %v897, %v897
        %v930 = vmul.f32 %v898, %v898
        %v931 = vmul.f32 %v899, %v899
        %v932 = vmul.f32 %v900, %v900
        %v933 = vmul.f32 %v901, %v901
        %v934 = vmul.f32 %v902, %v902
        %v935 = vmul.f32 %v903, %v903
        %v936 = vmul.f32 %v904, %v904
        %v937 = vmul.f32 %v905, %v905
        %v938 = vmul.f32 %v906, %v906
        %v939 = vmul.f32 %v907, %v907
        %v940 = vmul.f32 %v908, %v908
        %v941 = vmul.f32 %v909, %v909
        %v942 = vmul.f32 %v910, %v910
        %v943 = vmul.f32 %v911, %v911
        %v944 = vmul.f32 %v912, %v912
        %v945 = vmul.f32 %v913, %v913
        %v946 = vmul.f32 %v914, %v914
        %v947 = vmul.f32 %v915, %v915
        %v948 = vmul.f32 %v916, %v916
        %v949 = vmul.f32 %v917, %v917
        %v950 = vmul.f32 %v918, %v918
        %v951 = vadd.f32 %v919, %v921
        %v952 = vadd.f32 %v951, %v923
        %v953 = vadd.f32 %v952, %v925
        %v954 = vadd.f32 %v953, %v927
        %v955 = vadd.f32 %v954, %v929
        %v956 = vadd.f32 %v955, %v931
        %v957 = vadd.f32 %v956, %v933
        %v958 = vadd.f32 %v957, %v935
        %v959 = vadd.f32 %v958, %v937
        %v960 = vadd.f32 %v959, %v939
        %v961 = vadd.f32 %v960, %v941
        %v962 = vadd.f32 %v961, %v943
        %v963 = vadd.f32 %v962, %v945
        %v964 = vadd.f32 %v963, %v947
        %v965 = vadd.f32 %v964, %v949
        %v966 = vrot.slane %v965, 4
        %v967 = vadd.f32 %v965, %v966
        %v968 = vrot.slane %v967, 2
        %v969 = vadd.f32 %v967, %v968
        %v970 = vrot.slane %v969, 1
        %v971 = vadd.f32 %v969, %v970
        %v972 = vadd.f32 %v920, %v922
        %v973 = vadd.f32 %v972, %v924
        %v974 = vadd.f32 %v973, %v926
        %v975 = vadd.f32 %v974, %v928
        %v976 = vadd.f32 %v975, %v930
        %v977 = vadd.f32 %v976, %v932
        %v978 = vadd.f32 %v977, %v934
        %v979 = vadd.f32 %v978, %v936
        %v980 = vadd.f32 %v979, %v938
        %v981 = vadd.f32 %v980, %v940
        %v982 = vadd.f32 %v981, %v942
        %v983 = vadd.f32 %v982, %v944
        %v984 = vadd.f32 %v983, %v946
        %v985 = vadd.f32 %v984, %v948
        %v986 = vadd.f32 %v985, %v950
        %v987 = vrot.slane %v986, 4
        %v988 = vadd.f32 %v986, %v987
        %v989 = vrot.slane %v988, 2
        %v990 = vadd.f32 %v988, %v989
        %v991 = vrot.slane %v990, 1
        %v992 = vadd.f32 %v990, %v991
        %v993 = vmul.f32 %v971, %v884
        %v994 = vmul.f32 %v992, %v884
        %v995 = vadd.f32 %v993, 1e-05
        %v996 = vadd.f32 %v994, 1e-05
        %v997 = vrsqrt.pop %v995
        %v998 = vrsqrt.pop %v996
        %v999 = vmul.f32 %v887, %v997
        %v1000 = vmul.f32 %v888, %v998
        %v1001 = vmul.f32 %v889, %v997
        %v1002 = vmul.f32 %v890, %v998
        %v1003 = vmul.f32 %v891, %v997
        %v1004 = vmul.f32 %v892, %v998
        %v1005 = vmul.f32 %v893, %v997
        %v1006 = vmul.f32 %v894, %v998
        %v1007 = vmul.f32 %v895, %v997
        %v1008 = vmul.f32 %v896, %v998
        %v1009 = vmul.f32 %v897, %v997
        %v1010 = vmul.f32 %v898, %v998
        %v1011 = vmul.f32 %v899, %v997
        %v1012 = vmul.f32 %v900, %v998
        %v1013 = vmul.f32 %v901, %v997
        %v1014 = vmul.f32 %v902, %v998
        %v1015 = vmul.f32 %v903, %v997
        %v1016 = vmul.f32 %v904, %v998
        %v1017 = vmul.f32 %v905, %v997
        %v1018 = vmul.f32 %v906, %v998
        %v1019 = vmul.f32 %v907, %v997
        %v1020 = vmul.f32 %v908, %v998
        %v1021 = vmul.f32 %v909, %v997
        %v1022 = vmul.f32 %v910, %v998
        %v1023 = vmul.f32 %v911, %v997
        %v1024 = vmul.f32 %v912, %v998
        %v1025 = vmul.f32 %v913, %v997
        %v1026 = vmul.f32 %v914, %v998
        %v1027 = vmul.f32 %v915, %v997
        %v1028 = vmul.f32 %v916, %v998
        %v1029 = vmul.f32 %v917, %v997
        %v1030 = vmul.f32 %v918, %v998
        %1032 = vset.pattern.permute.xlu0 0
        %1033 = vperm.xlu0 %1032, %v810
        %v1034 = vpop.permute.xlu0 %1033
        %1037 = vset.pattern.permute.xlu0 0
        %1038 = vperm.xlu0 %1037, %v811
        %v1039 = vpop.permute.xlu0 %1038
        %1042 = vset.pattern.permute.xlu0 0
        %1043 = vperm.xlu0 %1042, %v812
        %v1044 = vpop.permute.xlu0 %1043
        %1047 = vset.pattern.permute.xlu0 0
        %1048 = vperm.xlu0 %1047, %v813
        %v1049 = vpop.permute.xlu0 %1048
        %1052 = vset.pattern.permute.xlu0 0
        %1053 = vperm.xlu0 %1052, %v814
        %v1054 = vpop.permute.xlu0 %1053
        %1057 = vset.pattern.permute.xlu0 0
        %1058 = vperm.xlu0 %1057, %v815
        %v1059 = vpop.permute.xlu0 %1058
        %1062 = vset.pattern.permute.xlu0 0
        %1063 = vperm.xlu0 %1062, %v816
        %v1064 = vpop.permute.xlu0 %1063
        %1067 = vset.pattern.permute.xlu0 0
        %1068 = vperm.xlu0 %1067, %v817
        %v1069 = vpop.permute.xlu0 %1068
        %1072 = vset.pattern.permute.xlu0 0
        %1073 = vperm.xlu0 %1072, %v818
        %v1074 = vpop.permute.xlu0 %1073
        %1077 = vset.pattern.permute.xlu0 0
        %1078 = vperm.xlu0 %1077, %v819
        %v1079 = vpop.permute.xlu0 %1078
        %1082 = vset.pattern.permute.xlu0 0
        %1083 = vperm.xlu0 %1082, %v820
        %v1084 = vpop.permute.xlu0 %1083
        %1087 = vset.pattern.permute.xlu0 0
        %1088 = vperm.xlu0 %1087, %v821
        %v1089 = vpop.permute.xlu0 %1088
        %1092 = vset.pattern.permute.xlu0 0
        %1093 = vperm.xlu0 %1092, %v822
        %v1094 = vpop.permute.xlu0 %1093
        %1097 = vset.pattern.permute.xlu0 0
        %1098 = vperm.xlu0 %1097, %v823
        %v1099 = vpop.permute.xlu0 %1098
        %1102 = vset.pattern.permute.xlu0 0
        %1103 = vperm.xlu0 %1102, %v824
        %v1104 = vpop.permute.xlu0 %1103
        %1107 = vset.pattern.permute.xlu0 0
        %1108 = vperm.xlu0 %1107, %v825
        %v1109 = vpop.permute.xlu0 %1108
        %v1111 = vmul.f32 %v999, %v1034
        %v1112 = vmul.f32 %v1000, %v1034
        %v1113 = vmul.f32 %v1001, %v1039
        %v1114 = vmul.f32 %v1002, %v1039
        %v1115 = vmul.f32 %v1003, %v1044
        %v1116 = vmul.f32 %v1004, %v1044
        %v1117 = vmul.f32 %v1005, %v1049
        %v1118 = vmul.f32 %v1006, %v1049
        %v1119 = vmul.f32 %v1007, %v1054
        %v1120 = vmul.f32 %v1008, %v1054
        %v1121 = vmul.f32 %v1009, %v1059
        %v1122 = vmul.f32 %v1010, %v1059
        %v1123 = vmul.f32 %v1011, %v1064
        %v1124 = vmul.f32 %v1012, %v1064
        %v1125 = vmul.f32 %v1013, %v1069
        %v1126 = vmul.f32 %v1014, %v1069
        %v1127 = vmul.f32 %v1015, %v1074
        %v1128 = vmul.f32 %v1016, %v1074
        %v1129 = vmul.f32 %v1017, %v1079
        %v1130 = vmul.f32 %v1018, %v1079
        %v1131 = vmul.f32 %v1019, %v1084
        %v1132 = vmul.f32 %v1020, %v1084
        %v1133 = vmul.f32 %v1021, %v1089
        %v1134 = vmul.f32 %v1022, %v1089
        %v1135 = vmul.f32 %v1023, %v1094
        %v1136 = vmul.f32 %v1024, %v1094
        %v1137 = vmul.f32 %v1025, %v1099
        %v1138 = vmul.f32 %v1026, %v1099
        %v1139 = vmul.f32 %v1027, %v1104
        %v1140 = vmul.f32 %v1028, %v1104
        %v1141 = vmul.f32 %v1029, %v1109
        %v1142 = vmul.f32 %v1030, %v1109
        %1144 = vset.pattern.permute.xlu0 0
        %1145 = vperm.xlu0 %1144, %v826
        %v1146 = vpop.permute.xlu0 %1145
        %1149 = vset.pattern.permute.xlu0 0
        %1150 = vperm.xlu0 %1149, %v827
        %v1151 = vpop.permute.xlu0 %1150
        %1154 = vset.pattern.permute.xlu0 0
        %1155 = vperm.xlu0 %1154, %v828
        %v1156 = vpop.permute.xlu0 %1155
        %1159 = vset.pattern.permute.xlu0 0
        %1160 = vperm.xlu0 %1159, %v829
        %v1161 = vpop.permute.xlu0 %1160
        %1164 = vset.pattern.permute.xlu0 0
        %1165 = vperm.xlu0 %1164, %v830
        %v1166 = vpop.permute.xlu0 %1165
        %1169 = vset.pattern.permute.xlu0 0
        %1170 = vperm.xlu0 %1169, %v831
        %v1171 = vpop.permute.xlu0 %1170
        %1174 = vset.pattern.permute.xlu0 0
        %1175 = vperm.xlu0 %1174, %v832
        %v1176 = vpop.permute.xlu0 %1175
        %1179 = vset.pattern.permute.xlu0 0
        %1180 = vperm.xlu0 %1179, %v833
        %v1181 = vpop.permute.xlu0 %1180
        %1184 = vset.pattern.permute.xlu0 0
        %1185 = vperm.xlu0 %1184, %v834
        %v1186 = vpop.permute.xlu0 %1185
        %1189 = vset.pattern.permute.xlu0 0
        %1190 = vperm.xlu0 %1189, %v835
        %v1191 = vpop.permute.xlu0 %1190
        %1194 = vset.pattern.permute.xlu0 0
        %1195 = vperm.xlu0 %1194, %v836
        %v1196 = vpop.permute.xlu0 %1195
        %1199 = vset.pattern.permute.xlu0 0
        %1200 = vperm.xlu0 %1199, %v837
        %v1201 = vpop.permute.xlu0 %1200
        %1204 = vset.pattern.permute.xlu0 0
        %1205 = vperm.xlu0 %1204, %v838
        %v1206 = vpop.permute.xlu0 %1205
        %1209 = vset.pattern.permute.xlu0 0
        %1210 = vperm.xlu0 %1209, %v839
        %v1211 = vpop.permute.xlu0 %1210
        %1214 = vset.pattern.permute.xlu0 0
        %1215 = vperm.xlu0 %1214, %v840
        %v1216 = vpop.permute.xlu0 %1215
        %1219 = vset.pattern.permute.xlu0 0
        %1220 = vperm.xlu0 %1219, %v841
        %v1221 = vpop.permute.xlu0 %1220
        %v1223 = vadd.f32 %v1111, %v1146
        %v1224 = vadd.f32 %v1112, %v1146
        %v1225 = vadd.f32 %v1113, %v1151
        %v1226 = vadd.f32 %v1114, %v1151
        %v1227 = vadd.f32 %v1115, %v1156
        %v1228 = vadd.f32 %v1116, %v1156
        %v1229 = vadd.f32 %v1117, %v1161
        %v1230 = vadd.f32 %v1118, %v1161
        %v1231 = vadd.f32 %v1119, %v1166
        %v1232 = vadd.f32 %v1120, %v1166
        %v1233 = vadd.f32 %v1121, %v1171
        %v1234 = vadd.f32 %v1122, %v1171
        %v1235 = vadd.f32 %v1123, %v1176
        %v1236 = vadd.f32 %v1124, %v1176
        %v1237 = vadd.f32 %v1125, %v1181
        %v1238 = vadd.f32 %v1126, %v1181
        %v1239 = vadd.f32 %v1127, %v1186
        %v1240 = vadd.f32 %v1128, %v1186
        %v1241 = vadd.f32 %v1129, %v1191
        %v1242 = vadd.f32 %v1130, %v1191
        %v1243 = vadd.f32 %v1131, %v1196
        %v1244 = vadd.f32 %v1132, %v1196
        %v1245 = vadd.f32 %v1133, %v1201
        %v1246 = vadd.f32 %v1134, %v1201
        %v1247 = vadd.f32 %v1135, %v1206
        %v1248 = vadd.f32 %v1136, %v1206
        %v1249 = vadd.f32 %v1137, %v1211
        %v1250 = vadd.f32 %v1138, %v1211
        %v1251 = vadd.f32 %v1139, %v1216
        %v1252 = vadd.f32 %v1140, %v1216
        %v1253 = vadd.f32 %v1141, %v1221
        %v1254 = vadd.f32 %v1142, %v1221
        %v1255 = vld [vmem:[%s11] sm:$0xf]
        %v1256 = vld [vmem:[%s11 + $0x4] sm:$0xf]
        %v1257 = vld [vmem:[%s11 + $0x8] sm:$0xf]
        %v1258 = vld [vmem:[%s11 + $0xc] sm:$0xf]
        %v1259 = vld [vmem:[%s11 + $0x10] sm:$0xf]
        %v1260 = vld [vmem:[%s11 + $0x14] sm:$0xf]
        %v1261 = vld [vmem:[%s11 + $0x18] sm:$0xf]
        %v1262 = vld [vmem:[%s11 + $0x1c] sm:$0xf]
        %v1263 = vld [vmem:[%s11 + $0x20] sm:$0xf]
        %v1264 = vld [vmem:[%s11 + $0x24] sm:$0xf]
        %v1265 = vld [vmem:[%s11 + $0x28] sm:$0xf]
        %v1266 = vld [vmem:[%s11 + $0x2c] sm:$0xf]
        %v1267 = vld [vmem:[%s11 + $0x30] sm:$0xf]
        %v1268 = vld [vmem:[%s11 + $0x34] sm:$0xf]
        %v1269 = vld [vmem:[%s11 + $0x38] sm:$0xf]
        %v1270 = vld [vmem:[%s11 + $0x3c] sm:$0xf]
        %v1271 = vpack.c.bf16 %v1225, %v1223
        %v1272 = vpack.c.bf16 %v1226, %v1224
        %v1273 = vpack.c.bf16 %v1229, %v1227
        %v1274 = vpack.c.bf16 %v1230, %v1228
        %v1275 = vpack.c.bf16 %v1233, %v1231
        %v1276 = vpack.c.bf16 %v1234, %v1232
        %v1277 = vpack.c.bf16 %v1237, %v1235
        %v1278 = vpack.c.bf16 %v1238, %v1236
        %v1279 = vpack.c.bf16 %v1241, %v1239
        %v1280 = vpack.c.bf16 %v1242, %v1240
        %v1281 = vpack.c.bf16 %v1245, %v1243
        %v1282 = vpack.c.bf16 %v1246, %v1244
        %v1283 = vpack.c.bf16 %v1249, %v1247
        %v1284 = vpack.c.bf16 %v1250, %v1248
        %v1285 = vpack.c.bf16 %v1253, %v1251
        %v1286 = vpack.c.bf16 %v1254, %v1252
        %v1287 = vld [vmem:[%s12] sm:$0xff]
        %v1288 = vld [vmem:[%s12 + $0x8] sm:$0xff]
        %v1289 = vld [vmem:[%s12 + $0x10] sm:$0xff]
        %v1290 = vld [vmem:[%s12 + $0x18] sm:$0xff]
        %v1291 = vld [vmem:[%s12 + $0x20] sm:$0xff]
        %v1292 = vld [vmem:[%s12 + $0x28] sm:$0xff]
        %v1293 = vld [vmem:[%s12 + $0x30] sm:$0xff]
        %v1294 = vld [vmem:[%s12 + $0x38] sm:$0xff]
        %v1295 = vld [vmem:[%s12 + $0x40] sm:$0xff]
        %v1296 = vld [vmem:[%s12 + $0x48] sm:$0xff]
        %v1297 = vld [vmem:[%s12 + $0x50] sm:$0xff]
        %v1298 = vld [vmem:[%s12 + $0x58] sm:$0xff]
        %v1299 = vld [vmem:[%s12 + $0x60] sm:$0xff]
        %v1300 = vld [vmem:[%s12 + $0x68] sm:$0xff]
        %v1301 = vld [vmem:[%s12 + $0x70] sm:$0xff]
        %v1302 = vld [vmem:[%s12 + $0x78] sm:$0xff]
        %1304 = vset.pattern.permute.xlu0 0
        %1305 = vperm.xlu0 %1304, %v1287
        %v1306 = vpop.permute.xlu0 %1305
        %1309 = vset.pattern.permute.xlu0 0
        %1310 = vperm.xlu0 %1309, %v1288
        %v1311 = vpop.permute.xlu0 %1310
        %1314 = vset.pattern.permute.xlu0 0
        %1315 = vperm.xlu0 %1314, %v1289
        %v1316 = vpop.permute.xlu0 %1315
        %1319 = vset.pattern.permute.xlu0 0
        %1320 = vperm.xlu0 %1319, %v1290
        %v1321 = vpop.permute.xlu0 %1320
        %1324 = vset.pattern.permute.xlu0 0
        %1325 = vperm.xlu0 %1324, %v1291
        %v1326 = vpop.permute.xlu0 %1325
        %1329 = vset.pattern.permute.xlu0 0
        %1330 = vperm.xlu0 %1329, %v1292
        %v1331 = vpop.permute.xlu0 %1330
        %1334 = vset.pattern.permute.xlu0 0
        %1335 = vperm.xlu0 %1334, %v1293
        %v1336 = vpop.permute.xlu0 %1335
        %1339 = vset.pattern.permute.xlu0 0
        %1340 = vperm.xlu0 %1339, %v1294
        %v1341 = vpop.permute.xlu0 %1340
        %1344 = vset.pattern.permute.xlu0 0
        %1345 = vperm.xlu0 %1344, %v1295
        %v1346 = vpop.permute.xlu0 %1345
        %1349 = vset.pattern.permute.xlu0 0
        %1350 = vperm.xlu0 %1349, %v1296
        %v1351 = vpop.permute.xlu0 %1350
        %1354 = vset.pattern.permute.xlu0 0
        %1355 = vperm.xlu0 %1354, %v1297
        %v1356 = vpop.permute.xlu0 %1355
        %1359 = vset.pattern.permute.xlu0 0
        %1360 = vperm.xlu0 %1359, %v1298
        %v1361 = vpop.permute.xlu0 %1360
        %1364 = vset.pattern.permute.xlu0 0
        %1365 = vperm.xlu0 %1364, %v1299
        %v1366 = vpop.permute.xlu0 %1365
        %1369 = vset.pattern.permute.xlu0 0
        %1370 = vperm.xlu0 %1369, %v1300
        %v1371 = vpop.permute.xlu0 %1370
        %1374 = vset.pattern.permute.xlu0 0
        %1375 = vperm.xlu0 %1374, %v1301
        %v1376 = vpop.permute.xlu0 %1375
        %1379 = vset.pattern.permute.xlu0 0
        %1380 = vperm.xlu0 %1379, %v1302
        %v1381 = vpop.permute.xlu0 %1380
        %v1399 = vunpack.c.l.b16 %v1255
        %v1400 = vunpack.c.l.b16 %v1256
        %v1401 = vunpack.c.l.b16 %v1257
        %v1402 = vunpack.c.l.b16 %v1258
        %v1403 = vunpack.c.l.b16 %v1259
        %v1404 = vunpack.c.l.b16 %v1260
        %v1405 = vunpack.c.l.b16 %v1261
        %v1406 = vunpack.c.l.b16 %v1262
        %v1407 = vunpack.c.l.b16 %v1263
        %v1408 = vunpack.c.l.b16 %v1264
        %v1409 = vunpack.c.l.b16 %v1265
        %v1410 = vunpack.c.l.b16 %v1266
        %v1411 = vunpack.c.l.b16 %v1267
        %v1412 = vunpack.c.l.b16 %v1268
        %v1413 = vunpack.c.l.b16 %v1269
        %v1414 = vunpack.c.l.b16 %v1270
        %v1415 = vpack.c.b16 %v1400, %v1399
        %v1416 = vpack.c.b16 %v1402, %v1401
        %v1417 = vpack.c.b16 %v1404, %v1403
        %v1418 = vpack.c.b16 %v1406, %v1405
        %v1419 = vpack.c.b16 %v1408, %v1407
        %v1420 = vpack.c.b16 %v1410, %v1409
        %v1421 = vpack.c.b16 %v1412, %v1411
        %v1422 = vpack.c.b16 %v1414, %v1413
        %1431 = vmatprep.subr.bf16.mxu0 %v1272
        %1432 = vmatpush1.bf16.msra.mxu0 %v1271
        %1433 = vmatprep.subr.bf16.mxu0 %v1274
        %1434 = vmatpush1.bf16.msra.mxu0 %v1273
        %1435 = vmatprep.subr.bf16.mxu0 %v1276
        %1436 = vmatpush1.bf16.msra.mxu0 %v1275
        %1437 = vmatprep.subr.bf16.mxu0 %v1278
        %1438 = vmatpush1.bf16.msra.mxu0 %v1277
        %1439 = vmatprep.subr.bf16.mxu0 %v1280
        %1440 = vmatpush1.bf16.msra.mxu0 %v1279
        %1441 = vmatprep.subr.bf16.mxu0 %v1282
        %1442 = vmatpush1.bf16.msra.mxu0 %v1281
        %1443 = vmatprep.subr.bf16.mxu0 %v1284
        %1444 = vmatpush1.bf16.msra.mxu0 %v1283
        %1445 = vmatprep.subr.bf16.mxu0 %v1286
        %1446 = vmatpush1.bf16.msra.mxu0 %v1285
        %1447 = vmatprep.subr.bf16.mxu0 0
        %1448 = vmatpush1.bf16.msra.mxu0 0
        %1449 = vmatprep.subr.bf16.mxu0 0
        %1450 = vmatpush1.bf16.msra.mxu0 0
        %1451 = vmatprep.subr.bf16.mxu0 0
        %1452 = vmatpush1.bf16.msra.mxu0 0
        %1453 = vmatprep.subr.bf16.mxu0 0
        %1454 = vmatpush1.bf16.msra.mxu0 0
        %1455 = vmatprep.subr.bf16.mxu0 0
        %1456 = vmatpush1.bf16.msra.mxu0 0
        %1457 = vmatprep.subr.bf16.mxu0 0
        %1458 = vmatpush1.bf16.msra.mxu0 0
        %1459 = vmatprep.subr.bf16.mxu0 0
        %1460 = vmatpush1.bf16.msra.mxu0 0
        %1461 = vmatprep.subr.bf16.mxu0 0
        %1462 = vmatpush1.bf16.msra.mxu0 0
        %1463 = vmatprep.mubr.bf16.mxu0 0
        %1464 = vmatmul.mubr.bf16.gmra.mrb[0].mxu0 %v1415
        %v1465 = vpop.f32.mrb[0].mxu0
        %v1466 = vadd.f32 %v1306, %v1465
        %v1467 = vpop.f32.mrb[0].mxu0
        %v1468 = vadd.f32 %v1306, %v1467
        %v1469 = vpop.f32.mrb[0].mxu0
        %v1470 = vadd.f32 %v1311, %v1469
        %v1471 = vpop.f32.mrb[0].mxu0
        %v1472 = vadd.f32 %v1311, %v1471
        %1473 = vmatprep.mubr.bf16.mxu0 0
        %1474 = vmatmul.mubr.bf16.gmra.mrb[0].mxu0 %v1416
        %v1475 = vpop.f32.mrb[0].mxu0
        %v1476 = vadd.f32 %v1316, %v1475
        %v1477 = vpop.f32.mrb[0].mxu0
        %v1478 = vadd.f32 %v1316, %v1477
        %v1479 = vpop.f32.mrb[0].mxu0
        %v1480 = vadd.f32 %v1321, %v1479
        %v1481 = vpop.f32.mrb[0].mxu0
        %v1482 = vadd.f32 %v1321, %v1481
        %1483 = vmatprep.mubr.bf16.mxu0 0
        %1484 = vmatmul.mubr.bf16.gmra.mrb[0].mxu0 %v1417
        %v1485 = vpop.f32.mrb[0].mxu0
        %v1486 = vadd.f32 %v1326, %v1485
        %v1487 = vpop.f32.mrb[0].mxu0
        %v1488 = vadd.f32 %v1326, %v1487
        %v1489 = vpop.f32.mrb[0].mxu0
        %v1490 = vadd.f32 %v1331, %v1489
        %v1491 = vpop.f32.mrb[0].mxu0
        %v1492 = vadd.f32 %v1331, %v1491
        %1493 = vmatprep.mubr.bf16.mxu0 0
        %1494 = vmatmul.mubr.bf16.gmra.mrb[0].mxu0 %v1418
        %v1495 = vpop.f32.mrb[0].mxu0
        %v1496 = vadd.f32 %v1336, %v1495
        %v1497 = vpop.f32.mrb[0].mxu0
        %v1498 = vadd.f32 %v1336, %v1497
        %v1499 = vpop.f32.mrb[0].mxu0
        %v1500 = vadd.f32 %v1341, %v1499
        %v1501 = vpop.f32.mrb[0].mxu0
        %v1502 = vadd.f32 %v1341, %v1501
        %1503 = vmatprep.mubr.bf16.mxu0 0
        %1504 = vmatmul.mubr.bf16.gmra.mrb[0].mxu0 %v1419
        %v1505 = vpop.f32.mrb[0].mxu0
        %v1506 = vadd.f32 %v1346, %v1505
        %v1507 = vpop.f32.mrb[0].mxu0
        %v1508 = vadd.f32 %v1346, %v1507
        %v1509 = vpop.f32.mrb[0].mxu0
        %v1510 = vadd.f32 %v1351, %v1509
        %v1511 = vpop.f32.mrb[0].mxu0
        %v1512 = vadd.f32 %v1351, %v1511
        %1513 = vmatprep.mubr.bf16.mxu0 0
        %1514 = vmatmul.mubr.bf16.gmra.mrb[0].mxu0 %v1420
        %v1515 = vpop.f32.mrb[0].mxu0
        %v1516 = vadd.f32 %v1356, %v1515
        %v1517 = vpop.f32.mrb[0].mxu0
        %v1518 = vadd.f32 %v1356, %v1517
        %v1519 = vpop.f32.mrb[0].mxu0
        %v1520 = vadd.f32 %v1361, %v1519
        %v1521 = vpop.f32.mrb[0].mxu0
        %v1522 = vadd.f32 %v1361, %v1521
        %1523 = vmatprep.mubr.bf16.mxu0 0
        %1524 = vmatmul.mubr.bf16.gmra.mrb[0].mxu0 %v1421
        %v1525 = vpop.f32.mrb[0].mxu0
        %v1526 = vadd.f32 %v1366, %v1525
        %v1527 = vpop.f32.mrb[0].mxu0
        %v1528 = vadd.f32 %v1366, %v1527
        %v1529 = vpop.f32.mrb[0].mxu0
        %v1530 = vadd.f32 %v1371, %v1529
        %v1531 = vpop.f32.mrb[0].mxu0
        %v1532 = vadd.f32 %v1371, %v1531
        %1533 = vmatprep.mubr.bf16.mxu0 0
        %1534 = vmatmul.mubr.bf16.gmra.mrb[0].mxu0 %v1422
        %v1535 = vpop.f32.mrb[0].mxu0
        %v1536 = vadd.f32 %v1376, %v1535
        %v1537 = vpop.f32.mrb[0].mxu0
        %v1538 = vadd.f32 %v1376, %v1537
        %v1539 = vpop.f32.mrb[0].mxu0
        %v1540 = vadd.f32 %v1381, %v1539
        %v1541 = vpop.f32.mrb[0].mxu0
        %v1542 = vadd.f32 %v1381, %v1541
        %1543 = vdwg.mxu0
        %1544 = vxpose.xlu0.b32.start [1/16] %v1466, 128
        %1545 = vxpose.xlu0.b32.cont [2/16] %v1470, 128
        %1546 = vxpose.xlu0.b32.cont [3/16] %v1476, 128
        %1547 = vxpose.xlu0.b32.cont [4/16] %v1480, 128
        %1548 = vxpose.xlu0.b32.cont [5/16] 0.0, 128
        %1549 = vxpose.xlu0.b32.cont [6/16] 0.0, 128
        %1550 = vxpose.xlu0.b32.cont [7/16] 0.0, 128
        %1551 = vxpose.xlu0.b32.cont [8/16] 0.0, 128
        %1552 = vxpose.xlu0.b32.cont [9/16] 0.0, 128
        %1553 = vxpose.xlu0.b32.cont [10/16] 0.0, 128
        %1554 = vxpose.xlu0.b32.cont [11/16] 0.0, 128
        %1555 = vxpose.xlu0.b32.cont [12/16] 0.0, 128
        %1556 = vxpose.xlu0.b32.cont [13/16] 0.0, 128
        %1557 = vxpose.xlu0.b32.cont [14/16] 0.0, 128
        %1558 = vxpose.xlu0.b32.cont [15/16] 0.0, 128
        %1559 = vxpose.xlu0.b32.end [16/16] 0.0, 128
        %v1560 = vpop.trf.xlu0
        %v1561 = vpop.trf.xlu0
        %v1562 = vpop.trf.xlu0
        %v1563 = vpop.trf.xlu0
        %v1564 = vpop.trf.xlu0
        %v1565 = vpop.trf.xlu0
        %v1566 = vpop.trf.xlu0
        %v1567 = vpop.trf.xlu0
        %v1568 = vpop.trf.xlu0
        %v1569 = vpop.trf.xlu0
        %v1570 = vpop.trf.xlu0
        %v1571 = vpop.trf.xlu0
        %v1572 = vpop.trf.xlu0
        %v1573 = vpop.trf.xlu0
        %v1574 = vpop.trf.xlu0
        %v1575 = vpop.trf.xlu0
        %1576 = vxpose.xlu0.b32.start [1/16] %v1468, 128
        %1577 = vxpose.xlu0.b32.cont [2/16] %v1472, 128
        %1578 = vxpose.xlu0.b32.cont [3/16] %v1478, 128
        %1579 = vxpose.xlu0.b32.cont [4/16] %v1482, 128
        %1580 = vxpose.xlu0.b32.cont [5/16] 0.0, 128
        %1581 = vxpose.xlu0.b32.cont [6/16] 0.0, 128
        %1582 = vxpose.xlu0.b32.cont [7/16] 0.0, 128
        %1583 = vxpose.xlu0.b32.cont [8/16] 0.0, 128
        %1584 = vxpose.xlu0.b32.cont [9/16] 0.0, 128
        %1585 = vxpose.xlu0.b32.cont [10/16] 0.0, 128
        %1586 = vxpose.xlu0.b32.cont [11/16] 0.0, 128
        %1587 = vxpose.xlu0.b32.cont [12/16] 0.0, 128
        %1588 = vxpose.xlu0.b32.cont [13/16] 0.0, 128
        %1589 = vxpose.xlu0.b32.cont [14/16] 0.0, 128
        %1590 = vxpose.xlu0.b32.cont [15/16] 0.0, 128
        %1591 = vxpose.xlu0.b32.end [16/16] 0.0, 128
        %v1592 = vpop.trf.xlu0
        %v1593 = vpop.trf.xlu0
        %v1594 = vpop.trf.xlu0
        %v1595 = vpop.trf.xlu0
        %v1596 = vpop.trf.xlu0
        %v1597 = vpop.trf.xlu0
        %v1598 = vpop.trf.xlu0
        %v1599 = vpop.trf.xlu0
        %v1600 = vpop.trf.xlu0
        %v1601 = vpop.trf.xlu0
        %v1602 = vpop.trf.xlu0
        %v1603 = vpop.trf.xlu0
        %v1604 = vpop.trf.xlu0
        %v1605 = vpop.trf.xlu0
        %v1606 = vpop.trf.xlu0
        %v1607 = vpop.trf.xlu0
        %1608 = vxpose.xlu0.b32.start [1/16] %v1486, 128
        %1609 = vxpose.xlu0.b32.cont [2/16] %v1490, 128
        %1610 = vxpose.xlu0.b32.cont [3/16] %v1496, 128
        %1611 = vxpose.xlu0.b32.cont [4/16] %v1500, 128
        %1612 = vxpose.xlu0.b32.cont [5/16] 0.0, 128
        %1613 = vxpose.xlu0.b32.cont [6/16] 0.0, 128
        %1614 = vxpose.xlu0.b32.cont [7/16] 0.0, 128
        %1615 = vxpose.xlu0.b32.cont [8/16] 0.0, 128
        %1616 = vxpose.xlu0.b32.cont [9/16] 0.0, 128
        %1617 = vxpose.xlu0.b32.cont [10/16] 0.0, 128
        %1618 = vxpose.xlu0.b32.cont [11/16] 0.0, 128
        %1619 = vxpose.xlu0.b32.cont [12/16] 0.0, 128
        %1620 = vxpose.xlu0.b32.cont [13/16] 0.0, 128
        %1621 = vxpose.xlu0.b32.cont [14/16] 0.0, 128
        %1622 = vxpose.xlu0.b32.cont [15/16] 0.0, 128
        %1623 = vxpose.xlu0.b32.end [16/16] 0.0, 128
        %v1624 = vpop.trf.xlu0
        %v1625 = vpop.trf.xlu0
        %v1626 = vpop.trf.xlu0
        %v1627 = vpop.trf.xlu0
        %v1628 = vpop.trf.xlu0
        %v1629 = vpop.trf.xlu0
        %v1630 = vpop.trf.xlu0
        %v1631 = vpop.trf.xlu0
        %v1632 = vpop.trf.xlu0
        %v1633 = vpop.trf.xlu0
        %v1634 = vpop.trf.xlu0
        %v1635 = vpop.trf.xlu0
        %v1636 = vpop.trf.xlu0
        %v1637 = vpop.trf.xlu0
        %v1638 = vpop.trf.xlu0
        %v1639 = vpop.trf.xlu0
        %1640 = vxpose.xlu0.b32.start [1/16] %v1488, 128
        %1641 = vxpose.xlu0.b32.cont [2/16] %v1492, 128
        %1642 = vxpose.xlu0.b32.cont [3/16] %v1498, 128
        %1643 = vxpose.xlu0.b32.cont [4/16] %v1502, 128
        %1644 = vxpose.xlu0.b32.cont [5/16] 0.0, 128
        %1645 = vxpose.xlu0.b32.cont [6/16] 0.0, 128
        %1646 = vxpose.xlu0.b32.cont [7/16] 0.0, 128
        %1647 = vxpose.xlu0.b32.cont [8/16] 0.0, 128
        %1648 = vxpose.xlu0.b32.cont [9/16] 0.0, 128
        %1649 = vxpose.xlu0.b32.cont [10/16] 0.0, 128
        %1650 = vxpose.xlu0.b32.cont [11/16] 0.0, 128
        %1651 = vxpose.xlu0.b32.cont [12/16] 0.0, 128
        %1652 = vxpose.xlu0.b32.cont [13/16] 0.0, 128
        %1653 = vxpose.xlu0.b32.cont [14/16] 0.0, 128
        %1654 = vxpose.xlu0.b32.cont [15/16] 0.0, 128
        %1655 = vxpose.xlu0.b32.end [16/16] 0.0, 128
        %v1656 = vpop.trf.xlu0
        %v1657 = vpop.trf.xlu0
        %v1658 = vpop.trf.xlu0
        %v1659 = vpop.trf.xlu0
        %v1660 = vpop.trf.xlu0
        %v1661 = vpop.trf.xlu0
        %v1662 = vpop.trf.xlu0
        %v1663 = vpop.trf.xlu0
        %v1664 = vpop.trf.xlu0
        %v1665 = vpop.trf.xlu0
        %v1666 = vpop.trf.xlu0
        %v1667 = vpop.trf.xlu0
        %v1668 = vpop.trf.xlu0
        %v1669 = vpop.trf.xlu0
        %v1670 = vpop.trf.xlu0
        %v1671 = vpop.trf.xlu0
        %1672 = vxpose.xlu0.b32.start [1/16] %v1506, 128
        %1673 = vxpose.xlu0.b32.cont [2/16] %v1510, 128
        %1674 = vxpose.xlu0.b32.cont [3/16] %v1516, 128
        %1675 = vxpose.xlu0.b32.cont [4/16] %v1520, 128
        %1676 = vxpose.xlu0.b32.cont [5/16] 0.0, 128
        %1677 = vxpose.xlu0.b32.cont [6/16] 0.0, 128
        %1678 = vxpose.xlu0.b32.cont [7/16] 0.0, 128
        %1679 = vxpose.xlu0.b32.cont [8/16] 0.0, 128
        %1680 = vxpose.xlu0.b32.cont [9/16] 0.0, 128
        %1681 = vxpose.xlu0.b32.cont [10/16] 0.0, 128
        %1682 = vxpose.xlu0.b32.cont [11/16] 0.0, 128
        %1683 = vxpose.xlu0.b32.cont [12/16] 0.0, 128
        %1684 = vxpose.xlu0.b32.cont [13/16] 0.0, 128
        %1685 = vxpose.xlu0.b32.cont [14/16] 0.0, 128
        %1686 = vxpose.xlu0.b32.cont [15/16] 0.0, 128
        %1687 = vxpose.xlu0.b32.end [16/16] 0.0, 128
        %v1688 = vpop.trf.xlu0
        %v1689 = vpop.trf.xlu0
        %v1690 = vpop.trf.xlu0
        %v1691 = vpop.trf.xlu0
        %v1692 = vpop.trf.xlu0
        %v1693 = vpop.trf.xlu0
        %v1694 = vpop.trf.xlu0
        %v1695 = vpop.trf.xlu0
        %v1696 = vpop.trf.xlu0
        %v1697 = vpop.trf.xlu0
        %v1698 = vpop.trf.xlu0
        %v1699 = vpop.trf.xlu0
        %v1700 = vpop.trf.xlu0
        %v1701 = vpop.trf.xlu0
        %v1702 = vpop.trf.xlu0
        %v1703 = vpop.trf.xlu0
        %1704 = vxpose.xlu0.b32.start [1/16] %v1508, 128
        %1705 = vxpose.xlu0.b32.cont [2/16] %v1512, 128
        %1706 = vxpose.xlu0.b32.cont [3/16] %v1518, 128
        %1707 = vxpose.xlu0.b32.cont [4/16] %v1522, 128
        %1708 = vxpose.xlu0.b32.cont [5/16] 0.0, 128
        %1709 = vxpose.xlu0.b32.cont [6/16] 0.0, 128
        %1710 = vxpose.xlu0.b32.cont [7/16] 0.0, 128
        %1711 = vxpose.xlu0.b32.cont [8/16] 0.0, 128
        %1712 = vxpose.xlu0.b32.cont [9/16] 0.0, 128
        %1713 = vxpose.xlu0.b32.cont [10/16] 0.0, 128
        %1714 = vxpose.xlu0.b32.cont [11/16] 0.0, 128
        %1715 = vxpose.xlu0.b32.cont [12/16] 0.0, 128
        %1716 = vxpose.xlu0.b32.cont [13/16] 0.0, 128
        %1717 = vxpose.xlu0.b32.cont [14/16] 0.0, 128
        %1718 = vxpose.xlu0.b32.cont [15/16] 0.0, 128
        %1719 = vxpose.xlu0.b32.end [16/16] 0.0, 128
        %v1720 = vpop.trf.xlu0
        %v1721 = vpop.trf.xlu0
        %v1722 = vpop.trf.xlu0
        %v1723 = vpop.trf.xlu0
        %v1724 = vpop.trf.xlu0
        %v1725 = vpop.trf.xlu0
        %v1726 = vpop.trf.xlu0
        %v1727 = vpop.trf.xlu0
        %v1728 = vpop.trf.xlu0
        %v1729 = vpop.trf.xlu0
        %v1730 = vpop.trf.xlu0
        %v1731 = vpop.trf.xlu0
        %v1732 = vpop.trf.xlu0
        %v1733 = vpop.trf.xlu0
        %v1734 = vpop.trf.xlu0
        %v1735 = vpop.trf.xlu0
        %1736 = vxpose.xlu0.b32.start [1/16] %v1526, 128
        %1737 = vxpose.xlu0.b32.cont [2/16] %v1530, 128
        %1738 = vxpose.xlu0.b32.cont [3/16] %v1536, 128
        %1739 = vxpose.xlu0.b32.cont [4/16] %v1540, 128
        %1740 = vxpose.xlu0.b32.cont [5/16] 0.0, 128
        %1741 = vxpose.xlu0.b32.cont [6/16] 0.0, 128
        %1742 = vxpose.xlu0.b32.cont [7/16] 0.0, 128
        %1743 = vxpose.xlu0.b32.cont [8/16] 0.0, 128
        %1744 = vxpose.xlu0.b32.cont [9/16] 0.0, 128
        %1745 = vxpose.xlu0.b32.cont [10/16] 0.0, 128
        %1746 = vxpose.xlu0.b32.cont [11/16] 0.0, 128
        %1747 = vxpose.xlu0.b32.cont [12/16] 0.0, 128
        %1748 = vxpose.xlu0.b32.cont [13/16] 0.0, 128
        %1749 = vxpose.xlu0.b32.cont [14/16] 0.0, 128
        %1750 = vxpose.xlu0.b32.cont [15/16] 0.0, 128
        %1751 = vxpose.xlu0.b32.end [16/16] 0.0, 128
        %v1752 = vpop.trf.xlu0
        %v1753 = vpop.trf.xlu0
        %v1754 = vpop.trf.xlu0
        %v1755 = vpop.trf.xlu0
        %v1756 = vpop.trf.xlu0
        %v1757 = vpop.trf.xlu0
        %v1758 = vpop.trf.xlu0
        %v1759 = vpop.trf.xlu0
        %v1760 = vpop.trf.xlu0
        %v1761 = vpop.trf.xlu0
        %v1762 = vpop.trf.xlu0
        %v1763 = vpop.trf.xlu0
        %v1764 = vpop.trf.xlu0
        %v1765 = vpop.trf.xlu0
        %v1766 = vpop.trf.xlu0
        %v1767 = vpop.trf.xlu0
        %1768 = vxpose.xlu0.b32.start [1/16] %v1528, 128
        %1769 = vxpose.xlu0.b32.cont [2/16] %v1532, 128
        %1770 = vxpose.xlu0.b32.cont [3/16] %v1538, 128
        %1771 = vxpose.xlu0.b32.cont [4/16] %v1542, 128
        %1772 = vxpose.xlu0.b32.cont [5/16] 0.0, 128
        %1773 = vxpose.xlu0.b32.cont [6/16] 0.0, 128
        %1774 = vxpose.xlu0.b32.cont [7/16] 0.0, 128
        %1775 = vxpose.xlu0.b32.cont [8/16] 0.0, 128
        %1776 = vxpose.xlu0.b32.cont [9/16] 0.0, 128
        %1777 = vxpose.xlu0.b32.cont [10/16] 0.0, 128
        %1778 = vxpose.xlu0.b32.cont [11/16] 0.0, 128
        %1779 = vxpose.xlu0.b32.cont [12/16] 0.0, 128
        %1780 = vxpose.xlu0.b32.cont [13/16] 0.0, 128
        %1781 = vxpose.xlu0.b32.cont [14/16] 0.0, 128
        %1782 = vxpose.xlu0.b32.cont [15/16] 0.0, 128
        %1783 = vxpose.xlu0.b32.end [16/16] 0.0, 128
        %v1784 = vpop.trf.xlu0
        %v1785 = vpop.trf.xlu0
        %v1786 = vpop.trf.xlu0
        %v1787 = vpop.trf.xlu0
        %v1788 = vpop.trf.xlu0
        %v1789 = vpop.trf.xlu0
        %v1790 = vpop.trf.xlu0
        %v1791 = vpop.trf.xlu0
        %v1792 = vpop.trf.xlu0
        %v1793 = vpop.trf.xlu0
        %v1794 = vpop.trf.xlu0
        %v1795 = vpop.trf.xlu0
        %v1796 = vpop.trf.xlu0
        %v1797 = vpop.trf.xlu0
        %v1798 = vpop.trf.xlu0
        %v1799 = vpop.trf.xlu0
        %v1800 = vpack.c.bf16 %v1561, %v1560
        %v1801 = vpack.c.bf16 %v1563, %v1562
        %v1802 = vpack.c.bf16 %v1565, %v1564
        %v1803 = vpack.c.bf16 %v1567, %v1566
        %v1804 = vpack.c.bf16 %v1569, %v1568
        %v1805 = vpack.c.bf16 %v1571, %v1570
        %v1806 = vpack.c.bf16 %v1573, %v1572
        %v1807 = vpack.c.bf16 %v1575, %v1574
        %v1808 = vpack.c.bf16 %v1593, %v1592
        %v1809 = vpack.c.bf16 %v1595, %v1594
        %v1810 = vpack.c.bf16 %v1597, %v1596
        %v1811 = vpack.c.bf16 %v1599, %v1598
        %v1812 = vpack.c.bf16 %v1601, %v1600
        %v1813 = vpack.c.bf16 %v1603, %v1602
        %v1814 = vpack.c.bf16 %v1605, %v1604
        %v1815 = vpack.c.bf16 %v1607, %v1606
        %v1816 = vpack.c.bf16 %v1625, %v1624
        %v1817 = vpack.c.bf16 %v1627, %v1626
        %v1818 = vpack.c.bf16 %v1629, %v1628
        %v1819 = vpack.c.bf16 %v1631, %v1630
        %v1820 = vpack.c.bf16 %v1633, %v1632
        %v1821 = vpack.c.bf16 %v1635, %v1634
        %v1822 = vpack.c.bf16 %v1637, %v1636
        %v1823 = vpack.c.bf16 %v1639, %v1638
        %v1824 = vpack.c.bf16 %v1657, %v1656
        %v1825 = vpack.c.bf16 %v1659, %v1658
        %v1826 = vpack.c.bf16 %v1661, %v1660
        %v1827 = vpack.c.bf16 %v1663, %v1662
        %v1828 = vpack.c.bf16 %v1665, %v1664
        %v1829 = vpack.c.bf16 %v1667, %v1666
        %v1830 = vpack.c.bf16 %v1669, %v1668
        %v1831 = vpack.c.bf16 %v1671, %v1670
        %v1832 = vpack.c.bf16 %v1689, %v1688
        %v1833 = vpack.c.bf16 %v1691, %v1690
        %v1834 = vpack.c.bf16 %v1693, %v1692
        %v1835 = vpack.c.bf16 %v1695, %v1694
        %v1836 = vpack.c.bf16 %v1697, %v1696
        %v1837 = vpack.c.bf16 %v1699, %v1698
        %v1838 = vpack.c.bf16 %v1701, %v1700
        %v1839 = vpack.c.bf16 %v1703, %v1702
        %v1840 = vpack.c.bf16 %v1721, %v1720
        %v1841 = vpack.c.bf16 %v1723, %v1722
        %v1842 = vpack.c.bf16 %v1725, %v1724
        %v1843 = vpack.c.bf16 %v1727, %v1726
        %v1844 = vpack.c.bf16 %v1729, %v1728
        %v1845 = vpack.c.bf16 %v1731, %v1730
        %v1846 = vpack.c.bf16 %v1733, %v1732
        %v1847 = vpack.c.bf16 %v1735, %v1734
        %v1848 = vpack.c.bf16 %v1753, %v1752
        %v1849 = vpack.c.bf16 %v1755, %v1754
        %v1850 = vpack.c.bf16 %v1757, %v1756
        %v1851 = vpack.c.bf16 %v1759, %v1758
        %v1852 = vpack.c.bf16 %v1761, %v1760
        %v1853 = vpack.c.bf16 %v1763, %v1762
        %v1854 = vpack.c.bf16 %v1765, %v1764
        %v1855 = vpack.c.bf16 %v1767, %v1766
        %v1856 = vpack.c.bf16 %v1785, %v1784
        %v1857 = vpack.c.bf16 %v1787, %v1786
        %v1858 = vpack.c.bf16 %v1789, %v1788
        %v1859 = vpack.c.bf16 %v1791, %v1790
        %v1860 = vpack.c.bf16 %v1793, %v1792
        %v1861 = vpack.c.bf16 %v1795, %v1794
        %v1862 = vpack.c.bf16 %v1797, %v1796
        %v1863 = vpack.c.bf16 %v1799, %v1798
        %v1864 = vld [vmem:[%s670] sm:$0xf]
        %v1865 = vld [vmem:[%s670 + $0x4] sm:$0xf]
        %v1866 = vld [vmem:[%s670 + $0x8] sm:$0xf]
        %v1867 = vld [vmem:[%s670 + $0xc] sm:$0xf]
        %v1868 = vld [vmem:[%s670 + $0x10] sm:$0xf]
        %v1869 = vld [vmem:[%s670 + $0x14] sm:$0xf]
        %v1870 = vld [vmem:[%s670 + $0x18] sm:$0xf]
        %v1871 = vld [vmem:[%s670 + $0x1c] sm:$0xf]
        %v1872 = vld [vmem:[%s670 + $0x20] sm:$0xf]
        %v1873 = vld [vmem:[%s670 + $0x24] sm:$0xf]
        %v1874 = vld [vmem:[%s670 + $0x28] sm:$0xf]
        %v1875 = vld [vmem:[%s670 + $0x2c] sm:$0xf]
        %v1876 = vld [vmem:[%s670 + $0x30] sm:$0xf]
        %v1877 = vld [vmem:[%s670 + $0x34] sm:$0xf]
        %v1878 = vld [vmem:[%s670 + $0x38] sm:$0xf]
        %v1879 = vld [vmem:[%s670 + $0x3c] sm:$0xf]
        %v1880 = vunpack.c.l.bf16 %v1864
        %v1881 = vunpack.c.l.bf16 %v1865
        %v1882 = vunpack.c.l.bf16 %v1866
        %v1883 = vunpack.c.l.bf16 %v1867
        %v1884 = vunpack.c.l.bf16 %v1868
        %v1885 = vunpack.c.l.bf16 %v1869
        %v1886 = vunpack.c.l.bf16 %v1870
        %v1887 = vunpack.c.l.bf16 %v1871
        %v1888 = vunpack.c.l.bf16 %v1872
        %v1889 = vunpack.c.l.bf16 %v1873
        %v1890 = vunpack.c.l.bf16 %v1874
        %v1891 = vunpack.c.l.bf16 %v1875
        %v1892 = vunpack.c.l.bf16 %v1876
        %v1893 = vunpack.c.l.bf16 %v1877
        %v1894 = vunpack.c.l.bf16 %v1878
        %v1895 = vunpack.c.l.bf16 %v1879
        %v1896 = vld [vmem:[%s675] sm:$0xf]
        %v1897 = vld [vmem:[%s675 + $0x4] sm:$0xf]
        %v1898 = vld [vmem:[%s675 + $0x8] sm:$0xf]
        %v1899 = vld [vmem:[%s675 + $0xc] sm:$0xf]
        %v1900 = vld [vmem:[%s675 + $0x10] sm:$0xf]
        %v1901 = vld [vmem:[%s675 + $0x14] sm:$0xf]
        %v1902 = vld [vmem:[%s675 + $0x18] sm:$0xf]
        %v1903 = vld [vmem:[%s675 + $0x1c] sm:$0xf]
        %v1904 = vld [vmem:[%s675 + $0x20] sm:$0xf]
        %v1905 = vld [vmem:[%s675 + $0x24] sm:$0xf]
        %v1906 = vld [vmem:[%s675 + $0x28] sm:$0xf]
        %v1907 = vld [vmem:[%s675 + $0x2c] sm:$0xf]
        %v1908 = vld [vmem:[%s675 + $0x30] sm:$0xf]
        %v1909 = vld [vmem:[%s675 + $0x34] sm:$0xf]
        %v1910 = vld [vmem:[%s675 + $0x38] sm:$0xf]
        %v1911 = vld [vmem:[%s675 + $0x3c] sm:$0xf]
        %v1912 = vunpack.c.l.bf16 %v1896
        %v1913 = vunpack.c.l.bf16 %v1897
        %v1914 = vunpack.c.l.bf16 %v1898
        %v1915 = vunpack.c.l.bf16 %v1899
        %v1916 = vunpack.c.l.bf16 %v1900
        %v1917 = vunpack.c.l.bf16 %v1901
        %v1918 = vunpack.c.l.bf16 %v1902
        %v1919 = vunpack.c.l.bf16 %v1903
        %v1920 = vunpack.c.l.bf16 %v1904
        %v1921 = vunpack.c.l.bf16 %v1905
        %v1922 = vunpack.c.l.bf16 %v1906
        %v1923 = vunpack.c.l.bf16 %v1907
        %v1924 = vunpack.c.l.bf16 %v1908
        %v1925 = vunpack.c.l.bf16 %v1909
        %v1926 = vunpack.c.l.bf16 %v1910
        %v1927 = vunpack.c.l.bf16 %v1911
        %v1928 = vadd.f32 %v1880, %v1912
        %v1929 = vadd.f32 %v1881, %v1913
        %v1930 = vadd.f32 %v1882, %v1914
        %v1931 = vadd.f32 %v1883, %v1915
        %v1932 = vadd.f32 %v1884, %v1916
        %v1933 = vadd.f32 %v1885, %v1917
        %v1934 = vadd.f32 %v1886, %v1918
        %v1935 = vadd.f32 %v1887, %v1919
        %v1936 = vadd.f32 %v1888, %v1920
        %v1937 = vadd.f32 %v1889, %v1921
        %v1938 = vadd.f32 %v1890, %v1922
        %v1939 = vadd.f32 %v1891, %v1923
        %v1940 = vadd.f32 %v1892, %v1924
        %v1941 = vadd.f32 %v1893, %v1925
        %v1942 = vadd.f32 %v1894, %v1926
        %v1943 = vadd.f32 %v1895, %v1927
        %v1944 = vld [vmem:[%s7] sm:$0xff]
        %v1945 = vld [vmem:[%s7 + $0x8] sm:$0xff]
        %v1946 = vld [vmem:[%s7 + $0x10] sm:$0xff]
        %v1947 = vld [vmem:[%s7 + $0x18] sm:$0xff]
        %v1948 = vld [vmem:[%s7 + $0x20] sm:$0xff]
        %v1949 = vld [vmem:[%s7 + $0x28] sm:$0xff]
        %v1950 = vld [vmem:[%s7 + $0x30] sm:$0xff]
        %v1951 = vld [vmem:[%s7 + $0x38] sm:$0xff]
        %v1952 = vld [vmem:[%s7 + $0x40] sm:$0xff]
        %v1953 = vld [vmem:[%s7 + $0x48] sm:$0xff]
        %v1954 = vld [vmem:[%s7 + $0x50] sm:$0xff]
        %v1955 = vld [vmem:[%s7 + $0x58] sm:$0xff]
        %v1956 = vld [vmem:[%s7 + $0x60] sm:$0xff]
        %v1957 = vld [vmem:[%s7 + $0x68] sm:$0xff]
        %v1958 = vld [vmem:[%s7 + $0x70] sm:$0xff]
        %v1959 = vld [vmem:[%s7 + $0x78] sm:$0xff]
        %v1960 = vld [vmem:[%s8] sm:$0xff]
        %v1961 = vld [vmem:[%s8 + $0x8] sm:$0xff]
        %v1962 = vld [vmem:[%s8 + $0x10] sm:$0xff]
        %v1963 = vld [vmem:[%s8 + $0x18] sm:$0xff]
        %v1964 = vld [vmem:[%s8 + $0x20] sm:$0xff]
        %v1965 = vld [vmem:[%s8 + $0x28] sm:$0xff]
        %v1966 = vld [vmem:[%s8 + $0x30] sm:$0xff]
        %v1967 = vld [vmem:[%s8 + $0x38] sm:$0xff]
        %v1968 = vld [vmem:[%s8 + $0x40] sm:$0xff]
        %v1969 = vld [vmem:[%s8 + $0x48] sm:$0xff]
        %v1970 = vld [vmem:[%s8 + $0x50] sm:$0xff]
        %v1971 = vld [vmem:[%s8 + $0x58] sm:$0xff]
        %v1972 = vld [vmem:[%s8 + $0x60] sm:$0xff]
        %v1973 = vld [vmem:[%s8 + $0x68] sm:$0xff]
        %v1974 = vld [vmem:[%s8 + $0x70] sm:$0xff]
        %v1975 = vld [vmem:[%s8 + $0x78] sm:$0xff]
        %vm1976 = vcmask 523264
        %v1977 = vsel %vm1976, %v1928, 0.0
        %v1978 = vsel %vm1976, %v1929, 0.0
        %v1979 = vadd.f32 %v1977, %v1978
        %v1980 = vsel %vm1976, %v1930, 0.0
        %v1981 = vadd.f32 %v1979, %v1980
        %v1982 = vsel %vm1976, %v1931, 0.0
        %v1983 = vadd.f32 %v1981, %v1982
        %v1984 = vsel %vm1976, %v1932, 0.0
        %v1985 = vadd.f32 %v1983, %v1984
        %v1986 = vsel %vm1976, %v1933, 0.0
        %v1987 = vadd.f32 %v1985, %v1986
        %v1988 = vsel %vm1976, %v1934, 0.0
        %v1989 = vadd.f32 %v1987, %v1988
        %v1990 = vsel %vm1976, %v1935, 0.0
        %v1991 = vadd.f32 %v1989, %v1990
        %v1992 = vsel %vm1976, %v1936, 0.0
        %v1993 = vadd.f32 %v1991, %v1992
        %v1994 = vsel %vm1976, %v1937, 0.0
        %v1995 = vadd.f32 %v1993, %v1994
        %v1996 = vsel %vm1976, %v1938, 0.0
        %v1997 = vadd.f32 %v1995, %v1996
        %v1998 = vsel %vm1976, %v1939, 0.0
        %v1999 = vadd.f32 %v1997, %v1998
        %v2000 = vsel %vm1976, %v1940, 0.0
        %v2001 = vadd.f32 %v1999, %v2000
        %v2002 = vsel %vm1976, %v1941, 0.0
        %v2003 = vadd.f32 %v2001, %v2002
        %v2004 = vsel %vm1976, %v1942, 0.0
        %v2005 = vadd.f32 %v2003, %v2004
        %v2006 = vsel %vm1976, %v1943, 0.0
        %v2007 = vadd.f32 %v2005, %v2006
        %v2008 = vrot.slane %v2007, 4
        %v2009 = vadd.f32 %v2007, %v2008
        %v2010 = vrot.slane %v2009, 2
        %v2011 = vadd.f32 %v2009, %v2010
        %v2012 = vrot.slane %v2011, 1
        %v2013 = vadd.f32 %v2011, %v2012
        %v2014 = vmul.f32 %v2013, %v884
        %v2015 = vsub.f32 %v1928, %v2014
        %v2016 = vsub.f32 %v1929, %v2014
        %v2017 = vsub.f32 %v1930, %v2014
        %v2018 = vsub.f32 %v1931, %v2014
        %v2019 = vsub.f32 %v1932, %v2014
        %v2020 = vsub.f32 %v1933, %v2014
        %v2021 = vsub.f32 %v1934, %v2014
        %v2022 = vsub.f32 %v1935, %v2014
        %v2023 = vsub.f32 %v1936, %v2014
        %v2024 = vsub.f32 %v1937, %v2014
        %v2025 = vsub.f32 %v1938, %v2014
        %v2026 = vsub.f32 %v1939, %v2014
        %v2027 = vsub.f32 %v1940, %v2014
        %v2028 = vsub.f32 %v1941, %v2014
        %v2029 = vsub.f32 %v1942, %v2014
        %v2030 = vsub.f32 %v1943, %v2014
        %v2031 = vmul.f32 %v2015, %v2015
        %v2032 = vmul.f32 %v2016, %v2016
        %v2033 = vmul.f32 %v2017, %v2017
        %v2034 = vmul.f32 %v2018, %v2018
        %v2035 = vmul.f32 %v2019, %v2019
        %v2036 = vmul.f32 %v2020, %v2020
        %v2037 = vmul.f32 %v2021, %v2021
        %v2038 = vmul.f32 %v2022, %v2022
        %v2039 = vmul.f32 %v2023, %v2023
        %v2040 = vmul.f32 %v2024, %v2024
        %v2041 = vmul.f32 %v2025, %v2025
        %v2042 = vmul.f32 %v2026, %v2026
        %v2043 = vmul.f32 %v2027, %v2027
        %v2044 = vmul.f32 %v2028, %v2028
        %v2045 = vmul.f32 %v2029, %v2029
        %v2046 = vmul.f32 %v2030, %v2030
        %v2047 = vsel %vm1976, %v2031, 0.0
        %v2048 = vsel %vm1976, %v2032, 0.0
        %v2049 = vadd.f32 %v2047, %v2048
        %v2050 = vsel %vm1976, %v2033, 0.0
        %v2051 = vadd.f32 %v2049, %v2050
        %v2052 = vsel %vm1976, %v2034, 0.0
        %v2053 = vadd.f32 %v2051, %v2052
        %v2054 = vsel %vm1976, %v2035, 0.0
        %v2055 = vadd.f32 %v2053, %v2054
        %v2056 = vsel %vm1976, %v2036, 0.0
        %v2057 = vadd.f32 %v2055, %v2056
        %v2058 = vsel %vm1976, %v2037, 0.0
        %v2059 = vadd.f32 %v2057, %v2058
        %v2060 = vsel %vm1976, %v2038, 0.0
        %v2061 = vadd.f32 %v2059, %v2060
        %v2062 = vsel %vm1976, %v2039, 0.0
        %v2063 = vadd.f32 %v2061, %v2062
        %v2064 = vsel %vm1976, %v2040, 0.0
        %v2065 = vadd.f32 %v2063, %v2064
        %v2066 = vsel %vm1976, %v2041, 0.0
        %v2067 = vadd.f32 %v2065, %v2066
        %v2068 = vsel %vm1976, %v2042, 0.0
        %v2069 = vadd.f32 %v2067, %v2068
        %v2070 = vsel %vm1976, %v2043, 0.0
        %v2071 = vadd.f32 %v2069, %v2070
        %v2072 = vsel %vm1976, %v2044, 0.0
        %v2073 = vadd.f32 %v2071, %v2072
        %v2074 = vsel %vm1976, %v2045, 0.0
        %v2075 = vadd.f32 %v2073, %v2074
        %v2076 = vsel %vm1976, %v2046, 0.0
        %v2077 = vadd.f32 %v2075, %v2076
        %v2078 = vrot.slane %v2077, 4
        %v2079 = vadd.f32 %v2077, %v2078
        %v2080 = vrot.slane %v2079, 2
        %v2081 = vadd.f32 %v2079, %v2080
        %v2082 = vrot.slane %v2081, 1
        %v2083 = vadd.f32 %v2081, %v2082
        %v2084 = vmul.f32 %v2083, %v884
        %v2085 = vadd.f32 %v2084, 1e-05
        %v2086 = vrsqrt.pop %v2085
        %v2087 = vmul.f32 %v2015, %v2086
        %v2088 = vmul.f32 %v2016, %v2086
        %v2089 = vmul.f32 %v2017, %v2086
        %v2090 = vmul.f32 %v2018, %v2086
        %v2091 = vmul.f32 %v2019, %v2086
        %v2092 = vmul.f32 %v2020, %v2086
        %v2093 = vmul.f32 %v2021, %v2086
        %v2094 = vmul.f32 %v2022, %v2086
        %v2095 = vmul.f32 %v2023, %v2086
        %v2096 = vmul.f32 %v2024, %v2086
        %v2097 = vmul.f32 %v2025, %v2086
        %v2098 = vmul.f32 %v2026, %v2086
        %v2099 = vmul.f32 %v2027, %v2086
        %v2100 = vmul.f32 %v2028, %v2086
        %v2101 = vmul.f32 %v2029, %v2086
        %v2102 = vmul.f32 %v2030, %v2086
        %2104 = vset.pattern.permute.xlu0 0
        %2105 = vperm.xlu0 %2104, %v1944
        %v2106 = vpop.permute.xlu0 %2105
        %2109 = vset.pattern.permute.xlu0 0
        %2110 = vperm.xlu0 %2109, %v1945
        %v2111 = vpop.permute.xlu0 %2110
        %2114 = vset.pattern.permute.xlu0 0
        %2115 = vperm.xlu0 %2114, %v1946
        %v2116 = vpop.permute.xlu0 %2115
        %2119 = vset.pattern.permute.xlu0 0
        %2120 = vperm.xlu0 %2119, %v1947
        %v2121 = vpop.permute.xlu0 %2120
        %2124 = vset.pattern.permute.xlu0 0
        %2125 = vperm.xlu0 %2124, %v1948
        %v2126 = vpop.permute.xlu0 %2125
        %2129 = vset.pattern.permute.xlu0 0
        %2130 = vperm.xlu0 %2129, %v1949
        %v2131 = vpop.permute.xlu0 %2130
        %2134 = vset.pattern.permute.xlu0 0
        %2135 = vperm.xlu0 %2134, %v1950
        %v2136 = vpop.permute.xlu0 %2135
        %2139 = vset.pattern.permute.xlu0 0
        %2140 = vperm.xlu0 %2139, %v1951
        %v2141 = vpop.permute.xlu0 %2140
        %2144 = vset.pattern.permute.xlu0 0
        %2145 = vperm.xlu0 %2144, %v1952
        %v2146 = vpop.permute.xlu0 %2145
        %2149 = vset.pattern.permute.xlu0 0
        %2150 = vperm.xlu0 %2149, %v1953
        %v2151 = vpop.permute.xlu0 %2150
        %2154 = vset.pattern.permute.xlu0 0
        %2155 = vperm.xlu0 %2154, %v1954
        %v2156 = vpop.permute.xlu0 %2155
        %2159 = vset.pattern.permute.xlu0 0
        %2160 = vperm.xlu0 %2159, %v1955
        %v2161 = vpop.permute.xlu0 %2160
        %2164 = vset.pattern.permute.xlu0 0
        %2165 = vperm.xlu0 %2164, %v1956
        %v2166 = vpop.permute.xlu0 %2165
        %2169 = vset.pattern.permute.xlu0 0
        %2170 = vperm.xlu0 %2169, %v1957
        %v2171 = vpop.permute.xlu0 %2170
        %2174 = vset.pattern.permute.xlu0 0
        %2175 = vperm.xlu0 %2174, %v1958
        %v2176 = vpop.permute.xlu0 %2175
        %2179 = vset.pattern.permute.xlu0 0
        %2180 = vperm.xlu0 %2179, %v1959
        %v2181 = vpop.permute.xlu0 %2180
        %v2183 = vmul.f32 %v2087, %v2106
        %v2184 = vmul.f32 %v2088, %v2111
        %v2185 = vmul.f32 %v2089, %v2116
        %v2186 = vmul.f32 %v2090, %v2121
        %v2187 = vmul.f32 %v2091, %v2126
        %v2188 = vmul.f32 %v2092, %v2131
        %v2189 = vmul.f32 %v2093, %v2136
        %v2190 = vmul.f32 %v2094, %v2141
        %v2191 = vmul.f32 %v2095, %v2146
        %v2192 = vmul.f32 %v2096, %v2151
        %v2193 = vmul.f32 %v2097, %v2156
        %v2194 = vmul.f32 %v2098, %v2161
        %v2195 = vmul.f32 %v2099, %v2166
        %v2196 = vmul.f32 %v2100, %v2171
        %v2197 = vmul.f32 %v2101, %v2176
        %v2198 = vmul.f32 %v2102, %v2181
        %2200 = vset.pattern.permute.xlu0 0
        %2201 = vperm.xlu0 %2200, %v1960
        %v2202 = vpop.permute.xlu0 %2201
        %2205 = vset.pattern.permute.xlu0 0
        %2206 = vperm.xlu0 %2205, %v1961
        %v2207 = vpop.permute.xlu0 %2206
        %2210 = vset.pattern.permute.xlu0 0
        %2211 = vperm.xlu0 %2210, %v1962
        %v2212 = vpop.permute.xlu0 %2211
        %2215 = vset.pattern.permute.xlu0 0
        %2216 = vperm.xlu0 %2215, %v1963
        %v2217 = vpop.permute.xlu0 %2216
        %2220 = vset.pattern.permute.xlu0 0
        %2221 = vperm.xlu0 %2220, %v1964
        %v2222 = vpop.permute.xlu0 %2221
        %2225 = vset.pattern.permute.xlu0 0
        %2226 = vperm.xlu0 %2225, %v1965
        %v2227 = vpop.permute.xlu0 %2226
        %2230 = vset.pattern.permute.xlu0 0
        %2231 = vperm.xlu0 %2230, %v1966
        %v2232 = vpop.permute.xlu0 %2231
        %2235 = vset.pattern.permute.xlu0 0
        %2236 = vperm.xlu0 %2235, %v1967
        %v2237 = vpop.permute.xlu0 %2236
        %2240 = vset.pattern.permute.xlu0 0
        %2241 = vperm.xlu0 %2240, %v1968
        %v2242 = vpop.permute.xlu0 %2241
        %2245 = vset.pattern.permute.xlu0 0
        %2246 = vperm.xlu0 %2245, %v1969
        %v2247 = vpop.permute.xlu0 %2246
        %2250 = vset.pattern.permute.xlu0 0
        %2251 = vperm.xlu0 %2250, %v1970
        %v2252 = vpop.permute.xlu0 %2251
        %2255 = vset.pattern.permute.xlu0 0
        %2256 = vperm.xlu0 %2255, %v1971
        %v2257 = vpop.permute.xlu0 %2256
        %2260 = vset.pattern.permute.xlu0 0
        %2261 = vperm.xlu0 %2260, %v1972
        %v2262 = vpop.permute.xlu0 %2261
        %2265 = vset.pattern.permute.xlu0 0
        %2266 = vperm.xlu0 %2265, %v1973
        %v2267 = vpop.permute.xlu0 %2266
        %2270 = vset.pattern.permute.xlu0 0
        %2271 = vperm.xlu0 %2270, %v1974
        %v2272 = vpop.permute.xlu0 %2271
        %2275 = vset.pattern.permute.xlu0 0
        %2276 = vperm.xlu0 %2275, %v1975
        %v2277 = vpop.permute.xlu0 %2276
        %v2279 = vadd.f32 %v2183, %v2202
        %v2280 = vadd.f32 %v2184, %v2207
        %v2281 = vadd.f32 %v2185, %v2212
        %v2282 = vadd.f32 %v2186, %v2217
        %v2283 = vadd.f32 %v2187, %v2222
        %v2284 = vadd.f32 %v2188, %v2227
        %v2285 = vadd.f32 %v2189, %v2232
        %v2286 = vadd.f32 %v2190, %v2237
        %v2287 = vadd.f32 %v2191, %v2242
        %v2288 = vadd.f32 %v2192, %v2247
        %v2289 = vadd.f32 %v2193, %v2252
        %v2290 = vadd.f32 %v2194, %v2257
        %v2291 = vadd.f32 %v2195, %v2262
        %v2292 = vadd.f32 %v2196, %v2267
        %v2293 = vadd.f32 %v2197, %v2272
        %v2294 = vadd.f32 %v2198, %v2277
        %v2295 = vld [vmem:[%s13] sm:$0xf]
        %v2296 = vld [vmem:[%s13 + $0x4] sm:$0xf]
        %v2297 = vld [vmem:[%s13 + $0x8] sm:$0xf]
        %v2298 = vld [vmem:[%s13 + $0xc] sm:$0xf]
        %v2299 = vld [vmem:[%s13 + $0x10] sm:$0xf]
        %v2300 = vld [vmem:[%s13 + $0x14] sm:$0xf]
        %v2301 = vld [vmem:[%s13 + $0x18] sm:$0xf]
        %v2302 = vld [vmem:[%s13 + $0x1c] sm:$0xf]
        %v2303 = vld [vmem:[%s13 + $0x20] sm:$0xf]
        %v2304 = vld [vmem:[%s13 + $0x24] sm:$0xf]
        %v2305 = vld [vmem:[%s13 + $0x28] sm:$0xf]
        %v2306 = vld [vmem:[%s13 + $0x2c] sm:$0xf]
        %v2307 = vld [vmem:[%s13 + $0x30] sm:$0xf]
        %v2308 = vld [vmem:[%s13 + $0x34] sm:$0xf]
        %v2309 = vld [vmem:[%s13 + $0x38] sm:$0xf]
        %v2310 = vld [vmem:[%s13 + $0x3c] sm:$0xf]
        %v2311 = vpack.c.bf16 %v2280, %v2279
        %v2312 = vpack.c.bf16 %v2282, %v2281
        %v2313 = vpack.c.bf16 %v2284, %v2283
        %v2314 = vpack.c.bf16 %v2286, %v2285
        %v2315 = vpack.c.bf16 %v2288, %v2287
        %v2316 = vpack.c.bf16 %v2290, %v2289
        %v2317 = vpack.c.bf16 %v2292, %v2291
        %v2318 = vpack.c.bf16 %v2294, %v2293
        %v2319 = vld [vmem:[%s14] sm:$0xff]
        %v2320 = vld [vmem:[%s14 + $0x8] sm:$0xff]
        %v2321 = vld [vmem:[%s14 + $0x10] sm:$0xff]
        %v2322 = vld [vmem:[%s14 + $0x18] sm:$0xff]
        %v2323 = vld [vmem:[%s14 + $0x20] sm:$0xff]
        %v2324 = vld [vmem:[%s14 + $0x28] sm:$0xff]
        %v2325 = vld [vmem:[%s14 + $0x30] sm:$0xff]
        %v2326 = vld [vmem:[%s14 + $0x38] sm:$0xff]
        %v2327 = vld [vmem:[%s14 + $0x40] sm:$0xff]
        %v2328 = vld [vmem:[%s14 + $0x48] sm:$0xff]
        %v2329 = vld [vmem:[%s14 + $0x50] sm:$0xff]
        %v2330 = vld [vmem:[%s14 + $0x58] sm:$0xff]
        %v2331 = vld [vmem:[%s14 + $0x60] sm:$0xff]
        %v2332 = vld [vmem:[%s14 + $0x68] sm:$0xff]
        %v2333 = vld [vmem:[%s14 + $0x70] sm:$0xff]
        %v2334 = vld [vmem:[%s14 + $0x78] sm:$0xff]
        %2336 = vset.pattern.permute.xlu0 0
        %2337 = vperm.xlu0 %2336, %v2319
        %v2338 = vpop.permute.xlu0 %2337
        %2341 = vset.pattern.permute.xlu0 0
        %2342 = vperm.xlu0 %2341, %v2320
        %v2343 = vpop.permute.xlu0 %2342
        %2346 = vset.pattern.permute.xlu0 0
        %2347 = vperm.xlu0 %2346, %v2321
        %v2348 = vpop.permute.xlu0 %2347
        %2351 = vset.pattern.permute.xlu0 0
        %2352 = vperm.xlu0 %2351, %v2322
        %v2353 = vpop.permute.xlu0 %2352
        %2356 = vset.pattern.permute.xlu0 0
        %2357 = vperm.xlu0 %2356, %v2323
        %v2358 = vpop.permute.xlu0 %2357
        %2361 = vset.pattern.permute.xlu0 0
        %2362 = vperm.xlu0 %2361, %v2324
        %v2363 = vpop.permute.xlu0 %2362
        %2366 = vset.pattern.permute.xlu0 0
        %2367 = vperm.xlu0 %2366, %v2325
        %v2368 = vpop.permute.xlu0 %2367
        %2371 = vset.pattern.permute.xlu0 0
        %2372 = vperm.xlu0 %2371, %v2326
        %v2373 = vpop.permute.xlu0 %2372
        %2376 = vset.pattern.permute.xlu0 0
        %2377 = vperm.xlu0 %2376, %v2327
        %v2378 = vpop.permute.xlu0 %2377
        %2381 = vset.pattern.permute.xlu0 0
        %2382 = vperm.xlu0 %2381, %v2328
        %v2383 = vpop.permute.xlu0 %2382
        %2386 = vset.pattern.permute.xlu0 0
        %2387 = vperm.xlu0 %2386, %v2329
        %v2388 = vpop.permute.xlu0 %2387
        %2391 = vset.pattern.permute.xlu0 0
        %2392 = vperm.xlu0 %2391, %v2330
        %v2393 = vpop.permute.xlu0 %2392
        %2396 = vset.pattern.permute.xlu0 0
        %2397 = vperm.xlu0 %2396, %v2331
        %v2398 = vpop.permute.xlu0 %2397
        %2401 = vset.pattern.permute.xlu0 0
        %2402 = vperm.xlu0 %2401, %v2332
        %v2403 = vpop.permute.xlu0 %2402
        %2406 = vset.pattern.permute.xlu0 0
        %2407 = vperm.xlu0 %2406, %v2333
        %v2408 = vpop.permute.xlu0 %2407
        %2411 = vset.pattern.permute.xlu0 0
        %2412 = vperm.xlu0 %2411, %v2334
        %v2413 = vpop.permute.xlu0 %2412
        %v2431 = vunpack.c.l.b16 %v2295
        %v2432 = vunpack.c.l.b16 %v2296
        %v2433 = vunpack.c.l.b16 %v2297
        %v2434 = vunpack.c.l.b16 %v2298
        %v2435 = vunpack.c.l.b16 %v2299
        %v2436 = vunpack.c.l.b16 %v2300
        %v2437 = vunpack.c.l.b16 %v2301
        %v2438 = vunpack.c.l.b16 %v2302
        %v2439 = vunpack.c.l.b16 %v2303
        %v2440 = vunpack.c.l.b16 %v2304
        %v2441 = vunpack.c.l.b16 %v2305
        %v2442 = vunpack.c.l.b16 %v2306
        %v2443 = vunpack.c.l.b16 %v2307
        %v2444 = vunpack.c.l.b16 %v2308
        %v2445 = vunpack.c.l.b16 %v2309
        %v2446 = vunpack.c.l.b16 %v2310
        %v2447 = vpack.c.b16 %v2432, %v2431
        %v2448 = vpack.c.b16 %v2434, %v2433
        %v2449 = vpack.c.b16 %v2436, %v2435
        %v2450 = vpack.c.b16 %v2438, %v2437
        %v2451 = vpack.c.b16 %v2440, %v2439
        %v2452 = vpack.c.b16 %v2442, %v2441
        %v2453 = vpack.c.b16 %v2444, %v2443
        %v2454 = vpack.c.b16 %v2446, %v2445
        %2463 = vmatprep.subr.bf16.mxu0 0
        %2464 = vmatpush1.bf16.msra.mxu0 %v2311
        %2465 = vmatprep.subr.bf16.mxu0 0
        %2466 = vmatpush1.bf16.msra.mxu0 %v2312
        %2467 = vmatprep.subr.bf16.mxu0 0
        %2468 = vmatpush1.bf16.msra.mxu0 %v2313
        %2469 = vmatprep.subr.bf16.mxu0 0
        %2470 = vmatpush1.bf16.msra.mxu0 %v2314
        %2471 = vmatprep.subr.bf16.mxu0 0
        %2472 = vmatpush1.bf16.msra.mxu0 %v2315
        %2473 = vmatprep.subr.bf16.mxu0 0
        %2474 = vmatpush1.bf16.msra.mxu0 %v2316
        %2475 = vmatprep.subr.bf16.mxu0 0
        %2476 = vmatpush1.bf16.msra.mxu0 %v2317
        %2477 = vmatprep.subr.bf16.mxu0 0
        %2478 = vmatpush1.bf16.msra.mxu0 %v2318
        %2479 = vmatprep.subr.bf16.mxu0 0
        %2480 = vmatpush1.bf16.msra.mxu0 0
        %2481 = vmatprep.subr.bf16.mxu0 0
        %2482 = vmatpush1.bf16.msra.mxu0 0
        %2483 = vmatprep.subr.bf16.mxu0 0
        %2484 = vmatpush1.bf16.msra.mxu0 0
        %2485 = vmatprep.subr.bf16.mxu0 0
        %2486 = vmatpush1.bf16.msra.mxu0 0
        %2487 = vmatprep.subr.bf16.mxu0 0
        %2488 = vmatpush1.bf16.msra.mxu0 0
        %2489 = vmatprep.subr.bf16.mxu0 0
        %2490 = vmatpush1.bf16.msra.mxu0 0
        %2491 = vmatprep.subr.bf16.mxu0 0
        %2492 = vmatpush1.bf16.msra.mxu0 0
        %2493 = vmatprep.subr.bf16.mxu0 0
        %2494 = vmatpush1.bf16.msra.mxu0 0
        %2495 = vmatprep.mubr.bf16.mxu0 0
        %2496 = vmatmul.mubr.bf16.gmra.mrb[0].mxu0 %v2447
        %v2497 = vpop.f32.mrb[0].mxu0
        %v2498 = vadd.f32 %v2338, %v2497
        %v2499 = vpop.f32.mrb[0].mxu0
        %v2500 = vpop.f32.mrb[0].mxu0
        %v2501 = vadd.f32 %v2343, %v2500
        %v2502 = vpop.f32.mrb[0].mxu0
        %2503 = vmatprep.mubr.bf16.mxu0 0
        %2504 = vmatmul.mubr.bf16.gmra.mrb[0].mxu0 %v2448
        %v2505 = vpop.f32.mrb[0].mxu0
        %v2506 = vadd.f32 %v2348, %v2505
        %v2507 = vpop.f32.mrb[0].mxu0
        %v2508 = vpop.f32.mrb[0].mxu0
        %v2509 = vadd.f32 %v2353, %v2508
        %v2510 = vpop.f32.mrb[0].mxu0
        %2511 = vmatprep.mubr.bf16.mxu0 0
        %2512 = vmatmul.mubr.bf16.gmra.mrb[0].mxu0 %v2449
        %v2513 = vpop.f32.mrb[0].mxu0
        %v2514 = vadd.f32 %v2358, %v2513
        %v2515 = vpop.f32.mrb[0].mxu0
        %v2516 = vpop.f32.mrb[0].mxu0
        %v2517 = vadd.f32 %v2363, %v2516
        %v2518 = vpop.f32.mrb[0].mxu0
        %2519 = vmatprep.mubr.bf16.mxu0 0
        %2520 = vmatmul.mubr.bf16.gmra.mrb[0].mxu0 %v2450
        %v2521 = vpop.f32.mrb[0].mxu0
        %v2522 = vadd.f32 %v2368, %v2521
        %v2523 = vpop.f32.mrb[0].mxu0
        %v2524 = vpop.f32.mrb[0].mxu0
        %v2525 = vadd.f32 %v2373, %v2524
        %v2526 = vpop.f32.mrb[0].mxu0
        %2527 = vmatprep.mubr.bf16.mxu0 0
        %2528 = vmatmul.mubr.bf16.gmra.mrb[0].mxu0 %v2451
        %v2529 = vpop.f32.mrb[0].mxu0
        %v2530 = vadd.f32 %v2378, %v2529
        %v2531 = vpop.f32.mrb[0].mxu0
        %v2532 = vpop.f32.mrb[0].mxu0
        %v2533 = vadd.f32 %v2383, %v2532
        %v2534 = vpop.f32.mrb[0].mxu0
        %2535 = vmatprep.mubr.bf16.mxu0 0
        %2536 = vmatmul.mubr.bf16.gmra.mrb[0].mxu0 %v2452
        %v2537 = vpop.f32.mrb[0].mxu0
        %v2538 = vadd.f32 %v2388, %v2537
        %v2539 = vpop.f32.mrb[0].mxu0
        %v2540 = vpop.f32.mrb[0].mxu0
        %v2541 = vadd.f32 %v2393, %v2540
        %v2542 = vpop.f32.mrb[0].mxu0
        %2543 = vmatprep.mubr.bf16.mxu0 0
        %2544 = vmatmul.mubr.bf16.gmra.mrb[0].mxu0 %v2453
        %v2545 = vpop.f32.mrb[0].mxu0
        %v2546 = vadd.f32 %v2398, %v2545
        %v2547 = vpop.f32.mrb[0].mxu0
        %v2548 = vpop.f32.mrb[0].mxu0
        %v2549 = vadd.f32 %v2403, %v2548
        %v2550 = vpop.f32.mrb[0].mxu0
        %2551 = vmatprep.mubr.bf16.mxu0 0
        %2552 = vmatmul.mubr.bf16.gmra.mrb[0].mxu0 %v2454
        %v2553 = vpop.f32.mrb[0].mxu0
        %v2554 = vadd.f32 %v2408, %v2553
        %v2555 = vpop.f32.mrb[0].mxu0
        %v2556 = vpop.f32.mrb[0].mxu0
        %v2557 = vadd.f32 %v2413, %v2556
        %v2558 = vpop.f32.mrb[0].mxu0
        %2559 = vdwg.mxu0
        %v2560 = vpack.c.bf16 %v2501, %v2498
        %v2561 = vpack.c.bf16 %v2509, %v2506
        %v2562 = vpack.c.bf16 %v2517, %v2514
        %v2563 = vpack.c.bf16 %v2525, %v2522
        %v2564 = vpack.c.bf16 %v2533, %v2530
        %v2565 = vpack.c.bf16 %v2541, %v2538
        %v2566 = vpack.c.bf16 %v2549, %v2546
        %v2567 = vpack.c.bf16 %v2557, %v2554
        %vm2568 = vcmask 261120
        %v2570 = vsel %vm2568, %v1800, 0
        %v2573 = vsel %vm2568, %v1801, 0
        %v2576 = vsel %vm2568, %v1802, 0
        %v2579 = vsel %vm2568, %v1803, 0
        %v2582 = vsel %vm2568, %v1804, 0
        %v2585 = vsel %vm2568, %v1805, 0
        %v2588 = vsel %vm2568, %v1806, 0
        %v2591 = vsel %vm2568, %v1807, 0
        %v2594 = vsel %vm2568, %v1808, 0
        %v2597 = vsel %vm2568, %v1809, 0
        %v2600 = vsel %vm2568, %v1810, 0
        %v2603 = vsel %vm2568, %v1811, 0
        %v2606 = vsel %vm2568, %v1812, 0
        %v2609 = vsel %vm2568, %v1813, 0
        %v2612 = vsel %vm2568, %v1814, 0
        %v2615 = vsel %vm2568, %v1815, 0
        %2617 = vmatprep.subr.bf16.mxu0 0
        %2618 = vmatpush1.bf16.msra.mxu0 %v2560
        %2619 = vmatprep.subr.bf16.mxu0 0
        %2620 = vmatpush1.bf16.msra.mxu0 %v2561
        %2621 = vmatprep.subr.bf16.mxu0 0
        %2622 = vmatpush1.bf16.msra.mxu0 0
        %2623 = vmatprep.subr.bf16.mxu0 0
        %2624 = vmatpush1.bf16.msra.mxu0 0
        %2625 = vmatprep.subr.bf16.mxu0 0
        %2626 = vmatpush1.bf16.msra.mxu0 0
        %2627 = vmatprep.subr.bf16.mxu0 0
        %2628 = vmatpush1.bf16.msra.mxu0 0
        %2629 = vmatprep.subr.bf16.mxu0 0
        %2630 = vmatpush1.bf16.msra.mxu0 0
        %2631 = vmatprep.subr.bf16.mxu0 0
        %2632 = vmatpush1.bf16.msra.mxu0 0
        %2633 = vmatprep.subr.bf16.mxu0 0
        %2634 = vmatpush1.bf16.msra.mxu0 0
        %2635 = vmatprep.subr.bf16.mxu0 0
        %2636 = vmatpush1.bf16.msra.mxu0 0
        %2637 = vmatprep.subr.bf16.mxu0 0
        %2638 = vmatpush1.bf16.msra.mxu0 0
        %2639 = vmatprep.subr.bf16.mxu0 0
        %2640 = vmatpush1.bf16.msra.mxu0 0
        %2641 = vmatprep.subr.bf16.mxu0 0
        %2642 = vmatpush1.bf16.msra.mxu0 0
        %2643 = vmatprep.subr.bf16.mxu0 0
        %2644 = vmatpush1.bf16.msra.mxu0 0
        %2645 = vmatprep.subr.bf16.mxu0 0
        %2646 = vmatpush1.bf16.msra.mxu0 0
        %2647 = vmatprep.subr.bf16.mxu0 0
        %2648 = vmatpush1.bf16.msra.mxu0 0
        %2649 = vmatprep.mubr.bf16.mxu0 0
        %2650 = vmatmul.mubr.bf16.gmra.mrb[0].mxu0 %v2570
        %v2651 = vpop.f32.mrb[0].mxu0
        %v2652 = vadd.f32 0.0, %v2651
        %v2653 = vpop.f32.mrb[0].mxu0
        %v2654 = vpop.f32.mrb[0].mxu0
        %v2655 = vadd.f32 0.0, %v2654
        %v2656 = vpop.f32.mrb[0].mxu0
        %2657 = vmatprep.mubr.bf16.mxu0 0
        %2658 = vmatmul.mubr.bf16.gmra.mrb[0].mxu0 %v2573
        %v2659 = vpop.f32.mrb[0].mxu0
        %v2660 = vadd.f32 0.0, %v2659
        %v2661 = vpop.f32.mrb[0].mxu0
        %v2662 = vpop.f32.mrb[0].mxu0
        %v2663 = vadd.f32 0.0, %v2662
        %v2664 = vpop.f32.mrb[0].mxu0
        %2665 = vmatprep.mubr.bf16.mxu0 0
        %2666 = vmatmul.mubr.bf16.gmra.mrb[0].mxu0 %v2576
        %v2667 = vpop.f32.mrb[0].mxu0
        %v2668 = vadd.f32 0.0, %v2667
        %v2669 = vpop.f32.mrb[0].mxu0
        %v2670 = vpop.f32.mrb[0].mxu0
        %v2671 = vadd.f32 0.0, %v2670
        %v2672 = vpop.f32.mrb[0].mxu0
        %2673 = vmatprep.mubr.bf16.mxu0 0
        %2674 = vmatmul.mubr.bf16.gmra.mrb[0].mxu0 %v2579
        %v2675 = vpop.f32.mrb[0].mxu0
        %v2676 = vadd.f32 0.0, %v2675
        %v2677 = vpop.f32.mrb[0].mxu0
        %v2678 = vpop.f32.mrb[0].mxu0
        %v2679 = vadd.f32 0.0, %v2678
        %v2680 = vpop.f32.mrb[0].mxu0
        %2681 = vmatprep.mubr.bf16.mxu0 0
        %2682 = vmatmul.mubr.bf16.gmra.mrb[0].mxu0 %v2582
        %v2683 = vpop.f32.mrb[0].mxu0
        %v2684 = vadd.f32 0.0, %v2683
        %v2685 = vpop.f32.mrb[0].mxu0
        %v2686 = vpop.f32.mrb[0].mxu0
        %v2687 = vadd.f32 0.0, %v2686
        %v2688 = vpop.f32.mrb[0].mxu0
        %2689 = vmatprep.mubr.bf16.mxu0 0
        %2690 = vmatmul.mubr.bf16.gmra.mrb[0].mxu0 %v2585
        %v2691 = vpop.f32.mrb[0].mxu0
        %v2692 = vadd.f32 0.0, %v2691
        %v2693 = vpop.f32.mrb[0].mxu0
        %v2694 = vpop.f32.mrb[0].mxu0
        %v2695 = vadd.f32 0.0, %v2694
        %v2696 = vpop.f32.mrb[0].mxu0
        %2697 = vmatprep.mubr.bf16.mxu0 0
        %2698 = vmatmul.mubr.bf16.gmra.mrb[0].mxu0 %v2588
        %v2699 = vpop.f32.mrb[0].mxu0
        %v2700 = vadd.f32 0.0, %v2699
        %v2701 = vpop.f32.mrb[0].mxu0
        %v2702 = vpop.f32.mrb[0].mxu0
        %v2703 = vadd.f32 0.0, %v2702
        %v2704 = vpop.f32.mrb[0].mxu0
        %2705 = vmatprep.mubr.bf16.mxu0 0
        %2706 = vmatmul.mubr.bf16.gmra.mrb[0].mxu0 %v2591
        %v2707 = vpop.f32.mrb[0].mxu0
        %v2708 = vadd.f32 0.0, %v2707
        %v2709 = vpop.f32.mrb[0].mxu0
        %v2710 = vpop.f32.mrb[0].mxu0
        %v2711 = vadd.f32 0.0, %v2710
        %v2712 = vpop.f32.mrb[0].mxu0
        %2713 = vmatprep.mubr.bf16.mxu0 0
        %2714 = vmatmul.mubr.bf16.gmra.mrb[0].mxu0 %v2594
        %v2715 = vpop.f32.mrb[0].mxu0
        %v2716 = vadd.f32 0.0, %v2715
        %v2717 = vpop.f32.mrb[0].mxu0
        %v2718 = vpop.f32.mrb[0].mxu0
        %v2719 = vadd.f32 0.0, %v2718
        %v2720 = vpop.f32.mrb[0].mxu0
        %2721 = vmatprep.mubr.bf16.mxu0 0
        %2722 = vmatmul.mubr.bf16.gmra.mrb[0].mxu0 %v2597
        %v2723 = vpop.f32.mrb[0].mxu0
        %v2724 = vadd.f32 0.0, %v2723
        %v2725 = vpop.f32.mrb[0].mxu0
        %v2726 = vpop.f32.mrb[0].mxu0
        %v2727 = vadd.f32 0.0, %v2726
        %v2728 = vpop.f32.mrb[0].mxu0
        %2729 = vmatprep.mubr.bf16.mxu0 0
        %2730 = vmatmul.mubr.bf16.gmra.mrb[0].mxu0 %v2600
        %v2731 = vpop.f32.mrb[0].mxu0
        %v2732 = vadd.f32 0.0, %v2731
        %v2733 = vpop.f32.mrb[0].mxu0
        %v2734 = vpop.f32.mrb[0].mxu0
        %v2735 = vadd.f32 0.0, %v2734
        %v2736 = vpop.f32.mrb[0].mxu0
        %2737 = vmatprep.mubr.bf16.mxu0 0
        %2738 = vmatmul.mubr.bf16.gmra.mrb[0].mxu0 %v2603
        %v2739 = vpop.f32.mrb[0].mxu0
        %v2740 = vadd.f32 0.0, %v2739
        %v2741 = vpop.f32.mrb[0].mxu0
        %v2742 = vpop.f32.mrb[0].mxu0
        %v2743 = vadd.f32 0.0, %v2742
        %v2744 = vpop.f32.mrb[0].mxu0
        %2745 = vmatprep.mubr.bf16.mxu0 0
        %2746 = vmatmul.mubr.bf16.gmra.mrb[0].mxu0 %v2606
        %v2747 = vpop.f32.mrb[0].mxu0
        %v2748 = vadd.f32 0.0, %v2747
        %v2749 = vpop.f32.mrb[0].mxu0
        %v2750 = vpop.f32.mrb[0].mxu0
        %v2751 = vadd.f32 0.0, %v2750
        %v2752 = vpop.f32.mrb[0].mxu0
        %2753 = vmatprep.mubr.bf16.mxu0 0
        %2754 = vmatmul.mubr.bf16.gmra.mrb[0].mxu0 %v2609
        %v2755 = vpop.f32.mrb[0].mxu0
        %v2756 = vadd.f32 0.0, %v2755
        %v2757 = vpop.f32.mrb[0].mxu0
        %v2758 = vpop.f32.mrb[0].mxu0
        %v2759 = vadd.f32 0.0, %v2758
        %v2760 = vpop.f32.mrb[0].mxu0
        %2761 = vmatprep.mubr.bf16.mxu0 0
        %2762 = vmatmul.mubr.bf16.gmra.mrb[0].mxu0 %v2612
        %v2763 = vpop.f32.mrb[0].mxu0
        %v2764 = vadd.f32 0.0, %v2763
        %v2765 = vpop.f32.mrb[0].mxu0
        %v2766 = vpop.f32.mrb[0].mxu0
        %v2767 = vadd.f32 0.0, %v2766
        %v2768 = vpop.f32.mrb[0].mxu0
        %2769 = vmatprep.mubr.bf16.mxu0 0
        %2770 = vmatmul.mubr.bf16.gmra.mrb[0].mxu0 %v2615
        %v2771 = vpop.f32.mrb[0].mxu0
        %v2772 = vadd.f32 0.0, %v2771
        %v2773 = vpop.f32.mrb[0].mxu0
        %v2774 = vpop.f32.mrb[0].mxu0
        %v2775 = vadd.f32 0.0, %v2774
        %v2776 = vpop.f32.mrb[0].mxu0
        %2777 = vdwg.mxu0
        %v2779 = vsel %vm2568, %v1816, 0
        %v2782 = vsel %vm2568, %v1817, 0
        %v2785 = vsel %vm2568, %v1818, 0
        %v2788 = vsel %vm2568, %v1819, 0
        %v2791 = vsel %vm2568, %v1820, 0
        %v2794 = vsel %vm2568, %v1821, 0
        %v2797 = vsel %vm2568, %v1822, 0
        %v2800 = vsel %vm2568, %v1823, 0
        %v2803 = vsel %vm2568, %v1824, 0
        %v2806 = vsel %vm2568, %v1825, 0
        %v2809 = vsel %vm2568, %v1826, 0
        %v2812 = vsel %vm2568, %v1827, 0
        %v2815 = vsel %vm2568, %v1828, 0
        %v2818 = vsel %vm2568, %v1829, 0
        %v2821 = vsel %vm2568, %v1830, 0
        %v2824 = vsel %vm2568, %v1831, 0
        %2826 = vmatprep.subr.bf16.mxu0 0
        %2827 = vmatpush1.bf16.msra.mxu0 %v2562
        %2828 = vmatprep.subr.bf16.mxu0 0
        %2829 = vmatpush1.bf16.msra.mxu0 %v2563
        %2830 = vmatprep.subr.bf16.mxu0 0
        %2831 = vmatpush1.bf16.msra.mxu0 0
        %2832 = vmatprep.subr.bf16.mxu0 0
        %2833 = vmatpush1.bf16.msra.mxu0 0
        %2834 = vmatprep.subr.bf16.mxu0 0
        %2835 = vmatpush1.bf16.msra.mxu0 0
        %2836 = vmatprep.subr.bf16.mxu0 0
        %2837 = vmatpush1.bf16.msra.mxu0 0
        %2838 = vmatprep.subr.bf16.mxu0 0
        %2839 = vmatpush1.bf16.msra.mxu0 0
        %2840 = vmatprep.subr.bf16.mxu0 0
        %2841 = vmatpush1.bf16.msra.mxu0 0
        %2842 = vmatprep.subr.bf16.mxu0 0
        %2843 = vmatpush1.bf16.msra.mxu0 0
        %2844 = vmatprep.subr.bf16.mxu0 0
        %2845 = vmatpush1.bf16.msra.mxu0 0
        %2846 = vmatprep.subr.bf16.mxu0 0
        %2847 = vmatpush1.bf16.msra.mxu0 0
        %2848 = vmatprep.subr.bf16.mxu0 0
        %2849 = vmatpush1.bf16.msra.mxu0 0
        %2850 = vmatprep.subr.bf16.mxu0 0
        %2851 = vmatpush1.bf16.msra.mxu0 0
        %2852 = vmatprep.subr.bf16.mxu0 0
        %2853 = vmatpush1.bf16.msra.mxu0 0
        %2854 = vmatprep.subr.bf16.mxu0 0
        %2855 = vmatpush1.bf16.msra.mxu0 0
        %2856 = vmatprep.subr.bf16.mxu0 0
        %2857 = vmatpush1.bf16.msra.mxu0 0
        %2858 = vmatprep.mubr.bf16.mxu0 0
        %2859 = vmatmul.mubr.bf16.gmra.mrb[0].mxu0 %v2779
        %v2860 = vpop.f32.mrb[0].mxu0
        %v2861 = vadd.f32 0.0, %v2860
        %v2862 = vpop.f32.mrb[0].mxu0
        %v2863 = vpop.f32.mrb[0].mxu0
        %v2864 = vadd.f32 0.0, %v2863
        %v2865 = vpop.f32.mrb[0].mxu0
        %2866 = vmatprep.mubr.bf16.mxu0 0
        %2867 = vmatmul.mubr.bf16.gmra.mrb[0].mxu0 %v2782
        %v2868 = vpop.f32.mrb[0].mxu0
        %v2869 = vadd.f32 0.0, %v2868
        %v2870 = vpop.f32.mrb[0].mxu0
        %v2871 = vpop.f32.mrb[0].mxu0
        %v2872 = vadd.f32 0.0, %v2871
        %v2873 = vpop.f32.mrb[0].mxu0
        %2874 = vmatprep.mubr.bf16.mxu0 0
        %2875 = vmatmul.mubr.bf16.gmra.mrb[0].mxu0 %v2785
        %v2876 = vpop.f32.mrb[0].mxu0
        %v2877 = vadd.f32 0.0, %v2876
        %v2878 = vpop.f32.mrb[0].mxu0
        %v2879 = vpop.f32.mrb[0].mxu0
        %v2880 = vadd.f32 0.0, %v2879
        %v2881 = vpop.f32.mrb[0].mxu0
        %2882 = vmatprep.mubr.bf16.mxu0 0
        %2883 = vmatmul.mubr.bf16.gmra.mrb[0].mxu0 %v2788
        %v2884 = vpop.f32.mrb[0].mxu0
        %v2885 = vadd.f32 0.0, %v2884
        %v2886 = vpop.f32.mrb[0].mxu0
        %v2887 = vpop.f32.mrb[0].mxu0
        %v2888 = vadd.f32 0.0, %v2887
        %v2889 = vpop.f32.mrb[0].mxu0
        %2890 = vmatprep.mubr.bf16.mxu0 0
        %2891 = vmatmul.mubr.bf16.gmra.mrb[0].mxu0 %v2791
        %v2892 = vpop.f32.mrb[0].mxu0
        %v2893 = vadd.f32 0.0, %v2892
        %v2894 = vpop.f32.mrb[0].mxu0
        %v2895 = vpop.f32.mrb[0].mxu0
        %v2896 = vadd.f32 0.0, %v2895
        %v2897 = vpop.f32.mrb[0].mxu0
        %2898 = vmatprep.mubr.bf16.mxu0 0
        %2899 = vmatmul.mubr.bf16.gmra.mrb[0].mxu0 %v2794
        %v2900 = vpop.f32.mrb[0].mxu0
        %v2901 = vadd.f32 0.0, %v2900
        %v2902 = vpop.f32.mrb[0].mxu0
        %v2903 = vpop.f32.mrb[0].mxu0
        %v2904 = vadd.f32 0.0, %v2903
        %v2905 = vpop.f32.mrb[0].mxu0
        %2906 = vmatprep.mubr.bf16.mxu0 0
        %2907 = vmatmul.mubr.bf16.gmra.mrb[0].mxu0 %v2797
        %v2908 = vpop.f32.mrb[0].mxu0
        %v2909 = vadd.f32 0.0, %v2908
        %v2910 = vpop.f32.mrb[0].mxu0
        %v2911 = vpop.f32.mrb[0].mxu0
        %v2912 = vadd.f32 0.0, %v2911
        %v2913 = vpop.f32.mrb[0].mxu0
        %2914 = vmatprep.mubr.bf16.mxu0 0
        %2915 = vmatmul.mubr.bf16.gmra.mrb[0].mxu0 %v2800
        %v2916 = vpop.f32.mrb[0].mxu0
        %v2917 = vadd.f32 0.0, %v2916
        %v2918 = vpop.f32.mrb[0].mxu0
        %v2919 = vpop.f32.mrb[0].mxu0
        %v2920 = vadd.f32 0.0, %v2919
        %v2921 = vpop.f32.mrb[0].mxu0
        %2922 = vmatprep.mubr.bf16.mxu0 0
        %2923 = vmatmul.mubr.bf16.gmra.mrb[0].mxu0 %v2803
        %v2924 = vpop.f32.mrb[0].mxu0
        %v2925 = vadd.f32 0.0, %v2924
        %v2926 = vpop.f32.mrb[0].mxu0
        %v2927 = vpop.f32.mrb[0].mxu0
        %v2928 = vadd.f32 0.0, %v2927
        %v2929 = vpop.f32.mrb[0].mxu0
        %2930 = vmatprep.mubr.bf16.mxu0 0
        %2931 = vmatmul.mubr.bf16.gmra.mrb[0].mxu0 %v2806
        %v2932 = vpop.f32.mrb[0].mxu0
        %v2933 = vadd.f32 0.0, %v2932
        %v2934 = vpop.f32.mrb[0].mxu0
        %v2935 = vpop.f32.mrb[0].mxu0
        %v2936 = vadd.f32 0.0, %v2935
        %v2937 = vpop.f32.mrb[0].mxu0
        %2938 = vmatprep.mubr.bf16.mxu0 0
        %2939 = vmatmul.mubr.bf16.gmra.mrb[0].mxu0 %v2809
        %v2940 = vpop.f32.mrb[0].mxu0
        %v2941 = vadd.f32 0.0, %v2940
        %v2942 = vpop.f32.mrb[0].mxu0
        %v2943 = vpop.f32.mrb[0].mxu0
        %v2944 = vadd.f32 0.0, %v2943
        %v2945 = vpop.f32.mrb[0].mxu0
        %2946 = vmatprep.mubr.bf16.mxu0 0
        %2947 = vmatmul.mubr.bf16.gmra.mrb[0].mxu0 %v2812
        %v2948 = vpop.f32.mrb[0].mxu0
        %v2949 = vadd.f32 0.0, %v2948
        %v2950 = vpop.f32.mrb[0].mxu0
        %v2951 = vpop.f32.mrb[0].mxu0
        %v2952 = vadd.f32 0.0, %v2951
        %v2953 = vpop.f32.mrb[0].mxu0
        %2954 = vmatprep.mubr.bf16.mxu0 0
        %2955 = vmatmul.mubr.bf16.gmra.mrb[0].mxu0 %v2815
        %v2956 = vpop.f32.mrb[0].mxu0
        %v2957 = vadd.f32 0.0, %v2956
        %v2958 = vpop.f32.mrb[0].mxu0
        %v2959 = vpop.f32.mrb[0].mxu0
        %v2960 = vadd.f32 0.0, %v2959
        %v2961 = vpop.f32.mrb[0].mxu0
        %2962 = vmatprep.mubr.bf16.mxu0 0
        %2963 = vmatmul.mubr.bf16.gmra.mrb[0].mxu0 %v2818
        %v2964 = vpop.f32.mrb[0].mxu0
        %v2965 = vadd.f32 0.0, %v2964
        %v2966 = vpop.f32.mrb[0].mxu0
        %v2967 = vpop.f32.mrb[0].mxu0
        %v2968 = vadd.f32 0.0, %v2967
        %v2969 = vpop.f32.mrb[0].mxu0
        %2970 = vmatprep.mubr.bf16.mxu0 0
        %2971 = vmatmul.mubr.bf16.gmra.mrb[0].mxu0 %v2821
        %v2972 = vpop.f32.mrb[0].mxu0
        %v2973 = vadd.f32 0.0, %v2972
        %v2974 = vpop.f32.mrb[0].mxu0
        %v2975 = vpop.f32.mrb[0].mxu0
        %v2976 = vadd.f32 0.0, %v2975
        %v2977 = vpop.f32.mrb[0].mxu0
        %2978 = vmatprep.mubr.bf16.mxu0 0
        %2979 = vmatmul.mubr.bf16.gmra.mrb[0].mxu0 %v2824
        %v2980 = vpop.f32.mrb[0].mxu0
        %v2981 = vadd.f32 0.0, %v2980
        %v2982 = vpop.f32.mrb[0].mxu0
        %v2983 = vpop.f32.mrb[0].mxu0
        %v2984 = vadd.f32 0.0, %v2983
        %v2985 = vpop.f32.mrb[0].mxu0
        %2986 = vdwg.mxu0
        %v2988 = vsel %vm2568, %v1832, 0
        %v2991 = vsel %vm2568, %v1833, 0
        %v2994 = vsel %vm2568, %v1834, 0
        %v2997 = vsel %vm2568, %v1835, 0
        %v3000 = vsel %vm2568, %v1836, 0
        %v3003 = vsel %vm2568, %v1837, 0
        %v3006 = vsel %vm2568, %v1838, 0
        %v3009 = vsel %vm2568, %v1839, 0
        %v3012 = vsel %vm2568, %v1840, 0
        %v3015 = vsel %vm2568, %v1841, 0
        %v3018 = vsel %vm2568, %v1842, 0
        %v3021 = vsel %vm2568, %v1843, 0
        %v3024 = vsel %vm2568, %v1844, 0
        %v3027 = vsel %vm2568, %v1845, 0
        %v3030 = vsel %vm2568, %v1846, 0
        %v3033 = vsel %vm2568, %v1847, 0
        %3035 = vmatprep.subr.bf16.mxu0 0
        %3036 = vmatpush1.bf16.msra.mxu0 %v2564
        %3037 = vmatprep.subr.bf16.mxu0 0
        %3038 = vmatpush1.bf16.msra.mxu0 %v2565
        %3039 = vmatprep.subr.bf16.mxu0 0
        %3040 = vmatpush1.bf16.msra.mxu0 0
        %3041 = vmatprep.subr.bf16.mxu0 0
        %3042 = vmatpush1.bf16.msra.mxu0 0
        %3043 = vmatprep.subr.bf16.mxu0 0
        %3044 = vmatpush1.bf16.msra.mxu0 0
        %3045 = vmatprep.subr.bf16.mxu0 0
        %3046 = vmatpush1.bf16.msra.mxu0 0
        %3047 = vmatprep.subr.bf16.mxu0 0
        %3048 = vmatpush1.bf16.msra.mxu0 0
        %3049 = vmatprep.subr.bf16.mxu0 0
        %3050 = vmatpush1.bf16.msra.mxu0 0
        %3051 = vmatprep.subr.bf16.mxu0 0
        %3052 = vmatpush1.bf16.msra.mxu0 0
        %3053 = vmatprep.subr.bf16.mxu0 0
        %3054 = vmatpush1.bf16.msra.mxu0 0
        %3055 = vmatprep.subr.bf16.mxu0 0
        %3056 = vmatpush1.bf16.msra.mxu0 0
        %3057 = vmatprep.subr.bf16.mxu0 0
        %3058 = vmatpush1.bf16.msra.mxu0 0
        %3059 = vmatprep.subr.bf16.mxu0 0
        %3060 = vmatpush1.bf16.msra.mxu0 0
        %3061 = vmatprep.subr.bf16.mxu0 0
        %3062 = vmatpush1.bf16.msra.mxu0 0
        %3063 = vmatprep.subr.bf16.mxu0 0
        %3064 = vmatpush1.bf16.msra.mxu0 0
        %3065 = vmatprep.subr.bf16.mxu0 0
        %3066 = vmatpush1.bf16.msra.mxu0 0
        %3067 = vmatprep.mubr.bf16.mxu0 0
        %3068 = vmatmul.mubr.bf16.gmra.mrb[0].mxu0 %v2988
        %v3069 = vpop.f32.mrb[0].mxu0
        %v3070 = vadd.f32 0.0, %v3069
        %v3071 = vpop.f32.mrb[0].mxu0
        %v3072 = vpop.f32.mrb[0].mxu0
        %v3073 = vadd.f32 0.0, %v3072
        %v3074 = vpop.f32.mrb[0].mxu0
        %3075 = vmatprep.mubr.bf16.mxu0 0
        %3076 = vmatmul.mubr.bf16.gmra.mrb[0].mxu0 %v2991
        %v3077 = vpop.f32.mrb[0].mxu0
        %v3078 = vadd.f32 0.0, %v3077
        %v3079 = vpop.f32.mrb[0].mxu0
        %v3080 = vpop.f32.mrb[0].mxu0
        %v3081 = vadd.f32 0.0, %v3080
        %v3082 = vpop.f32.mrb[0].mxu0
        %3083 = vmatprep.mubr.bf16.mxu0 0
        %3084 = vmatmul.mubr.bf16.gmra.mrb[0].mxu0 %v2994
        %v3085 = vpop.f32.mrb[0].mxu0
        %v3086 = vadd.f32 0.0, %v3085
        %v3087 = vpop.f32.mrb[0].mxu0
        %v3088 = vpop.f32.mrb[0].mxu0
        %v3089 = vadd.f32 0.0, %v3088
        %v3090 = vpop.f32.mrb[0].mxu0
        %3091 = vmatprep.mubr.bf16.mxu0 0
        %3092 = vmatmul.mubr.bf16.gmra.mrb[0].mxu0 %v2997
        %v3093 = vpop.f32.mrb[0].mxu0
        %v3094 = vadd.f32 0.0, %v3093
        %v3095 = vpop.f32.mrb[0].mxu0
        %v3096 = vpop.f32.mrb[0].mxu0
        %v3097 = vadd.f32 0.0, %v3096
        %v3098 = vpop.f32.mrb[0].mxu0
        %3099 = vmatprep.mubr.bf16.mxu0 0
        %3100 = vmatmul.mubr.bf16.gmra.mrb[0].mxu0 %v3000
        %v3101 = vpop.f32.mrb[0].mxu0
        %v3102 = vadd.f32 0.0, %v3101
        %v3103 = vpop.f32.mrb[0].mxu0
        %v3104 = vpop.f32.mrb[0].mxu0
        %v3105 = vadd.f32 0.0, %v3104
        %v3106 = vpop.f32.mrb[0].mxu0
        %3107 = vmatprep.mubr.bf16.mxu0 0
        %3108 = vmatmul.mubr.bf16.gmra.mrb[0].mxu0 %v3003
        %v3109 = vpop.f32.mrb[0].mxu0
        %v3110 = vadd.f32 0.0, %v3109
        %v3111 = vpop.f32.mrb[0].mxu0
        %v3112 = vpop.f32.mrb[0].mxu0
        %v3113 = vadd.f32 0.0, %v3112
        %v3114 = vpop.f32.mrb[0].mxu0
        %3115 = vmatprep.mubr.bf16.mxu0 0
        %3116 = vmatmul.mubr.bf16.gmra.mrb[0].mxu0 %v3006
        %v3117 = vpop.f32.mrb[0].mxu0
        %v3118 = vadd.f32 0.0, %v3117
        %v3119 = vpop.f32.mrb[0].mxu0
        %v3120 = vpop.f32.mrb[0].mxu0
        %v3121 = vadd.f32 0.0, %v3120
        %v3122 = vpop.f32.mrb[0].mxu0
        %3123 = vmatprep.mubr.bf16.mxu0 0
        %3124 = vmatmul.mubr.bf16.gmra.mrb[0].mxu0 %v3009
        %v3125 = vpop.f32.mrb[0].mxu0
        %v3126 = vadd.f32 0.0, %v3125
        %v3127 = vpop.f32.mrb[0].mxu0
        %v3128 = vpop.f32.mrb[0].mxu0
        %v3129 = vadd.f32 0.0, %v3128
        %v3130 = vpop.f32.mrb[0].mxu0
        %3131 = vmatprep.mubr.bf16.mxu0 0
        %3132 = vmatmul.mubr.bf16.gmra.mrb[0].mxu0 %v3012
        %v3133 = vpop.f32.mrb[0].mxu0
        %v3134 = vadd.f32 0.0, %v3133
        %v3135 = vpop.f32.mrb[0].mxu0
        %v3136 = vpop.f32.mrb[0].mxu0
        %v3137 = vadd.f32 0.0, %v3136
        %v3138 = vpop.f32.mrb[0].mxu0
        %3139 = vmatprep.mubr.bf16.mxu0 0
        %3140 = vmatmul.mubr.bf16.gmra.mrb[0].mxu0 %v3015
        %v3141 = vpop.f32.mrb[0].mxu0
        %v3142 = vadd.f32 0.0, %v3141
        %v3143 = vpop.f32.mrb[0].mxu0
        %v3144 = vpop.f32.mrb[0].mxu0
        %v3145 = vadd.f32 0.0, %v3144
        %v3146 = vpop.f32.mrb[0].mxu0
        %3147 = vmatprep.mubr.bf16.mxu0 0
        %3148 = vmatmul.mubr.bf16.gmra.mrb[0].mxu0 %v3018
        %v3149 = vpop.f32.mrb[0].mxu0
        %v3150 = vadd.f32 0.0, %v3149
        %v3151 = vpop.f32.mrb[0].mxu0
        %v3152 = vpop.f32.mrb[0].mxu0
        %v3153 = vadd.f32 0.0, %v3152
        %v3154 = vpop.f32.mrb[0].mxu0
        %3155 = vmatprep.mubr.bf16.mxu0 0
        %3156 = vmatmul.mubr.bf16.gmra.mrb[0].mxu0 %v3021
        %v3157 = vpop.f32.mrb[0].mxu0
        %v3158 = vadd.f32 0.0, %v3157
        %v3159 = vpop.f32.mrb[0].mxu0
        %v3160 = vpop.f32.mrb[0].mxu0
        %v3161 = vadd.f32 0.0, %v3160
        %v3162 = vpop.f32.mrb[0].mxu0
        %3163 = vmatprep.mubr.bf16.mxu0 0
        %3164 = vmatmul.mubr.bf16.gmra.mrb[0].mxu0 %v3024
        %v3165 = vpop.f32.mrb[0].mxu0
        %v3166 = vadd.f32 0.0, %v3165
        %v3167 = vpop.f32.mrb[0].mxu0
        %v3168 = vpop.f32.mrb[0].mxu0
        %v3169 = vadd.f32 0.0, %v3168
        %v3170 = vpop.f32.mrb[0].mxu0
        %3171 = vmatprep.mubr.bf16.mxu0 0
        %3172 = vmatmul.mubr.bf16.gmra.mrb[0].mxu0 %v3027
        %v3173 = vpop.f32.mrb[0].mxu0
        %v3174 = vadd.f32 0.0, %v3173
        %v3175 = vpop.f32.mrb[0].mxu0
        %v3176 = vpop.f32.mrb[0].mxu0
        %v3177 = vadd.f32 0.0, %v3176
        %v3178 = vpop.f32.mrb[0].mxu0
        %3179 = vmatprep.mubr.bf16.mxu0 0
        %3180 = vmatmul.mubr.bf16.gmra.mrb[0].mxu0 %v3030
        %v3181 = vpop.f32.mrb[0].mxu0
        %v3182 = vadd.f32 0.0, %v3181
        %v3183 = vpop.f32.mrb[0].mxu0
        %v3184 = vpop.f32.mrb[0].mxu0
        %v3185 = vadd.f32 0.0, %v3184
        %v3186 = vpop.f32.mrb[0].mxu0
        %3187 = vmatprep.mubr.bf16.mxu0 0
        %3188 = vmatmul.mubr.bf16.gmra.mrb[0].mxu0 %v3033
        %v3189 = vpop.f32.mrb[0].mxu0
        %v3190 = vadd.f32 0.0, %v3189
        %v3191 = vpop.f32.mrb[0].mxu0
        %v3192 = vpop.f32.mrb[0].mxu0
        %v3193 = vadd.f32 0.0, %v3192
        %v3194 = vpop.f32.mrb[0].mxu0
        %3195 = vdwg.mxu0
        %v3197 = vsel %vm2568, %v1848, 0
        %v3200 = vsel %vm2568, %v1849, 0
        %v3203 = vsel %vm2568, %v1850, 0
        %v3206 = vsel %vm2568, %v1851, 0
        %v3209 = vsel %vm2568, %v1852, 0
        %v3212 = vsel %vm2568, %v1853, 0
        %v3215 = vsel %vm2568, %v1854, 0
        %v3218 = vsel %vm2568, %v1855, 0
        %v3221 = vsel %vm2568, %v1856, 0
        %v3224 = vsel %vm2568, %v1857, 0
        %v3227 = vsel %vm2568, %v1858, 0
        %v3230 = vsel %vm2568, %v1859, 0
        %v3233 = vsel %vm2568, %v1860, 0
        %v3236 = vsel %vm2568, %v1861, 0
        %v3239 = vsel %vm2568, %v1862, 0
        %v3242 = vsel %vm2568, %v1863, 0
        %3244 = vmatprep.subr.bf16.mxu0 0
        %3245 = vmatpush1.bf16.msra.mxu0 %v2566
        %3246 = vmatprep.subr.bf16.mxu0 0
        %3247 = vmatpush1.bf16.msra.mxu0 %v2567
        %3248 = vmatprep.subr.bf16.mxu0 0
        %3249 = vmatpush1.bf16.msra.mxu0 0
        %3250 = vmatprep.subr.bf16.mxu0 0
        %3251 = vmatpush1.bf16.msra.mxu0 0
        %3252 = vmatprep.subr.bf16.mxu0 0
        %3253 = vmatpush1.bf16.msra.mxu0 0
        %3254 = vmatprep.subr.bf16.mxu0 0
        %3255 = vmatpush1.bf16.msra.mxu0 0
        %3256 = vmatprep.subr.bf16.mxu0 0
        %3257 = vmatpush1.bf16.msra.mxu0 0
        %3258 = vmatprep.subr.bf16.mxu0 0
        %3259 = vmatpush1.bf16.msra.mxu0 0
        %3260 = vmatprep.subr.bf16.mxu0 0
        %3261 = vmatpush1.bf16.msra.mxu0 0
        %3262 = vmatprep.subr.bf16.mxu0 0
        %3263 = vmatpush1.bf16.msra.mxu0 0
        %3264 = vmatprep.subr.bf16.mxu0 0
        %3265 = vmatpush1.bf16.msra.mxu0 0
        %3266 = vmatprep.subr.bf16.mxu0 0
        %3267 = vmatpush1.bf16.msra.mxu0 0
        %3268 = vmatprep.subr.bf16.mxu0 0
        %3269 = vmatpush1.bf16.msra.mxu0 0
        %3270 = vmatprep.subr.bf16.mxu0 0
        %3271 = vmatpush1.bf16.msra.mxu0 0
        %3272 = vmatprep.subr.bf16.mxu0 0
        %3273 = vmatpush1.bf16.msra.mxu0 0
        %3274 = vmatprep.subr.bf16.mxu0 0
        %3275 = vmatpush1.bf16.msra.mxu0 0
        %3276 = vmatprep.mubr.bf16.mxu0 0
        %3277 = vmatmul.mubr.bf16.gmra.mrb[0].mxu0 %v3197
        %v3278 = vpop.f32.mrb[0].mxu0
        %v3279 = vadd.f32 0.0, %v3278
        %v3280 = vpop.f32.mrb[0].mxu0
        %v3281 = vpop.f32.mrb[0].mxu0
        %v3282 = vadd.f32 0.0, %v3281
        %v3283 = vpop.f32.mrb[0].mxu0
        %3284 = vmatprep.mubr.bf16.mxu0 0
        %3285 = vmatmul.mubr.bf16.gmra.mrb[0].mxu0 %v3200
        %v3286 = vpop.f32.mrb[0].mxu0
        %v3287 = vadd.f32 0.0, %v3286
        %v3288 = vpop.f32.mrb[0].mxu0
        %v3289 = vpop.f32.mrb[0].mxu0
        %v3290 = vadd.f32 0.0, %v3289
        %v3291 = vpop.f32.mrb[0].mxu0
        %3292 = vmatprep.mubr.bf16.mxu0 0
        %3293 = vmatmul.mubr.bf16.gmra.mrb[0].mxu0 %v3203
        %v3294 = vpop.f32.mrb[0].mxu0
        %v3295 = vadd.f32 0.0, %v3294
        %v3296 = vpop.f32.mrb[0].mxu0
        %v3297 = vpop.f32.mrb[0].mxu0
        %v3298 = vadd.f32 0.0, %v3297
        %v3299 = vpop.f32.mrb[0].mxu0
        %3300 = vmatprep.mubr.bf16.mxu0 0
        %3301 = vmatmul.mubr.bf16.gmra.mrb[0].mxu0 %v3206
        %v3302 = vpop.f32.mrb[0].mxu0
        %v3303 = vadd.f32 0.0, %v3302
        %v3304 = vpop.f32.mrb[0].mxu0
        %v3305 = vpop.f32.mrb[0].mxu0
        %v3306 = vadd.f32 0.0, %v3305
        %v3307 = vpop.f32.mrb[0].mxu0
        %3308 = vmatprep.mubr.bf16.mxu0 0
        %3309 = vmatmul.mubr.bf16.gmra.mrb[0].mxu0 %v3209
        %v3310 = vpop.f32.mrb[0].mxu0
        %v3311 = vadd.f32 0.0, %v3310
        %v3312 = vpop.f32.mrb[0].mxu0
        %v3313 = vpop.f32.mrb[0].mxu0
        %v3314 = vadd.f32 0.0, %v3313
        %v3315 = vpop.f32.mrb[0].mxu0
        %3316 = vmatprep.mubr.bf16.mxu0 0
        %3317 = vmatmul.mubr.bf16.gmra.mrb[0].mxu0 %v3212
        %v3318 = vpop.f32.mrb[0].mxu0
        %v3319 = vadd.f32 0.0, %v3318
        %v3320 = vpop.f32.mrb[0].mxu0
        %v3321 = vpop.f32.mrb[0].mxu0
        %v3322 = vadd.f32 0.0, %v3321
        %v3323 = vpop.f32.mrb[0].mxu0
        %3324 = vmatprep.mubr.bf16.mxu0 0
        %3325 = vmatmul.mubr.bf16.gmra.mrb[0].mxu0 %v3215
        %v3326 = vpop.f32.mrb[0].mxu0
        %v3327 = vadd.f32 0.0, %v3326
        %v3328 = vpop.f32.mrb[0].mxu0
        %v3329 = vpop.f32.mrb[0].mxu0
        %v3330 = vadd.f32 0.0, %v3329
        %v3331 = vpop.f32.mrb[0].mxu0
        %3332 = vmatprep.mubr.bf16.mxu0 0
        %3333 = vmatmul.mubr.bf16.gmra.mrb[0].mxu0 %v3218
        %v3334 = vpop.f32.mrb[0].mxu0
        %v3335 = vadd.f32 0.0, %v3334
        %v3336 = vpop.f32.mrb[0].mxu0
        %v3337 = vpop.f32.mrb[0].mxu0
        %v3338 = vadd.f32 0.0, %v3337
        %v3339 = vpop.f32.mrb[0].mxu0
        %3340 = vmatprep.mubr.bf16.mxu0 0
        %3341 = vmatmul.mubr.bf16.gmra.mrb[0].mxu0 %v3221
        %v3342 = vpop.f32.mrb[0].mxu0
        %v3343 = vadd.f32 0.0, %v3342
        %v3344 = vpop.f32.mrb[0].mxu0
        %v3345 = vpop.f32.mrb[0].mxu0
        %v3346 = vadd.f32 0.0, %v3345
        %v3347 = vpop.f32.mrb[0].mxu0
        %3348 = vmatprep.mubr.bf16.mxu0 0
        %3349 = vmatmul.mubr.bf16.gmra.mrb[0].mxu0 %v3224
        %v3350 = vpop.f32.mrb[0].mxu0
        %v3351 = vadd.f32 0.0, %v3350
        %v3352 = vpop.f32.mrb[0].mxu0
        %v3353 = vpop.f32.mrb[0].mxu0
        %v3354 = vadd.f32 0.0, %v3353
        %v3355 = vpop.f32.mrb[0].mxu0
        %3356 = vmatprep.mubr.bf16.mxu0 0
        %3357 = vmatmul.mubr.bf16.gmra.mrb[0].mxu0 %v3227
        %v3358 = vpop.f32.mrb[0].mxu0
        %v3359 = vadd.f32 0.0, %v3358
        %v3360 = vpop.f32.mrb[0].mxu0
        %v3361 = vpop.f32.mrb[0].mxu0
        %v3362 = vadd.f32 0.0, %v3361
        %v3363 = vpop.f32.mrb[0].mxu0
        %3364 = vmatprep.mubr.bf16.mxu0 0
        %3365 = vmatmul.mubr.bf16.gmra.mrb[0].mxu0 %v3230
        %v3366 = vpop.f32.mrb[0].mxu0
        %v3367 = vadd.f32 0.0, %v3366
        %v3368 = vpop.f32.mrb[0].mxu0
        %v3369 = vpop.f32.mrb[0].mxu0
        %v3370 = vadd.f32 0.0, %v3369
        %v3371 = vpop.f32.mrb[0].mxu0
        %3372 = vmatprep.mubr.bf16.mxu0 0
        %3373 = vmatmul.mubr.bf16.gmra.mrb[0].mxu0 %v3233
        %v3374 = vpop.f32.mrb[0].mxu0
        %v3375 = vadd.f32 0.0, %v3374
        %v3376 = vpop.f32.mrb[0].mxu0
        %v3377 = vpop.f32.mrb[0].mxu0
        %v3378 = vadd.f32 0.0, %v3377
        %v3379 = vpop.f32.mrb[0].mxu0
        %3380 = vmatprep.mubr.bf16.mxu0 0
        %3381 = vmatmul.mubr.bf16.gmra.mrb[0].mxu0 %v3236
        %v3382 = vpop.f32.mrb[0].mxu0
        %v3383 = vadd.f32 0.0, %v3382
        %v3384 = vpop.f32.mrb[0].mxu0
        %v3385 = vpop.f32.mrb[0].mxu0
        %v3386 = vadd.f32 0.0, %v3385
        %v3387 = vpop.f32.mrb[0].mxu0
        %3388 = vmatprep.mubr.bf16.mxu0 0
        %3389 = vmatmul.mubr.bf16.gmra.mrb[0].mxu0 %v3239
        %v3390 = vpop.f32.mrb[0].mxu0
        %v3391 = vadd.f32 0.0, %v3390
        %v3392 = vpop.f32.mrb[0].mxu0
        %v3393 = vpop.f32.mrb[0].mxu0
        %v3394 = vadd.f32 0.0, %v3393
        %v3395 = vpop.f32.mrb[0].mxu0
        %3396 = vmatprep.mubr.bf16.mxu0 0
        %3397 = vmatmul.mubr.bf16.gmra.mrb[0].mxu0 %v3242
        %v3398 = vpop.f32.mrb[0].mxu0
        %v3399 = vadd.f32 0.0, %v3398
        %v3400 = vpop.f32.mrb[0].mxu0
        %v3401 = vpop.f32.mrb[0].mxu0
        %v3402 = vadd.f32 0.0, %v3401
        %v3403 = vpop.f32.mrb[0].mxu0
        %3404 = vdwg.mxu0
        %v3405 = vld [vmem:[%s680] sm:$0xf]
        %v3406 = vld [vmem:[%s680 + $0x4] sm:$0xf]
        %v3407 = vld [vmem:[%s680 + $0x8] sm:$0xf]
        %v3408 = vld [vmem:[%s680 + $0xc] sm:$0xf]
        %v3409 = vld [vmem:[%s680 + $0x10] sm:$0xf]
        %v3410 = vld [vmem:[%s680 + $0x14] sm:$0xf]
        %v3411 = vld [vmem:[%s680 + $0x18] sm:$0xf]
        %v3412 = vld [vmem:[%s680 + $0x1c] sm:$0xf]
        %v3413 = vld [vmem:[%s680 + $0x20] sm:$0xf]
        %v3414 = vld [vmem:[%s680 + $0x24] sm:$0xf]
        %v3415 = vld [vmem:[%s680 + $0x28] sm:$0xf]
        %v3416 = vld [vmem:[%s680 + $0x2c] sm:$0xf]
        %v3417 = vld [vmem:[%s680 + $0x30] sm:$0xf]
        %v3418 = vld [vmem:[%s680 + $0x34] sm:$0xf]
        %v3419 = vld [vmem:[%s680 + $0x38] sm:$0xf]
        %v3420 = vld [vmem:[%s680 + $0x3c] sm:$0xf]
        %v3421 = vunpack.c.l.bf16 %v3405
        %v3422 = vunpack.c.l.bf16 %v3406
        %v3423 = vunpack.c.l.bf16 %v3407
        %v3424 = vunpack.c.l.bf16 %v3408
        %v3425 = vunpack.c.l.bf16 %v3409
        %v3426 = vunpack.c.l.bf16 %v3410
        %v3427 = vunpack.c.l.bf16 %v3411
        %v3428 = vunpack.c.l.bf16 %v3412
        %v3429 = vunpack.c.l.bf16 %v3413
        %v3430 = vunpack.c.l.bf16 %v3414
        %v3431 = vunpack.c.l.bf16 %v3415
        %v3432 = vunpack.c.l.bf16 %v3416
        %v3433 = vunpack.c.l.bf16 %v3417
        %v3434 = vunpack.c.l.bf16 %v3418
        %v3435 = vunpack.c.l.bf16 %v3419
        %v3436 = vunpack.c.l.bf16 %v3420
        %v3437 = vld [vmem:[%s9] sm:$0xff]
        %v3438 = vld [vmem:[%s9 + $0x8] sm:$0xff]
        %v3439 = vld [vmem:[%s9 + $0x10] sm:$0xff]
        %v3440 = vld [vmem:[%s9 + $0x18] sm:$0xff]
        %v3441 = vld [vmem:[%s9 + $0x20] sm:$0xff]
        %v3442 = vld [vmem:[%s9 + $0x28] sm:$0xff]
        %v3443 = vld [vmem:[%s9 + $0x30] sm:$0xff]
        %v3444 = vld [vmem:[%s9 + $0x38] sm:$0xff]
        %v3445 = vld [vmem:[%s9 + $0x40] sm:$0xff]
        %v3446 = vld [vmem:[%s9 + $0x48] sm:$0xff]
        %v3447 = vld [vmem:[%s9 + $0x50] sm:$0xff]
        %v3448 = vld [vmem:[%s9 + $0x58] sm:$0xff]
        %v3449 = vld [vmem:[%s9 + $0x60] sm:$0xff]
        %v3450 = vld [vmem:[%s9 + $0x68] sm:$0xff]
        %v3451 = vld [vmem:[%s9 + $0x70] sm:$0xff]
        %v3452 = vld [vmem:[%s9 + $0x78] sm:$0xff]
        %v3453 = vld [vmem:[%s10] sm:$0xff]
        %v3454 = vld [vmem:[%s10 + $0x8] sm:$0xff]
        %v3455 = vld [vmem:[%s10 + $0x10] sm:$0xff]
        %v3456 = vld [vmem:[%s10 + $0x18] sm:$0xff]
        %v3457 = vld [vmem:[%s10 + $0x20] sm:$0xff]
        %v3458 = vld [vmem:[%s10 + $0x28] sm:$0xff]
        %v3459 = vld [vmem:[%s10 + $0x30] sm:$0xff]
        %v3460 = vld [vmem:[%s10 + $0x38] sm:$0xff]
        %v3461 = vld [vmem:[%s10 + $0x40] sm:$0xff]
        %v3462 = vld [vmem:[%s10 + $0x48] sm:$0xff]
        %v3463 = vld [vmem:[%s10 + $0x50] sm:$0xff]
        %v3464 = vld [vmem:[%s10 + $0x58] sm:$0xff]
        %v3465 = vld [vmem:[%s10 + $0x60] sm:$0xff]
        %v3466 = vld [vmem:[%s10 + $0x68] sm:$0xff]
        %v3467 = vld [vmem:[%s10 + $0x70] sm:$0xff]
        %v3468 = vld [vmem:[%s10 + $0x78] sm:$0xff]
        %v3469 = vsel %vm1976, %v3421, 0.0
        %v3470 = vsel %vm1976, %v3422, 0.0
        %v3471 = vadd.f32 %v3469, %v3470
        %v3472 = vsel %vm1976, %v3423, 0.0
        %v3473 = vadd.f32 %v3471, %v3472
        %v3474 = vsel %vm1976, %v3424, 0.0
        %v3475 = vadd.f32 %v3473, %v3474
        %v3476 = vsel %vm1976, %v3425, 0.0
        %v3477 = vadd.f32 %v3475, %v3476
        %v3478 = vsel %vm1976, %v3426, 0.0
        %v3479 = vadd.f32 %v3477, %v3478
        %v3480 = vsel %vm1976, %v3427, 0.0
        %v3481 = vadd.f32 %v3479, %v3480
        %v3482 = vsel %vm1976, %v3428, 0.0
        %v3483 = vadd.f32 %v3481, %v3482
        %v3484 = vsel %vm1976, %v3429, 0.0
        %v3485 = vadd.f32 %v3483, %v3484
        %v3486 = vsel %vm1976, %v3430, 0.0
        %v3487 = vadd.f32 %v3485, %v3486
        %v3488 = vsel %vm1976, %v3431, 0.0
        %v3489 = vadd.f32 %v3487, %v3488
        %v3490 = vsel %vm1976, %v3432, 0.0
        %v3491 = vadd.f32 %v3489, %v3490
        %v3492 = vsel %vm1976, %v3433, 0.0
        %v3493 = vadd.f32 %v3491, %v3492
        %v3494 = vsel %vm1976, %v3434, 0.0
        %v3495 = vadd.f32 %v3493, %v3494
        %v3496 = vsel %vm1976, %v3435, 0.0
        %v3497 = vadd.f32 %v3495, %v3496
        %v3498 = vsel %vm1976, %v3436, 0.0
        %v3499 = vadd.f32 %v3497, %v3498
        %v3500 = vrot.slane %v3499, 4
        %v3501 = vadd.f32 %v3499, %v3500
        %v3502 = vrot.slane %v3501, 2
        %v3503 = vadd.f32 %v3501, %v3502
        %v3504 = vrot.slane %v3503, 1
        %v3505 = vadd.f32 %v3503, %v3504
        %v3506 = vmul.f32 %v3505, %v884
        %v3507 = vsub.f32 %v3421, %v3506
        %v3508 = vsub.f32 %v3422, %v3506
        %v3509 = vsub.f32 %v3423, %v3506
        %v3510 = vsub.f32 %v3424, %v3506
        %v3511 = vsub.f32 %v3425, %v3506
        %v3512 = vsub.f32 %v3426, %v3506
        %v3513 = vsub.f32 %v3427, %v3506
        %v3514 = vsub.f32 %v3428, %v3506
        %v3515 = vsub.f32 %v3429, %v3506
        %v3516 = vsub.f32 %v3430, %v3506
        %v3517 = vsub.f32 %v3431, %v3506
        %v3518 = vsub.f32 %v3432, %v3506
        %v3519 = vsub.f32 %v3433, %v3506
        %v3520 = vsub.f32 %v3434, %v3506
        %v3521 = vsub.f32 %v3435, %v3506
        %v3522 = vsub.f32 %v3436, %v3506
        %v3523 = vmul.f32 %v3507, %v3507
        %v3524 = vmul.f32 %v3508, %v3508
        %v3525 = vmul.f32 %v3509, %v3509
        %v3526 = vmul.f32 %v3510, %v3510
        %v3527 = vmul.f32 %v3511, %v3511
        %v3528 = vmul.f32 %v3512, %v3512
        %v3529 = vmul.f32 %v3513, %v3513
        %v3530 = vmul.f32 %v3514, %v3514
        %v3531 = vmul.f32 %v3515, %v3515
        %v3532 = vmul.f32 %v3516, %v3516
        %v3533 = vmul.f32 %v3517, %v3517
        %v3534 = vmul.f32 %v3518, %v3518
        %v3535 = vmul.f32 %v3519, %v3519
        %v3536 = vmul.f32 %v3520, %v3520
        %v3537 = vmul.f32 %v3521, %v3521
        %v3538 = vmul.f32 %v3522, %v3522
        %v3539 = vsel %vm1976, %v3523, 0.0
        %v3540 = vsel %vm1976, %v3524, 0.0
        %v3541 = vadd.f32 %v3539, %v3540
        %v3542 = vsel %vm1976, %v3525, 0.0
        %v3543 = vadd.f32 %v3541, %v3542
        %v3544 = vsel %vm1976, %v3526, 0.0
        %v3545 = vadd.f32 %v3543, %v3544
        %v3546 = vsel %vm1976, %v3527, 0.0
        %v3547 = vadd.f32 %v3545, %v3546
        %v3548 = vsel %vm1976, %v3528, 0.0
        %v3549 = vadd.f32 %v3547, %v3548
        %v3550 = vsel %vm1976, %v3529, 0.0
        %v3551 = vadd.f32 %v3549, %v3550
        %v3552 = vsel %vm1976, %v3530, 0.0
        %v3553 = vadd.f32 %v3551, %v3552
        %v3554 = vsel %vm1976, %v3531, 0.0
        %v3555 = vadd.f32 %v3553, %v3554
        %v3556 = vsel %vm1976, %v3532, 0.0
        %v3557 = vadd.f32 %v3555, %v3556
        %v3558 = vsel %vm1976, %v3533, 0.0
        %v3559 = vadd.f32 %v3557, %v3558
        %v3560 = vsel %vm1976, %v3534, 0.0
        %v3561 = vadd.f32 %v3559, %v3560
        %v3562 = vsel %vm1976, %v3535, 0.0
        %v3563 = vadd.f32 %v3561, %v3562
        %v3564 = vsel %vm1976, %v3536, 0.0
        %v3565 = vadd.f32 %v3563, %v3564
        %v3566 = vsel %vm1976, %v3537, 0.0
        %v3567 = vadd.f32 %v3565, %v3566
        %v3568 = vsel %vm1976, %v3538, 0.0
        %v3569 = vadd.f32 %v3567, %v3568
        %v3570 = vrot.slane %v3569, 4
        %v3571 = vadd.f32 %v3569, %v3570
        %v3572 = vrot.slane %v3571, 2
        %v3573 = vadd.f32 %v3571, %v3572
        %v3574 = vrot.slane %v3573, 1
        %v3575 = vadd.f32 %v3573, %v3574
        %v3576 = vmul.f32 %v3575, %v884
        %v3577 = vadd.f32 %v3576, 1e-05
        %v3578 = vrsqrt.pop %v3577
        %v3579 = vmul.f32 %v3507, %v3578
        %v3580 = vmul.f32 %v3508, %v3578
        %v3581 = vmul.f32 %v3509, %v3578
        %v3582 = vmul.f32 %v3510, %v3578
        %v3583 = vmul.f32 %v3511, %v3578
        %v3584 = vmul.f32 %v3512, %v3578
        %v3585 = vmul.f32 %v3513, %v3578
        %v3586 = vmul.f32 %v3514, %v3578
        %v3587 = vmul.f32 %v3515, %v3578
        %v3588 = vmul.f32 %v3516, %v3578
        %v3589 = vmul.f32 %v3517, %v3578
        %v3590 = vmul.f32 %v3518, %v3578
        %v3591 = vmul.f32 %v3519, %v3578
        %v3592 = vmul.f32 %v3520, %v3578
        %v3593 = vmul.f32 %v3521, %v3578
        %v3594 = vmul.f32 %v3522, %v3578
        %3596 = vset.pattern.permute.xlu0 0
        %3597 = vperm.xlu0 %3596, %v3437
        %v3598 = vpop.permute.xlu0 %3597
        %3601 = vset.pattern.permute.xlu0 0
        %3602 = vperm.xlu0 %3601, %v3438
        %v3603 = vpop.permute.xlu0 %3602
        %3606 = vset.pattern.permute.xlu0 0
        %3607 = vperm.xlu0 %3606, %v3439
        %v3608 = vpop.permute.xlu0 %3607
        %3611 = vset.pattern.permute.xlu0 0
        %3612 = vperm.xlu0 %3611, %v3440
        %v3613 = vpop.permute.xlu0 %3612
        %3616 = vset.pattern.permute.xlu0 0
        %3617 = vperm.xlu0 %3616, %v3441
        %v3618 = vpop.permute.xlu0 %3617
        %3621 = vset.pattern.permute.xlu0 0
        %3622 = vperm.xlu0 %3621, %v3442
        %v3623 = vpop.permute.xlu0 %3622
        %3626 = vset.pattern.permute.xlu0 0
        %3627 = vperm.xlu0 %3626, %v3443
        %v3628 = vpop.permute.xlu0 %3627
        %3631 = vset.pattern.permute.xlu0 0
        %3632 = vperm.xlu0 %3631, %v3444
        %v3633 = vpop.permute.xlu0 %3632
        %3636 = vset.pattern.permute.xlu0 0
        %3637 = vperm.xlu0 %3636, %v3445
        %v3638 = vpop.permute.xlu0 %3637
        %3641 = vset.pattern.permute.xlu0 0
        %3642 = vperm.xlu0 %3641, %v3446
        %v3643 = vpop.permute.xlu0 %3642
        %3646 = vset.pattern.permute.xlu0 0
        %3647 = vperm.xlu0 %3646, %v3447
        %v3648 = vpop.permute.xlu0 %3647
        %3651 = vset.pattern.permute.xlu0 0
        %3652 = vperm.xlu0 %3651, %v3448
        %v3653 = vpop.permute.xlu0 %3652
        %3656 = vset.pattern.permute.xlu0 0
        %3657 = vperm.xlu0 %3656, %v3449
        %v3658 = vpop.permute.xlu0 %3657
        %3661 = vset.pattern.permute.xlu0 0
        %3662 = vperm.xlu0 %3661, %v3450
        %v3663 = vpop.permute.xlu0 %3662
        %3666 = vset.pattern.permute.xlu0 0
        %3667 = vperm.xlu0 %3666, %v3451
        %v3668 = vpop.permute.xlu0 %3667
        %3671 = vset.pattern.permute.xlu0 0
        %3672 = vperm.xlu0 %3671, %v3452
        %v3673 = vpop.permute.xlu0 %3672
        %v3675 = vmul.f32 %v3579, %v3598
        %v3676 = vmul.f32 %v3580, %v3603
        %v3677 = vmul.f32 %v3581, %v3608
        %v3678 = vmul.f32 %v3582, %v3613
        %v3679 = vmul.f32 %v3583, %v3618
        %v3680 = vmul.f32 %v3584, %v3623
        %v3681 = vmul.f32 %v3585, %v3628
        %v3682 = vmul.f32 %v3586, %v3633
        %v3683 = vmul.f32 %v3587, %v3638
        %v3684 = vmul.f32 %v3588, %v3643
        %v3685 = vmul.f32 %v3589, %v3648
        %v3686 = vmul.f32 %v3590, %v3653
        %v3687 = vmul.f32 %v3591, %v3658
        %v3688 = vmul.f32 %v3592, %v3663
        %v3689 = vmul.f32 %v3593, %v3668
        %v3690 = vmul.f32 %v3594, %v3673
        %3692 = vset.pattern.permute.xlu0 0
        %3693 = vperm.xlu0 %3692, %v3453
        %v3694 = vpop.permute.xlu0 %3693
        %3697 = vset.pattern.permute.xlu0 0
        %3698 = vperm.xlu0 %3697, %v3454
        %v3699 = vpop.permute.xlu0 %3698
        %3702 = vset.pattern.permute.xlu0 0
        %3703 = vperm.xlu0 %3702, %v3455
        %v3704 = vpop.permute.xlu0 %3703
        %3707 = vset.pattern.permute.xlu0 0
        %3708 = vperm.xlu0 %3707, %v3456
        %v3709 = vpop.permute.xlu0 %3708
        %3712 = vset.pattern.permute.xlu0 0
        %3713 = vperm.xlu0 %3712, %v3457
        %v3714 = vpop.permute.xlu0 %3713
        %3717 = vset.pattern.permute.xlu0 0
        %3718 = vperm.xlu0 %3717, %v3458
        %v3719 = vpop.permute.xlu0 %3718
        %3722 = vset.pattern.permute.xlu0 0
        %3723 = vperm.xlu0 %3722, %v3459
        %v3724 = vpop.permute.xlu0 %3723
        %3727 = vset.pattern.permute.xlu0 0
        %3728 = vperm.xlu0 %3727, %v3460
        %v3729 = vpop.permute.xlu0 %3728
        %3732 = vset.pattern.permute.xlu0 0
        %3733 = vperm.xlu0 %3732, %v3461
        %v3734 = vpop.permute.xlu0 %3733
        %3737 = vset.pattern.permute.xlu0 0
        %3738 = vperm.xlu0 %3737, %v3462
        %v3739 = vpop.permute.xlu0 %3738
        %3742 = vset.pattern.permute.xlu0 0
        %3743 = vperm.xlu0 %3742, %v3463
        %v3744 = vpop.permute.xlu0 %3743
        %3747 = vset.pattern.permute.xlu0 0
        %3748 = vperm.xlu0 %3747, %v3464
        %v3749 = vpop.permute.xlu0 %3748
        %3752 = vset.pattern.permute.xlu0 0
        %3753 = vperm.xlu0 %3752, %v3465
        %v3754 = vpop.permute.xlu0 %3753
        %3757 = vset.pattern.permute.xlu0 0
        %3758 = vperm.xlu0 %3757, %v3466
        %v3759 = vpop.permute.xlu0 %3758
        %3762 = vset.pattern.permute.xlu0 0
        %3763 = vperm.xlu0 %3762, %v3467
        %v3764 = vpop.permute.xlu0 %3763
        %3767 = vset.pattern.permute.xlu0 0
        %3768 = vperm.xlu0 %3767, %v3468
        %v3769 = vpop.permute.xlu0 %3768
        %v3771 = vadd.f32 %v3675, %v3694
        %v3772 = vadd.f32 %v3676, %v3699
        %v3773 = vadd.f32 %v3677, %v3704
        %v3774 = vadd.f32 %v3678, %v3709
        %v3775 = vadd.f32 %v3679, %v3714
        %v3776 = vadd.f32 %v3680, %v3719
        %v3777 = vadd.f32 %v3681, %v3724
        %v3778 = vadd.f32 %v3682, %v3729
        %v3779 = vadd.f32 %v3683, %v3734
        %v3780 = vadd.f32 %v3684, %v3739
        %v3781 = vadd.f32 %v3685, %v3744
        %v3782 = vadd.f32 %v3686, %v3749
        %v3783 = vadd.f32 %v3687, %v3754
        %v3784 = vadd.f32 %v3688, %v3759
        %v3785 = vadd.f32 %v3689, %v3764
        %v3786 = vadd.f32 %v3690, %v3769
        %v3787 = vld [vmem:[%s15] sm:$0xf]
        %v3788 = vld [vmem:[%s15 + $0x4] sm:$0xf]
        %v3789 = vld [vmem:[%s15 + $0x8] sm:$0xf]
        %v3790 = vld [vmem:[%s15 + $0xc] sm:$0xf]
        %v3791 = vld [vmem:[%s15 + $0x10] sm:$0xf]
        %v3792 = vld [vmem:[%s15 + $0x14] sm:$0xf]
        %v3793 = vld [vmem:[%s15 + $0x18] sm:$0xf]
        %v3794 = vld [vmem:[%s15 + $0x1c] sm:$0xf]
        %v3795 = vld [vmem:[%s15 + $0x20] sm:$0xf]
        %v3796 = vld [vmem:[%s15 + $0x24] sm:$0xf]
        %v3797 = vld [vmem:[%s15 + $0x28] sm:$0xf]
        %v3798 = vld [vmem:[%s15 + $0x2c] sm:$0xf]
        %v3799 = vld [vmem:[%s15 + $0x30] sm:$0xf]
        %v3800 = vld [vmem:[%s15 + $0x34] sm:$0xf]
        %v3801 = vld [vmem:[%s15 + $0x38] sm:$0xf]
        %v3802 = vld [vmem:[%s15 + $0x3c] sm:$0xf]
        %v3803 = vpack.c.bf16 %v3772, %v3771
        %v3804 = vpack.c.bf16 %v3774, %v3773
        %v3805 = vpack.c.bf16 %v3776, %v3775
        %v3806 = vpack.c.bf16 %v3778, %v3777
        %v3807 = vpack.c.bf16 %v3780, %v3779
        %v3808 = vpack.c.bf16 %v3782, %v3781
        %v3809 = vpack.c.bf16 %v3784, %v3783
        %v3810 = vpack.c.bf16 %v3786, %v3785
        %v3811 = vld [vmem:[%s16] sm:$0xff]
        %v3812 = vld [vmem:[%s16 + $0x8] sm:$0xff]
        %v3813 = vld [vmem:[%s16 + $0x10] sm:$0xff]
        %v3814 = vld [vmem:[%s16 + $0x18] sm:$0xff]
        %v3815 = vld [vmem:[%s16 + $0x20] sm:$0xff]
        %v3816 = vld [vmem:[%s16 + $0x28] sm:$0xff]
        %v3817 = vld [vmem:[%s16 + $0x30] sm:$0xff]
        %v3818 = vld [vmem:[%s16 + $0x38] sm:$0xff]
        %v3819 = vld [vmem:[%s16 + $0x40] sm:$0xff]
        %v3820 = vld [vmem:[%s16 + $0x48] sm:$0xff]
        %v3821 = vld [vmem:[%s16 + $0x50] sm:$0xff]
        %v3822 = vld [vmem:[%s16 + $0x58] sm:$0xff]
        %v3823 = vld [vmem:[%s16 + $0x60] sm:$0xff]
        %v3824 = vld [vmem:[%s16 + $0x68] sm:$0xff]
        %v3825 = vld [vmem:[%s16 + $0x70] sm:$0xff]
        %v3826 = vld [vmem:[%s16 + $0x78] sm:$0xff]
        %3828 = vset.pattern.permute.xlu0 0
        %3829 = vperm.xlu0 %3828, %v3811
        %v3830 = vpop.permute.xlu0 %3829
        %3833 = vset.pattern.permute.xlu0 0
        %3834 = vperm.xlu0 %3833, %v3812
        %v3835 = vpop.permute.xlu0 %3834
        %3838 = vset.pattern.permute.xlu0 0
        %3839 = vperm.xlu0 %3838, %v3813
        %v3840 = vpop.permute.xlu0 %3839
        %3843 = vset.pattern.permute.xlu0 0
        %3844 = vperm.xlu0 %3843, %v3814
        %v3845 = vpop.permute.xlu0 %3844
        %3848 = vset.pattern.permute.xlu0 0
        %3849 = vperm.xlu0 %3848, %v3815
        %v3850 = vpop.permute.xlu0 %3849
        %3853 = vset.pattern.permute.xlu0 0
        %3854 = vperm.xlu0 %3853, %v3816
        %v3855 = vpop.permute.xlu0 %3854
        %3858 = vset.pattern.permute.xlu0 0
        %3859 = vperm.xlu0 %3858, %v3817
        %v3860 = vpop.permute.xlu0 %3859
        %3863 = vset.pattern.permute.xlu0 0
        %3864 = vperm.xlu0 %3863, %v3818
        %v3865 = vpop.permute.xlu0 %3864
        %3868 = vset.pattern.permute.xlu0 0
        %3869 = vperm.xlu0 %3868, %v3819
        %v3870 = vpop.permute.xlu0 %3869
        %3873 = vset.pattern.permute.xlu0 0
        %3874 = vperm.xlu0 %3873, %v3820
        %v3875 = vpop.permute.xlu0 %3874
        %3878 = vset.pattern.permute.xlu0 0
        %3879 = vperm.xlu0 %3878, %v3821
        %v3880 = vpop.permute.xlu0 %3879
        %3883 = vset.pattern.permute.xlu0 0
        %3884 = vperm.xlu0 %3883, %v3822
        %v3885 = vpop.permute.xlu0 %3884
        %3888 = vset.pattern.permute.xlu0 0
        %3889 = vperm.xlu0 %3888, %v3823
        %v3890 = vpop.permute.xlu0 %3889
        %3893 = vset.pattern.permute.xlu0 0
        %3894 = vperm.xlu0 %3893, %v3824
        %v3895 = vpop.permute.xlu0 %3894
        %3898 = vset.pattern.permute.xlu0 0
        %3899 = vperm.xlu0 %3898, %v3825
        %v3900 = vpop.permute.xlu0 %3899
        %3903 = vset.pattern.permute.xlu0 0
        %3904 = vperm.xlu0 %3903, %v3826
        %v3905 = vpop.permute.xlu0 %3904
        %v3923 = vunpack.c.l.b16 %v3787
        %v3924 = vunpack.c.l.b16 %v3788
        %v3925 = vunpack.c.l.b16 %v3789
        %v3926 = vunpack.c.l.b16 %v3790
        %v3927 = vunpack.c.l.b16 %v3791
        %v3928 = vunpack.c.l.b16 %v3792
        %v3929 = vunpack.c.l.b16 %v3793
        %v3930 = vunpack.c.l.b16 %v3794
        %v3931 = vunpack.c.l.b16 %v3795
        %v3932 = vunpack.c.l.b16 %v3796
        %v3933 = vunpack.c.l.b16 %v3797
        %v3934 = vunpack.c.l.b16 %v3798
        %v3935 = vunpack.c.l.b16 %v3799
        %v3936 = vunpack.c.l.b16 %v3800
        %v3937 = vunpack.c.l.b16 %v3801
        %v3938 = vunpack.c.l.b16 %v3802
        %v3939 = vpack.c.b16 %v3924, %v3923
        %v3940 = vpack.c.b16 %v3926, %v3925
        %v3941 = vpack.c.b16 %v3928, %v3927
        %v3942 = vpack.c.b16 %v3930, %v3929
        %v3943 = vpack.c.b16 %v3932, %v3931
        %v3944 = vpack.c.b16 %v3934, %v3933
        %v3945 = vpack.c.b16 %v3936, %v3935
        %v3946 = vpack.c.b16 %v3938, %v3937
        %3955 = vmatprep.subr.bf16.mxu0 0
        %3956 = vmatpush1.bf16.msra.mxu0 %v3803
        %3957 = vmatprep.subr.bf16.mxu0 0
        %3958 = vmatpush1.bf16.msra.mxu0 %v3804
        %3959 = vmatprep.subr.bf16.mxu0 0
        %3960 = vmatpush1.bf16.msra.mxu0 %v3805
        %3961 = vmatprep.subr.bf16.mxu0 0
        %3962 = vmatpush1.bf16.msra.mxu0 %v3806
        %3963 = vmatprep.subr.bf16.mxu0 0
        %3964 = vmatpush1.bf16.msra.mxu0 %v3807
        %3965 = vmatprep.subr.bf16.mxu0 0
        %3966 = vmatpush1.bf16.msra.mxu0 %v3808
        %3967 = vmatprep.subr.bf16.mxu0 0
        %3968 = vmatpush1.bf16.msra.mxu0 %v3809
        %3969 = vmatprep.subr.bf16.mxu0 0
        %3970 = vmatpush1.bf16.msra.mxu0 %v3810
        %3971 = vmatprep.subr.bf16.mxu0 0
        %3972 = vmatpush1.bf16.msra.mxu0 0
        %3973 = vmatprep.subr.bf16.mxu0 0
        %3974 = vmatpush1.bf16.msra.mxu0 0
        %3975 = vmatprep.subr.bf16.mxu0 0
        %3976 = vmatpush1.bf16.msra.mxu0 0
        %3977 = vmatprep.subr.bf16.mxu0 0
        %3978 = vmatpush1.bf16.msra.mxu0 0
        %3979 = vmatprep.subr.bf16.mxu0 0
        %3980 = vmatpush1.bf16.msra.mxu0 0
        %3981 = vmatprep.subr.bf16.mxu0 0
        %3982 = vmatpush1.bf16.msra.mxu0 0
        %3983 = vmatprep.subr.bf16.mxu0 0
        %3984 = vmatpush1.bf16.msra.mxu0 0
        %3985 = vmatprep.subr.bf16.mxu0 0
        %3986 = vmatpush1.bf16.msra.mxu0 0
        %3987 = vmatprep.mubr.bf16.mxu0 0
        %3988 = vmatmul.mubr.bf16.gmra.mrb[0].mxu0 %v3939
        %v3989 = vpop.f32.mrb[0].mxu0
        %v3990 = vadd.f32 %v3830, %v3989
        %v3991 = vpop.f32.mrb[0].mxu0
        %v3992 = vpop.f32.mrb[0].mxu0
        %v3993 = vadd.f32 %v3835, %v3992
        %v3994 = vpop.f32.mrb[0].mxu0
        %3995 = vmatprep.mubr.bf16.mxu0 0
        %3996 = vmatmul.mubr.bf16.gmra.mrb[0].mxu0 %v3940
        %v3997 = vpop.f32.mrb[0].mxu0
        %v3998 = vadd.f32 %v3840, %v3997
        %v3999 = vpop.f32.mrb[0].mxu0
        %v4000 = vpop.f32.mrb[0].mxu0
        %v4001 = vadd.f32 %v3845, %v4000
        %v4002 = vpop.f32.mrb[0].mxu0
        %4003 = vmatprep.mubr.bf16.mxu0 0
        %4004 = vmatmul.mubr.bf16.gmra.mrb[0].mxu0 %v3941
        %v4005 = vpop.f32.mrb[0].mxu0
        %v4006 = vadd.f32 %v3850, %v4005
        %v4007 = vpop.f32.mrb[0].mxu0
        %v4008 = vpop.f32.mrb[0].mxu0
        %v4009 = vadd.f32 %v3855, %v4008
        %v4010 = vpop.f32.mrb[0].mxu0
        %4011 = vmatprep.mubr.bf16.mxu0 0
        %4012 = vmatmul.mubr.bf16.gmra.mrb[0].mxu0 %v3942
        %v4013 = vpop.f32.mrb[0].mxu0
        %v4014 = vadd.f32 %v3860, %v4013
        %v4015 = vpop.f32.mrb[0].mxu0
        %v4016 = vpop.f32.mrb[0].mxu0
        %v4017 = vadd.f32 %v3865, %v4016
        %v4018 = vpop.f32.mrb[0].mxu0
        %4019 = vmatprep.mubr.bf16.mxu0 0
        %4020 = vmatmul.mubr.bf16.gmra.mrb[0].mxu0 %v3943
        %v4021 = vpop.f32.mrb[0].mxu0
        %v4022 = vadd.f32 %v3870, %v4021
        %v4023 = vpop.f32.mrb[0].mxu0
        %v4024 = vpop.f32.mrb[0].mxu0
        %v4025 = vadd.f32 %v3875, %v4024
        %v4026 = vpop.f32.mrb[0].mxu0
        %4027 = vmatprep.mubr.bf16.mxu0 0
        %4028 = vmatmul.mubr.bf16.gmra.mrb[0].mxu0 %v3944
        %v4029 = vpop.f32.mrb[0].mxu0
        %v4030 = vadd.f32 %v3880, %v4029
        %v4031 = vpop.f32.mrb[0].mxu0
        %v4032 = vpop.f32.mrb[0].mxu0
        %v4033 = vadd.f32 %v3885, %v4032
        %v4034 = vpop.f32.mrb[0].mxu0
        %4035 = vmatprep.mubr.bf16.mxu0 0
        %4036 = vmatmul.mubr.bf16.gmra.mrb[0].mxu0 %v3945
        %v4037 = vpop.f32.mrb[0].mxu0
        %v4038 = vadd.f32 %v3890, %v4037
        %v4039 = vpop.f32.mrb[0].mxu0
        %v4040 = vpop.f32.mrb[0].mxu0
        %v4041 = vadd.f32 %v3895, %v4040
        %v4042 = vpop.f32.mrb[0].mxu0
        %4043 = vmatprep.mubr.bf16.mxu0 0
        %4044 = vmatmul.mubr.bf16.gmra.mrb[0].mxu0 %v3946
        %v4045 = vpop.f32.mrb[0].mxu0
        %v4046 = vadd.f32 %v3900, %v4045
        %v4047 = vpop.f32.mrb[0].mxu0
        %v4048 = vpop.f32.mrb[0].mxu0
        %v4049 = vadd.f32 %v3905, %v4048
        %v4050 = vpop.f32.mrb[0].mxu0
        %4051 = vdwg.mxu0
        %v4052 = vpack.c.bf16 %v3993, %v3990
        %v4053 = vpack.c.bf16 %v4001, %v3998
        %v4054 = vpack.c.bf16 %v4009, %v4006
        %v4055 = vpack.c.bf16 %v4017, %v4014
        %v4056 = vpack.c.bf16 %v4025, %v4022
        %v4057 = vpack.c.bf16 %v4033, %v4030
        %v4058 = vpack.c.bf16 %v4041, %v4038
        %v4059 = vpack.c.bf16 %v4049, %v4046
        %s4060 = scalar_lea.vmem %s670, 64
        %v4061 = vld [vmem:[%s4060] sm:$0xf]
        %v4062 = vld [vmem:[%s4060 + $0x4] sm:$0xf]
        %v4063 = vld [vmem:[%s4060 + $0x8] sm:$0xf]
        %v4064 = vld [vmem:[%s4060 + $0xc] sm:$0xf]
        %v4065 = vld [vmem:[%s4060 + $0x10] sm:$0xf]
        %v4066 = vld [vmem:[%s4060 + $0x14] sm:$0xf]
        %v4067 = vld [vmem:[%s4060 + $0x18] sm:$0xf]
        %v4068 = vld [vmem:[%s4060 + $0x1c] sm:$0xf]
        %v4069 = vld [vmem:[%s4060 + $0x20] sm:$0xf]
        %v4070 = vld [vmem:[%s4060 + $0x24] sm:$0xf]
        %v4071 = vld [vmem:[%s4060 + $0x28] sm:$0xf]
        %v4072 = vld [vmem:[%s4060 + $0x2c] sm:$0xf]
        %v4073 = vld [vmem:[%s4060 + $0x30] sm:$0xf]
        %v4074 = vld [vmem:[%s4060 + $0x34] sm:$0xf]
        %v4075 = vld [vmem:[%s4060 + $0x38] sm:$0xf]
        %v4076 = vld [vmem:[%s4060 + $0x3c] sm:$0xf]
        %v4077 = vunpack.c.l.bf16 %v4061
        %v4078 = vunpack.c.l.bf16 %v4062
        %v4079 = vunpack.c.l.bf16 %v4063
        %v4080 = vunpack.c.l.bf16 %v4064
        %v4081 = vunpack.c.l.bf16 %v4065
        %v4082 = vunpack.c.l.bf16 %v4066
        %v4083 = vunpack.c.l.bf16 %v4067
        %v4084 = vunpack.c.l.bf16 %v4068
        %v4085 = vunpack.c.l.bf16 %v4069
        %v4086 = vunpack.c.l.bf16 %v4070
        %v4087 = vunpack.c.l.bf16 %v4071
        %v4088 = vunpack.c.l.bf16 %v4072
        %v4089 = vunpack.c.l.bf16 %v4073
        %v4090 = vunpack.c.l.bf16 %v4074
        %v4091 = vunpack.c.l.bf16 %v4075
        %v4092 = vunpack.c.l.bf16 %v4076
        %s4093 = scalar_lea.vmem %s675, 64
        %v4094 = vld [vmem:[%s4093] sm:$0xf]
        %v4095 = vld [vmem:[%s4093 + $0x4] sm:$0xf]
        %v4096 = vld [vmem:[%s4093 + $0x8] sm:$0xf]
        %v4097 = vld [vmem:[%s4093 + $0xc] sm:$0xf]
        %v4098 = vld [vmem:[%s4093 + $0x10] sm:$0xf]
        %v4099 = vld [vmem:[%s4093 + $0x14] sm:$0xf]
        %v4100 = vld [vmem:[%s4093 + $0x18] sm:$0xf]
        %v4101 = vld [vmem:[%s4093 + $0x1c] sm:$0xf]
        %v4102 = vld [vmem:[%s4093 + $0x20] sm:$0xf]
        %v4103 = vld [vmem:[%s4093 + $0x24] sm:$0xf]
        %v4104 = vld [vmem:[%s4093 + $0x28] sm:$0xf]
        %v4105 = vld [vmem:[%s4093 + $0x2c] sm:$0xf]
        %v4106 = vld [vmem:[%s4093 + $0x30] sm:$0xf]
        %v4107 = vld [vmem:[%s4093 + $0x34] sm:$0xf]
        %v4108 = vld [vmem:[%s4093 + $0x38] sm:$0xf]
        %v4109 = vld [vmem:[%s4093 + $0x3c] sm:$0xf]
        %v4110 = vunpack.c.l.bf16 %v4094
        %v4111 = vunpack.c.l.bf16 %v4095
        %v4112 = vunpack.c.l.bf16 %v4096
        %v4113 = vunpack.c.l.bf16 %v4097
        %v4114 = vunpack.c.l.bf16 %v4098
        %v4115 = vunpack.c.l.bf16 %v4099
        %v4116 = vunpack.c.l.bf16 %v4100
        %v4117 = vunpack.c.l.bf16 %v4101
        %v4118 = vunpack.c.l.bf16 %v4102
        %v4119 = vunpack.c.l.bf16 %v4103
        %v4120 = vunpack.c.l.bf16 %v4104
        %v4121 = vunpack.c.l.bf16 %v4105
        %v4122 = vunpack.c.l.bf16 %v4106
        %v4123 = vunpack.c.l.bf16 %v4107
        %v4124 = vunpack.c.l.bf16 %v4108
        %v4125 = vunpack.c.l.bf16 %v4109
        %v4126 = vadd.f32 %v4077, %v4110
        %v4127 = vadd.f32 %v4078, %v4111
        %v4128 = vadd.f32 %v4079, %v4112
        %v4129 = vadd.f32 %v4080, %v4113
        %v4130 = vadd.f32 %v4081, %v4114
        %v4131 = vadd.f32 %v4082, %v4115
        %v4132 = vadd.f32 %v4083, %v4116
        %v4133 = vadd.f32 %v4084, %v4117
        %v4134 = vadd.f32 %v4085, %v4118
        %v4135 = vadd.f32 %v4086, %v4119
        %v4136 = vadd.f32 %v4087, %v4120
        %v4137 = vadd.f32 %v4088, %v4121
        %v4138 = vadd.f32 %v4089, %v4122
        %v4139 = vadd.f32 %v4090, %v4123
        %v4140 = vadd.f32 %v4091, %v4124
        %v4141 = vadd.f32 %v4092, %v4125
        %v4142 = vld [vmem:[%s7] sm:$0xff]
        %v4143 = vld [vmem:[%s7 + $0x8] sm:$0xff]
        %v4144 = vld [vmem:[%s7 + $0x10] sm:$0xff]
        %v4145 = vld [vmem:[%s7 + $0x18] sm:$0xff]
        %v4146 = vld [vmem:[%s7 + $0x20] sm:$0xff]
        %v4147 = vld [vmem:[%s7 + $0x28] sm:$0xff]
        %v4148 = vld [vmem:[%s7 + $0x30] sm:$0xff]
        %v4149 = vld [vmem:[%s7 + $0x38] sm:$0xff]
        %v4150 = vld [vmem:[%s7 + $0x40] sm:$0xff]
        %v4151 = vld [vmem:[%s7 + $0x48] sm:$0xff]
        %v4152 = vld [vmem:[%s7 + $0x50] sm:$0xff]
        %v4153 = vld [vmem:[%s7 + $0x58] sm:$0xff]
        %v4154 = vld [vmem:[%s7 + $0x60] sm:$0xff]
        %v4155 = vld [vmem:[%s7 + $0x68] sm:$0xff]
        %v4156 = vld [vmem:[%s7 + $0x70] sm:$0xff]
        %v4157 = vld [vmem:[%s7 + $0x78] sm:$0xff]
        %v4158 = vld [vmem:[%s8] sm:$0xff]
        %v4159 = vld [vmem:[%s8 + $0x8] sm:$0xff]
        %v4160 = vld [vmem:[%s8 + $0x10] sm:$0xff]
        %v4161 = vld [vmem:[%s8 + $0x18] sm:$0xff]
        %v4162 = vld [vmem:[%s8 + $0x20] sm:$0xff]
        %v4163 = vld [vmem:[%s8 + $0x28] sm:$0xff]
        %v4164 = vld [vmem:[%s8 + $0x30] sm:$0xff]
        %v4165 = vld [vmem:[%s8 + $0x38] sm:$0xff]
        %v4166 = vld [vmem:[%s8 + $0x40] sm:$0xff]
        %v4167 = vld [vmem:[%s8 + $0x48] sm:$0xff]
        %v4168 = vld [vmem:[%s8 + $0x50] sm:$0xff]
        %v4169 = vld [vmem:[%s8 + $0x58] sm:$0xff]
        %v4170 = vld [vmem:[%s8 + $0x60] sm:$0xff]
        %v4171 = vld [vmem:[%s8 + $0x68] sm:$0xff]
        %v4172 = vld [vmem:[%s8 + $0x70] sm:$0xff]
        %v4173 = vld [vmem:[%s8 + $0x78] sm:$0xff]
        %v4174 = vsel %vm1976, %v4126, 0.0
        %v4175 = vsel %vm1976, %v4127, 0.0
        %v4176 = vadd.f32 %v4174, %v4175
        %v4177 = vsel %vm1976, %v4128, 0.0
        %v4178 = vadd.f32 %v4176, %v4177
        %v4179 = vsel %vm1976, %v4129, 0.0
        %v4180 = vadd.f32 %v4178, %v4179
        %v4181 = vsel %vm1976, %v4130, 0.0
        %v4182 = vadd.f32 %v4180, %v4181
        %v4183 = vsel %vm1976, %v4131, 0.0
        %v4184 = vadd.f32 %v4182, %v4183
        %v4185 = vsel %vm1976, %v4132, 0.0
        %v4186 = vadd.f32 %v4184, %v4185
        %v4187 = vsel %vm1976, %v4133, 0.0
        %v4188 = vadd.f32 %v4186, %v4187
        %v4189 = vsel %vm1976, %v4134, 0.0
        %v4190 = vadd.f32 %v4188, %v4189
        %v4191 = vsel %vm1976, %v4135, 0.0
        %v4192 = vadd.f32 %v4190, %v4191
        %v4193 = vsel %vm1976, %v4136, 0.0
        %v4194 = vadd.f32 %v4192, %v4193
        %v4195 = vsel %vm1976, %v4137, 0.0
        %v4196 = vadd.f32 %v4194, %v4195
        %v4197 = vsel %vm1976, %v4138, 0.0
        %v4198 = vadd.f32 %v4196, %v4197
        %v4199 = vsel %vm1976, %v4139, 0.0
        %v4200 = vadd.f32 %v4198, %v4199
        %v4201 = vsel %vm1976, %v4140, 0.0
        %v4202 = vadd.f32 %v4200, %v4201
        %v4203 = vsel %vm1976, %v4141, 0.0
        %v4204 = vadd.f32 %v4202, %v4203
        %v4205 = vrot.slane %v4204, 4
        %v4206 = vadd.f32 %v4204, %v4205
        %v4207 = vrot.slane %v4206, 2
        %v4208 = vadd.f32 %v4206, %v4207
        %v4209 = vrot.slane %v4208, 1
        %v4210 = vadd.f32 %v4208, %v4209
        %v4211 = vmul.f32 %v4210, %v884
        %v4212 = vsub.f32 %v4126, %v4211
        %v4213 = vsub.f32 %v4127, %v4211
        %v4214 = vsub.f32 %v4128, %v4211
        %v4215 = vsub.f32 %v4129, %v4211
        %v4216 = vsub.f32 %v4130, %v4211
        %v4217 = vsub.f32 %v4131, %v4211
        %v4218 = vsub.f32 %v4132, %v4211
        %v4219 = vsub.f32 %v4133, %v4211
        %v4220 = vsub.f32 %v4134, %v4211
        %v4221 = vsub.f32 %v4135, %v4211
        %v4222 = vsub.f32 %v4136, %v4211
        %v4223 = vsub.f32 %v4137, %v4211
        %v4224 = vsub.f32 %v4138, %v4211
        %v4225 = vsub.f32 %v4139, %v4211
        %v4226 = vsub.f32 %v4140, %v4211
        %v4227 = vsub.f32 %v4141, %v4211
        %v4228 = vmul.f32 %v4212, %v4212
        %v4229 = vmul.f32 %v4213, %v4213
        %v4230 = vmul.f32 %v4214, %v4214
        %v4231 = vmul.f32 %v4215, %v4215
        %v4232 = vmul.f32 %v4216, %v4216
        %v4233 = vmul.f32 %v4217, %v4217
        %v4234 = vmul.f32 %v4218, %v4218
        %v4235 = vmul.f32 %v4219, %v4219
        %v4236 = vmul.f32 %v4220, %v4220
        %v4237 = vmul.f32 %v4221, %v4221
        %v4238 = vmul.f32 %v4222, %v4222
        %v4239 = vmul.f32 %v4223, %v4223
        %v4240 = vmul.f32 %v4224, %v4224
        %v4241 = vmul.f32 %v4225, %v4225
        %v4242 = vmul.f32 %v4226, %v4226
        %v4243 = vmul.f32 %v4227, %v4227
        %v4244 = vsel %vm1976, %v4228, 0.0
        %v4245 = vsel %vm1976, %v4229, 0.0
        %v4246 = vadd.f32 %v4244, %v4245
        %v4247 = vsel %vm1976, %v4230, 0.0
        %v4248 = vadd.f32 %v4246, %v4247
        %v4249 = vsel %vm1976, %v4231, 0.0
        %v4250 = vadd.f32 %v4248, %v4249
        %v4251 = vsel %vm1976, %v4232, 0.0
        %v4252 = vadd.f32 %v4250, %v4251
        %v4253 = vsel %vm1976, %v4233, 0.0
        %v4254 = vadd.f32 %v4252, %v4253
        %v4255 = vsel %vm1976, %v4234, 0.0
        %v4256 = vadd.f32 %v4254, %v4255
        %v4257 = vsel %vm1976, %v4235, 0.0
        %v4258 = vadd.f32 %v4256, %v4257
        %v4259 = vsel %vm1976, %v4236, 0.0
        %v4260 = vadd.f32 %v4258, %v4259
        %v4261 = vsel %vm1976, %v4237, 0.0
        %v4262 = vadd.f32 %v4260, %v4261
        %v4263 = vsel %vm1976, %v4238, 0.0
        %v4264 = vadd.f32 %v4262, %v4263
        %v4265 = vsel %vm1976, %v4239, 0.0
        %v4266 = vadd.f32 %v4264, %v4265
        %v4267 = vsel %vm1976, %v4240, 0.0
        %v4268 = vadd.f32 %v4266, %v4267
        %v4269 = vsel %vm1976, %v4241, 0.0
        %v4270 = vadd.f32 %v4268, %v4269
        %v4271 = vsel %vm1976, %v4242, 0.0
        %v4272 = vadd.f32 %v4270, %v4271
        %v4273 = vsel %vm1976, %v4243, 0.0
        %v4274 = vadd.f32 %v4272, %v4273
        %v4275 = vrot.slane %v4274, 4
        %v4276 = vadd.f32 %v4274, %v4275
        %v4277 = vrot.slane %v4276, 2
        %v4278 = vadd.f32 %v4276, %v4277
        %v4279 = vrot.slane %v4278, 1
        %v4280 = vadd.f32 %v4278, %v4279
        %v4281 = vmul.f32 %v4280, %v884
        %v4282 = vadd.f32 %v4281, 1e-05
        %v4283 = vrsqrt.pop %v4282
        %v4284 = vmul.f32 %v4212, %v4283
        %v4285 = vmul.f32 %v4213, %v4283
        %v4286 = vmul.f32 %v4214, %v4283
        %v4287 = vmul.f32 %v4215, %v4283
        %v4288 = vmul.f32 %v4216, %v4283
        %v4289 = vmul.f32 %v4217, %v4283
        %v4290 = vmul.f32 %v4218, %v4283
        %v4291 = vmul.f32 %v4219, %v4283
        %v4292 = vmul.f32 %v4220, %v4283
        %v4293 = vmul.f32 %v4221, %v4283
        %v4294 = vmul.f32 %v4222, %v4283
        %v4295 = vmul.f32 %v4223, %v4283
        %v4296 = vmul.f32 %v4224, %v4283
        %v4297 = vmul.f32 %v4225, %v4283
        %v4298 = vmul.f32 %v4226, %v4283
        %v4299 = vmul.f32 %v4227, %v4283
        %4301 = vset.pattern.permute.xlu0 0
        %4302 = vperm.xlu0 %4301, %v4142
        %v4303 = vpop.permute.xlu0 %4302
        %4306 = vset.pattern.permute.xlu0 0
        %4307 = vperm.xlu0 %4306, %v4143
        %v4308 = vpop.permute.xlu0 %4307
        %4311 = vset.pattern.permute.xlu0 0
        %4312 = vperm.xlu0 %4311, %v4144
        %v4313 = vpop.permute.xlu0 %4312
        %4316 = vset.pattern.permute.xlu0 0
        %4317 = vperm.xlu0 %4316, %v4145
        %v4318 = vpop.permute.xlu0 %4317
        %4321 = vset.pattern.permute.xlu0 0
        %4322 = vperm.xlu0 %4321, %v4146
        %v4323 = vpop.permute.xlu0 %4322
        %4326 = vset.pattern.permute.xlu0 0
        %4327 = vperm.xlu0 %4326, %v4147
        %v4328 = vpop.permute.xlu0 %4327
        %4331 = vset.pattern.permute.xlu0 0
        %4332 = vperm.xlu0 %4331, %v4148
        %v4333 = vpop.permute.xlu0 %4332
        %4336 = vset.pattern.permute.xlu0 0
        %4337 = vperm.xlu0 %4336, %v4149
        %v4338 = vpop.permute.xlu0 %4337
        %4341 = vset.pattern.permute.xlu0 0
        %4342 = vperm.xlu0 %4341, %v4150
        %v4343 = vpop.permute.xlu0 %4342
        %4346 = vset.pattern.permute.xlu0 0
        %4347 = vperm.xlu0 %4346, %v4151
        %v4348 = vpop.permute.xlu0 %4347
        %4351 = vset.pattern.permute.xlu0 0
        %4352 = vperm.xlu0 %4351, %v4152
        %v4353 = vpop.permute.xlu0 %4352
        %4356 = vset.pattern.permute.xlu0 0
        %4357 = vperm.xlu0 %4356, %v4153
        %v4358 = vpop.permute.xlu0 %4357
        %4361 = vset.pattern.permute.xlu0 0
        %4362 = vperm.xlu0 %4361, %v4154
        %v4363 = vpop.permute.xlu0 %4362
        %4366 = vset.pattern.permute.xlu0 0
        %4367 = vperm.xlu0 %4366, %v4155
        %v4368 = vpop.permute.xlu0 %4367
        %4371 = vset.pattern.permute.xlu0 0
        %4372 = vperm.xlu0 %4371, %v4156
        %v4373 = vpop.permute.xlu0 %4372
        %4376 = vset.pattern.permute.xlu0 0
        %4377 = vperm.xlu0 %4376, %v4157
        %v4378 = vpop.permute.xlu0 %4377
        %v4380 = vmul.f32 %v4284, %v4303
        %v4381 = vmul.f32 %v4285, %v4308
        %v4382 = vmul.f32 %v4286, %v4313
        %v4383 = vmul.f32 %v4287, %v4318
        %v4384 = vmul.f32 %v4288, %v4323
        %v4385 = vmul.f32 %v4289, %v4328
        %v4386 = vmul.f32 %v4290, %v4333
        %v4387 = vmul.f32 %v4291, %v4338
        %v4388 = vmul.f32 %v4292, %v4343
        %v4389 = vmul.f32 %v4293, %v4348
        %v4390 = vmul.f32 %v4294, %v4353
        %v4391 = vmul.f32 %v4295, %v4358
        %v4392 = vmul.f32 %v4296, %v4363
        %v4393 = vmul.f32 %v4297, %v4368
        %v4394 = vmul.f32 %v4298, %v4373
        %v4395 = vmul.f32 %v4299, %v4378
        %4397 = vset.pattern.permute.xlu0 0
        %4398 = vperm.xlu0 %4397, %v4158
        %v4399 = vpop.permute.xlu0 %4398
        %4402 = vset.pattern.permute.xlu0 0
        %4403 = vperm.xlu0 %4402, %v4159
        %v4404 = vpop.permute.xlu0 %4403
        %4407 = vset.pattern.permute.xlu0 0
        %4408 = vperm.xlu0 %4407, %v4160
        %v4409 = vpop.permute.xlu0 %4408
        %4412 = vset.pattern.permute.xlu0 0
        %4413 = vperm.xlu0 %4412, %v4161
        %v4414 = vpop.permute.xlu0 %4413
        %4417 = vset.pattern.permute.xlu0 0
        %4418 = vperm.xlu0 %4417, %v4162
        %v4419 = vpop.permute.xlu0 %4418
        %4422 = vset.pattern.permute.xlu0 0
        %4423 = vperm.xlu0 %4422, %v4163
        %v4424 = vpop.permute.xlu0 %4423
        %4427 = vset.pattern.permute.xlu0 0
        %4428 = vperm.xlu0 %4427, %v4164
        %v4429 = vpop.permute.xlu0 %4428
        %4432 = vset.pattern.permute.xlu0 0
        %4433 = vperm.xlu0 %4432, %v4165
        %v4434 = vpop.permute.xlu0 %4433
        %4437 = vset.pattern.permute.xlu0 0
        %4438 = vperm.xlu0 %4437, %v4166
        %v4439 = vpop.permute.xlu0 %4438
        %4442 = vset.pattern.permute.xlu0 0
        %4443 = vperm.xlu0 %4442, %v4167
        %v4444 = vpop.permute.xlu0 %4443
        %4447 = vset.pattern.permute.xlu0 0
        %4448 = vperm.xlu0 %4447, %v4168
        %v4449 = vpop.permute.xlu0 %4448
        %4452 = vset.pattern.permute.xlu0 0
        %4453 = vperm.xlu0 %4452, %v4169
        %v4454 = vpop.permute.xlu0 %4453
        %4457 = vset.pattern.permute.xlu0 0
        %4458 = vperm.xlu0 %4457, %v4170
        %v4459 = vpop.permute.xlu0 %4458
        %4462 = vset.pattern.permute.xlu0 0
        %4463 = vperm.xlu0 %4462, %v4171
        %v4464 = vpop.permute.xlu0 %4463
        %4467 = vset.pattern.permute.xlu0 0
        %4468 = vperm.xlu0 %4467, %v4172
        %v4469 = vpop.permute.xlu0 %4468
        %4472 = vset.pattern.permute.xlu0 0
        %4473 = vperm.xlu0 %4472, %v4173
        %v4474 = vpop.permute.xlu0 %4473
        %v4476 = vadd.f32 %v4380, %v4399
        %v4477 = vadd.f32 %v4381, %v4404
        %v4478 = vadd.f32 %v4382, %v4409
        %v4479 = vadd.f32 %v4383, %v4414
        %v4480 = vadd.f32 %v4384, %v4419
        %v4481 = vadd.f32 %v4385, %v4424
        %v4482 = vadd.f32 %v4386, %v4429
        %v4483 = vadd.f32 %v4387, %v4434
        %v4484 = vadd.f32 %v4388, %v4439
        %v4485 = vadd.f32 %v4389, %v4444
        %v4486 = vadd.f32 %v4390, %v4449
        %v4487 = vadd.f32 %v4391, %v4454
        %v4488 = vadd.f32 %v4392, %v4459
        %v4489 = vadd.f32 %v4393, %v4464
        %v4490 = vadd.f32 %v4394, %v4469
        %v4491 = vadd.f32 %v4395, %v4474
        %v4492 = vld [vmem:[%s13] sm:$0xf]
        %v4493 = vld [vmem:[%s13 + $0x4] sm:$0xf]
        %v4494 = vld [vmem:[%s13 + $0x8] sm:$0xf]
        %v4495 = vld [vmem:[%s13 + $0xc] sm:$0xf]
        %v4496 = vld [vmem:[%s13 + $0x10] sm:$0xf]
        %v4497 = vld [vmem:[%s13 + $0x14] sm:$0xf]
        %v4498 = vld [vmem:[%s13 + $0x18] sm:$0xf]
        %v4499 = vld [vmem:[%s13 + $0x1c] sm:$0xf]
        %v4500 = vld [vmem:[%s13 + $0x20] sm:$0xf]
        %v4501 = vld [vmem:[%s13 + $0x24] sm:$0xf]
        %v4502 = vld [vmem:[%s13 + $0x28] sm:$0xf]
        %v4503 = vld [vmem:[%s13 + $0x2c] sm:$0xf]
        %v4504 = vld [vmem:[%s13 + $0x30] sm:$0xf]
        %v4505 = vld [vmem:[%s13 + $0x34] sm:$0xf]
        %v4506 = vld [vmem:[%s13 + $0x38] sm:$0xf]
        %v4507 = vld [vmem:[%s13 + $0x3c] sm:$0xf]
        %v4508 = vpack.c.bf16 %v4477, %v4476
        %v4509 = vpack.c.bf16 %v4479, %v4478
        %v4510 = vpack.c.bf16 %v4481, %v4480
        %v4511 = vpack.c.bf16 %v4483, %v4482
        %v4512 = vpack.c.bf16 %v4485, %v4484
        %v4513 = vpack.c.bf16 %v4487, %v4486
        %v4514 = vpack.c.bf16 %v4489, %v4488
        %v4515 = vpack.c.bf16 %v4491, %v4490
        %v4516 = vld [vmem:[%s14] sm:$0xff]
        %v4517 = vld [vmem:[%s14 + $0x8] sm:$0xff]
        %v4518 = vld [vmem:[%s14 + $0x10] sm:$0xff]
        %v4519 = vld [vmem:[%s14 + $0x18] sm:$0xff]
        %v4520 = vld [vmem:[%s14 + $0x20] sm:$0xff]
        %v4521 = vld [vmem:[%s14 + $0x28] sm:$0xff]
        %v4522 = vld [vmem:[%s14 + $0x30] sm:$0xff]
        %v4523 = vld [vmem:[%s14 + $0x38] sm:$0xff]
        %v4524 = vld [vmem:[%s14 + $0x40] sm:$0xff]
        %v4525 = vld [vmem:[%s14 + $0x48] sm:$0xff]
        %v4526 = vld [vmem:[%s14 + $0x50] sm:$0xff]
        %v4527 = vld [vmem:[%s14 + $0x58] sm:$0xff]
        %v4528 = vld [vmem:[%s14 + $0x60] sm:$0xff]
        %v4529 = vld [vmem:[%s14 + $0x68] sm:$0xff]
        %v4530 = vld [vmem:[%s14 + $0x70] sm:$0xff]
        %v4531 = vld [vmem:[%s14 + $0x78] sm:$0xff]
        %4533 = vset.pattern.permute.xlu0 0
        %4534 = vperm.xlu0 %4533, %v4516
        %v4535 = vpop.permute.xlu0 %4534
        %4538 = vset.pattern.permute.xlu0 0
        %4539 = vperm.xlu0 %4538, %v4517
        %v4540 = vpop.permute.xlu0 %4539
        %4543 = vset.pattern.permute.xlu0 0
        %4544 = vperm.xlu0 %4543, %v4518
        %v4545 = vpop.permute.xlu0 %4544
        %4548 = vset.pattern.permute.xlu0 0
        %4549 = vperm.xlu0 %4548, %v4519
        %v4550 = vpop.permute.xlu0 %4549
        %4553 = vset.pattern.permute.xlu0 0
        %4554 = vperm.xlu0 %4553, %v4520
        %v4555 = vpop.permute.xlu0 %4554
        %4558 = vset.pattern.permute.xlu0 0
        %4559 = vperm.xlu0 %4558, %v4521
        %v4560 = vpop.permute.xlu0 %4559
        %4563 = vset.pattern.permute.xlu0 0
        %4564 = vperm.xlu0 %4563, %v4522
        %v4565 = vpop.permute.xlu0 %4564
        %4568 = vset.pattern.permute.xlu0 0
        %4569 = vperm.xlu0 %4568, %v4523
        %v4570 = vpop.permute.xlu0 %4569
        %4573 = vset.pattern.permute.xlu0 0
        %4574 = vperm.xlu0 %4573, %v4524
        %v4575 = vpop.permute.xlu0 %4574
        %4578 = vset.pattern.permute.xlu0 0
        %4579 = vperm.xlu0 %4578, %v4525
        %v4580 = vpop.permute.xlu0 %4579
        %4583 = vset.pattern.permute.xlu0 0
        %4584 = vperm.xlu0 %4583, %v4526
        %v4585 = vpop.permute.xlu0 %4584
        %4588 = vset.pattern.permute.xlu0 0
        %4589 = vperm.xlu0 %4588, %v4527
        %v4590 = vpop.permute.xlu0 %4589
        %4593 = vset.pattern.permute.xlu0 0
        %4594 = vperm.xlu0 %4593, %v4528
        %v4595 = vpop.permute.xlu0 %4594
        %4598 = vset.pattern.permute.xlu0 0
        %4599 = vperm.xlu0 %4598, %v4529
        %v4600 = vpop.permute.xlu0 %4599
        %4603 = vset.pattern.permute.xlu0 0
        %4604 = vperm.xlu0 %4603, %v4530
        %v4605 = vpop.permute.xlu0 %4604
        %4608 = vset.pattern.permute.xlu0 0
        %4609 = vperm.xlu0 %4608, %v4531
        %v4610 = vpop.permute.xlu0 %4609
        %v4628 = vunpack.c.l.b16 %v4492
        %v4629 = vunpack.c.l.b16 %v4493
        %v4630 = vunpack.c.l.b16 %v4494
        %v4631 = vunpack.c.l.b16 %v4495
        %v4632 = vunpack.c.l.b16 %v4496
        %v4633 = vunpack.c.l.b16 %v4497
        %v4634 = vunpack.c.l.b16 %v4498
        %v4635 = vunpack.c.l.b16 %v4499
        %v4636 = vunpack.c.l.b16 %v4500
        %v4637 = vunpack.c.l.b16 %v4501
        %v4638 = vunpack.c.l.b16 %v4502
        %v4639 = vunpack.c.l.b16 %v4503
        %v4640 = vunpack.c.l.b16 %v4504
        %v4641 = vunpack.c.l.b16 %v4505
        %v4642 = vunpack.c.l.b16 %v4506
        %v4643 = vunpack.c.l.b16 %v4507
        %v4644 = vpack.c.b16 %v4629, %v4628
        %v4645 = vpack.c.b16 %v4631, %v4630
        %v4646 = vpack.c.b16 %v4633, %v4632
        %v4647 = vpack.c.b16 %v4635, %v4634
        %v4648 = vpack.c.b16 %v4637, %v4636
        %v4649 = vpack.c.b16 %v4639, %v4638
        %v4650 = vpack.c.b16 %v4641, %v4640
        %v4651 = vpack.c.b16 %v4643, %v4642
        %4660 = vmatprep.subr.bf16.mxu0 0
        %4661 = vmatpush1.bf16.msra.mxu0 %v4508
        %4662 = vmatprep.subr.bf16.mxu0 0
        %4663 = vmatpush1.bf16.msra.mxu0 %v4509
        %4664 = vmatprep.subr.bf16.mxu0 0
        %4665 = vmatpush1.bf16.msra.mxu0 %v4510
        %4666 = vmatprep.subr.bf16.mxu0 0
        %4667 = vmatpush1.bf16.msra.mxu0 %v4511
        %4668 = vmatprep.subr.bf16.mxu0 0
        %4669 = vmatpush1.bf16.msra.mxu0 %v4512
        %4670 = vmatprep.subr.bf16.mxu0 0
        %4671 = vmatpush1.bf16.msra.mxu0 %v4513
        %4672 = vmatprep.subr.bf16.mxu0 0
        %4673 = vmatpush1.bf16.msra.mxu0 %v4514
        %4674 = vmatprep.subr.bf16.mxu0 0
        %4675 = vmatpush1.bf16.msra.mxu0 %v4515
        %4676 = vmatprep.subr.bf16.mxu0 0
        %4677 = vmatpush1.bf16.msra.mxu0 0
        %4678 = vmatprep.subr.bf16.mxu0 0
        %4679 = vmatpush1.bf16.msra.mxu0 0
        %4680 = vmatprep.subr.bf16.mxu0 0
        %4681 = vmatpush1.bf16.msra.mxu0 0
        %4682 = vmatprep.subr.bf16.mxu0 0
        %4683 = vmatpush1.bf16.msra.mxu0 0
        %4684 = vmatprep.subr.bf16.mxu0 0
        %4685 = vmatpush1.bf16.msra.mxu0 0
        %4686 = vmatprep.subr.bf16.mxu0 0
        %4687 = vmatpush1.bf16.msra.mxu0 0
        %4688 = vmatprep.subr.bf16.mxu0 0
        %4689 = vmatpush1.bf16.msra.mxu0 0
        %4690 = vmatprep.subr.bf16.mxu0 0
        %4691 = vmatpush1.bf16.msra.mxu0 0
        %4692 = vmatprep.mubr.bf16.mxu0 0
        %4693 = vmatmul.mubr.bf16.gmra.mrb[0].mxu0 %v4644
        %v4694 = vpop.f32.mrb[0].mxu0
        %v4695 = vadd.f32 %v4535, %v4694
        %v4696 = vpop.f32.mrb[0].mxu0
        %v4697 = vpop.f32.mrb[0].mxu0
        %v4698 = vadd.f32 %v4540, %v4697
        %v4699 = vpop.f32.mrb[0].mxu0
        %4700 = vmatprep.mubr.bf16.mxu0 0
        %4701 = vmatmul.mubr.bf16.gmra.mrb[0].mxu0 %v4645
        %v4702 = vpop.f32.mrb[0].mxu0
        %v4703 = vadd.f32 %v4545, %v4702
        %v4704 = vpop.f32.mrb[0].mxu0
        %v4705 = vpop.f32.mrb[0].mxu0
        %v4706 = vadd.f32 %v4550, %v4705
        %v4707 = vpop.f32.mrb[0].mxu0
        %4708 = vmatprep.mubr.bf16.mxu0 0
        %4709 = vmatmul.mubr.bf16.gmra.mrb[0].mxu0 %v4646
        %v4710 = vpop.f32.mrb[0].mxu0
        %v4711 = vadd.f32 %v4555, %v4710
        %v4712 = vpop.f32.mrb[0].mxu0
        %v4713 = vpop.f32.mrb[0].mxu0
        %v4714 = vadd.f32 %v4560, %v4713
        %v4715 = vpop.f32.mrb[0].mxu0
        %4716 = vmatprep.mubr.bf16.mxu0 0
        %4717 = vmatmul.mubr.bf16.gmra.mrb[0].mxu0 %v4647
        %v4718 = vpop.f32.mrb[0].mxu0
        %v4719 = vadd.f32 %v4565, %v4718
        %v4720 = vpop.f32.mrb[0].mxu0
        %v4721 = vpop.f32.mrb[0].mxu0
        %v4722 = vadd.f32 %v4570, %v4721
        %v4723 = vpop.f32.mrb[0].mxu0
        %4724 = vmatprep.mubr.bf16.mxu0 0
        %4725 = vmatmul.mubr.bf16.gmra.mrb[0].mxu0 %v4648
        %v4726 = vpop.f32.mrb[0].mxu0
        %v4727 = vadd.f32 %v4575, %v4726
        %v4728 = vpop.f32.mrb[0].mxu0
        %v4729 = vpop.f32.mrb[0].mxu0
        %v4730 = vadd.f32 %v4580, %v4729
        %v4731 = vpop.f32.mrb[0].mxu0
        %4732 = vmatprep.mubr.bf16.mxu0 0
        %4733 = vmatmul.mubr.bf16.gmra.mrb[0].mxu0 %v4649
        %v4734 = vpop.f32.mrb[0].mxu0
        %v4735 = vadd.f32 %v4585, %v4734
        %v4736 = vpop.f32.mrb[0].mxu0
        %v4737 = vpop.f32.mrb[0].mxu0
        %v4738 = vadd.f32 %v4590, %v4737
        %v4739 = vpop.f32.mrb[0].mxu0
        %4740 = vmatprep.mubr.bf16.mxu0 0
        %4741 = vmatmul.mubr.bf16.gmra.mrb[0].mxu0 %v4650
        %v4742 = vpop.f32.mrb[0].mxu0
        %v4743 = vadd.f32 %v4595, %v4742
        %v4744 = vpop.f32.mrb[0].mxu0
        %v4745 = vpop.f32.mrb[0].mxu0
        %v4746 = vadd.f32 %v4600, %v4745
        %v4747 = vpop.f32.mrb[0].mxu0
        %4748 = vmatprep.mubr.bf16.mxu0 0
        %4749 = vmatmul.mubr.bf16.gmra.mrb[0].mxu0 %v4651
        %v4750 = vpop.f32.mrb[0].mxu0
        %v4751 = vadd.f32 %v4605, %v4750
        %v4752 = vpop.f32.mrb[0].mxu0
        %v4753 = vpop.f32.mrb[0].mxu0
        %v4754 = vadd.f32 %v4610, %v4753
        %v4755 = vpop.f32.mrb[0].mxu0
        %4756 = vdwg.mxu0
        %v4757 = vpack.c.bf16 %v4698, %v4695
        %v4758 = vpack.c.bf16 %v4706, %v4703
        %v4759 = vpack.c.bf16 %v4714, %v4711
        %v4760 = vpack.c.bf16 %v4722, %v4719
        %v4761 = vpack.c.bf16 %v4730, %v4727
        %v4762 = vpack.c.bf16 %v4738, %v4735
        %v4763 = vpack.c.bf16 %v4746, %v4743
        %v4764 = vpack.c.bf16 %v4754, %v4751
        %4765 = vmatprep.subr.bf16.mxu0 0
        %4766 = vmatpush1.bf16.msra.mxu0 %v4757
        %4767 = vmatprep.subr.bf16.mxu0 0
        %4768 = vmatpush1.bf16.msra.mxu0 %v4758
        %4769 = vmatprep.subr.bf16.mxu0 0
        %4770 = vmatpush1.bf16.msra.mxu0 0
        %4771 = vmatprep.subr.bf16.mxu0 0
        %4772 = vmatpush1.bf16.msra.mxu0 0
        %4773 = vmatprep.subr.bf16.mxu0 0
        %4774 = vmatpush1.bf16.msra.mxu0 0
        %4775 = vmatprep.subr.bf16.mxu0 0
        %4776 = vmatpush1.bf16.msra.mxu0 0
        %4777 = vmatprep.subr.bf16.mxu0 0
        %4778 = vmatpush1.bf16.msra.mxu0 0
        %4779 = vmatprep.subr.bf16.mxu0 0
        %4780 = vmatpush1.bf16.msra.mxu0 0
        %4781 = vmatprep.subr.bf16.mxu0 0
        %4782 = vmatpush1.bf16.msra.mxu0 0
        %4783 = vmatprep.subr.bf16.mxu0 0
        %4784 = vmatpush1.bf16.msra.mxu0 0
        %4785 = vmatprep.subr.bf16.mxu0 0
        %4786 = vmatpush1.bf16.msra.mxu0 0
        %4787 = vmatprep.subr.bf16.mxu0 0
        %4788 = vmatpush1.bf16.msra.mxu0 0
        %4789 = vmatprep.subr.bf16.mxu0 0
        %4790 = vmatpush1.bf16.msra.mxu0 0
        %4791 = vmatprep.subr.bf16.mxu0 0
        %4792 = vmatpush1.bf16.msra.mxu0 0
        %4793 = vmatprep.subr.bf16.mxu0 0
        %4794 = vmatpush1.bf16.msra.mxu0 0
        %4795 = vmatprep.subr.bf16.mxu0 0
        %4796 = vmatpush1.bf16.msra.mxu0 0
        %4797 = vmatprep.mubr.bf16.mxu0 0
        %4798 = vmatmul.mubr.bf16.gmra.mrb[0].mxu0 %v2570
        %v4799 = vpop.f32.mrb[0].mxu0
        %v4800 = vadd.f32 0.0, %v4799
        %v4801 = vpop.f32.mrb[0].mxu0
        %v4802 = vpop.f32.mrb[0].mxu0
        %v4803 = vadd.f32 0.0, %v4802
        %v4804 = vpop.f32.mrb[0].mxu0
        %4805 = vmatprep.mubr.bf16.mxu0 0
        %4806 = vmatmul.mubr.bf16.gmra.mrb[0].mxu0 %v2573
        %v4807 = vpop.f32.mrb[0].mxu0
        %v4808 = vadd.f32 0.0, %v4807
        %v4809 = vpop.f32.mrb[0].mxu0
        %v4810 = vpop.f32.mrb[0].mxu0
        %v4811 = vadd.f32 0.0, %v4810
        %v4812 = vpop.f32.mrb[0].mxu0
        %4813 = vmatprep.mubr.bf16.mxu0 0
        %4814 = vmatmul.mubr.bf16.gmra.mrb[0].mxu0 %v2576
        %v4815 = vpop.f32.mrb[0].mxu0
        %v4816 = vadd.f32 0.0, %v4815
        %v4817 = vpop.f32.mrb[0].mxu0
        %v4818 = vpop.f32.mrb[0].mxu0
        %v4819 = vadd.f32 0.0, %v4818
        %v4820 = vpop.f32.mrb[0].mxu0
        %4821 = vmatprep.mubr.bf16.mxu0 0
        %4822 = vmatmul.mubr.bf16.gmra.mrb[0].mxu0 %v2579
        %v4823 = vpop.f32.mrb[0].mxu0
        %v4824 = vadd.f32 0.0, %v4823
        %v4825 = vpop.f32.mrb[0].mxu0
        %v4826 = vpop.f32.mrb[0].mxu0
        %v4827 = vadd.f32 0.0, %v4826
        %v4828 = vpop.f32.mrb[0].mxu0
        %4829 = vmatprep.mubr.bf16.mxu0 0
        %4830 = vmatmul.mubr.bf16.gmra.mrb[0].mxu0 %v2582
        %v4831 = vpop.f32.mrb[0].mxu0
        %v4832 = vadd.f32 0.0, %v4831
        %v4833 = vpop.f32.mrb[0].mxu0
        %v4834 = vpop.f32.mrb[0].mxu0
        %v4835 = vadd.f32 0.0, %v4834
        %v4836 = vpop.f32.mrb[0].mxu0
        %4837 = vmatprep.mubr.bf16.mxu0 0
        %4838 = vmatmul.mubr.bf16.gmra.mrb[0].mxu0 %v2585
        %v4839 = vpop.f32.mrb[0].mxu0
        %v4840 = vadd.f32 0.0, %v4839
        %v4841 = vpop.f32.mrb[0].mxu0
        %v4842 = vpop.f32.mrb[0].mxu0
        %v4843 = vadd.f32 0.0, %v4842
        %v4844 = vpop.f32.mrb[0].mxu0
        %4845 = vmatprep.mubr.bf16.mxu0 0
        %4846 = vmatmul.mubr.bf16.gmra.mrb[0].mxu0 %v2588
        %v4847 = vpop.f32.mrb[0].mxu0
        %v4848 = vadd.f32 0.0, %v4847
        %v4849 = vpop.f32.mrb[0].mxu0
        %v4850 = vpop.f32.mrb[0].mxu0
        %v4851 = vadd.f32 0.0, %v4850
        %v4852 = vpop.f32.mrb[0].mxu0
        %4853 = vmatprep.mubr.bf16.mxu0 0
        %4854 = vmatmul.mubr.bf16.gmra.mrb[0].mxu0 %v2591
        %v4855 = vpop.f32.mrb[0].mxu0
        %v4856 = vadd.f32 0.0, %v4855
        %v4857 = vpop.f32.mrb[0].mxu0
        %v4858 = vpop.f32.mrb[0].mxu0
        %v4859 = vadd.f32 0.0, %v4858
        %v4860 = vpop.f32.mrb[0].mxu0
        %4861 = vmatprep.mubr.bf16.mxu0 0
        %4862 = vmatmul.mubr.bf16.gmra.mrb[0].mxu0 %v2594
        %v4863 = vpop.f32.mrb[0].mxu0
        %v4864 = vadd.f32 0.0, %v4863
        %v4865 = vpop.f32.mrb[0].mxu0
        %v4866 = vpop.f32.mrb[0].mxu0
        %v4867 = vadd.f32 0.0, %v4866
        %v4868 = vpop.f32.mrb[0].mxu0
        %4869 = vmatprep.mubr.bf16.mxu0 0
        %4870 = vmatmul.mubr.bf16.gmra.mrb[0].mxu0 %v2597
        %v4871 = vpop.f32.mrb[0].mxu0
        %v4872 = vadd.f32 0.0, %v4871
        %v4873 = vpop.f32.mrb[0].mxu0
        %v4874 = vpop.f32.mrb[0].mxu0
        %v4875 = vadd.f32 0.0, %v4874
        %v4876 = vpop.f32.mrb[0].mxu0
        %4877 = vmatprep.mubr.bf16.mxu0 0
        %4878 = vmatmul.mubr.bf16.gmra.mrb[0].mxu0 %v2600
        %v4879 = vpop.f32.mrb[0].mxu0
        %v4880 = vadd.f32 0.0, %v4879
        %v4881 = vpop.f32.mrb[0].mxu0
        %v4882 = vpop.f32.mrb[0].mxu0
        %v4883 = vadd.f32 0.0, %v4882
        %v4884 = vpop.f32.mrb[0].mxu0
        %4885 = vmatprep.mubr.bf16.mxu0 0
        %4886 = vmatmul.mubr.bf16.gmra.mrb[0].mxu0 %v2603
        %v4887 = vpop.f32.mrb[0].mxu0
        %v4888 = vadd.f32 0.0, %v4887
        %v4889 = vpop.f32.mrb[0].mxu0
        %v4890 = vpop.f32.mrb[0].mxu0
        %v4891 = vadd.f32 0.0, %v4890
        %v4892 = vpop.f32.mrb[0].mxu0
        %4893 = vmatprep.mubr.bf16.mxu0 0
        %4894 = vmatmul.mubr.bf16.gmra.mrb[0].mxu0 %v2606
        %v4895 = vpop.f32.mrb[0].mxu0
        %v4896 = vadd.f32 0.0, %v4895
        %v4897 = vpop.f32.mrb[0].mxu0
        %v4898 = vpop.f32.mrb[0].mxu0
        %v4899 = vadd.f32 0.0, %v4898
        %v4900 = vpop.f32.mrb[0].mxu0
        %4901 = vmatprep.mubr.bf16.mxu0 0
        %4902 = vmatmul.mubr.bf16.gmra.mrb[0].mxu0 %v2609
        %v4903 = vpop.f32.mrb[0].mxu0
        %v4904 = vadd.f32 0.0, %v4903
        %v4905 = vpop.f32.mrb[0].mxu0
        %v4906 = vpop.f32.mrb[0].mxu0
        %v4907 = vadd.f32 0.0, %v4906
        %v4908 = vpop.f32.mrb[0].mxu0
        %4909 = vmatprep.mubr.bf16.mxu0 0
        %4910 = vmatmul.mubr.bf16.gmra.mrb[0].mxu0 %v2612
        %v4911 = vpop.f32.mrb[0].mxu0
        %v4912 = vadd.f32 0.0, %v4911
        %v4913 = vpop.f32.mrb[0].mxu0
        %v4914 = vpop.f32.mrb[0].mxu0
        %v4915 = vadd.f32 0.0, %v4914
        %v4916 = vpop.f32.mrb[0].mxu0
        %4917 = vmatprep.mubr.bf16.mxu0 0
        %4918 = vmatmul.mubr.bf16.gmra.mrb[0].mxu0 %v2615
        %v4919 = vpop.f32.mrb[0].mxu0
        %v4920 = vadd.f32 0.0, %v4919
        %v4921 = vpop.f32.mrb[0].mxu0
        %v4922 = vpop.f32.mrb[0].mxu0
        %v4923 = vadd.f32 0.0, %v4922
        %v4924 = vpop.f32.mrb[0].mxu0
        %4925 = vdwg.mxu0
        %4926 = vmatprep.subr.bf16.mxu0 0
        %4927 = vmatpush1.bf16.msra.mxu0 %v4759
        %4928 = vmatprep.subr.bf16.mxu0 0
        %4929 = vmatpush1.bf16.msra.mxu0 %v4760
        %4930 = vmatprep.subr.bf16.mxu0 0
        %4931 = vmatpush1.bf16.msra.mxu0 0
        %4932 = vmatprep.subr.bf16.mxu0 0
        %4933 = vmatpush1.bf16.msra.mxu0 0
        %4934 = vmatprep.subr.bf16.mxu0 0
        %4935 = vmatpush1.bf16.msra.mxu0 0
        %4936 = vmatprep.subr.bf16.mxu0 0
        %4937 = vmatpush1.bf16.msra.mxu0 0
        %4938 = vmatprep.subr.bf16.mxu0 0
        %4939 = vmatpush1.bf16.msra.mxu0 0
        %4940 = vmatprep.subr.bf16.mxu0 0
        %4941 = vmatpush1.bf16.msra.mxu0 0
        %4942 = vmatprep.subr.bf16.mxu0 0
        %4943 = vmatpush1.bf16.msra.mxu0 0
        %4944 = vmatprep.subr.bf16.mxu0 0
        %4945 = vmatpush1.bf16.msra.mxu0 0
        %4946 = vmatprep.subr.bf16.mxu0 0
        %4947 = vmatpush1.bf16.msra.mxu0 0
        %4948 = vmatprep.subr.bf16.mxu0 0
        %4949 = vmatpush1.bf16.msra.mxu0 0
        %4950 = vmatprep.subr.bf16.mxu0 0
        %4951 = vmatpush1.bf16.msra.mxu0 0
        %4952 = vmatprep.subr.bf16.mxu0 0
        %4953 = vmatpush1.bf16.msra.mxu0 0
        %4954 = vmatprep.subr.bf16.mxu0 0
        %4955 = vmatpush1.bf16.msra.mxu0 0
        %4956 = vmatprep.subr.bf16.mxu0 0
        %4957 = vmatpush1.bf16.msra.mxu0 0
        %4958 = vmatprep.mubr.bf16.mxu0 0
        %4959 = vmatmul.mubr.bf16.gmra.mrb[0].mxu0 %v2779
        %v4960 = vpop.f32.mrb[0].mxu0
        %v4961 = vadd.f32 0.0, %v4960
        %v4962 = vpop.f32.mrb[0].mxu0
        %v4963 = vpop.f32.mrb[0].mxu0
        %v4964 = vadd.f32 0.0, %v4963
        %v4965 = vpop.f32.mrb[0].mxu0
        %4966 = vmatprep.mubr.bf16.mxu0 0
        %4967 = vmatmul.mubr.bf16.gmra.mrb[0].mxu0 %v2782
        %v4968 = vpop.f32.mrb[0].mxu0
        %v4969 = vadd.f32 0.0, %v4968
        %v4970 = vpop.f32.mrb[0].mxu0
        %v4971 = vpop.f32.mrb[0].mxu0
        %v4972 = vadd.f32 0.0, %v4971
        %v4973 = vpop.f32.mrb[0].mxu0
        %4974 = vmatprep.mubr.bf16.mxu0 0
        %4975 = vmatmul.mubr.bf16.gmra.mrb[0].mxu0 %v2785
        %v4976 = vpop.f32.mrb[0].mxu0
        %v4977 = vadd.f32 0.0, %v4976
        %v4978 = vpop.f32.mrb[0].mxu0
        %v4979 = vpop.f32.mrb[0].mxu0
        %v4980 = vadd.f32 0.0, %v4979
        %v4981 = vpop.f32.mrb[0].mxu0
        %4982 = vmatprep.mubr.bf16.mxu0 0
        %4983 = vmatmul.mubr.bf16.gmra.mrb[0].mxu0 %v2788
        %v4984 = vpop.f32.mrb[0].mxu0
        %v4985 = vadd.f32 0.0, %v4984
        %v4986 = vpop.f32.mrb[0].mxu0
        %v4987 = vpop.f32.mrb[0].mxu0
        %v4988 = vadd.f32 0.0, %v4987
        %v4989 = vpop.f32.mrb[0].mxu0
        %4990 = vmatprep.mubr.bf16.mxu0 0
        %4991 = vmatmul.mubr.bf16.gmra.mrb[0].mxu0 %v2791
        %v4992 = vpop.f32.mrb[0].mxu0
        %v4993 = vadd.f32 0.0, %v4992
        %v4994 = vpop.f32.mrb[0].mxu0
        %v4995 = vpop.f32.mrb[0].mxu0
        %v4996 = vadd.f32 0.0, %v4995
        %v4997 = vpop.f32.mrb[0].mxu0
        %4998 = vmatprep.mubr.bf16.mxu0 0
        %4999 = vmatmul.mubr.bf16.gmra.mrb[0].mxu0 %v2794
        %v5000 = vpop.f32.mrb[0].mxu0
        %v5001 = vadd.f32 0.0, %v5000
        %v5002 = vpop.f32.mrb[0].mxu0
        %v5003 = vpop.f32.mrb[0].mxu0
        %v5004 = vadd.f32 0.0, %v5003
        %v5005 = vpop.f32.mrb[0].mxu0
        %5006 = vmatprep.mubr.bf16.mxu0 0
        %5007 = vmatmul.mubr.bf16.gmra.mrb[0].mxu0 %v2797
        %v5008 = vpop.f32.mrb[0].mxu0
        %v5009 = vadd.f32 0.0, %v5008
        %v5010 = vpop.f32.mrb[0].mxu0
        %v5011 = vpop.f32.mrb[0].mxu0
        %v5012 = vadd.f32 0.0, %v5011
        %v5013 = vpop.f32.mrb[0].mxu0
        %5014 = vmatprep.mubr.bf16.mxu0 0
        %5015 = vmatmul.mubr.bf16.gmra.mrb[0].mxu0 %v2800
        %v5016 = vpop.f32.mrb[0].mxu0
        %v5017 = vadd.f32 0.0, %v5016
        %v5018 = vpop.f32.mrb[0].mxu0
        %v5019 = vpop.f32.mrb[0].mxu0
        %v5020 = vadd.f32 0.0, %v5019
        %v5021 = vpop.f32.mrb[0].mxu0
        %5022 = vmatprep.mubr.bf16.mxu0 0
        %5023 = vmatmul.mubr.bf16.gmra.mrb[0].mxu0 %v2803
        %v5024 = vpop.f32.mrb[0].mxu0
        %v5025 = vadd.f32 0.0, %v5024
        %v5026 = vpop.f32.mrb[0].mxu0
        %v5027 = vpop.f32.mrb[0].mxu0
        %v5028 = vadd.f32 0.0, %v5027
        %v5029 = vpop.f32.mrb[0].mxu0
        %5030 = vmatprep.mubr.bf16.mxu0 0
        %5031 = vmatmul.mubr.bf16.gmra.mrb[0].mxu0 %v2806
        %v5032 = vpop.f32.mrb[0].mxu0
        %v5033 = vadd.f32 0.0, %v5032
        %v5034 = vpop.f32.mrb[0].mxu0
        %v5035 = vpop.f32.mrb[0].mxu0
        %v5036 = vadd.f32 0.0, %v5035
        %v5037 = vpop.f32.mrb[0].mxu0
        %5038 = vmatprep.mubr.bf16.mxu0 0
        %5039 = vmatmul.mubr.bf16.gmra.mrb[0].mxu0 %v2809
        %v5040 = vpop.f32.mrb[0].mxu0
        %v5041 = vadd.f32 0.0, %v5040
        %v5042 = vpop.f32.mrb[0].mxu0
        %v5043 = vpop.f32.mrb[0].mxu0
        %v5044 = vadd.f32 0.0, %v5043
        %v5045 = vpop.f32.mrb[0].mxu0
        %5046 = vmatprep.mubr.bf16.mxu0 0
        %5047 = vmatmul.mubr.bf16.gmra.mrb[0].mxu0 %v2812
        %v5048 = vpop.f32.mrb[0].mxu0
        %v5049 = vadd.f32 0.0, %v5048
        %v5050 = vpop.f32.mrb[0].mxu0
        %v5051 = vpop.f32.mrb[0].mxu0
        %v5052 = vadd.f32 0.0, %v5051
        %v5053 = vpop.f32.mrb[0].mxu0
        %5054 = vmatprep.mubr.bf16.mxu0 0
        %5055 = vmatmul.mubr.bf16.gmra.mrb[0].mxu0 %v2815
        %v5056 = vpop.f32.mrb[0].mxu0
        %v5057 = vadd.f32 0.0, %v5056
        %v5058 = vpop.f32.mrb[0].mxu0
        %v5059 = vpop.f32.mrb[0].mxu0
        %v5060 = vadd.f32 0.0, %v5059
        %v5061 = vpop.f32.mrb[0].mxu0
        %5062 = vmatprep.mubr.bf16.mxu0 0
        %5063 = vmatmul.mubr.bf16.gmra.mrb[0].mxu0 %v2818
        %v5064 = vpop.f32.mrb[0].mxu0
        %v5065 = vadd.f32 0.0, %v5064
        %v5066 = vpop.f32.mrb[0].mxu0
        %v5067 = vpop.f32.mrb[0].mxu0
        %v5068 = vadd.f32 0.0, %v5067
        %v5069 = vpop.f32.mrb[0].mxu0
        %5070 = vmatprep.mubr.bf16.mxu0 0
        %5071 = vmatmul.mubr.bf16.gmra.mrb[0].mxu0 %v2821
        %v5072 = vpop.f32.mrb[0].mxu0
        %v5073 = vadd.f32 0.0, %v5072
        %v5074 = vpop.f32.mrb[0].mxu0
        %v5075 = vpop.f32.mrb[0].mxu0
        %v5076 = vadd.f32 0.0, %v5075
        %v5077 = vpop.f32.mrb[0].mxu0
        %5078 = vmatprep.mubr.bf16.mxu0 0
        %5079 = vmatmul.mubr.bf16.gmra.mrb[0].mxu0 %v2824
        %v5080 = vpop.f32.mrb[0].mxu0
        %v5081 = vadd.f32 0.0, %v5080
        %v5082 = vpop.f32.mrb[0].mxu0
        %v5083 = vpop.f32.mrb[0].mxu0
        %v5084 = vadd.f32 0.0, %v5083
        %v5085 = vpop.f32.mrb[0].mxu0
        %5086 = vdwg.mxu0
        %5087 = vmatprep.subr.bf16.mxu0 0
        %5088 = vmatpush1.bf16.msra.mxu0 %v4761
        %5089 = vmatprep.subr.bf16.mxu0 0
        %5090 = vmatpush1.bf16.msra.mxu0 %v4762
        %5091 = vmatprep.subr.bf16.mxu0 0
        %5092 = vmatpush1.bf16.msra.mxu0 0
        %5093 = vmatprep.subr.bf16.mxu0 0
        %5094 = vmatpush1.bf16.msra.mxu0 0
        %5095 = vmatprep.subr.bf16.mxu0 0
        %5096 = vmatpush1.bf16.msra.mxu0 0
        %5097 = vmatprep.subr.bf16.mxu0 0
        %5098 = vmatpush1.bf16.msra.mxu0 0
        %5099 = vmatprep.subr.bf16.mxu0 0
        %5100 = vmatpush1.bf16.msra.mxu0 0
        %5101 = vmatprep.subr.bf16.mxu0 0
        %5102 = vmatpush1.bf16.msra.mxu0 0
        %5103 = vmatprep.subr.bf16.mxu0 0
        %5104 = vmatpush1.bf16.msra.mxu0 0
        %5105 = vmatprep.subr.bf16.mxu0 0
        %5106 = vmatpush1.bf16.msra.mxu0 0
        %5107 = vmatprep.subr.bf16.mxu0 0
        %5108 = vmatpush1.bf16.msra.mxu0 0
        %5109 = vmatprep.subr.bf16.mxu0 0
        %5110 = vmatpush1.bf16.msra.mxu0 0
        %5111 = vmatprep.subr.bf16.mxu0 0
        %5112 = vmatpush1.bf16.msra.mxu0 0
        %5113 = vmatprep.subr.bf16.mxu0 0
        %5114 = vmatpush1.bf16.msra.mxu0 0
        %5115 = vmatprep.subr.bf16.mxu0 0
        %5116 = vmatpush1.bf16.msra.mxu0 0
        %5117 = vmatprep.subr.bf16.mxu0 0
        %5118 = vmatpush1.bf16.msra.mxu0 0
        %5119 = vmatprep.mubr.bf16.mxu0 0
        %5120 = vmatmul.mubr.bf16.gmra.mrb[0].mxu0 %v2988
        %v5121 = vpop.f32.mrb[0].mxu0
        %v5122 = vadd.f32 0.0, %v5121
        %v5123 = vpop.f32.mrb[0].mxu0
        %v5124 = vpop.f32.mrb[0].mxu0
        %v5125 = vadd.f32 0.0, %v5124
        %v5126 = vpop.f32.mrb[0].mxu0
        %5127 = vmatprep.mubr.bf16.mxu0 0
        %5128 = vmatmul.mubr.bf16.gmra.mrb[0].mxu0 %v2991
        %v5129 = vpop.f32.mrb[0].mxu0
        %v5130 = vadd.f32 0.0, %v5129
        %v5131 = vpop.f32.mrb[0].mxu0
        %v5132 = vpop.f32.mrb[0].mxu0
        %v5133 = vadd.f32 0.0, %v5132
        %v5134 = vpop.f32.mrb[0].mxu0
        %5135 = vmatprep.mubr.bf16.mxu0 0
        %5136 = vmatmul.mubr.bf16.gmra.mrb[0].mxu0 %v2994
        %v5137 = vpop.f32.mrb[0].mxu0
        %v5138 = vadd.f32 0.0, %v5137
        %v5139 = vpop.f32.mrb[0].mxu0
        %v5140 = vpop.f32.mrb[0].mxu0
        %v5141 = vadd.f32 0.0, %v5140
        %v5142 = vpop.f32.mrb[0].mxu0
        %5143 = vmatprep.mubr.bf16.mxu0 0
        %5144 = vmatmul.mubr.bf16.gmra.mrb[0].mxu0 %v2997
        %v5145 = vpop.f32.mrb[0].mxu0
        %v5146 = vadd.f32 0.0, %v5145
        %v5147 = vpop.f32.mrb[0].mxu0
        %v5148 = vpop.f32.mrb[0].mxu0
        %v5149 = vadd.f32 0.0, %v5148
        %v5150 = vpop.f32.mrb[0].mxu0
        %5151 = vmatprep.mubr.bf16.mxu0 0
        %5152 = vmatmul.mubr.bf16.gmra.mrb[0].mxu0 %v3000
        %v5153 = vpop.f32.mrb[0].mxu0
        %v5154 = vadd.f32 0.0, %v5153
        %v5155 = vpop.f32.mrb[0].mxu0
        %v5156 = vpop.f32.mrb[0].mxu0
        %v5157 = vadd.f32 0.0, %v5156
        %v5158 = vpop.f32.mrb[0].mxu0
        %5159 = vmatprep.mubr.bf16.mxu0 0
        %5160 = vmatmul.mubr.bf16.gmra.mrb[0].mxu0 %v3003
        %v5161 = vpop.f32.mrb[0].mxu0
        %v5162 = vadd.f32 0.0, %v5161
        %v5163 = vpop.f32.mrb[0].mxu0
        %v5164 = vpop.f32.mrb[0].mxu0
        %v5165 = vadd.f32 0.0, %v5164
        %v5166 = vpop.f32.mrb[0].mxu0
        %5167 = vmatprep.mubr.bf16.mxu0 0
        %5168 = vmatmul.mubr.bf16.gmra.mrb[0].mxu0 %v3006
        %v5169 = vpop.f32.mrb[0].mxu0
        %v5170 = vadd.f32 0.0, %v5169
        %v5171 = vpop.f32.mrb[0].mxu0
        %v5172 = vpop.f32.mrb[0].mxu0
        %v5173 = vadd.f32 0.0, %v5172
        %v5174 = vpop.f32.mrb[0].mxu0
        %5175 = vmatprep.mubr.bf16.mxu0 0
        %5176 = vmatmul.mubr.bf16.gmra.mrb[0].mxu0 %v3009
        %v5177 = vpop.f32.mrb[0].mxu0
        %v5178 = vadd.f32 0.0, %v5177
        %v5179 = vpop.f32.mrb[0].mxu0
        %v5180 = vpop.f32.mrb[0].mxu0
        %v5181 = vadd.f32 0.0, %v5180
        %v5182 = vpop.f32.mrb[0].mxu0
        %5183 = vmatprep.mubr.bf16.mxu0 0
        %5184 = vmatmul.mubr.bf16.gmra.mrb[0].mxu0 %v3012
        %v5185 = vpop.f32.mrb[0].mxu0
        %v5186 = vadd.f32 0.0, %v5185
        %v5187 = vpop.f32.mrb[0].mxu0
        %v5188 = vpop.f32.mrb[0].mxu0
        %v5189 = vadd.f32 0.0, %v5188
        %v5190 = vpop.f32.mrb[0].mxu0
        %5191 = vmatprep.mubr.bf16.mxu0 0
        %5192 = vmatmul.mubr.bf16.gmra.mrb[0].mxu0 %v3015
        %v5193 = vpop.f32.mrb[0].mxu0
        %v5194 = vadd.f32 0.0, %v5193
        %v5195 = vpop.f32.mrb[0].mxu0
        %v5196 = vpop.f32.mrb[0].mxu0
        %v5197 = vadd.f32 0.0, %v5196
        %v5198 = vpop.f32.mrb[0].mxu0
        %5199 = vmatprep.mubr.bf16.mxu0 0
        %5200 = vmatmul.mubr.bf16.gmra.mrb[0].mxu0 %v3018
        %v5201 = vpop.f32.mrb[0].mxu0
        %v5202 = vadd.f32 0.0, %v5201
        %v5203 = vpop.f32.mrb[0].mxu0
        %v5204 = vpop.f32.mrb[0].mxu0
        %v5205 = vadd.f32 0.0, %v5204
        %v5206 = vpop.f32.mrb[0].mxu0
        %5207 = vmatprep.mubr.bf16.mxu0 0
        %5208 = vmatmul.mubr.bf16.gmra.mrb[0].mxu0 %v3021
        %v5209 = vpop.f32.mrb[0].mxu0
        %v5210 = vadd.f32 0.0, %v5209
        %v5211 = vpop.f32.mrb[0].mxu0
        %v5212 = vpop.f32.mrb[0].mxu0
        %v5213 = vadd.f32 0.0, %v5212
        %v5214 = vpop.f32.mrb[0].mxu0
        %5215 = vmatprep.mubr.bf16.mxu0 0
        %5216 = vmatmul.mubr.bf16.gmra.mrb[0].mxu0 %v3024
        %v5217 = vpop.f32.mrb[0].mxu0
        %v5218 = vadd.f32 0.0, %v5217
        %v5219 = vpop.f32.mrb[0].mxu0
        %v5220 = vpop.f32.mrb[0].mxu0
        %v5221 = vadd.f32 0.0, %v5220
        %v5222 = vpop.f32.mrb[0].mxu0
        %5223 = vmatprep.mubr.bf16.mxu0 0
        %5224 = vmatmul.mubr.bf16.gmra.mrb[0].mxu0 %v3027
        %v5225 = vpop.f32.mrb[0].mxu0
        %v5226 = vadd.f32 0.0, %v5225
        %v5227 = vpop.f32.mrb[0].mxu0
        %v5228 = vpop.f32.mrb[0].mxu0
        %v5229 = vadd.f32 0.0, %v5228
        %v5230 = vpop.f32.mrb[0].mxu0
        %5231 = vmatprep.mubr.bf16.mxu0 0
        %5232 = vmatmul.mubr.bf16.gmra.mrb[0].mxu0 %v3030
        %v5233 = vpop.f32.mrb[0].mxu0
        %v5234 = vadd.f32 0.0, %v5233
        %v5235 = vpop.f32.mrb[0].mxu0
        %v5236 = vpop.f32.mrb[0].mxu0
        %v5237 = vadd.f32 0.0, %v5236
        %v5238 = vpop.f32.mrb[0].mxu0
        %5239 = vmatprep.mubr.bf16.mxu0 0
        %5240 = vmatmul.mubr.bf16.gmra.mrb[0].mxu0 %v3033
        %v5241 = vpop.f32.mrb[0].mxu0
        %v5242 = vadd.f32 0.0, %v5241
        %v5243 = vpop.f32.mrb[0].mxu0
        %v5244 = vpop.f32.mrb[0].mxu0
        %v5245 = vadd.f32 0.0, %v5244
        %v5246 = vpop.f32.mrb[0].mxu0
        %5247 = vdwg.mxu0
        %5248 = vmatprep.subr.bf16.mxu0 0
        %5249 = vmatpush1.bf16.msra.mxu0 %v4763
        %5250 = vmatprep.subr.bf16.mxu0 0
        %5251 = vmatpush1.bf16.msra.mxu0 %v4764
        %5252 = vmatprep.subr.bf16.mxu0 0
        %5253 = vmatpush1.bf16.msra.mxu0 0
        %5254 = vmatprep.subr.bf16.mxu0 0
        %5255 = vmatpush1.bf16.msra.mxu0 0
        %5256 = vmatprep.subr.bf16.mxu0 0
        %5257 = vmatpush1.bf16.msra.mxu0 0
        %5258 = vmatprep.subr.bf16.mxu0 0
        %5259 = vmatpush1.bf16.msra.mxu0 0
        %5260 = vmatprep.subr.bf16.mxu0 0
        %5261 = vmatpush1.bf16.msra.mxu0 0
        %5262 = vmatprep.subr.bf16.mxu0 0
        %5263 = vmatpush1.bf16.msra.mxu0 0
        %5264 = vmatprep.subr.bf16.mxu0 0
        %5265 = vmatpush1.bf16.msra.mxu0 0
        %5266 = vmatprep.subr.bf16.mxu0 0
        %5267 = vmatpush1.bf16.msra.mxu0 0
        %5268 = vmatprep.subr.bf16.mxu0 0
        %5269 = vmatpush1.bf16.msra.mxu0 0
        %5270 = vmatprep.subr.bf16.mxu0 0
        %5271 = vmatpush1.bf16.msra.mxu0 0
        %5272 = vmatprep.subr.bf16.mxu0 0
        %5273 = vmatpush1.bf16.msra.mxu0 0
        %5274 = vmatprep.subr.bf16.mxu0 0
        %5275 = vmatpush1.bf16.msra.mxu0 0
        %5276 = vmatprep.subr.bf16.mxu0 0
        %5277 = vmatpush1.bf16.msra.mxu0 0
        %5278 = vmatprep.subr.bf16.mxu0 0
        %5279 = vmatpush1.bf16.msra.mxu0 0
        %5280 = vmatprep.mubr.bf16.mxu0 0
        %5281 = vmatmul.mubr.bf16.gmra.mrb[0].mxu0 %v3197
        %v5282 = vpop.f32.mrb[0].mxu0
        %v5283 = vadd.f32 0.0, %v5282
        %v5284 = vpop.f32.mrb[0].mxu0
        %v5285 = vpop.f32.mrb[0].mxu0
        %v5286 = vadd.f32 0.0, %v5285
        %v5287 = vpop.f32.mrb[0].mxu0
        %5288 = vmatprep.mubr.bf16.mxu0 0
        %5289 = vmatmul.mubr.bf16.gmra.mrb[0].mxu0 %v3200
        %v5290 = vpop.f32.mrb[0].mxu0
        %v5291 = vadd.f32 0.0, %v5290
        %v5292 = vpop.f32.mrb[0].mxu0
        %v5293 = vpop.f32.mrb[0].mxu0
        %v5294 = vadd.f32 0.0, %v5293
        %v5295 = vpop.f32.mrb[0].mxu0
        %5296 = vmatprep.mubr.bf16.mxu0 0
        %5297 = vmatmul.mubr.bf16.gmra.mrb[0].mxu0 %v3203
        %v5298 = vpop.f32.mrb[0].mxu0
        %v5299 = vadd.f32 0.0, %v5298
        %v5300 = vpop.f32.mrb[0].mxu0
        %v5301 = vpop.f32.mrb[0].mxu0
        %v5302 = vadd.f32 0.0, %v5301
        %v5303 = vpop.f32.mrb[0].mxu0
        %5304 = vmatprep.mubr.bf16.mxu0 0
        %5305 = vmatmul.mubr.bf16.gmra.mrb[0].mxu0 %v3206
        %v5306 = vpop.f32.mrb[0].mxu0
        %v5307 = vadd.f32 0.0, %v5306
        %v5308 = vpop.f32.mrb[0].mxu0
        %v5309 = vpop.f32.mrb[0].mxu0
        %v5310 = vadd.f32 0.0, %v5309
        %v5311 = vpop.f32.mrb[0].mxu0
        %5312 = vmatprep.mubr.bf16.mxu0 0
        %5313 = vmatmul.mubr.bf16.gmra.mrb[0].mxu0 %v3209
        %v5314 = vpop.f32.mrb[0].mxu0
        %v5315 = vadd.f32 0.0, %v5314
        %v5316 = vpop.f32.mrb[0].mxu0
        %v5317 = vpop.f32.mrb[0].mxu0
        %v5318 = vadd.f32 0.0, %v5317
        %v5319 = vpop.f32.mrb[0].mxu0
        %5320 = vmatprep.mubr.bf16.mxu0 0
        %5321 = vmatmul.mubr.bf16.gmra.mrb[0].mxu0 %v3212
        %v5322 = vpop.f32.mrb[0].mxu0
        %v5323 = vadd.f32 0.0, %v5322
        %v5324 = vpop.f32.mrb[0].mxu0
        %v5325 = vpop.f32.mrb[0].mxu0
        %v5326 = vadd.f32 0.0, %v5325
        %v5327 = vpop.f32.mrb[0].mxu0
        %5328 = vmatprep.mubr.bf16.mxu0 0
        %5329 = vmatmul.mubr.bf16.gmra.mrb[0].mxu0 %v3215
        %v5330 = vpop.f32.mrb[0].mxu0
        %v5331 = vadd.f32 0.0, %v5330
        %v5332 = vpop.f32.mrb[0].mxu0
        %v5333 = vpop.f32.mrb[0].mxu0
        %v5334 = vadd.f32 0.0, %v5333
        %v5335 = vpop.f32.mrb[0].mxu0
        %5336 = vmatprep.mubr.bf16.mxu0 0
        %5337 = vmatmul.mubr.bf16.gmra.mrb[0].mxu0 %v3218
        %v5338 = vpop.f32.mrb[0].mxu0
        %v5339 = vadd.f32 0.0, %v5338
        %v5340 = vpop.f32.mrb[0].mxu0
        %v5341 = vpop.f32.mrb[0].mxu0
        %v5342 = vadd.f32 0.0, %v5341
        %v5343 = vpop.f32.mrb[0].mxu0
        %5344 = vmatprep.mubr.bf16.mxu0 0
        %5345 = vmatmul.mubr.bf16.gmra.mrb[0].mxu0 %v3221
        %v5346 = vpop.f32.mrb[0].mxu0
        %v5347 = vadd.f32 0.0, %v5346
        %v5348 = vpop.f32.mrb[0].mxu0
        %v5349 = vpop.f32.mrb[0].mxu0
        %v5350 = vadd.f32 0.0, %v5349
        %v5351 = vpop.f32.mrb[0].mxu0
        %5352 = vmatprep.mubr.bf16.mxu0 0
        %5353 = vmatmul.mubr.bf16.gmra.mrb[0].mxu0 %v3224
        %v5354 = vpop.f32.mrb[0].mxu0
        %v5355 = vadd.f32 0.0, %v5354
        %v5356 = vpop.f32.mrb[0].mxu0
        %v5357 = vpop.f32.mrb[0].mxu0
        %v5358 = vadd.f32 0.0, %v5357
        %v5359 = vpop.f32.mrb[0].mxu0
        %5360 = vmatprep.mubr.bf16.mxu0 0
        %5361 = vmatmul.mubr.bf16.gmra.mrb[0].mxu0 %v3227
        %v5362 = vpop.f32.mrb[0].mxu0
        %v5363 = vadd.f32 0.0, %v5362
        %v5364 = vpop.f32.mrb[0].mxu0
        %v5365 = vpop.f32.mrb[0].mxu0
        %v5366 = vadd.f32 0.0, %v5365
        %v5367 = vpop.f32.mrb[0].mxu0
        %5368 = vmatprep.mubr.bf16.mxu0 0
        %5369 = vmatmul.mubr.bf16.gmra.mrb[0].mxu0 %v3230
        %v5370 = vpop.f32.mrb[0].mxu0
        %v5371 = vadd.f32 0.0, %v5370
        %v5372 = vpop.f32.mrb[0].mxu0
        %v5373 = vpop.f32.mrb[0].mxu0
        %v5374 = vadd.f32 0.0, %v5373
        %v5375 = vpop.f32.mrb[0].mxu0
        %5376 = vmatprep.mubr.bf16.mxu0 0
        %5377 = vmatmul.mubr.bf16.gmra.mrb[0].mxu0 %v3233
        %v5378 = vpop.f32.mrb[0].mxu0
        %v5379 = vadd.f32 0.0, %v5378
        %v5380 = vpop.f32.mrb[0].mxu0
        %v5381 = vpop.f32.mrb[0].mxu0
        %v5382 = vadd.f32 0.0, %v5381
        %v5383 = vpop.f32.mrb[0].mxu0
        %5384 = vmatprep.mubr.bf16.mxu0 0
        %5385 = vmatmul.mubr.bf16.gmra.mrb[0].mxu0 %v3236
        %v5386 = vpop.f32.mrb[0].mxu0
        %v5387 = vadd.f32 0.0, %v5386
        %v5388 = vpop.f32.mrb[0].mxu0
        %v5389 = vpop.f32.mrb[0].mxu0
        %v5390 = vadd.f32 0.0, %v5389
        %v5391 = vpop.f32.mrb[0].mxu0
        %5392 = vmatprep.mubr.bf16.mxu0 0
        %5393 = vmatmul.mubr.bf16.gmra.mrb[0].mxu0 %v3239
        %v5394 = vpop.f32.mrb[0].mxu0
        %v5395 = vadd.f32 0.0, %v5394
        %v5396 = vpop.f32.mrb[0].mxu0
        %v5397 = vpop.f32.mrb[0].mxu0
        %v5398 = vadd.f32 0.0, %v5397
        %v5399 = vpop.f32.mrb[0].mxu0
        %5400 = vmatprep.mubr.bf16.mxu0 0
        %5401 = vmatmul.mubr.bf16.gmra.mrb[0].mxu0 %v3242
        %v5402 = vpop.f32.mrb[0].mxu0
        %v5403 = vadd.f32 0.0, %v5402
        %v5404 = vpop.f32.mrb[0].mxu0
        %v5405 = vpop.f32.mrb[0].mxu0
        %v5406 = vadd.f32 0.0, %v5405
        %v5407 = vpop.f32.mrb[0].mxu0
        %5408 = vdwg.mxu0
        %s5409 = scalar_lea.vmem %s680, 64
        %v5410 = vld [vmem:[%s5409] sm:$0xf]
        %v5411 = vld [vmem:[%s5409 + $0x4] sm:$0xf]
        %v5412 = vld [vmem:[%s5409 + $0x8] sm:$0xf]
        %v5413 = vld [vmem:[%s5409 + $0xc] sm:$0xf]
        %v5414 = vld [vmem:[%s5409 + $0x10] sm:$0xf]
        %v5415 = vld [vmem:[%s5409 + $0x14] sm:$0xf]
        %v5416 = vld [vmem:[%s5409 + $0x18] sm:$0xf]
        %v5417 = vld [vmem:[%s5409 + $0x1c] sm:$0xf]
        %v5418 = vld [vmem:[%s5409 + $0x20] sm:$0xf]
        %v5419 = vld [vmem:[%s5409 + $0x24] sm:$0xf]
        %v5420 = vld [vmem:[%s5409 + $0x28] sm:$0xf]
        %v5421 = vld [vmem:[%s5409 + $0x2c] sm:$0xf]
        %v5422 = vld [vmem:[%s5409 + $0x30] sm:$0xf]
        %v5423 = vld [vmem:[%s5409 + $0x34] sm:$0xf]
        %v5424 = vld [vmem:[%s5409 + $0x38] sm:$0xf]
        %v5425 = vld [vmem:[%s5409 + $0x3c] sm:$0xf]
        %v5426 = vunpack.c.l.bf16 %v5410
        %v5427 = vunpack.c.l.bf16 %v5411
        %v5428 = vunpack.c.l.bf16 %v5412
        %v5429 = vunpack.c.l.bf16 %v5413
        %v5430 = vunpack.c.l.bf16 %v5414
        %v5431 = vunpack.c.l.bf16 %v5415
        %v5432 = vunpack.c.l.bf16 %v5416
        %v5433 = vunpack.c.l.bf16 %v5417
        %v5434 = vunpack.c.l.bf16 %v5418
        %v5435 = vunpack.c.l.bf16 %v5419
        %v5436 = vunpack.c.l.bf16 %v5420
        %v5437 = vunpack.c.l.bf16 %v5421
        %v5438 = vunpack.c.l.bf16 %v5422
        %v5439 = vunpack.c.l.bf16 %v5423
        %v5440 = vunpack.c.l.bf16 %v5424
        %v5441 = vunpack.c.l.bf16 %v5425
        %v5442 = vld [vmem:[%s9] sm:$0xff]
        %v5443 = vld [vmem:[%s9 + $0x8] sm:$0xff]
        %v5444 = vld [vmem:[%s9 + $0x10] sm:$0xff]
        %v5445 = vld [vmem:[%s9 + $0x18] sm:$0xff]
        %v5446 = vld [vmem:[%s9 + $0x20] sm:$0xff]
        %v5447 = vld [vmem:[%s9 + $0x28] sm:$0xff]
        %v5448 = vld [vmem:[%s9 + $0x30] sm:$0xff]
        %v5449 = vld [vmem:[%s9 + $0x38] sm:$0xff]
        %v5450 = vld [vmem:[%s9 + $0x40] sm:$0xff]
        %v5451 = vld [vmem:[%s9 + $0x48] sm:$0xff]
        %v5452 = vld [vmem:[%s9 + $0x50] sm:$0xff]
        %v5453 = vld [vmem:[%s9 + $0x58] sm:$0xff]
        %v5454 = vld [vmem:[%s9 + $0x60] sm:$0xff]
        %v5455 = vld [vmem:[%s9 + $0x68] sm:$0xff]
        %v5456 = vld [vmem:[%s9 + $0x70] sm:$0xff]
        %v5457 = vld [vmem:[%s9 + $0x78] sm:$0xff]
        %v5458 = vld [vmem:[%s10] sm:$0xff]
        %v5459 = vld [vmem:[%s10 + $0x8] sm:$0xff]
        %v5460 = vld [vmem:[%s10 + $0x10] sm:$0xff]
        %v5461 = vld [vmem:[%s10 + $0x18] sm:$0xff]
        %v5462 = vld [vmem:[%s10 + $0x20] sm:$0xff]
        %v5463 = vld [vmem:[%s10 + $0x28] sm:$0xff]
        %v5464 = vld [vmem:[%s10 + $0x30] sm:$0xff]
        %v5465 = vld [vmem:[%s10 + $0x38] sm:$0xff]
        %v5466 = vld [vmem:[%s10 + $0x40] sm:$0xff]
        %v5467 = vld [vmem:[%s10 + $0x48] sm:$0xff]
        %v5468 = vld [vmem:[%s10 + $0x50] sm:$0xff]
        %v5469 = vld [vmem:[%s10 + $0x58] sm:$0xff]
        %v5470 = vld [vmem:[%s10 + $0x60] sm:$0xff]
        %v5471 = vld [vmem:[%s10 + $0x68] sm:$0xff]
        %v5472 = vld [vmem:[%s10 + $0x70] sm:$0xff]
        %v5473 = vld [vmem:[%s10 + $0x78] sm:$0xff]
        %v5474 = vsel %vm1976, %v5426, 0.0
        %v5475 = vsel %vm1976, %v5427, 0.0
        %v5476 = vadd.f32 %v5474, %v5475
        %v5477 = vsel %vm1976, %v5428, 0.0
        %v5478 = vadd.f32 %v5476, %v5477
        %v5479 = vsel %vm1976, %v5429, 0.0
        %v5480 = vadd.f32 %v5478, %v5479
        %v5481 = vsel %vm1976, %v5430, 0.0
        %v5482 = vadd.f32 %v5480, %v5481
        %v5483 = vsel %vm1976, %v5431, 0.0
        %v5484 = vadd.f32 %v5482, %v5483
        %v5485 = vsel %vm1976, %v5432, 0.0
        %v5486 = vadd.f32 %v5484, %v5485
        %v5487 = vsel %vm1976, %v5433, 0.0
        %v5488 = vadd.f32 %v5486, %v5487
        %v5489 = vsel %vm1976, %v5434, 0.0
        %v5490 = vadd.f32 %v5488, %v5489
        %v5491 = vsel %vm1976, %v5435, 0.0
        %v5492 = vadd.f32 %v5490, %v5491
        %v5493 = vsel %vm1976, %v5436, 0.0
        %v5494 = vadd.f32 %v5492, %v5493
        %v5495 = vsel %vm1976, %v5437, 0.0
        %v5496 = vadd.f32 %v5494, %v5495
        %v5497 = vsel %vm1976, %v5438, 0.0
        %v5498 = vadd.f32 %v5496, %v5497
        %v5499 = vsel %vm1976, %v5439, 0.0
        %v5500 = vadd.f32 %v5498, %v5499
        %v5501 = vsel %vm1976, %v5440, 0.0
        %v5502 = vadd.f32 %v5500, %v5501
        %v5503 = vsel %vm1976, %v5441, 0.0
        %v5504 = vadd.f32 %v5502, %v5503
        %v5505 = vrot.slane %v5504, 4
        %v5506 = vadd.f32 %v5504, %v5505
        %v5507 = vrot.slane %v5506, 2
        %v5508 = vadd.f32 %v5506, %v5507
        %v5509 = vrot.slane %v5508, 1
        %v5510 = vadd.f32 %v5508, %v5509
        %v5511 = vmul.f32 %v5510, %v884
        %v5512 = vsub.f32 %v5426, %v5511
        %v5513 = vsub.f32 %v5427, %v5511
        %v5514 = vsub.f32 %v5428, %v5511
        %v5515 = vsub.f32 %v5429, %v5511
        %v5516 = vsub.f32 %v5430, %v5511
        %v5517 = vsub.f32 %v5431, %v5511
        %v5518 = vsub.f32 %v5432, %v5511
        %v5519 = vsub.f32 %v5433, %v5511
        %v5520 = vsub.f32 %v5434, %v5511
        %v5521 = vsub.f32 %v5435, %v5511
        %v5522 = vsub.f32 %v5436, %v5511
        %v5523 = vsub.f32 %v5437, %v5511
        %v5524 = vsub.f32 %v5438, %v5511
        %v5525 = vsub.f32 %v5439, %v5511
        %v5526 = vsub.f32 %v5440, %v5511
        %v5527 = vsub.f32 %v5441, %v5511
        %v5528 = vmul.f32 %v5512, %v5512
        %v5529 = vmul.f32 %v5513, %v5513
        %v5530 = vmul.f32 %v5514, %v5514
        %v5531 = vmul.f32 %v5515, %v5515
        %v5532 = vmul.f32 %v5516, %v5516
        %v5533 = vmul.f32 %v5517, %v5517
        %v5534 = vmul.f32 %v5518, %v5518
        %v5535 = vmul.f32 %v5519, %v5519
        %v5536 = vmul.f32 %v5520, %v5520
        %v5537 = vmul.f32 %v5521, %v5521
        %v5538 = vmul.f32 %v5522, %v5522
        %v5539 = vmul.f32 %v5523, %v5523
        %v5540 = vmul.f32 %v5524, %v5524
        %v5541 = vmul.f32 %v5525, %v5525
        %v5542 = vmul.f32 %v5526, %v5526
        %v5543 = vmul.f32 %v5527, %v5527
        %v5544 = vsel %vm1976, %v5528, 0.0
        %v5545 = vsel %vm1976, %v5529, 0.0
        %v5546 = vadd.f32 %v5544, %v5545
        %v5547 = vsel %vm1976, %v5530, 0.0
        %v5548 = vadd.f32 %v5546, %v5547
        %v5549 = vsel %vm1976, %v5531, 0.0
        %v5550 = vadd.f32 %v5548, %v5549
        %v5551 = vsel %vm1976, %v5532, 0.0
        %v5552 = vadd.f32 %v5550, %v5551
        %v5553 = vsel %vm1976, %v5533, 0.0
        %v5554 = vadd.f32 %v5552, %v5553
        %v5555 = vsel %vm1976, %v5534, 0.0
        %v5556 = vadd.f32 %v5554, %v5555
        %v5557 = vsel %vm1976, %v5535, 0.0
        %v5558 = vadd.f32 %v5556, %v5557
        %v5559 = vsel %vm1976, %v5536, 0.0
        %v5560 = vadd.f32 %v5558, %v5559
        %v5561 = vsel %vm1976, %v5537, 0.0
        %v5562 = vadd.f32 %v5560, %v5561
        %v5563 = vsel %vm1976, %v5538, 0.0
        %v5564 = vadd.f32 %v5562, %v5563
        %v5565 = vsel %vm1976, %v5539, 0.0
        %v5566 = vadd.f32 %v5564, %v5565
        %v5567 = vsel %vm1976, %v5540, 0.0
        %v5568 = vadd.f32 %v5566, %v5567
        %v5569 = vsel %vm1976, %v5541, 0.0
        %v5570 = vadd.f32 %v5568, %v5569
        %v5571 = vsel %vm1976, %v5542, 0.0
        %v5572 = vadd.f32 %v5570, %v5571
        %v5573 = vsel %vm1976, %v5543, 0.0
        %v5574 = vadd.f32 %v5572, %v5573
        %v5575 = vrot.slane %v5574, 4
        %v5576 = vadd.f32 %v5574, %v5575
        %v5577 = vrot.slane %v5576, 2
        %v5578 = vadd.f32 %v5576, %v5577
        %v5579 = vrot.slane %v5578, 1
        %v5580 = vadd.f32 %v5578, %v5579
        %v5581 = vmul.f32 %v5580, %v884
        %v5582 = vadd.f32 %v5581, 1e-05
        %v5583 = vrsqrt.pop %v5582
        %v5584 = vmul.f32 %v5512, %v5583
        %v5585 = vmul.f32 %v5513, %v5583
        %v5586 = vmul.f32 %v5514, %v5583
        %v5587 = vmul.f32 %v5515, %v5583
        %v5588 = vmul.f32 %v5516, %v5583
        %v5589 = vmul.f32 %v5517, %v5583
        %v5590 = vmul.f32 %v5518, %v5583
        %v5591 = vmul.f32 %v5519, %v5583
        %v5592 = vmul.f32 %v5520, %v5583
        %v5593 = vmul.f32 %v5521, %v5583
        %v5594 = vmul.f32 %v5522, %v5583
        %v5595 = vmul.f32 %v5523, %v5583
        %v5596 = vmul.f32 %v5524, %v5583
        %v5597 = vmul.f32 %v5525, %v5583
        %v5598 = vmul.f32 %v5526, %v5583
        %v5599 = vmul.f32 %v5527, %v5583
        %5601 = vset.pattern.permute.xlu0 0
        %5602 = vperm.xlu0 %5601, %v5442
        %v5603 = vpop.permute.xlu0 %5602
        %5606 = vset.pattern.permute.xlu0 0
        %5607 = vperm.xlu0 %5606, %v5443
        %v5608 = vpop.permute.xlu0 %5607
        %5611 = vset.pattern.permute.xlu0 0
        %5612 = vperm.xlu0 %5611, %v5444
        %v5613 = vpop.permute.xlu0 %5612
        %5616 = vset.pattern.permute.xlu0 0
        %5617 = vperm.xlu0 %5616, %v5445
        %v5618 = vpop.permute.xlu0 %5617
        %5621 = vset.pattern.permute.xlu0 0
        %5622 = vperm.xlu0 %5621, %v5446
        %v5623 = vpop.permute.xlu0 %5622
        %5626 = vset.pattern.permute.xlu0 0
        %5627 = vperm.xlu0 %5626, %v5447
        %v5628 = vpop.permute.xlu0 %5627
        %5631 = vset.pattern.permute.xlu0 0
        %5632 = vperm.xlu0 %5631, %v5448
        %v5633 = vpop.permute.xlu0 %5632
        %5636 = vset.pattern.permute.xlu0 0
        %5637 = vperm.xlu0 %5636, %v5449
        %v5638 = vpop.permute.xlu0 %5637
        %5641 = vset.pattern.permute.xlu0 0
        %5642 = vperm.xlu0 %5641, %v5450
        %v5643 = vpop.permute.xlu0 %5642
        %5646 = vset.pattern.permute.xlu0 0
        %5647 = vperm.xlu0 %5646, %v5451
        %v5648 = vpop.permute.xlu0 %5647
        %5651 = vset.pattern.permute.xlu0 0
        %5652 = vperm.xlu0 %5651, %v5452
        %v5653 = vpop.permute.xlu0 %5652
        %5656 = vset.pattern.permute.xlu0 0
        %5657 = vperm.xlu0 %5656, %v5453
        %v5658 = vpop.permute.xlu0 %5657
        %5661 = vset.pattern.permute.xlu0 0
        %5662 = vperm.xlu0 %5661, %v5454
        %v5663 = vpop.permute.xlu0 %5662
        %5666 = vset.pattern.permute.xlu0 0
        %5667 = vperm.xlu0 %5666, %v5455
        %v5668 = vpop.permute.xlu0 %5667
        %5671 = vset.pattern.permute.xlu0 0
        %5672 = vperm.xlu0 %5671, %v5456
        %v5673 = vpop.permute.xlu0 %5672
        %5676 = vset.pattern.permute.xlu0 0
        %5677 = vperm.xlu0 %5676, %v5457
        %v5678 = vpop.permute.xlu0 %5677
        %v5680 = vmul.f32 %v5584, %v5603
        %v5681 = vmul.f32 %v5585, %v5608
        %v5682 = vmul.f32 %v5586, %v5613
        %v5683 = vmul.f32 %v5587, %v5618
        %v5684 = vmul.f32 %v5588, %v5623
        %v5685 = vmul.f32 %v5589, %v5628
        %v5686 = vmul.f32 %v5590, %v5633
        %v5687 = vmul.f32 %v5591, %v5638
        %v5688 = vmul.f32 %v5592, %v5643
        %v5689 = vmul.f32 %v5593, %v5648
        %v5690 = vmul.f32 %v5594, %v5653
        %v5691 = vmul.f32 %v5595, %v5658
        %v5692 = vmul.f32 %v5596, %v5663
        %v5693 = vmul.f32 %v5597, %v5668
        %v5694 = vmul.f32 %v5598, %v5673
        %v5695 = vmul.f32 %v5599, %v5678
        %5697 = vset.pattern.permute.xlu0 0
        %5698 = vperm.xlu0 %5697, %v5458
        %v5699 = vpop.permute.xlu0 %5698
        %5702 = vset.pattern.permute.xlu0 0
        %5703 = vperm.xlu0 %5702, %v5459
        %v5704 = vpop.permute.xlu0 %5703
        %5707 = vset.pattern.permute.xlu0 0
        %5708 = vperm.xlu0 %5707, %v5460
        %v5709 = vpop.permute.xlu0 %5708
        %5712 = vset.pattern.permute.xlu0 0
        %5713 = vperm.xlu0 %5712, %v5461
        %v5714 = vpop.permute.xlu0 %5713
        %5717 = vset.pattern.permute.xlu0 0
        %5718 = vperm.xlu0 %5717, %v5462
        %v5719 = vpop.permute.xlu0 %5718
        %5722 = vset.pattern.permute.xlu0 0
        %5723 = vperm.xlu0 %5722, %v5463
        %v5724 = vpop.permute.xlu0 %5723
        %5727 = vset.pattern.permute.xlu0 0
        %5728 = vperm.xlu0 %5727, %v5464
        %v5729 = vpop.permute.xlu0 %5728
        %5732 = vset.pattern.permute.xlu0 0
        %5733 = vperm.xlu0 %5732, %v5465
        %v5734 = vpop.permute.xlu0 %5733
        %5737 = vset.pattern.permute.xlu0 0
        %5738 = vperm.xlu0 %5737, %v5466
        %v5739 = vpop.permute.xlu0 %5738
        %5742 = vset.pattern.permute.xlu0 0
        %5743 = vperm.xlu0 %5742, %v5467
        %v5744 = vpop.permute.xlu0 %5743
        %5747 = vset.pattern.permute.xlu0 0
        %5748 = vperm.xlu0 %5747, %v5468
        %v5749 = vpop.permute.xlu0 %5748
        %5752 = vset.pattern.permute.xlu0 0
        %5753 = vperm.xlu0 %5752, %v5469
        %v5754 = vpop.permute.xlu0 %5753
        %5757 = vset.pattern.permute.xlu0 0
        %5758 = vperm.xlu0 %5757, %v5470
        %v5759 = vpop.permute.xlu0 %5758
        %5762 = vset.pattern.permute.xlu0 0
        %5763 = vperm.xlu0 %5762, %v5471
        %v5764 = vpop.permute.xlu0 %5763
        %5767 = vset.pattern.permute.xlu0 0
        %5768 = vperm.xlu0 %5767, %v5472
        %v5769 = vpop.permute.xlu0 %5768
        %5772 = vset.pattern.permute.xlu0 0
        %5773 = vperm.xlu0 %5772, %v5473
        %v5774 = vpop.permute.xlu0 %5773
        %v5776 = vadd.f32 %v5680, %v5699
        %v5777 = vadd.f32 %v5681, %v5704
        %v5778 = vadd.f32 %v5682, %v5709
        %v5779 = vadd.f32 %v5683, %v5714
        %v5780 = vadd.f32 %v5684, %v5719
        %v5781 = vadd.f32 %v5685, %v5724
        %v5782 = vadd.f32 %v5686, %v5729
        %v5783 = vadd.f32 %v5687, %v5734
        %v5784 = vadd.f32 %v5688, %v5739
        %v5785 = vadd.f32 %v5689, %v5744
        %v5786 = vadd.f32 %v5690, %v5749
        %v5787 = vadd.f32 %v5691, %v5754
        %v5788 = vadd.f32 %v5692, %v5759
        %v5789 = vadd.f32 %v5693, %v5764
        %v5790 = vadd.f32 %v5694, %v5769
        %v5791 = vadd.f32 %v5695, %v5774
        %v5792 = vld [vmem:[%s15] sm:$0xf]
        %v5793 = vld [vmem:[%s15 + $0x4] sm:$0xf]
        %v5794 = vld [vmem:[%s15 + $0x8] sm:$0xf]
        %v5795 = vld [vmem:[%s15 + $0xc] sm:$0xf]
        %v5796 = vld [vmem:[%s15 + $0x10] sm:$0xf]
        %v5797 = vld [vmem:[%s15 + $0x14] sm:$0xf]
        %v5798 = vld [vmem:[%s15 + $0x18] sm:$0xf]
        %v5799 = vld [vmem:[%s15 + $0x1c] sm:$0xf]
        %v5800 = vld [vmem:[%s15 + $0x20] sm:$0xf]
        %v5801 = vld [vmem:[%s15 + $0x24] sm:$0xf]
        %v5802 = vld [vmem:[%s15 + $0x28] sm:$0xf]
        %v5803 = vld [vmem:[%s15 + $0x2c] sm:$0xf]
        %v5804 = vld [vmem:[%s15 + $0x30] sm:$0xf]
        %v5805 = vld [vmem:[%s15 + $0x34] sm:$0xf]
        %v5806 = vld [vmem:[%s15 + $0x38] sm:$0xf]
        %v5807 = vld [vmem:[%s15 + $0x3c] sm:$0xf]
        %v5808 = vpack.c.bf16 %v5777, %v5776
        %v5809 = vpack.c.bf16 %v5779, %v5778
        %v5810 = vpack.c.bf16 %v5781, %v5780
        %v5811 = vpack.c.bf16 %v5783, %v5782
        %v5812 = vpack.c.bf16 %v5785, %v5784
        %v5813 = vpack.c.bf16 %v5787, %v5786
        %v5814 = vpack.c.bf16 %v5789, %v5788
        %v5815 = vpack.c.bf16 %v5791, %v5790
        %v5816 = vld [vmem:[%s16] sm:$0xff]
        %v5817 = vld [vmem:[%s16 + $0x8] sm:$0xff]
        %v5818 = vld [vmem:[%s16 + $0x10] sm:$0xff]
        %v5819 = vld [vmem:[%s16 + $0x18] sm:$0xff]
        %v5820 = vld [vmem:[%s16 + $0x20] sm:$0xff]
        %v5821 = vld [vmem:[%s16 + $0x28] sm:$0xff]
        %v5822 = vld [vmem:[%s16 + $0x30] sm:$0xff]
        %v5823 = vld [vmem:[%s16 + $0x38] sm:$0xff]
        %v5824 = vld [vmem:[%s16 + $0x40] sm:$0xff]
        %v5825 = vld [vmem:[%s16 + $0x48] sm:$0xff]
        %v5826 = vld [vmem:[%s16 + $0x50] sm:$0xff]
        %v5827 = vld [vmem:[%s16 + $0x58] sm:$0xff]
        %v5828 = vld [vmem:[%s16 + $0x60] sm:$0xff]
        %v5829 = vld [vmem:[%s16 + $0x68] sm:$0xff]
        %v5830 = vld [vmem:[%s16 + $0x70] sm:$0xff]
        %v5831 = vld [vmem:[%s16 + $0x78] sm:$0xff]
        %5833 = vset.pattern.permute.xlu0 0
        %5834 = vperm.xlu0 %5833, %v5816
        %v5835 = vpop.permute.xlu0 %5834
        %5838 = vset.pattern.permute.xlu0 0
        %5839 = vperm.xlu0 %5838, %v5817
        %v5840 = vpop.permute.xlu0 %5839
        %5843 = vset.pattern.permute.xlu0 0
        %5844 = vperm.xlu0 %5843, %v5818
        %v5845 = vpop.permute.xlu0 %5844
        %5848 = vset.pattern.permute.xlu0 0
        %5849 = vperm.xlu0 %5848, %v5819
        %v5850 = vpop.permute.xlu0 %5849
        %5853 = vset.pattern.permute.xlu0 0
        %5854 = vperm.xlu0 %5853, %v5820
        %v5855 = vpop.permute.xlu0 %5854
        %5858 = vset.pattern.permute.xlu0 0
        %5859 = vperm.xlu0 %5858, %v5821
        %v5860 = vpop.permute.xlu0 %5859
        %5863 = vset.pattern.permute.xlu0 0
        %5864 = vperm.xlu0 %5863, %v5822
        %v5865 = vpop.permute.xlu0 %5864
        %5868 = vset.pattern.permute.xlu0 0
        %5869 = vperm.xlu0 %5868, %v5823
        %v5870 = vpop.permute.xlu0 %5869
        %5873 = vset.pattern.permute.xlu0 0
        %5874 = vperm.xlu0 %5873, %v5824
        %v5875 = vpop.permute.xlu0 %5874
        %5878 = vset.pattern.permute.xlu0 0
        %5879 = vperm.xlu0 %5878, %v5825
        %v5880 = vpop.permute.xlu0 %5879
        %5883 = vset.pattern.permute.xlu0 0
        %5884 = vperm.xlu0 %5883, %v5826
        %v5885 = vpop.permute.xlu0 %5884
        %5888 = vset.pattern.permute.xlu0 0
        %5889 = vperm.xlu0 %5888, %v5827
        %v5890 = vpop.permute.xlu0 %5889
        %5893 = vset.pattern.permute.xlu0 0
        %5894 = vperm.xlu0 %5893, %v5828
        %v5895 = vpop.permute.xlu0 %5894
        %5898 = vset.pattern.permute.xlu0 0
        %5899 = vperm.xlu0 %5898, %v5829
        %v5900 = vpop.permute.xlu0 %5899
        %5903 = vset.pattern.permute.xlu0 0
        %5904 = vperm.xlu0 %5903, %v5830
        %v5905 = vpop.permute.xlu0 %5904
        %5908 = vset.pattern.permute.xlu0 0
        %5909 = vperm.xlu0 %5908, %v5831
        %v5910 = vpop.permute.xlu0 %5909
        %v5928 = vunpack.c.l.b16 %v5792
        %v5929 = vunpack.c.l.b16 %v5793
        %v5930 = vunpack.c.l.b16 %v5794
        %v5931 = vunpack.c.l.b16 %v5795
        %v5932 = vunpack.c.l.b16 %v5796
        %v5933 = vunpack.c.l.b16 %v5797
        %v5934 = vunpack.c.l.b16 %v5798
        %v5935 = vunpack.c.l.b16 %v5799
        %v5936 = vunpack.c.l.b16 %v5800
        %v5937 = vunpack.c.l.b16 %v5801
        %v5938 = vunpack.c.l.b16 %v5802
        %v5939 = vunpack.c.l.b16 %v5803
        %v5940 = vunpack.c.l.b16 %v5804
        %v5941 = vunpack.c.l.b16 %v5805
        %v5942 = vunpack.c.l.b16 %v5806
        %v5943 = vunpack.c.l.b16 %v5807
        %v5944 = vpack.c.b16 %v5929, %v5928
        %v5945 = vpack.c.b16 %v5931, %v5930
        %v5946 = vpack.c.b16 %v5933, %v5932
        %v5947 = vpack.c.b16 %v5935, %v5934
        %v5948 = vpack.c.b16 %v5937, %v5936
        %v5949 = vpack.c.b16 %v5939, %v5938
        %v5950 = vpack.c.b16 %v5941, %v5940
        %v5951 = vpack.c.b16 %v5943, %v5942
        %5960 = vmatprep.subr.bf16.mxu0 0
        %5961 = vmatpush1.bf16.msra.mxu0 %v5808
        %5962 = vmatprep.subr.bf16.mxu0 0
        %5963 = vmatpush1.bf16.msra.mxu0 %v5809
        %5964 = vmatprep.subr.bf16.mxu0 0
        %5965 = vmatpush1.bf16.msra.mxu0 %v5810
        %5966 = vmatprep.subr.bf16.mxu0 0
        %5967 = vmatpush1.bf16.msra.mxu0 %v5811
        %5968 = vmatprep.subr.bf16.mxu0 0
        %5969 = vmatpush1.bf16.msra.mxu0 %v5812
        %5970 = vmatprep.subr.bf16.mxu0 0
        %5971 = vmatpush1.bf16.msra.mxu0 %v5813
        %5972 = vmatprep.subr.bf16.mxu0 0
        %5973 = vmatpush1.bf16.msra.mxu0 %v5814
        %5974 = vmatprep.subr.bf16.mxu0 0
        %5975 = vmatpush1.bf16.msra.mxu0 %v5815
        %5976 = vmatprep.subr.bf16.mxu0 0
        %5977 = vmatpush1.bf16.msra.mxu0 0
        %5978 = vmatprep.subr.bf16.mxu0 0
        %5979 = vmatpush1.bf16.msra.mxu0 0
        %5980 = vmatprep.subr.bf16.mxu0 0
        %5981 = vmatpush1.bf16.msra.mxu0 0
        %5982 = vmatprep.subr.bf16.mxu0 0
        %5983 = vmatpush1.bf16.msra.mxu0 0
        %5984 = vmatprep.subr.bf16.mxu0 0
        %5985 = vmatpush1.bf16.msra.mxu0 0
        %5986 = vmatprep.subr.bf16.mxu0 0
        %5987 = vmatpush1.bf16.msra.mxu0 0
        %5988 = vmatprep.subr.bf16.mxu0 0
        %5989 = vmatpush1.bf16.msra.mxu0 0
        %5990 = vmatprep.subr.bf16.mxu0 0
        %5991 = vmatpush1.bf16.msra.mxu0 0
        %5992 = vmatprep.mubr.bf16.mxu0 0
        %5993 = vmatmul.mubr.bf16.gmra.mrb[0].mxu0 %v5944
        %v5994 = vpop.f32.mrb[0].mxu0
        %v5995 = vadd.f32 %v5835, %v5994
        %v5996 = vpop.f32.mrb[0].mxu0
        %v5997 = vpop.f32.mrb[0].mxu0
        %v5998 = vadd.f32 %v5840, %v5997
        %v5999 = vpop.f32.mrb[0].mxu0
        %6000 = vmatprep.mubr.bf16.mxu0 0
        %6001 = vmatmul.mubr.bf16.gmra.mrb[0].mxu0 %v5945
        %v6002 = vpop.f32.mrb[0].mxu0
        %v6003 = vadd.f32 %v5845, %v6002
        %v6004 = vpop.f32.mrb[0].mxu0
        %v6005 = vpop.f32.mrb[0].mxu0
        %v6006 = vadd.f32 %v5850, %v6005
        %v6007 = vpop.f32.mrb[0].mxu0
        %6008 = vmatprep.mubr.bf16.mxu0 0
        %6009 = vmatmul.mubr.bf16.gmra.mrb[0].mxu0 %v5946
        %v6010 = vpop.f32.mrb[0].mxu0
        %v6011 = vadd.f32 %v5855, %v6010
        %v6012 = vpop.f32.mrb[0].mxu0
        %v6013 = vpop.f32.mrb[0].mxu0
        %v6014 = vadd.f32 %v5860, %v6013
        %v6015 = vpop.f32.mrb[0].mxu0
        %6016 = vmatprep.mubr.bf16.mxu0 0
        %6017 = vmatmul.mubr.bf16.gmra.mrb[0].mxu0 %v5947
        %v6018 = vpop.f32.mrb[0].mxu0
        %v6019 = vadd.f32 %v5865, %v6018
        %v6020 = vpop.f32.mrb[0].mxu0
        %v6021 = vpop.f32.mrb[0].mxu0
        %v6022 = vadd.f32 %v5870, %v6021
        %v6023 = vpop.f32.mrb[0].mxu0
        %6024 = vmatprep.mubr.bf16.mxu0 0
        %6025 = vmatmul.mubr.bf16.gmra.mrb[0].mxu0 %v5948
        %v6026 = vpop.f32.mrb[0].mxu0
        %v6027 = vadd.f32 %v5875, %v6026
        %v6028 = vpop.f32.mrb[0].mxu0
        %v6029 = vpop.f32.mrb[0].mxu0
        %v6030 = vadd.f32 %v5880, %v6029
        %v6031 = vpop.f32.mrb[0].mxu0
        %6032 = vmatprep.mubr.bf16.mxu0 0
        %6033 = vmatmul.mubr.bf16.gmra.mrb[0].mxu0 %v5949
        %v6034 = vpop.f32.mrb[0].mxu0
        %v6035 = vadd.f32 %v5885, %v6034
        %v6036 = vpop.f32.mrb[0].mxu0
        %v6037 = vpop.f32.mrb[0].mxu0
        %v6038 = vadd.f32 %v5890, %v6037
        %v6039 = vpop.f32.mrb[0].mxu0
        %6040 = vmatprep.mubr.bf16.mxu0 0
        %6041 = vmatmul.mubr.bf16.gmra.mrb[0].mxu0 %v5950
        %v6042 = vpop.f32.mrb[0].mxu0
        %v6043 = vadd.f32 %v5895, %v6042
        %v6044 = vpop.f32.mrb[0].mxu0
        %v6045 = vpop.f32.mrb[0].mxu0
        %v6046 = vadd.f32 %v5900, %v6045
        %v6047 = vpop.f32.mrb[0].mxu0
        %6048 = vmatprep.mubr.bf16.mxu0 0
        %6049 = vmatmul.mubr.bf16.gmra.mrb[0].mxu0 %v5951
        %v6050 = vpop.f32.mrb[0].mxu0
        %v6051 = vadd.f32 %v5905, %v6050
        %v6052 = vpop.f32.mrb[0].mxu0
        %v6053 = vpop.f32.mrb[0].mxu0
        %v6054 = vadd.f32 %v5910, %v6053
        %v6055 = vpop.f32.mrb[0].mxu0
        %6056 = vdwg.mxu0
        %v6057 = vpack.c.bf16 %v5998, %v5995
        %v6058 = vpack.c.bf16 %v6006, %v6003
        %v6059 = vpack.c.bf16 %v6014, %v6011
        %v6060 = vpack.c.bf16 %v6022, %v6019
        %v6061 = vpack.c.bf16 %v6030, %v6027
        %v6062 = vpack.c.bf16 %v6038, %v6035
        %v6063 = vpack.c.bf16 %v6046, %v6043
        %v6064 = vpack.c.bf16 %v6054, %v6051
        %v6065 = vsel %vm1976, %v2652, -inf
        %6066 = vmax.xlane.f32.xlu0 %v6065
        %v6067 = vpop.xlane.xlu0 %6066
        %v6068 = vsel %vm1976, %v2655, -inf
        %6069 = vmax.xlane.f32.xlu0 %v6068
        %v6070 = vpop.xlane.xlu0 %6069
        %v6071 = vsel %vm1976, %v2660, -inf
        %6072 = vmax.xlane.f32.xlu0 %v6071
        %v6073 = vpop.xlane.xlu0 %6072
        %v6074 = vsel %vm1976, %v2663, -inf
        %6075 = vmax.xlane.f32.xlu0 %v6074
        %v6076 = vpop.xlane.xlu0 %6075
        %v6077 = vsel %vm1976, %v2668, -inf
        %6078 = vmax.xlane.f32.xlu0 %v6077
        %v6079 = vpop.xlane.xlu0 %6078
        %v6080 = vsel %vm1976, %v2671, -inf
        %6081 = vmax.xlane.f32.xlu0 %v6080
        %v6082 = vpop.xlane.xlu0 %6081
        %v6083 = vsel %vm1976, %v2676, -inf
        %6084 = vmax.xlane.f32.xlu0 %v6083
        %v6085 = vpop.xlane.xlu0 %6084
        %v6086 = vsel %vm1976, %v2679, -inf
        %6087 = vmax.xlane.f32.xlu0 %v6086
        %v6088 = vpop.xlane.xlu0 %6087
        %v6089 = vsel %vm1976, %v2684, -inf
        %6090 = vmax.xlane.f32.xlu0 %v6089
        %v6091 = vpop.xlane.xlu0 %6090
        %v6092 = vsel %vm1976, %v2687, -inf
        %6093 = vmax.xlane.f32.xlu0 %v6092
        %v6094 = vpop.xlane.xlu0 %6093
        %v6095 = vsel %vm1976, %v2692, -inf
        %6096 = vmax.xlane.f32.xlu0 %v6095
        %v6097 = vpop.xlane.xlu0 %6096
        %v6098 = vsel %vm1976, %v2695, -inf
        %6099 = vmax.xlane.f32.xlu0 %v6098
        %v6100 = vpop.xlane.xlu0 %6099
        %v6101 = vsel %vm1976, %v2700, -inf
        %6102 = vmax.xlane.f32.xlu0 %v6101
        %v6103 = vpop.xlane.xlu0 %6102
        %v6104 = vsel %vm1976, %v2703, -inf
        %6105 = vmax.xlane.f32.xlu0 %v6104
        %v6106 = vpop.xlane.xlu0 %6105
        %v6107 = vsel %vm1976, %v2708, -inf
        %6108 = vmax.xlane.f32.xlu0 %v6107
        %v6109 = vpop.xlane.xlu0 %6108
        %v6110 = vsel %vm1976, %v2711, -inf
        %6111 = vmax.xlane.f32.xlu0 %v6110
        %v6112 = vpop.xlane.xlu0 %6111
        %v6113 = vsel %vm1976, %v2716, -inf
        %6114 = vmax.xlane.f32.xlu0 %v6113
        %v6115 = vpop.xlane.xlu0 %6114
        %v6116 = vsel %vm1976, %v2719, -inf
        %6117 = vmax.xlane.f32.xlu0 %v6116
        %v6118 = vpop.xlane.xlu0 %6117
        %v6119 = vsel %vm1976, %v2724, -inf
        %6120 = vmax.xlane.f32.xlu0 %v6119
        %v6121 = vpop.xlane.xlu0 %6120
        %v6122 = vsel %vm1976, %v2727, -inf
        %6123 = vmax.xlane.f32.xlu0 %v6122
        %v6124 = vpop.xlane.xlu0 %6123
        %v6125 = vsel %vm1976, %v2732, -inf
        %6126 = vmax.xlane.f32.xlu0 %v6125
        %v6127 = vpop.xlane.xlu0 %6126
        %v6128 = vsel %vm1976, %v2735, -inf
        %6129 = vmax.xlane.f32.xlu0 %v6128
        %v6130 = vpop.xlane.xlu0 %6129
        %v6131 = vsel %vm1976, %v2740, -inf
        %6132 = vmax.xlane.f32.xlu0 %v6131
        %v6133 = vpop.xlane.xlu0 %6132
        %v6134 = vsel %vm1976, %v2743, -inf
        %6135 = vmax.xlane.f32.xlu0 %v6134
        %v6136 = vpop.xlane.xlu0 %6135
        %v6137 = vsel %vm1976, %v2748, -inf
        %6138 = vmax.xlane.f32.xlu0 %v6137
        %v6139 = vpop.xlane.xlu0 %6138
        %v6140 = vsel %vm1976, %v2751, -inf
        %6141 = vmax.xlane.f32.xlu0 %v6140
        %v6142 = vpop.xlane.xlu0 %6141
        %v6143 = vsel %vm1976, %v2756, -inf
        %6144 = vmax.xlane.f32.xlu0 %v6143
        %v6145 = vpop.xlane.xlu0 %6144
        %v6146 = vsel %vm1976, %v2759, -inf
        %6147 = vmax.xlane.f32.xlu0 %v6146
        %v6148 = vpop.xlane.xlu0 %6147
        %v6149 = vsel %vm1976, %v2764, -inf
        %6150 = vmax.xlane.f32.xlu0 %v6149
        %v6151 = vpop.xlane.xlu0 %6150
        %v6152 = vsel %vm1976, %v2767, -inf
        %6153 = vmax.xlane.f32.xlu0 %v6152
        %v6154 = vpop.xlane.xlu0 %6153
        %v6155 = vsel %vm1976, %v2772, -inf
        %6156 = vmax.xlane.f32.xlu0 %v6155
        %v6157 = vpop.xlane.xlu0 %6156
        %v6158 = vsel %vm1976, %v2775, -inf
        %6159 = vmax.xlane.f32.xlu0 %v6158
        %v6160 = vpop.xlane.xlu0 %6159
        %v6161 = vsel %vm1976, %v2861, -inf
        %6162 = vmax.xlane.f32.xlu0 %v6161
        %v6163 = vpop.xlane.xlu0 %6162
        %v6164 = vsel %vm1976, %v2864, -inf
        %6165 = vmax.xlane.f32.xlu0 %v6164
        %v6166 = vpop.xlane.xlu0 %6165
        %v6167 = vsel %vm1976, %v2869, -inf
        %6168 = vmax.xlane.f32.xlu0 %v6167
        %v6169 = vpop.xlane.xlu0 %6168
        %v6170 = vsel %vm1976, %v2872, -inf
        %6171 = vmax.xlane.f32.xlu0 %v6170
        %v6172 = vpop.xlane.xlu0 %6171
        %v6173 = vsel %vm1976, %v2877, -inf
        %6174 = vmax.xlane.f32.xlu0 %v6173
        %v6175 = vpop.xlane.xlu0 %6174
        %v6176 = vsel %vm1976, %v2880, -inf
        %6177 = vmax.xlane.f32.xlu0 %v6176
        %v6178 = vpop.xlane.xlu0 %6177
        %v6179 = vsel %vm1976, %v2885, -inf
        %6180 = vmax.xlane.f32.xlu0 %v6179
        %v6181 = vpop.xlane.xlu0 %6180
        %v6182 = vsel %vm1976, %v2888, -inf
        %6183 = vmax.xlane.f32.xlu0 %v6182
        %v6184 = vpop.xlane.xlu0 %6183
        %v6185 = vsel %vm1976, %v2893, -inf
        %6186 = vmax.xlane.f32.xlu0 %v6185
        %v6187 = vpop.xlane.xlu0 %6186
        %v6188 = vsel %vm1976, %v2896, -inf
        %6189 = vmax.xlane.f32.xlu0 %v6188
        %v6190 = vpop.xlane.xlu0 %6189
        %v6191 = vsel %vm1976, %v2901, -inf
        %6192 = vmax.xlane.f32.xlu0 %v6191
        %v6193 = vpop.xlane.xlu0 %6192
        %v6194 = vsel %vm1976, %v2904, -inf
        %6195 = vmax.xlane.f32.xlu0 %v6194
        %v6196 = vpop.xlane.xlu0 %6195
        %v6197 = vsel %vm1976, %v2909, -inf
        %6198 = vmax.xlane.f32.xlu0 %v6197
        %v6199 = vpop.xlane.xlu0 %6198
        %v6200 = vsel %vm1976, %v2912, -inf
        %6201 = vmax.xlane.f32.xlu0 %v6200
        %v6202 = vpop.xlane.xlu0 %6201
        %v6203 = vsel %vm1976, %v2917, -inf
        %6204 = vmax.xlane.f32.xlu0 %v6203
        %v6205 = vpop.xlane.xlu0 %6204
        %v6206 = vsel %vm1976, %v2920, -inf
        %6207 = vmax.xlane.f32.xlu0 %v6206
        %v6208 = vpop.xlane.xlu0 %6207
        %v6209 = vsel %vm1976, %v2925, -inf
        %6210 = vmax.xlane.f32.xlu0 %v6209
        %v6211 = vpop.xlane.xlu0 %6210
        %v6212 = vsel %vm1976, %v2928, -inf
        %6213 = vmax.xlane.f32.xlu0 %v6212
        %v6214 = vpop.xlane.xlu0 %6213
        %v6215 = vsel %vm1976, %v2933, -inf
        %6216 = vmax.xlane.f32.xlu0 %v6215
        %v6217 = vpop.xlane.xlu0 %6216
        %v6218 = vsel %vm1976, %v2936, -inf
        %6219 = vmax.xlane.f32.xlu0 %v6218
        %v6220 = vpop.xlane.xlu0 %6219
        %v6221 = vsel %vm1976, %v2941, -inf
        %6222 = vmax.xlane.f32.xlu0 %v6221
        %v6223 = vpop.xlane.xlu0 %6222
        %v6224 = vsel %vm1976, %v2944, -inf
        %6225 = vmax.xlane.f32.xlu0 %v6224
        %v6226 = vpop.xlane.xlu0 %6225
        %v6227 = vsel %vm1976, %v2949, -inf
        %6228 = vmax.xlane.f32.xlu0 %v6227
        %v6229 = vpop.xlane.xlu0 %6228
        %v6230 = vsel %vm1976, %v2952, -inf
        %6231 = vmax.xlane.f32.xlu0 %v6230
        %v6232 = vpop.xlane.xlu0 %6231
        %v6233 = vsel %vm1976, %v2957, -inf
        %6234 = vmax.xlane.f32.xlu0 %v6233
        %v6235 = vpop.xlane.xlu0 %6234
        %v6236 = vsel %vm1976, %v2960, -inf
        %6237 = vmax.xlane.f32.xlu0 %v6236
        %v6238 = vpop.xlane.xlu0 %6237
        %v6239 = vsel %vm1976, %v2965, -inf
        %6240 = vmax.xlane.f32.xlu0 %v6239
        %v6241 = vpop.xlane.xlu0 %6240
        %v6242 = vsel %vm1976, %v2968, -inf
        %6243 = vmax.xlane.f32.xlu0 %v6242
        %v6244 = vpop.xlane.xlu0 %6243
        %v6245 = vsel %vm1976, %v2973, -inf
        %6246 = vmax.xlane.f32.xlu0 %v6245
        %v6247 = vpop.xlane.xlu0 %6246
        %v6248 = vsel %vm1976, %v2976, -inf
        %6249 = vmax.xlane.f32.xlu0 %v6248
        %v6250 = vpop.xlane.xlu0 %6249
        %v6251 = vsel %vm1976, %v2981, -inf
        %6252 = vmax.xlane.f32.xlu0 %v6251
        %v6253 = vpop.xlane.xlu0 %6252
        %v6254 = vsel %vm1976, %v2984, -inf
        %6255 = vmax.xlane.f32.xlu0 %v6254
        %v6256 = vpop.xlane.xlu0 %6255
        %v6257 = vsel %vm1976, %v3070, -inf
        %6258 = vmax.xlane.f32.xlu0 %v6257
        %v6259 = vpop.xlane.xlu0 %6258
        %v6260 = vsel %vm1976, %v3073, -inf
        %6261 = vmax.xlane.f32.xlu0 %v6260
        %v6262 = vpop.xlane.xlu0 %6261
        %v6263 = vsel %vm1976, %v3078, -inf
        %6264 = vmax.xlane.f32.xlu0 %v6263
        %v6265 = vpop.xlane.xlu0 %6264
        %v6266 = vsel %vm1976, %v3081, -inf
        %6267 = vmax.xlane.f32.xlu0 %v6266
        %v6268 = vpop.xlane.xlu0 %6267
        %v6269 = vsel %vm1976, %v3086, -inf
        %6270 = vmax.xlane.f32.xlu0 %v6269
        %v6271 = vpop.xlane.xlu0 %6270
        %v6272 = vsel %vm1976, %v3089, -inf
        %6273 = vmax.xlane.f32.xlu0 %v6272
        %v6274 = vpop.xlane.xlu0 %6273
        %v6275 = vsel %vm1976, %v3094, -inf
        %6276 = vmax.xlane.f32.xlu0 %v6275
        %v6277 = vpop.xlane.xlu0 %6276
        %v6278 = vsel %vm1976, %v3097, -inf
        %6279 = vmax.xlane.f32.xlu0 %v6278
        %v6280 = vpop.xlane.xlu0 %6279
        %v6281 = vsel %vm1976, %v3102, -inf
        %6282 = vmax.xlane.f32.xlu0 %v6281
        %v6283 = vpop.xlane.xlu0 %6282
        %v6284 = vsel %vm1976, %v3105, -inf
        %6285 = vmax.xlane.f32.xlu0 %v6284
        %v6286 = vpop.xlane.xlu0 %6285
        %v6287 = vsel %vm1976, %v3110, -inf
        %6288 = vmax.xlane.f32.xlu0 %v6287
        %v6289 = vpop.xlane.xlu0 %6288
        %v6290 = vsel %vm1976, %v3113, -inf
        %6291 = vmax.xlane.f32.xlu0 %v6290
        %v6292 = vpop.xlane.xlu0 %6291
        %v6293 = vsel %vm1976, %v3118, -inf
        %6294 = vmax.xlane.f32.xlu0 %v6293
        %v6295 = vpop.xlane.xlu0 %6294
        %v6296 = vsel %vm1976, %v3121, -inf
        %6297 = vmax.xlane.f32.xlu0 %v6296
        %v6298 = vpop.xlane.xlu0 %6297
        %v6299 = vsel %vm1976, %v3126, -inf
        %6300 = vmax.xlane.f32.xlu0 %v6299
        %v6301 = vpop.xlane.xlu0 %6300
        %v6302 = vsel %vm1976, %v3129, -inf
        %6303 = vmax.xlane.f32.xlu0 %v6302
        %v6304 = vpop.xlane.xlu0 %6303
        %v6305 = vsel %vm1976, %v3134, -inf
        %6306 = vmax.xlane.f32.xlu0 %v6305
        %v6307 = vpop.xlane.xlu0 %6306
        %v6308 = vsel %vm1976, %v3137, -inf
        %6309 = vmax.xlane.f32.xlu0 %v6308
        %v6310 = vpop.xlane.xlu0 %6309
        %v6311 = vsel %vm1976, %v3142, -inf
        %6312 = vmax.xlane.f32.xlu0 %v6311
        %v6313 = vpop.xlane.xlu0 %6312
        %v6314 = vsel %vm1976, %v3145, -inf
        %6315 = vmax.xlane.f32.xlu0 %v6314
        %v6316 = vpop.xlane.xlu0 %6315
        %v6317 = vsel %vm1976, %v3150, -inf
        %6318 = vmax.xlane.f32.xlu0 %v6317
        %v6319 = vpop.xlane.xlu0 %6318
        %v6320 = vsel %vm1976, %v3153, -inf
        %6321 = vmax.xlane.f32.xlu0 %v6320
        %v6322 = vpop.xlane.xlu0 %6321
        %v6323 = vsel %vm1976, %v3158, -inf
        %6324 = vmax.xlane.f32.xlu0 %v6323
        %v6325 = vpop.xlane.xlu0 %6324
        %v6326 = vsel %vm1976, %v3161, -inf
        %6327 = vmax.xlane.f32.xlu0 %v6326
        %v6328 = vpop.xlane.xlu0 %6327
        %v6329 = vsel %vm1976, %v3166, -inf
        %6330 = vmax.xlane.f32.xlu0 %v6329
        %v6331 = vpop.xlane.xlu0 %6330
        %v6332 = vsel %vm1976, %v3169, -inf
        %6333 = vmax.xlane.f32.xlu0 %v6332
        %v6334 = vpop.xlane.xlu0 %6333
        %v6335 = vsel %vm1976, %v3174, -inf
        %6336 = vmax.xlane.f32.xlu0 %v6335
        %v6337 = vpop.xlane.xlu0 %6336
        %v6338 = vsel %vm1976, %v3177, -inf
        %6339 = vmax.xlane.f32.xlu0 %v6338
        %v6340 = vpop.xlane.xlu0 %6339
        %v6341 = vsel %vm1976, %v3182, -inf
        %6342 = vmax.xlane.f32.xlu0 %v6341
        %v6343 = vpop.xlane.xlu0 %6342
        %v6344 = vsel %vm1976, %v3185, -inf
        %6345 = vmax.xlane.f32.xlu0 %v6344
        %v6346 = vpop.xlane.xlu0 %6345
        %v6347 = vsel %vm1976, %v3190, -inf
        %6348 = vmax.xlane.f32.xlu0 %v6347
        %v6349 = vpop.xlane.xlu0 %6348
        %v6350 = vsel %vm1976, %v3193, -inf
        %6351 = vmax.xlane.f32.xlu0 %v6350
        %v6352 = vpop.xlane.xlu0 %6351
        %v6353 = vsel %vm1976, %v3279, -inf
        %6354 = vmax.xlane.f32.xlu0 %v6353
        %v6355 = vpop.xlane.xlu0 %6354
        %v6356 = vsel %vm1976, %v3282, -inf
        %6357 = vmax.xlane.f32.xlu0 %v6356
        %v6358 = vpop.xlane.xlu0 %6357
        %v6359 = vsel %vm1976, %v3287, -inf
        %6360 = vmax.xlane.f32.xlu0 %v6359
        %v6361 = vpop.xlane.xlu0 %6360
        %v6362 = vsel %vm1976, %v3290, -inf
        %6363 = vmax.xlane.f32.xlu0 %v6362
        %v6364 = vpop.xlane.xlu0 %6363
        %v6365 = vsel %vm1976, %v3295, -inf
        %6366 = vmax.xlane.f32.xlu0 %v6365
        %v6367 = vpop.xlane.xlu0 %6366
        %v6368 = vsel %vm1976, %v3298, -inf
        %6369 = vmax.xlane.f32.xlu0 %v6368
        %v6370 = vpop.xlane.xlu0 %6369
        %v6371 = vsel %vm1976, %v3303, -inf
        %6372 = vmax.xlane.f32.xlu0 %v6371
        %v6373 = vpop.xlane.xlu0 %6372
        %v6374 = vsel %vm1976, %v3306, -inf
        %6375 = vmax.xlane.f32.xlu0 %v6374
        %v6376 = vpop.xlane.xlu0 %6375
        %v6377 = vsel %vm1976, %v3311, -inf
        %6378 = vmax.xlane.f32.xlu0 %v6377
        %v6379 = vpop.xlane.xlu0 %6378
        %v6380 = vsel %vm1976, %v3314, -inf
        %6381 = vmax.xlane.f32.xlu0 %v6380
        %v6382 = vpop.xlane.xlu0 %6381
        %v6383 = vsel %vm1976, %v3319, -inf
        %6384 = vmax.xlane.f32.xlu0 %v6383
        %v6385 = vpop.xlane.xlu0 %6384
        %v6386 = vsel %vm1976, %v3322, -inf
        %6387 = vmax.xlane.f32.xlu0 %v6386
        %v6388 = vpop.xlane.xlu0 %6387
        %v6389 = vsel %vm1976, %v3327, -inf
        %6390 = vmax.xlane.f32.xlu0 %v6389
        %v6391 = vpop.xlane.xlu0 %6390
        %v6392 = vsel %vm1976, %v3330, -inf
        %6393 = vmax.xlane.f32.xlu0 %v6392
        %v6394 = vpop.xlane.xlu0 %6393
        %v6395 = vsel %vm1976, %v3335, -inf
        %6396 = vmax.xlane.f32.xlu0 %v6395
        %v6397 = vpop.xlane.xlu0 %6396
        %v6398 = vsel %vm1976, %v3338, -inf
        %6399 = vmax.xlane.f32.xlu0 %v6398
        %v6400 = vpop.xlane.xlu0 %6399
        %v6401 = vsel %vm1976, %v3343, -inf
        %6402 = vmax.xlane.f32.xlu0 %v6401
        %v6403 = vpop.xlane.xlu0 %6402
        %v6404 = vsel %vm1976, %v3346, -inf
        %6405 = vmax.xlane.f32.xlu0 %v6404
        %v6406 = vpop.xlane.xlu0 %6405
        %v6407 = vsel %vm1976, %v3351, -inf
        %6408 = vmax.xlane.f32.xlu0 %v6407
        %v6409 = vpop.xlane.xlu0 %6408
        %v6410 = vsel %vm1976, %v3354, -inf
        %6411 = vmax.xlane.f32.xlu0 %v6410
        %v6412 = vpop.xlane.xlu0 %6411
        %v6413 = vsel %vm1976, %v3359, -inf
        %6414 = vmax.xlane.f32.xlu0 %v6413
        %v6415 = vpop.xlane.xlu0 %6414
        %v6416 = vsel %vm1976, %v3362, -inf
        %6417 = vmax.xlane.f32.xlu0 %v6416
        %v6418 = vpop.xlane.xlu0 %6417
        %v6419 = vsel %vm1976, %v3367, -inf
        %6420 = vmax.xlane.f32.xlu0 %v6419
        %v6421 = vpop.xlane.xlu0 %6420
        %v6422 = vsel %vm1976, %v3370, -inf
        %6423 = vmax.xlane.f32.xlu0 %v6422
        %v6424 = vpop.xlane.xlu0 %6423
        %v6425 = vsel %vm1976, %v3375, -inf
        %6426 = vmax.xlane.f32.xlu0 %v6425
        %v6427 = vpop.xlane.xlu0 %6426
        %v6428 = vsel %vm1976, %v3378, -inf
        %6429 = vmax.xlane.f32.xlu0 %v6428
        %v6430 = vpop.xlane.xlu0 %6429
        %v6431 = vsel %vm1976, %v3383, -inf
        %6432 = vmax.xlane.f32.xlu0 %v6431
        %v6433 = vpop.xlane.xlu0 %6432
        %v6434 = vsel %vm1976, %v3386, -inf
        %6435 = vmax.xlane.f32.xlu0 %v6434
        %v6436 = vpop.xlane.xlu0 %6435
        %v6437 = vsel %vm1976, %v3391, -inf
        %6438 = vmax.xlane.f32.xlu0 %v6437
        %v6439 = vpop.xlane.xlu0 %6438
        %v6440 = vsel %vm1976, %v3394, -inf
        %6441 = vmax.xlane.f32.xlu0 %v6440
        %v6442 = vpop.xlane.xlu0 %6441
        %v6443 = vsel %vm1976, %v3399, -inf
        %6444 = vmax.xlane.f32.xlu0 %v6443
        %v6445 = vpop.xlane.xlu0 %6444
        %v6446 = vsel %vm1976, %v3402, -inf
        %6447 = vmax.xlane.f32.xlu0 %v6446
        %v6448 = vpop.xlane.xlu0 %6447
        %v6449 = vsel %vm1976, %v4800, -inf
        %6450 = vmax.xlane.f32.xlu0 %v6449
        %v6451 = vpop.xlane.xlu0 %6450
        %v6452 = vsel %vm1976, %v4803, -inf
        %6453 = vmax.xlane.f32.xlu0 %v6452
        %v6454 = vpop.xlane.xlu0 %6453
        %v6455 = vsel %vm1976, %v4808, -inf
        %6456 = vmax.xlane.f32.xlu0 %v6455
        %v6457 = vpop.xlane.xlu0 %6456
        %v6458 = vsel %vm1976, %v4811, -inf
        %6459 = vmax.xlane.f32.xlu0 %v6458
        %v6460 = vpop.xlane.xlu0 %6459
        %v6461 = vsel %vm1976, %v4816, -inf
        %6462 = vmax.xlane.f32.xlu0 %v6461
        %v6463 = vpop.xlane.xlu0 %6462
        %v6464 = vsel %vm1976, %v4819, -inf
        %6465 = vmax.xlane.f32.xlu0 %v6464
        %v6466 = vpop.xlane.xlu0 %6465
        %v6467 = vsel %vm1976, %v4824, -inf
        %6468 = vmax.xlane.f32.xlu0 %v6467
        %v6469 = vpop.xlane.xlu0 %6468
        %v6470 = vsel %vm1976, %v4827, -inf
        %6471 = vmax.xlane.f32.xlu0 %v6470
        %v6472 = vpop.xlane.xlu0 %6471
        %v6473 = vsel %vm1976, %v4832, -inf
        %6474 = vmax.xlane.f32.xlu0 %v6473
        %v6475 = vpop.xlane.xlu0 %6474
        %v6476 = vsel %vm1976, %v4835, -inf
        %6477 = vmax.xlane.f32.xlu0 %v6476
        %v6478 = vpop.xlane.xlu0 %6477
        %v6479 = vsel %vm1976, %v4840, -inf
        %6480 = vmax.xlane.f32.xlu0 %v6479
        %v6481 = vpop.xlane.xlu0 %6480
        %v6482 = vsel %vm1976, %v4843, -inf
        %6483 = vmax.xlane.f32.xlu0 %v6482
        %v6484 = vpop.xlane.xlu0 %6483
        %v6485 = vsel %vm1976, %v4848, -inf
        %6486 = vmax.xlane.f32.xlu0 %v6485
        %v6487 = vpop.xlane.xlu0 %6486
        %v6488 = vsel %vm1976, %v4851, -inf
        %6489 = vmax.xlane.f32.xlu0 %v6488
        %v6490 = vpop.xlane.xlu0 %6489
        %v6491 = vsel %vm1976, %v4856, -inf
        %6492 = vmax.xlane.f32.xlu0 %v6491
        %v6493 = vpop.xlane.xlu0 %6492
        %v6494 = vsel %vm1976, %v4859, -inf
        %6495 = vmax.xlane.f32.xlu0 %v6494
        %v6496 = vpop.xlane.xlu0 %6495
        %v6497 = vsel %vm1976, %v4864, -inf
        %6498 = vmax.xlane.f32.xlu0 %v6497
        %v6499 = vpop.xlane.xlu0 %6498
        %v6500 = vsel %vm1976, %v4867, -inf
        %6501 = vmax.xlane.f32.xlu0 %v6500
        %v6502 = vpop.xlane.xlu0 %6501
        %v6503 = vsel %vm1976, %v4872, -inf
        %6504 = vmax.xlane.f32.xlu0 %v6503
        %v6505 = vpop.xlane.xlu0 %6504
        %v6506 = vsel %vm1976, %v4875, -inf
        %6507 = vmax.xlane.f32.xlu0 %v6506
        %v6508 = vpop.xlane.xlu0 %6507
        %v6509 = vsel %vm1976, %v4880, -inf
        %6510 = vmax.xlane.f32.xlu0 %v6509
        %v6511 = vpop.xlane.xlu0 %6510
        %v6512 = vsel %vm1976, %v4883, -inf
        %6513 = vmax.xlane.f32.xlu0 %v6512
        %v6514 = vpop.xlane.xlu0 %6513
        %v6515 = vsel %vm1976, %v4888, -inf
        %6516 = vmax.xlane.f32.xlu0 %v6515
        %v6517 = vpop.xlane.xlu0 %6516
        %v6518 = vsel %vm1976, %v4891, -inf
        %6519 = vmax.xlane.f32.xlu0 %v6518
        %v6520 = vpop.xlane.xlu0 %6519
        %v6521 = vsel %vm1976, %v4896, -inf
        %6522 = vmax.xlane.f32.xlu0 %v6521
        %v6523 = vpop.xlane.xlu0 %6522
        %v6524 = vsel %vm1976, %v4899, -inf
        %6525 = vmax.xlane.f32.xlu0 %v6524
        %v6526 = vpop.xlane.xlu0 %6525
        %v6527 = vsel %vm1976, %v4904, -inf
        %6528 = vmax.xlane.f32.xlu0 %v6527
        %v6529 = vpop.xlane.xlu0 %6528
        %v6530 = vsel %vm1976, %v4907, -inf
        %6531 = vmax.xlane.f32.xlu0 %v6530
        %v6532 = vpop.xlane.xlu0 %6531
        %v6533 = vsel %vm1976, %v4912, -inf
        %6534 = vmax.xlane.f32.xlu0 %v6533
        %v6535 = vpop.xlane.xlu0 %6534
        %v6536 = vsel %vm1976, %v4915, -inf
        %6537 = vmax.xlane.f32.xlu0 %v6536
        %v6538 = vpop.xlane.xlu0 %6537
        %v6539 = vsel %vm1976, %v4920, -inf
        %6540 = vmax.xlane.f32.xlu0 %v6539
        %v6541 = vpop.xlane.xlu0 %6540
        %v6542 = vsel %vm1976, %v4923, -inf
        %6543 = vmax.xlane.f32.xlu0 %v6542
        %v6544 = vpop.xlane.xlu0 %6543
        %v6545 = vsel %vm1976, %v4961, -inf
        %6546 = vmax.xlane.f32.xlu0 %v6545
        %v6547 = vpop.xlane.xlu0 %6546
        %v6548 = vsel %vm1976, %v4964, -inf
        %6549 = vmax.xlane.f32.xlu0 %v6548
        %v6550 = vpop.xlane.xlu0 %6549
        %v6551 = vsel %vm1976, %v4969, -inf
        %6552 = vmax.xlane.f32.xlu0 %v6551
        %v6553 = vpop.xlane.xlu0 %6552
        %v6554 = vsel %vm1976, %v4972, -inf
        %6555 = vmax.xlane.f32.xlu0 %v6554
        %v6556 = vpop.xlane.xlu0 %6555
        %v6557 = vsel %vm1976, %v4977, -inf
        %6558 = vmax.xlane.f32.xlu0 %v6557
        %v6559 = vpop.xlane.xlu0 %6558
        %v6560 = vsel %vm1976, %v4980, -inf
        %6561 = vmax.xlane.f32.xlu0 %v6560
        %v6562 = vpop.xlane.xlu0 %6561
        %v6563 = vsel %vm1976, %v4985, -inf
        %6564 = vmax.xlane.f32.xlu0 %v6563
        %v6565 = vpop.xlane.xlu0 %6564
        %v6566 = vsel %vm1976, %v4988, -inf
        %6567 = vmax.xlane.f32.xlu0 %v6566
        %v6568 = vpop.xlane.xlu0 %6567
        %v6569 = vsel %vm1976, %v4993, -inf
        %6570 = vmax.xlane.f32.xlu0 %v6569
        %v6571 = vpop.xlane.xlu0 %6570
        %v6572 = vsel %vm1976, %v4996, -inf
        %6573 = vmax.xlane.f32.xlu0 %v6572
        %v6574 = vpop.xlane.xlu0 %6573
        %v6575 = vsel %vm1976, %v5001, -inf
        %6576 = vmax.xlane.f32.xlu0 %v6575
        %v6577 = vpop.xlane.xlu0 %6576
        %v6578 = vsel %vm1976, %v5004, -inf
        %6579 = vmax.xlane.f32.xlu0 %v6578
        %v6580 = vpop.xlane.xlu0 %6579
        %v6581 = vsel %vm1976, %v5009, -inf
        %6582 = vmax.xlane.f32.xlu0 %v6581
        %v6583 = vpop.xlane.xlu0 %6582
        %v6584 = vsel %vm1976, %v5012, -inf
        %6585 = vmax.xlane.f32.xlu0 %v6584
        %v6586 = vpop.xlane.xlu0 %6585
        %v6587 = vsel %vm1976, %v5017, -inf
        %6588 = vmax.xlane.f32.xlu0 %v6587
        %v6589 = vpop.xlane.xlu0 %6588
        %v6590 = vsel %vm1976, %v5020, -inf
        %6591 = vmax.xlane.f32.xlu0 %v6590
        %v6592 = vpop.xlane.xlu0 %6591
        %v6593 = vsel %vm1976, %v5025, -inf
        %6594 = vmax.xlane.f32.xlu0 %v6593
        %v6595 = vpop.xlane.xlu0 %6594
        %v6596 = vsel %vm1976, %v5028, -inf
        %6597 = vmax.xlane.f32.xlu0 %v6596
        %v6598 = vpop.xlane.xlu0 %6597
        %v6599 = vsel %vm1976, %v5033, -inf
        %6600 = vmax.xlane.f32.xlu0 %v6599
        %v6601 = vpop.xlane.xlu0 %6600
        %v6602 = vsel %vm1976, %v5036, -inf
        %6603 = vmax.xlane.f32.xlu0 %v6602
        %v6604 = vpop.xlane.xlu0 %6603
        %v6605 = vsel %vm1976, %v5041, -inf
        %6606 = vmax.xlane.f32.xlu0 %v6605
        %v6607 = vpop.xlane.xlu0 %6606
        %v6608 = vsel %vm1976, %v5044, -inf
        %6609 = vmax.xlane.f32.xlu0 %v6608
        %v6610 = vpop.xlane.xlu0 %6609
        %v6611 = vsel %vm1976, %v5049, -inf
        %6612 = vmax.xlane.f32.xlu0 %v6611
        %v6613 = vpop.xlane.xlu0 %6612
        %v6614 = vsel %vm1976, %v5052, -inf
        %6615 = vmax.xlane.f32.xlu0 %v6614
        %v6616 = vpop.xlane.xlu0 %6615
        %v6617 = vsel %vm1976, %v5057, -inf
        %6618 = vmax.xlane.f32.xlu0 %v6617
        %v6619 = vpop.xlane.xlu0 %6618
        %v6620 = vsel %vm1976, %v5060, -inf
        %6621 = vmax.xlane.f32.xlu0 %v6620
        %v6622 = vpop.xlane.xlu0 %6621
        %v6623 = vsel %vm1976, %v5065, -inf
        %6624 = vmax.xlane.f32.xlu0 %v6623
        %v6625 = vpop.xlane.xlu0 %6624
        %v6626 = vsel %vm1976, %v5068, -inf
        %6627 = vmax.xlane.f32.xlu0 %v6626
        %v6628 = vpop.xlane.xlu0 %6627
        %v6629 = vsel %vm1976, %v5073, -inf
        %6630 = vmax.xlane.f32.xlu0 %v6629
        %v6631 = vpop.xlane.xlu0 %6630
        %v6632 = vsel %vm1976, %v5076, -inf
        %6633 = vmax.xlane.f32.xlu0 %v6632
        %v6634 = vpop.xlane.xlu0 %6633
        %v6635 = vsel %vm1976, %v5081, -inf
        %6636 = vmax.xlane.f32.xlu0 %v6635
        %v6637 = vpop.xlane.xlu0 %6636
        %v6638 = vsel %vm1976, %v5084, -inf
        %6639 = vmax.xlane.f32.xlu0 %v6638
        %v6640 = vpop.xlane.xlu0 %6639
        %v6641 = vsel %vm1976, %v5122, -inf
        %6642 = vmax.xlane.f32.xlu0 %v6641
        %v6643 = vpop.xlane.xlu0 %6642
        %v6644 = vsel %vm1976, %v5125, -inf
        %6645 = vmax.xlane.f32.xlu0 %v6644
        %v6646 = vpop.xlane.xlu0 %6645
        %v6647 = vsel %vm1976, %v5130, -inf
        %6648 = vmax.xlane.f32.xlu0 %v6647
        %v6649 = vpop.xlane.xlu0 %6648
        %v6650 = vsel %vm1976, %v5133, -inf
        %6651 = vmax.xlane.f32.xlu0 %v6650
        %v6652 = vpop.xlane.xlu0 %6651
        %v6653 = vsel %vm1976, %v5138, -inf
        %6654 = vmax.xlane.f32.xlu0 %v6653
        %v6655 = vpop.xlane.xlu0 %6654
        %v6656 = vsel %vm1976, %v5141, -inf
        %6657 = vmax.xlane.f32.xlu0 %v6656
        %v6658 = vpop.xlane.xlu0 %6657
        %v6659 = vsel %vm1976, %v5146, -inf
        %6660 = vmax.xlane.f32.xlu0 %v6659
        %v6661 = vpop.xlane.xlu0 %6660
        %v6662 = vsel %vm1976, %v5149, -inf
        %6663 = vmax.xlane.f32.xlu0 %v6662
        %v6664 = vpop.xlane.xlu0 %6663
        %v6665 = vsel %vm1976, %v5154, -inf
        %6666 = vmax.xlane.f32.xlu0 %v6665
        %v6667 = vpop.xlane.xlu0 %6666
        %v6668 = vsel %vm1976, %v5157, -inf
        %6669 = vmax.xlane.f32.xlu0 %v6668
        %v6670 = vpop.xlane.xlu0 %6669
        %v6671 = vsel %vm1976, %v5162, -inf
        %6672 = vmax.xlane.f32.xlu0 %v6671
        %v6673 = vpop.xlane.xlu0 %6672
        %v6674 = vsel %vm1976, %v5165, -inf
        %6675 = vmax.xlane.f32.xlu0 %v6674
        %v6676 = vpop.xlane.xlu0 %6675
        %v6677 = vsel %vm1976, %v5170, -inf
        %6678 = vmax.xlane.f32.xlu0 %v6677
        %v6679 = vpop.xlane.xlu0 %6678
        %v6680 = vsel %vm1976, %v5173, -inf
        %6681 = vmax.xlane.f32.xlu0 %v6680
        %v6682 = vpop.xlane.xlu0 %6681
        %v6683 = vsel %vm1976, %v5178, -inf
        %6684 = vmax.xlane.f32.xlu0 %v6683
        %v6685 = vpop.xlane.xlu0 %6684
        %v6686 = vsel %vm1976, %v5181, -inf
        %6687 = vmax.xlane.f32.xlu0 %v6686
        %v6688 = vpop.xlane.xlu0 %6687
        %v6689 = vsel %vm1976, %v5186, -inf
        %6690 = vmax.xlane.f32.xlu0 %v6689
        %v6691 = vpop.xlane.xlu0 %6690
        %v6692 = vsel %vm1976, %v5189, -inf
        %6693 = vmax.xlane.f32.xlu0 %v6692
        %v6694 = vpop.xlane.xlu0 %6693
        %v6695 = vsel %vm1976, %v5194, -inf
        %6696 = vmax.xlane.f32.xlu0 %v6695
        %v6697 = vpop.xlane.xlu0 %6696
        %v6698 = vsel %vm1976, %v5197, -inf
        %6699 = vmax.xlane.f32.xlu0 %v6698
        %v6700 = vpop.xlane.xlu0 %6699
        %v6701 = vsel %vm1976, %v5202, -inf
        %6702 = vmax.xlane.f32.xlu0 %v6701
        %v6703 = vpop.xlane.xlu0 %6702
        %v6704 = vsel %vm1976, %v5205, -inf
        %6705 = vmax.xlane.f32.xlu0 %v6704
        %v6706 = vpop.xlane.xlu0 %6705
        %v6707 = vsel %vm1976, %v5210, -inf
        %6708 = vmax.xlane.f32.xlu0 %v6707
        %v6709 = vpop.xlane.xlu0 %6708
        %v6710 = vsel %vm1976, %v5213, -inf
        %6711 = vmax.xlane.f32.xlu0 %v6710
        %v6712 = vpop.xlane.xlu0 %6711
        %v6713 = vsel %vm1976, %v5218, -inf
        %6714 = vmax.xlane.f32.xlu0 %v6713
        %v6715 = vpop.xlane.xlu0 %6714
        %v6716 = vsel %vm1976, %v5221, -inf
        %6717 = vmax.xlane.f32.xlu0 %v6716
        %v6718 = vpop.xlane.xlu0 %6717
        %v6719 = vsel %vm1976, %v5226, -inf
        %6720 = vmax.xlane.f32.xlu0 %v6719
        %v6721 = vpop.xlane.xlu0 %6720
        %v6722 = vsel %vm1976, %v5229, -inf
        %6723 = vmax.xlane.f32.xlu0 %v6722
        %v6724 = vpop.xlane.xlu0 %6723
        %v6725 = vsel %vm1976, %v5234, -inf
        %6726 = vmax.xlane.f32.xlu0 %v6725
        %v6727 = vpop.xlane.xlu0 %6726
        %v6728 = vsel %vm1976, %v5237, -inf
        %6729 = vmax.xlane.f32.xlu0 %v6728
        %v6730 = vpop.xlane.xlu0 %6729
        %v6731 = vsel %vm1976, %v5242, -inf
        %6732 = vmax.xlane.f32.xlu0 %v6731
        %v6733 = vpop.xlane.xlu0 %6732
        %v6734 = vsel %vm1976, %v5245, -inf
        %6735 = vmax.xlane.f32.xlu0 %v6734
        %v6736 = vpop.xlane.xlu0 %6735
        %v6737 = vsel %vm1976, %v5283, -inf
        %6738 = vmax.xlane.f32.xlu0 %v6737
        %v6739 = vpop.xlane.xlu0 %6738
        %v6740 = vsel %vm1976, %v5286, -inf
        %6741 = vmax.xlane.f32.xlu0 %v6740
        %v6742 = vpop.xlane.xlu0 %6741
        %v6743 = vsel %vm1976, %v5291, -inf
        %6744 = vmax.xlane.f32.xlu0 %v6743
        %v6745 = vpop.xlane.xlu0 %6744
        %v6746 = vsel %vm1976, %v5294, -inf
        %6747 = vmax.xlane.f32.xlu0 %v6746
        %v6748 = vpop.xlane.xlu0 %6747
        %v6749 = vsel %vm1976, %v5299, -inf
        %6750 = vmax.xlane.f32.xlu0 %v6749
        %v6751 = vpop.xlane.xlu0 %6750
        %v6752 = vsel %vm1976, %v5302, -inf
        %6753 = vmax.xlane.f32.xlu0 %v6752
        %v6754 = vpop.xlane.xlu0 %6753
        %v6755 = vsel %vm1976, %v5307, -inf
        %6756 = vmax.xlane.f32.xlu0 %v6755
        %v6757 = vpop.xlane.xlu0 %6756
        %v6758 = vsel %vm1976, %v5310, -inf
        %6759 = vmax.xlane.f32.xlu0 %v6758
        %v6760 = vpop.xlane.xlu0 %6759
        %v6761 = vsel %vm1976, %v5315, -inf
        %6762 = vmax.xlane.f32.xlu0 %v6761
        %v6763 = vpop.xlane.xlu0 %6762
        %v6764 = vsel %vm1976, %v5318, -inf
        %6765 = vmax.xlane.f32.xlu0 %v6764
        %v6766 = vpop.xlane.xlu0 %6765
        %v6767 = vsel %vm1976, %v5323, -inf
        %6768 = vmax.xlane.f32.xlu0 %v6767
        %v6769 = vpop.xlane.xlu0 %6768
        %v6770 = vsel %vm1976, %v5326, -inf
        %6771 = vmax.xlane.f32.xlu0 %v6770
        %v6772 = vpop.xlane.xlu0 %6771
        %v6773 = vsel %vm1976, %v5331, -inf
        %6774 = vmax.xlane.f32.xlu0 %v6773
        %v6775 = vpop.xlane.xlu0 %6774
        %v6776 = vsel %vm1976, %v5334, -inf
        %6777 = vmax.xlane.f32.xlu0 %v6776
        %v6778 = vpop.xlane.xlu0 %6777
        %v6779 = vsel %vm1976, %v5339, -inf
        %6780 = vmax.xlane.f32.xlu0 %v6779
        %v6781 = vpop.xlane.xlu0 %6780
        %v6782 = vsel %vm1976, %v5342, -inf
        %6783 = vmax.xlane.f32.xlu0 %v6782
        %v6784 = vpop.xlane.xlu0 %6783
        %v6785 = vsel %vm1976, %v5347, -inf
        %6786 = vmax.xlane.f32.xlu0 %v6785
        %v6787 = vpop.xlane.xlu0 %6786
        %v6788 = vsel %vm1976, %v5350, -inf
        %6789 = vmax.xlane.f32.xlu0 %v6788
        %v6790 = vpop.xlane.xlu0 %6789
        %v6791 = vsel %vm1976, %v5355, -inf
        %6792 = vmax.xlane.f32.xlu0 %v6791
        %v6793 = vpop.xlane.xlu0 %6792
        %v6794 = vsel %vm1976, %v5358, -inf
        %6795 = vmax.xlane.f32.xlu0 %v6794
        %v6796 = vpop.xlane.xlu0 %6795
        %v6797 = vsel %vm1976, %v5363, -inf
        %6798 = vmax.xlane.f32.xlu0 %v6797
        %v6799 = vpop.xlane.xlu0 %6798
        %v6800 = vsel %vm1976, %v5366, -inf
        %6801 = vmax.xlane.f32.xlu0 %v6800
        %v6802 = vpop.xlane.xlu0 %6801
        %v6803 = vsel %vm1976, %v5371, -inf
        %6804 = vmax.xlane.f32.xlu0 %v6803
        %v6805 = vpop.xlane.xlu0 %6804
        %v6806 = vsel %vm1976, %v5374, -inf
        %6807 = vmax.xlane.f32.xlu0 %v6806
        %v6808 = vpop.xlane.xlu0 %6807
        %v6809 = vsel %vm1976, %v5379, -inf
        %6810 = vmax.xlane.f32.xlu0 %v6809
        %v6811 = vpop.xlane.xlu0 %6810
        %v6812 = vsel %vm1976, %v5382, -inf
        %6813 = vmax.xlane.f32.xlu0 %v6812
        %v6814 = vpop.xlane.xlu0 %6813
        %v6815 = vsel %vm1976, %v5387, -inf
        %6816 = vmax.xlane.f32.xlu0 %v6815
        %v6817 = vpop.xlane.xlu0 %6816
        %v6818 = vsel %vm1976, %v5390, -inf
        %6819 = vmax.xlane.f32.xlu0 %v6818
        %v6820 = vpop.xlane.xlu0 %6819
        %v6821 = vsel %vm1976, %v5395, -inf
        %6822 = vmax.xlane.f32.xlu0 %v6821
        %v6823 = vpop.xlane.xlu0 %6822
        %v6824 = vsel %vm1976, %v5398, -inf
        %6825 = vmax.xlane.f32.xlu0 %v6824
        %v6826 = vpop.xlane.xlu0 %6825
        %v6827 = vsel %vm1976, %v5403, -inf
        %6828 = vmax.xlane.f32.xlu0 %v6827
        %v6829 = vpop.xlane.xlu0 %6828
        %v6830 = vsel %vm1976, %v5406, -inf
        %6831 = vmax.xlane.f32.xlu0 %v6830
        %v6832 = vpop.xlane.xlu0 %6831
        %v6833 = vmax.f32 %v6067, %v6451
        %v6834 = vmax.f32 %v6070, %v6454
        %v6835 = vmax.f32 %v6073, %v6457
        %v6836 = vmax.f32 %v6076, %v6460
        %v6837 = vmax.f32 %v6079, %v6463
        %v6838 = vmax.f32 %v6082, %v6466
        %v6839 = vmax.f32 %v6085, %v6469
        %v6840 = vmax.f32 %v6088, %v6472
        %v6841 = vmax.f32 %v6091, %v6475
        %v6842 = vmax.f32 %v6094, %v6478
        %v6843 = vmax.f32 %v6097, %v6481
        %v6844 = vmax.f32 %v6100, %v6484
        %v6845 = vmax.f32 %v6103, %v6487
        %v6846 = vmax.f32 %v6106, %v6490
        %v6847 = vmax.f32 %v6109, %v6493
        %v6848 = vmax.f32 %v6112, %v6496
        %v6849 = vmax.f32 %v6115, %v6499
        %v6850 = vmax.f32 %v6118, %v6502
        %v6851 = vmax.f32 %v6121, %v6505
        %v6852 = vmax.f32 %v6124, %v6508
        %v6853 = vmax.f32 %v6127, %v6511
        %v6854 = vmax.f32 %v6130, %v6514
        %v6855 = vmax.f32 %v6133, %v6517
        %v6856 = vmax.f32 %v6136, %v6520
        %v6857 = vmax.f32 %v6139, %v6523
        %v6858 = vmax.f32 %v6142, %v6526
        %v6859 = vmax.f32 %v6145, %v6529
        %v6860 = vmax.f32 %v6148, %v6532
        %v6861 = vmax.f32 %v6151, %v6535
        %v6862 = vmax.f32 %v6154, %v6538
        %v6863 = vmax.f32 %v6157, %v6541
        %v6864 = vmax.f32 %v6160, %v6544
        %v6865 = vmax.f32 %v6163, %v6547
        %v6866 = vmax.f32 %v6166, %v6550
        %v6867 = vmax.f32 %v6169, %v6553
        %v6868 = vmax.f32 %v6172, %v6556
        %v6869 = vmax.f32 %v6175, %v6559
        %v6870 = vmax.f32 %v6178, %v6562
        %v6871 = vmax.f32 %v6181, %v6565
        %v6872 = vmax.f32 %v6184, %v6568
        %v6873 = vmax.f32 %v6187, %v6571
        %v6874 = vmax.f32 %v6190, %v6574
        %v6875 = vmax.f32 %v6193, %v6577
        %v6876 = vmax.f32 %v6196, %v6580
        %v6877 = vmax.f32 %v6199, %v6583
        %v6878 = vmax.f32 %v6202, %v6586
        %v6879 = vmax.f32 %v6205, %v6589
        %v6880 = vmax.f32 %v6208, %v6592
        %v6881 = vmax.f32 %v6211, %v6595
        %v6882 = vmax.f32 %v6214, %v6598
        %v6883 = vmax.f32 %v6217, %v6601
        %v6884 = vmax.f32 %v6220, %v6604
        %v6885 = vmax.f32 %v6223, %v6607
        %v6886 = vmax.f32 %v6226, %v6610
        %v6887 = vmax.f32 %v6229, %v6613
        %v6888 = vmax.f32 %v6232, %v6616
        %v6889 = vmax.f32 %v6235, %v6619
        %v6890 = vmax.f32 %v6238, %v6622
        %v6891 = vmax.f32 %v6241, %v6625
        %v6892 = vmax.f32 %v6244, %v6628
        %v6893 = vmax.f32 %v6247, %v6631
        %v6894 = vmax.f32 %v6250, %v6634
        %v6895 = vmax.f32 %v6253, %v6637
        %v6896 = vmax.f32 %v6256, %v6640
        %v6897 = vmax.f32 %v6259, %v6643
        %v6898 = vmax.f32 %v6262, %v6646
        %v6899 = vmax.f32 %v6265, %v6649
        %v6900 = vmax.f32 %v6268, %v6652
        %v6901 = vmax.f32 %v6271, %v6655
        %v6902 = vmax.f32 %v6274, %v6658
        %v6903 = vmax.f32 %v6277, %v6661
        %v6904 = vmax.f32 %v6280, %v6664
        %v6905 = vmax.f32 %v6283, %v6667
        %v6906 = vmax.f32 %v6286, %v6670
        %v6907 = vmax.f32 %v6289, %v6673
        %v6908 = vmax.f32 %v6292, %v6676
        %v6909 = vmax.f32 %v6295, %v6679
        %v6910 = vmax.f32 %v6298, %v6682
        %v6911 = vmax.f32 %v6301, %v6685
        %v6912 = vmax.f32 %v6304, %v6688
        %v6913 = vmax.f32 %v6307, %v6691
        %v6914 = vmax.f32 %v6310, %v6694
        %v6915 = vmax.f32 %v6313, %v6697
        %v6916 = vmax.f32 %v6316, %v6700
        %v6917 = vmax.f32 %v6319, %v6703
        %v6918 = vmax.f32 %v6322, %v6706
        %v6919 = vmax.f32 %v6325, %v6709
        %v6920 = vmax.f32 %v6328, %v6712
        %v6921 = vmax.f32 %v6331, %v6715
        %v6922 = vmax.f32 %v6334, %v6718
        %v6923 = vmax.f32 %v6337, %v6721
        %v6924 = vmax.f32 %v6340, %v6724
        %v6925 = vmax.f32 %v6343, %v6727
        %v6926 = vmax.f32 %v6346, %v6730
        %v6927 = vmax.f32 %v6349, %v6733
        %v6928 = vmax.f32 %v6352, %v6736
        %v6929 = vmax.f32 %v6355, %v6739
        %v6930 = vmax.f32 %v6358, %v6742
        %v6931 = vmax.f32 %v6361, %v6745
        %v6932 = vmax.f32 %v6364, %v6748
        %v6933 = vmax.f32 %v6367, %v6751
        %v6934 = vmax.f32 %v6370, %v6754
        %v6935 = vmax.f32 %v6373, %v6757
        %v6936 = vmax.f32 %v6376, %v6760
        %v6937 = vmax.f32 %v6379, %v6763
        %v6938 = vmax.f32 %v6382, %v6766
        %v6939 = vmax.f32 %v6385, %v6769
        %v6940 = vmax.f32 %v6388, %v6772
        %v6941 = vmax.f32 %v6391, %v6775
        %v6942 = vmax.f32 %v6394, %v6778
        %v6943 = vmax.f32 %v6397, %v6781
        %v6944 = vmax.f32 %v6400, %v6784
        %v6945 = vmax.f32 %v6403, %v6787
        %v6946 = vmax.f32 %v6406, %v6790
        %v6947 = vmax.f32 %v6409, %v6793
        %v6948 = vmax.f32 %v6412, %v6796
        %v6949 = vmax.f32 %v6415, %v6799
        %v6950 = vmax.f32 %v6418, %v6802
        %v6951 = vmax.f32 %v6421, %v6805
        %v6952 = vmax.f32 %v6424, %v6808
        %v6953 = vmax.f32 %v6427, %v6811
        %v6954 = vmax.f32 %v6430, %v6814
        %v6955 = vmax.f32 %v6433, %v6817
        %v6956 = vmax.f32 %v6436, %v6820
        %v6957 = vmax.f32 %v6439, %v6823
        %v6958 = vmax.f32 %v6442, %v6826
        %v6959 = vmax.f32 %v6445, %v6829
        %v6960 = vmax.f32 %v6448, %v6832
        %v6961 = vsub.f32 %v2652, %v6833
        %v6962 = vsub.f32 %v2655, %v6834
        %v6963 = vsub.f32 %v2660, %v6835
        %v6964 = vsub.f32 %v2663, %v6836
        %v6965 = vsub.f32 %v2668, %v6837
        %v6966 = vsub.f32 %v2671, %v6838
        %v6967 = vsub.f32 %v2676, %v6839
        %v6968 = vsub.f32 %v2679, %v6840
        %v6969 = vsub.f32 %v2684, %v6841
        %v6970 = vsub.f32 %v2687, %v6842
        %v6971 = vsub.f32 %v2692, %v6843
        %v6972 = vsub.f32 %v2695, %v6844
        %v6973 = vsub.f32 %v2700, %v6845
        %v6974 = vsub.f32 %v2703, %v6846
        %v6975 = vsub.f32 %v2708, %v6847
        %v6976 = vsub.f32 %v2711, %v6848
        %v6977 = vsub.f32 %v2716, %v6849
        %v6978 = vsub.f32 %v2719, %v6850
        %v6979 = vsub.f32 %v2724, %v6851
        %v6980 = vsub.f32 %v2727, %v6852
        %v6981 = vsub.f32 %v2732, %v6853
        %v6982 = vsub.f32 %v2735, %v6854
        %v6983 = vsub.f32 %v2740, %v6855
        %v6984 = vsub.f32 %v2743, %v6856
        %v6985 = vsub.f32 %v2748, %v6857
        %v6986 = vsub.f32 %v2751, %v6858
        %v6987 = vsub.f32 %v2756, %v6859
        %v6988 = vsub.f32 %v2759, %v6860
        %v6989 = vsub.f32 %v2764, %v6861
        %v6990 = vsub.f32 %v2767, %v6862
        %v6991 = vsub.f32 %v2772, %v6863
        %v6992 = vsub.f32 %v2775, %v6864
        %v6993 = vsub.f32 %v2861, %v6865
        %v6994 = vsub.f32 %v2864, %v6866
        %v6995 = vsub.f32 %v2869, %v6867
        %v6996 = vsub.f32 %v2872, %v6868
        %v6997 = vsub.f32 %v2877, %v6869
        %v6998 = vsub.f32 %v2880, %v6870
        %v6999 = vsub.f32 %v2885, %v6871
        %v7000 = vsub.f32 %v2888, %v6872
        %v7001 = vsub.f32 %v2893, %v6873
        %v7002 = vsub.f32 %v2896, %v6874
        %v7003 = vsub.f32 %v2901, %v6875
        %v7004 = vsub.f32 %v2904, %v6876
        %v7005 = vsub.f32 %v2909, %v6877
        %v7006 = vsub.f32 %v2912, %v6878
        %v7007 = vsub.f32 %v2917, %v6879
        %v7008 = vsub.f32 %v2920, %v6880
        %v7009 = vsub.f32 %v2925, %v6881
        %v7010 = vsub.f32 %v2928, %v6882
        %v7011 = vsub.f32 %v2933, %v6883
        %v7012 = vsub.f32 %v2936, %v6884
        %v7013 = vsub.f32 %v2941, %v6885
        %v7014 = vsub.f32 %v2944, %v6886
        %v7015 = vsub.f32 %v2949, %v6887
        %v7016 = vsub.f32 %v2952, %v6888
        %v7017 = vsub.f32 %v2957, %v6889
        %v7018 = vsub.f32 %v2960, %v6890
        %v7019 = vsub.f32 %v2965, %v6891
        %v7020 = vsub.f32 %v2968, %v6892
        %v7021 = vsub.f32 %v2973, %v6893
        %v7022 = vsub.f32 %v2976, %v6894
        %v7023 = vsub.f32 %v2981, %v6895
        %v7024 = vsub.f32 %v2984, %v6896
        %v7025 = vsub.f32 %v3070, %v6897
        %v7026 = vsub.f32 %v3073, %v6898
        %v7027 = vsub.f32 %v3078, %v6899
        %v7028 = vsub.f32 %v3081, %v6900
        %v7029 = vsub.f32 %v3086, %v6901
        %v7030 = vsub.f32 %v3089, %v6902
        %v7031 = vsub.f32 %v3094, %v6903
        %v7032 = vsub.f32 %v3097, %v6904
        %v7033 = vsub.f32 %v3102, %v6905
        %v7034 = vsub.f32 %v3105, %v6906
        %v7035 = vsub.f32 %v3110, %v6907
        %v7036 = vsub.f32 %v3113, %v6908
        %v7037 = vsub.f32 %v3118, %v6909
        %v7038 = vsub.f32 %v3121, %v6910
        %v7039 = vsub.f32 %v3126, %v6911
        %v7040 = vsub.f32 %v3129, %v6912
        %v7041 = vsub.f32 %v3134, %v6913
        %v7042 = vsub.f32 %v3137, %v6914
        %v7043 = vsub.f32 %v3142, %v6915
        %v7044 = vsub.f32 %v3145, %v6916
        %v7045 = vsub.f32 %v3150, %v6917
        %v7046 = vsub.f32 %v3153, %v6918
        %v7047 = vsub.f32 %v3158, %v6919
        %v7048 = vsub.f32 %v3161, %v6920
        %v7049 = vsub.f32 %v3166, %v6921
        %v7050 = vsub.f32 %v3169, %v6922
        %v7051 = vsub.f32 %v3174, %v6923
        %v7052 = vsub.f32 %v3177, %v6924
        %v7053 = vsub.f32 %v3182, %v6925
        %v7054 = vsub.f32 %v3185, %v6926
        %v7055 = vsub.f32 %v3190, %v6927
        %v7056 = vsub.f32 %v3193, %v6928
        %v7057 = vsub.f32 %v3279, %v6929
        %v7058 = vsub.f32 %v3282, %v6930
        %v7059 = vsub.f32 %v3287, %v6931
        %v7060 = vsub.f32 %v3290, %v6932
        %v7061 = vsub.f32 %v3295, %v6933
        %v7062 = vsub.f32 %v3298, %v6934
        %v7063 = vsub.f32 %v3303, %v6935
        %v7064 = vsub.f32 %v3306, %v6936
        %v7065 = vsub.f32 %v3311, %v6937
        %v7066 = vsub.f32 %v3314, %v6938
        %v7067 = vsub.f32 %v3319, %v6939
        %v7068 = vsub.f32 %v3322, %v6940
        %v7069 = vsub.f32 %v3327, %v6941
        %v7070 = vsub.f32 %v3330, %v6942
        %v7071 = vsub.f32 %v3335, %v6943
        %v7072 = vsub.f32 %v3338, %v6944
        %v7073 = vsub.f32 %v3343, %v6945
        %v7074 = vsub.f32 %v3346, %v6946
        %v7075 = vsub.f32 %v3351, %v6947
        %v7076 = vsub.f32 %v3354, %v6948
        %v7077 = vsub.f32 %v3359, %v6949
        %v7078 = vsub.f32 %v3362, %v6950
        %v7079 = vsub.f32 %v3367, %v6951
        %v7080 = vsub.f32 %v3370, %v6952
        %v7081 = vsub.f32 %v3375, %v6953
        %v7082 = vsub.f32 %v3378, %v6954
        %v7083 = vsub.f32 %v3383, %v6955
        %v7084 = vsub.f32 %v3386, %v6956
        %v7085 = vsub.f32 %v3391, %v6957
        %v7086 = vsub.f32 %v3394, %v6958
        %v7087 = vsub.f32 %v3399, %v6959
        %v7088 = vsub.f32 %v3402, %v6960
        %v7089 = vmul.f32 %v6961, 1.442695
        %v7090 = vpow.pop %v7089
        %v7091 = vmul.f32 %v6962, 1.442695
        %v7092 = vpow.pop %v7091
        %v7093 = vmul.f32 %v6963, 1.442695
        %v7094 = vpow.pop %v7093
        %v7095 = vmul.f32 %v6964, 1.442695
        %v7096 = vpow.pop %v7095
        %v7097 = vmul.f32 %v6965, 1.442695
        %v7098 = vpow.pop %v7097
        %v7099 = vmul.f32 %v6966, 1.442695
        %v7100 = vpow.pop %v7099
        %v7101 = vmul.f32 %v6967, 1.442695
        %v7102 = vpow.pop %v7101
        %v7103 = vmul.f32 %v6968, 1.442695
        %v7104 = vpow.pop %v7103
        %v7105 = vmul.f32 %v6969, 1.442695
        %v7106 = vpow.pop %v7105
        %v7107 = vmul.f32 %v6970, 1.442695
        %v7108 = vpow.pop %v7107
        %v7109 = vmul.f32 %v6971, 1.442695
        %v7110 = vpow.pop %v7109
        %v7111 = vmul.f32 %v6972, 1.442695
        %v7112 = vpow.pop %v7111
        %v7113 = vmul.f32 %v6973, 1.442695
        %v7114 = vpow.pop %v7113
        %v7115 = vmul.f32 %v6974, 1.442695
        %v7116 = vpow.pop %v7115
        %v7117 = vmul.f32 %v6975, 1.442695
        %v7118 = vpow.pop %v7117
        %v7119 = vmul.f32 %v6976, 1.442695
        %v7120 = vpow.pop %v7119
        %v7121 = vmul.f32 %v6977, 1.442695
        %v7122 = vpow.pop %v7121
        %v7123 = vmul.f32 %v6978, 1.442695
        %v7124 = vpow.pop %v7123
        %v7125 = vmul.f32 %v6979, 1.442695
        %v7126 = vpow.pop %v7125
        %v7127 = vmul.f32 %v6980, 1.442695
        %v7128 = vpow.pop %v7127
        %v7129 = vmul.f32 %v6981, 1.442695
        %v7130 = vpow.pop %v7129
        %v7131 = vmul.f32 %v6982, 1.442695
        %v7132 = vpow.pop %v7131
        %v7133 = vmul.f32 %v6983, 1.442695
        %v7134 = vpow.pop %v7133
        %v7135 = vmul.f32 %v6984, 1.442695
        %v7136 = vpow.pop %v7135
        %v7137 = vmul.f32 %v6985, 1.442695
        %v7138 = vpow.pop %v7137
        %v7139 = vmul.f32 %v6986, 1.442695
        %v7140 = vpow.pop %v7139
        %v7141 = vmul.f32 %v6987, 1.442695
        %v7142 = vpow.pop %v7141
        %v7143 = vmul.f32 %v6988, 1.442695
        %v7144 = vpow.pop %v7143
        %v7145 = vmul.f32 %v6989, 1.442695
        %v7146 = vpow.pop %v7145
        %v7147 = vmul.f32 %v6990, 1.442695
        %v7148 = vpow.pop %v7147
        %v7149 = vmul.f32 %v6991, 1.442695
        %v7150 = vpow.pop %v7149
        %v7151 = vmul.f32 %v6992, 1.442695
        %v7152 = vpow.pop %v7151
        %v7153 = vmul.f32 %v6993, 1.442695
        %v7154 = vpow.pop %v7153
        %v7155 = vmul.f32 %v6994, 1.442695
        %v7156 = vpow.pop %v7155
        %v7157 = vmul.f32 %v6995, 1.442695
        %v7158 = vpow.pop %v7157
        %v7159 = vmul.f32 %v6996, 1.442695
        %v7160 = vpow.pop %v7159
        %v7161 = vmul.f32 %v6997, 1.442695
        %v7162 = vpow.pop %v7161
        %v7163 = vmul.f32 %v6998, 1.442695
        %v7164 = vpow.pop %v7163
        %v7165 = vmul.f32 %v6999, 1.442695
        %v7166 = vpow.pop %v7165
        %v7167 = vmul.f32 %v7000, 1.442695
        %v7168 = vpow.pop %v7167
        %v7169 = vmul.f32 %v7001, 1.442695
        %v7170 = vpow.pop %v7169
        %v7171 = vmul.f32 %v7002, 1.442695
        %v7172 = vpow.pop %v7171
        %v7173 = vmul.f32 %v7003, 1.442695
        %v7174 = vpow.pop %v7173
        %v7175 = vmul.f32 %v7004, 1.442695
        %v7176 = vpow.pop %v7175
        %v7177 = vmul.f32 %v7005, 1.442695
        %v7178 = vpow.pop %v7177
        %v7179 = vmul.f32 %v7006, 1.442695
        %v7180 = vpow.pop %v7179
        %v7181 = vmul.f32 %v7007, 1.442695
        %v7182 = vpow.pop %v7181
        %v7183 = vmul.f32 %v7008, 1.442695
        %v7184 = vpow.pop %v7183
        %v7185 = vmul.f32 %v7009, 1.442695
        %v7186 = vpow.pop %v7185
        %v7187 = vmul.f32 %v7010, 1.442695
        %v7188 = vpow.pop %v7187
        %v7189 = vmul.f32 %v7011, 1.442695
        %v7190 = vpow.pop %v7189
        %v7191 = vmul.f32 %v7012, 1.442695
        %v7192 = vpow.pop %v7191
        %v7193 = vmul.f32 %v7013, 1.442695
        %v7194 = vpow.pop %v7193
        %v7195 = vmul.f32 %v7014, 1.442695
        %v7196 = vpow.pop %v7195
        %v7197 = vmul.f32 %v7015, 1.442695
        %v7198 = vpow.pop %v7197
        %v7199 = vmul.f32 %v7016, 1.442695
        %v7200 = vpow.pop %v7199
        %v7201 = vmul.f32 %v7017, 1.442695
        %v7202 = vpow.pop %v7201
        %v7203 = vmul.f32 %v7018, 1.442695
        %v7204 = vpow.pop %v7203
        %v7205 = vmul.f32 %v7019, 1.442695
        %v7206 = vpow.pop %v7205
        %v7207 = vmul.f32 %v7020, 1.442695
        %v7208 = vpow.pop %v7207
        %v7209 = vmul.f32 %v7021, 1.442695
        %v7210 = vpow.pop %v7209
        %v7211 = vmul.f32 %v7022, 1.442695
        %v7212 = vpow.pop %v7211
        %v7213 = vmul.f32 %v7023, 1.442695
        %v7214 = vpow.pop %v7213
        %v7215 = vmul.f32 %v7024, 1.442695
        %v7216 = vpow.pop %v7215
        %v7217 = vmul.f32 %v7025, 1.442695
        %v7218 = vpow.pop %v7217
        %v7219 = vmul.f32 %v7026, 1.442695
        %v7220 = vpow.pop %v7219
        %v7221 = vmul.f32 %v7027, 1.442695
        %v7222 = vpow.pop %v7221
        %v7223 = vmul.f32 %v7028, 1.442695
        %v7224 = vpow.pop %v7223
        %v7225 = vmul.f32 %v7029, 1.442695
        %v7226 = vpow.pop %v7225
        %v7227 = vmul.f32 %v7030, 1.442695
        %v7228 = vpow.pop %v7227
        %v7229 = vmul.f32 %v7031, 1.442695
        %v7230 = vpow.pop %v7229
        %v7231 = vmul.f32 %v7032, 1.442695
        %v7232 = vpow.pop %v7231
        %v7233 = vmul.f32 %v7033, 1.442695
        %v7234 = vpow.pop %v7233
        %v7235 = vmul.f32 %v7034, 1.442695
        %v7236 = vpow.pop %v7235
        %v7237 = vmul.f32 %v7035, 1.442695
        %v7238 = vpow.pop %v7237
        %v7239 = vmul.f32 %v7036, 1.442695
        %v7240 = vpow.pop %v7239
        %v7241 = vmul.f32 %v7037, 1.442695
        %v7242 = vpow.pop %v7241
        %v7243 = vmul.f32 %v7038, 1.442695
        %v7244 = vpow.pop %v7243
        %v7245 = vmul.f32 %v7039, 1.442695
        %v7246 = vpow.pop %v7245
        %v7247 = vmul.f32 %v7040, 1.442695
        %v7248 = vpow.pop %v7247
        %v7249 = vmul.f32 %v7041, 1.442695
        %v7250 = vpow.pop %v7249
        %v7251 = vmul.f32 %v7042, 1.442695
        %v7252 = vpow.pop %v7251
        %v7253 = vmul.f32 %v7043, 1.442695
        %v7254 = vpow.pop %v7253
        %v7255 = vmul.f32 %v7044, 1.442695
        %v7256 = vpow.pop %v7255
        %v7257 = vmul.f32 %v7045, 1.442695
        %v7258 = vpow.pop %v7257
        %v7259 = vmul.f32 %v7046, 1.442695
        %v7260 = vpow.pop %v7259
        %v7261 = vmul.f32 %v7047, 1.442695
        %v7262 = vpow.pop %v7261
        %v7263 = vmul.f32 %v7048, 1.442695
        %v7264 = vpow.pop %v7263
        %v7265 = vmul.f32 %v7049, 1.442695
        %v7266 = vpow.pop %v7265
        %v7267 = vmul.f32 %v7050, 1.442695
        %v7268 = vpow.pop %v7267
        %v7269 = vmul.f32 %v7051, 1.442695
        %v7270 = vpow.pop %v7269
        %v7271 = vmul.f32 %v7052, 1.442695
        %v7272 = vpow.pop %v7271
        %v7273 = vmul.f32 %v7053, 1.442695
        %v7274 = vpow.pop %v7273
        %v7275 = vmul.f32 %v7054, 1.442695
        %v7276 = vpow.pop %v7275
        %v7277 = vmul.f32 %v7055, 1.442695
        %v7278 = vpow.pop %v7277
        %v7279 = vmul.f32 %v7056, 1.442695
        %v7280 = vpow.pop %v7279
        %v7281 = vmul.f32 %v7057, 1.442695
        %v7282 = vpow.pop %v7281
        %v7283 = vmul.f32 %v7058, 1.442695
        %v7284 = vpow.pop %v7283
        %v7285 = vmul.f32 %v7059, 1.442695
        %v7286 = vpow.pop %v7285
        %v7287 = vmul.f32 %v7060, 1.442695
        %v7288 = vpow.pop %v7287
        %v7289 = vmul.f32 %v7061, 1.442695
        %v7290 = vpow.pop %v7289
        %v7291 = vmul.f32 %v7062, 1.442695
        %v7292 = vpow.pop %v7291
        %v7293 = vmul.f32 %v7063, 1.442695
        %v7294 = vpow.pop %v7293
        %v7295 = vmul.f32 %v7064, 1.442695
        %v7296 = vpow.pop %v7295
        %v7297 = vmul.f32 %v7065, 1.442695
        %v7298 = vpow.pop %v7297
        %v7299 = vmul.f32 %v7066, 1.442695
        %v7300 = vpow.pop %v7299
        %v7301 = vmul.f32 %v7067, 1.442695
        %v7302 = vpow.pop %v7301
        %v7303 = vmul.f32 %v7068, 1.442695
        %v7304 = vpow.pop %v7303
        %v7305 = vmul.f32 %v7069, 1.442695
        %v7306 = vpow.pop %v7305
        %v7307 = vmul.f32 %v7070, 1.442695
        %v7308 = vpow.pop %v7307
        %v7309 = vmul.f32 %v7071, 1.442695
        %v7310 = vpow.pop %v7309
        %v7311 = vmul.f32 %v7072, 1.442695
        %v7312 = vpow.pop %v7311
        %v7313 = vmul.f32 %v7073, 1.442695
        %v7314 = vpow.pop %v7313
        %v7315 = vmul.f32 %v7074, 1.442695
        %v7316 = vpow.pop %v7315
        %v7317 = vmul.f32 %v7075, 1.442695
        %v7318 = vpow.pop %v7317
        %v7319 = vmul.f32 %v7076, 1.442695
        %v7320 = vpow.pop %v7319
        %v7321 = vmul.f32 %v7077, 1.442695
        %v7322 = vpow.pop %v7321
        %v7323 = vmul.f32 %v7078, 1.442695
        %v7324 = vpow.pop %v7323
        %v7325 = vmul.f32 %v7079, 1.442695
        %v7326 = vpow.pop %v7325
        %v7327 = vmul.f32 %v7080, 1.442695
        %v7328 = vpow.pop %v7327
        %v7329 = vmul.f32 %v7081, 1.442695
        %v7330 = vpow.pop %v7329
        %v7331 = vmul.f32 %v7082, 1.442695
        %v7332 = vpow.pop %v7331
        %v7333 = vmul.f32 %v7083, 1.442695
        %v7334 = vpow.pop %v7333
        %v7335 = vmul.f32 %v7084, 1.442695
        %v7336 = vpow.pop %v7335
        %v7337 = vmul.f32 %v7085, 1.442695
        %v7338 = vpow.pop %v7337
        %v7339 = vmul.f32 %v7086, 1.442695
        %v7340 = vpow.pop %v7339
        %v7341 = vmul.f32 %v7087, 1.442695
        %v7342 = vpow.pop %v7341
        %v7343 = vmul.f32 %v7088, 1.442695
        %v7344 = vpow.pop %v7343
        %v7345 = vsub.f32 %v4800, %v6833
        %v7346 = vsub.f32 %v4803, %v6834
        %v7347 = vsub.f32 %v4808, %v6835
        %v7348 = vsub.f32 %v4811, %v6836
        %v7349 = vsub.f32 %v4816, %v6837
        %v7350 = vsub.f32 %v4819, %v6838
        %v7351 = vsub.f32 %v4824, %v6839
        %v7352 = vsub.f32 %v4827, %v6840
        %v7353 = vsub.f32 %v4832, %v6841
        %v7354 = vsub.f32 %v4835, %v6842
        %v7355 = vsub.f32 %v4840, %v6843
        %v7356 = vsub.f32 %v4843, %v6844
        %v7357 = vsub.f32 %v4848, %v6845
        %v7358 = vsub.f32 %v4851, %v6846
        %v7359 = vsub.f32 %v4856, %v6847
        %v7360 = vsub.f32 %v4859, %v6848
        %v7361 = vsub.f32 %v4864, %v6849
        %v7362 = vsub.f32 %v4867, %v6850
        %v7363 = vsub.f32 %v4872, %v6851
        %v7364 = vsub.f32 %v4875, %v6852
        %v7365 = vsub.f32 %v4880, %v6853
        %v7366 = vsub.f32 %v4883, %v6854
        %v7367 = vsub.f32 %v4888, %v6855
        %v7368 = vsub.f32 %v4891, %v6856
        %v7369 = vsub.f32 %v4896, %v6857
        %v7370 = vsub.f32 %v4899, %v6858
        %v7371 = vsub.f32 %v4904, %v6859
        %v7372 = vsub.f32 %v4907, %v6860
        %v7373 = vsub.f32 %v4912, %v6861
        %v7374 = vsub.f32 %v4915, %v6862
        %v7375 = vsub.f32 %v4920, %v6863
        %v7376 = vsub.f32 %v4923, %v6864
        %v7377 = vsub.f32 %v4961, %v6865
        %v7378 = vsub.f32 %v4964, %v6866
        %v7379 = vsub.f32 %v4969, %v6867
        %v7380 = vsub.f32 %v4972, %v6868
        %v7381 = vsub.f32 %v4977, %v6869
        %v7382 = vsub.f32 %v4980, %v6870
        %v7383 = vsub.f32 %v4985, %v6871
        %v7384 = vsub.f32 %v4988, %v6872
        %v7385 = vsub.f32 %v4993, %v6873
        %v7386 = vsub.f32 %v4996, %v6874
        %v7387 = vsub.f32 %v5001, %v6875
        %v7388 = vsub.f32 %v5004, %v6876
        %v7389 = vsub.f32 %v5009, %v6877
        %v7390 = vsub.f32 %v5012, %v6878
        %v7391 = vsub.f32 %v5017, %v6879
        %v7392 = vsub.f32 %v5020, %v6880
        %v7393 = vsub.f32 %v5025, %v6881
        %v7394 = vsub.f32 %v5028, %v6882
        %v7395 = vsub.f32 %v5033, %v6883
        %v7396 = vsub.f32 %v5036, %v6884
        %v7397 = vsub.f32 %v5041, %v6885
        %v7398 = vsub.f32 %v5044, %v6886
        %v7399 = vsub.f32 %v5049, %v6887
        %v7400 = vsub.f32 %v5052, %v6888
        %v7401 = vsub.f32 %v5057, %v6889
        %v7402 = vsub.f32 %v5060, %v6890
        %v7403 = vsub.f32 %v5065, %v6891
        %v7404 = vsub.f32 %v5068, %v6892
        %v7405 = vsub.f32 %v5073, %v6893
        %v7406 = vsub.f32 %v5076, %v6894
        %v7407 = vsub.f32 %v5081, %v6895
        %v7408 = vsub.f32 %v5084, %v6896
        %v7409 = vsub.f32 %v5122, %v6897
        %v7410 = vsub.f32 %v5125, %v6898
        %v7411 = vsub.f32 %v5130, %v6899
        %v7412 = vsub.f32 %v5133, %v6900
        %v7413 = vsub.f32 %v5138, %v6901
        %v7414 = vsub.f32 %v5141, %v6902
        %v7415 = vsub.f32 %v5146, %v6903
        %v7416 = vsub.f32 %v5149, %v6904
        %v7417 = vsub.f32 %v5154, %v6905
        %v7418 = vsub.f32 %v5157, %v6906
        %v7419 = vsub.f32 %v5162, %v6907
        %v7420 = vsub.f32 %v5165, %v6908
        %v7421 = vsub.f32 %v5170, %v6909
        %v7422 = vsub.f32 %v5173, %v6910
        %v7423 = vsub.f32 %v5178, %v6911
        %v7424 = vsub.f32 %v5181, %v6912
        %v7425 = vsub.f32 %v5186, %v6913
        %v7426 = vsub.f32 %v5189, %v6914
        %v7427 = vsub.f32 %v5194, %v6915
        %v7428 = vsub.f32 %v5197, %v6916
        %v7429 = vsub.f32 %v5202, %v6917
        %v7430 = vsub.f32 %v5205, %v6918
        %v7431 = vsub.f32 %v5210, %v6919
        %v7432 = vsub.f32 %v5213, %v6920
        %v7433 = vsub.f32 %v5218, %v6921
        %v7434 = vsub.f32 %v5221, %v6922
        %v7435 = vsub.f32 %v5226, %v6923
        %v7436 = vsub.f32 %v5229, %v6924
        %v7437 = vsub.f32 %v5234, %v6925
        %v7438 = vsub.f32 %v5237, %v6926
        %v7439 = vsub.f32 %v5242, %v6927
        %v7440 = vsub.f32 %v5245, %v6928
        %v7441 = vsub.f32 %v5283, %v6929
        %v7442 = vsub.f32 %v5286, %v6930
        %v7443 = vsub.f32 %v5291, %v6931
        %v7444 = vsub.f32 %v5294, %v6932
        %v7445 = vsub.f32 %v5299, %v6933
        %v7446 = vsub.f32 %v5302, %v6934
        %v7447 = vsub.f32 %v5307, %v6935
        %v7448 = vsub.f32 %v5310, %v6936
        %v7449 = vsub.f32 %v5315, %v6937
        %v7450 = vsub.f32 %v5318, %v6938
        %v7451 = vsub.f32 %v5323, %v6939
        %v7452 = vsub.f32 %v5326, %v6940
        %v7453 = vsub.f32 %v5331, %v6941
        %v7454 = vsub.f32 %v5334, %v6942
        %v7455 = vsub.f32 %v5339, %v6943
        %v7456 = vsub.f32 %v5342, %v6944
        %v7457 = vsub.f32 %v5347, %v6945
        %v7458 = vsub.f32 %v5350, %v6946
        %v7459 = vsub.f32 %v5355, %v6947
        %v7460 = vsub.f32 %v5358, %v6948
        %v7461 = vsub.f32 %v5363, %v6949
        %v7462 = vsub.f32 %v5366, %v6950
        %v7463 = vsub.f32 %v5371, %v6951
        %v7464 = vsub.f32 %v5374, %v6952
        %v7465 = vsub.f32 %v5379, %v6953
        %v7466 = vsub.f32 %v5382, %v6954
        %v7467 = vsub.f32 %v5387, %v6955
        %v7468 = vsub.f32 %v5390, %v6956
        %v7469 = vsub.f32 %v5395, %v6957
        %v7470 = vsub.f32 %v5398, %v6958
        %v7471 = vsub.f32 %v5403, %v6959
        %v7472 = vsub.f32 %v5406, %v6960
        %v7473 = vmul.f32 %v7345, 1.442695
        %v7474 = vpow.pop %v7473
        %v7475 = vmul.f32 %v7346, 1.442695
        %v7476 = vpow.pop %v7475
        %v7477 = vmul.f32 %v7347, 1.442695
        %v7478 = vpow.pop %v7477
        %v7479 = vmul.f32 %v7348, 1.442695
        %v7480 = vpow.pop %v7479
        %v7481 = vmul.f32 %v7349, 1.442695
        %v7482 = vpow.pop %v7481
        %v7483 = vmul.f32 %v7350, 1.442695
        %v7484 = vpow.pop %v7483
        %v7485 = vmul.f32 %v7351, 1.442695
        %v7486 = vpow.pop %v7485
        %v7487 = vmul.f32 %v7352, 1.442695
        %v7488 = vpow.pop %v7487
        %v7489 = vmul.f32 %v7353, 1.442695
        %v7490 = vpow.pop %v7489
        %v7491 = vmul.f32 %v7354, 1.442695
        %v7492 = vpow.pop %v7491
        %v7493 = vmul.f32 %v7355, 1.442695
        %v7494 = vpow.pop %v7493
        %v7495 = vmul.f32 %v7356, 1.442695
        %v7496 = vpow.pop %v7495
        %v7497 = vmul.f32 %v7357, 1.442695
        %v7498 = vpow.pop %v7497
        %v7499 = vmul.f32 %v7358, 1.442695
        %v7500 = vpow.pop %v7499
        %v7501 = vmul.f32 %v7359, 1.442695
        %v7502 = vpow.pop %v7501
        %v7503 = vmul.f32 %v7360, 1.442695
        %v7504 = vpow.pop %v7503
        %v7505 = vmul.f32 %v7361, 1.442695
        %v7506 = vpow.pop %v7505
        %v7507 = vmul.f32 %v7362, 1.442695
        %v7508 = vpow.pop %v7507
        %v7509 = vmul.f32 %v7363, 1.442695
        %v7510 = vpow.pop %v7509
        %v7511 = vmul.f32 %v7364, 1.442695
        %v7512 = vpow.pop %v7511
        %v7513 = vmul.f32 %v7365, 1.442695
        %v7514 = vpow.pop %v7513
        %v7515 = vmul.f32 %v7366, 1.442695
        %v7516 = vpow.pop %v7515
        %v7517 = vmul.f32 %v7367, 1.442695
        %v7518 = vpow.pop %v7517
        %v7519 = vmul.f32 %v7368, 1.442695
        %v7520 = vpow.pop %v7519
        %v7521 = vmul.f32 %v7369, 1.442695
        %v7522 = vpow.pop %v7521
        %v7523 = vmul.f32 %v7370, 1.442695
        %v7524 = vpow.pop %v7523
        %v7525 = vmul.f32 %v7371, 1.442695
        %v7526 = vpow.pop %v7525
        %v7527 = vmul.f32 %v7372, 1.442695
        %v7528 = vpow.pop %v7527
        %v7529 = vmul.f32 %v7373, 1.442695
        %v7530 = vpow.pop %v7529
        %v7531 = vmul.f32 %v7374, 1.442695
        %v7532 = vpow.pop %v7531
        %v7533 = vmul.f32 %v7375, 1.442695
        %v7534 = vpow.pop %v7533
        %v7535 = vmul.f32 %v7376, 1.442695
        %v7536 = vpow.pop %v7535
        %v7537 = vmul.f32 %v7377, 1.442695
        %v7538 = vpow.pop %v7537
        %v7539 = vmul.f32 %v7378, 1.442695
        %v7540 = vpow.pop %v7539
        %v7541 = vmul.f32 %v7379, 1.442695
        %v7542 = vpow.pop %v7541
        %v7543 = vmul.f32 %v7380, 1.442695
        %v7544 = vpow.pop %v7543
        %v7545 = vmul.f32 %v7381, 1.442695
        %v7546 = vpow.pop %v7545
        %v7547 = vmul.f32 %v7382, 1.442695
        %v7548 = vpow.pop %v7547
        %v7549 = vmul.f32 %v7383, 1.442695
        %v7550 = vpow.pop %v7549
        %v7551 = vmul.f32 %v7384, 1.442695
        %v7552 = vpow.pop %v7551
        %v7553 = vmul.f32 %v7385, 1.442695
        %v7554 = vpow.pop %v7553
        %v7555 = vmul.f32 %v7386, 1.442695
        %v7556 = vpow.pop %v7555
        %v7557 = vmul.f32 %v7387, 1.442695
        %v7558 = vpow.pop %v7557
        %v7559 = vmul.f32 %v7388, 1.442695
        %v7560 = vpow.pop %v7559
        %v7561 = vmul.f32 %v7389, 1.442695
        %v7562 = vpow.pop %v7561
        %v7563 = vmul.f32 %v7390, 1.442695
        %v7564 = vpow.pop %v7563
        %v7565 = vmul.f32 %v7391, 1.442695
        %v7566 = vpow.pop %v7565
        %v7567 = vmul.f32 %v7392, 1.442695
        %v7568 = vpow.pop %v7567
        %v7569 = vmul.f32 %v7393, 1.442695
        %v7570 = vpow.pop %v7569
        %v7571 = vmul.f32 %v7394, 1.442695
        %v7572 = vpow.pop %v7571
        %v7573 = vmul.f32 %v7395, 1.442695
        %v7574 = vpow.pop %v7573
        %v7575 = vmul.f32 %v7396, 1.442695
        %v7576 = vpow.pop %v7575
        %v7577 = vmul.f32 %v7397, 1.442695
        %v7578 = vpow.pop %v7577
        %v7579 = vmul.f32 %v7398, 1.442695
        %v7580 = vpow.pop %v7579
        %v7581 = vmul.f32 %v7399, 1.442695
        %v7582 = vpow.pop %v7581
        %v7583 = vmul.f32 %v7400, 1.442695
        %v7584 = vpow.pop %v7583
        %v7585 = vmul.f32 %v7401, 1.442695
        %v7586 = vpow.pop %v7585
        %v7587 = vmul.f32 %v7402, 1.442695
        %v7588 = vpow.pop %v7587
        %v7589 = vmul.f32 %v7403, 1.442695
        %v7590 = vpow.pop %v7589
        %v7591 = vmul.f32 %v7404, 1.442695
        %v7592 = vpow.pop %v7591
        %v7593 = vmul.f32 %v7405, 1.442695
        %v7594 = vpow.pop %v7593
        %v7595 = vmul.f32 %v7406, 1.442695
        %v7596 = vpow.pop %v7595
        %v7597 = vmul.f32 %v7407, 1.442695
        %v7598 = vpow.pop %v7597
        %v7599 = vmul.f32 %v7408, 1.442695
        %v7600 = vpow.pop %v7599
        %v7601 = vmul.f32 %v7409, 1.442695
        %v7602 = vpow.pop %v7601
        %v7603 = vmul.f32 %v7410, 1.442695
        %v7604 = vpow.pop %v7603
        %v7605 = vmul.f32 %v7411, 1.442695
        %v7606 = vpow.pop %v7605
        %v7607 = vmul.f32 %v7412, 1.442695
        %v7608 = vpow.pop %v7607
        %v7609 = vmul.f32 %v7413, 1.442695
        %v7610 = vpow.pop %v7609
        %v7611 = vmul.f32 %v7414, 1.442695
        %v7612 = vpow.pop %v7611
        %v7613 = vmul.f32 %v7415, 1.442695
        %v7614 = vpow.pop %v7613
        %v7615 = vmul.f32 %v7416, 1.442695
        %v7616 = vpow.pop %v7615
        %v7617 = vmul.f32 %v7417, 1.442695
        %v7618 = vpow.pop %v7617
        %v7619 = vmul.f32 %v7418, 1.442695
        %v7620 = vpow.pop %v7619
        %v7621 = vmul.f32 %v7419, 1.442695
        %v7622 = vpow.pop %v7621
        %v7623 = vmul.f32 %v7420, 1.442695
        %v7624 = vpow.pop %v7623
        %v7625 = vmul.f32 %v7421, 1.442695
        %v7626 = vpow.pop %v7625
        %v7627 = vmul.f32 %v7422, 1.442695
        %v7628 = vpow.pop %v7627
        %v7629 = vmul.f32 %v7423, 1.442695
        %v7630 = vpow.pop %v7629
        %v7631 = vmul.f32 %v7424, 1.442695
        %v7632 = vpow.pop %v7631
        %v7633 = vmul.f32 %v7425, 1.442695
        %v7634 = vpow.pop %v7633
        %v7635 = vmul.f32 %v7426, 1.442695
        %v7636 = vpow.pop %v7635
        %v7637 = vmul.f32 %v7427, 1.442695
        %v7638 = vpow.pop %v7637
        %v7639 = vmul.f32 %v7428, 1.442695
        %v7640 = vpow.pop %v7639
        %v7641 = vmul.f32 %v7429, 1.442695
        %v7642 = vpow.pop %v7641
        %v7643 = vmul.f32 %v7430, 1.442695
        %v7644 = vpow.pop %v7643
        %v7645 = vmul.f32 %v7431, 1.442695
        %v7646 = vpow.pop %v7645
        %v7647 = vmul.f32 %v7432, 1.442695
        %v7648 = vpow.pop %v7647
        %v7649 = vmul.f32 %v7433, 1.442695
        %v7650 = vpow.pop %v7649
        %v7651 = vmul.f32 %v7434, 1.442695
        %v7652 = vpow.pop %v7651
        %v7653 = vmul.f32 %v7435, 1.442695
        %v7654 = vpow.pop %v7653
        %v7655 = vmul.f32 %v7436, 1.442695
        %v7656 = vpow.pop %v7655
        %v7657 = vmul.f32 %v7437, 1.442695
        %v7658 = vpow.pop %v7657
        %v7659 = vmul.f32 %v7438, 1.442695
        %v7660 = vpow.pop %v7659
        %v7661 = vmul.f32 %v7439, 1.442695
        %v7662 = vpow.pop %v7661
        %v7663 = vmul.f32 %v7440, 1.442695
        %v7664 = vpow.pop %v7663
        %v7665 = vmul.f32 %v7441, 1.442695
        %v7666 = vpow.pop %v7665
        %v7667 = vmul.f32 %v7442, 1.442695
        %v7668 = vpow.pop %v7667
        %v7669 = vmul.f32 %v7443, 1.442695
        %v7670 = vpow.pop %v7669
        %v7671 = vmul.f32 %v7444, 1.442695
        %v7672 = vpow.pop %v7671
        %v7673 = vmul.f32 %v7445, 1.442695
        %v7674 = vpow.pop %v7673
        %v7675 = vmul.f32 %v7446, 1.442695
        %v7676 = vpow.pop %v7675
        %v7677 = vmul.f32 %v7447, 1.442695
        %v7678 = vpow.pop %v7677
        %v7679 = vmul.f32 %v7448, 1.442695
        %v7680 = vpow.pop %v7679
        %v7681 = vmul.f32 %v7449, 1.442695
        %v7682 = vpow.pop %v7681
        %v7683 = vmul.f32 %v7450, 1.442695
        %v7684 = vpow.pop %v7683
        %v7685 = vmul.f32 %v7451, 1.442695
        %v7686 = vpow.pop %v7685
        %v7687 = vmul.f32 %v7452, 1.442695
        %v7688 = vpow.pop %v7687
        %v7689 = vmul.f32 %v7453, 1.442695
        %v7690 = vpow.pop %v7689
        %v7691 = vmul.f32 %v7454, 1.442695
        %v7692 = vpow.pop %v7691
        %v7693 = vmul.f32 %v7455, 1.442695
        %v7694 = vpow.pop %v7693
        %v7695 = vmul.f32 %v7456, 1.442695
        %v7696 = vpow.pop %v7695
        %v7697 = vmul.f32 %v7457, 1.442695
        %v7698 = vpow.pop %v7697
        %v7699 = vmul.f32 %v7458, 1.442695
        %v7700 = vpow.pop %v7699
        %v7701 = vmul.f32 %v7459, 1.442695
        %v7702 = vpow.pop %v7701
        %v7703 = vmul.f32 %v7460, 1.442695
        %v7704 = vpow.pop %v7703
        %v7705 = vmul.f32 %v7461, 1.442695
        %v7706 = vpow.pop %v7705
        %v7707 = vmul.f32 %v7462, 1.442695
        %v7708 = vpow.pop %v7707
        %v7709 = vmul.f32 %v7463, 1.442695
        %v7710 = vpow.pop %v7709
        %v7711 = vmul.f32 %v7464, 1.442695
        %v7712 = vpow.pop %v7711
        %v7713 = vmul.f32 %v7465, 1.442695
        %v7714 = vpow.pop %v7713
        %v7715 = vmul.f32 %v7466, 1.442695
        %v7716 = vpow.pop %v7715
        %v7717 = vmul.f32 %v7467, 1.442695
        %v7718 = vpow.pop %v7717
        %v7719 = vmul.f32 %v7468, 1.442695
        %v7720 = vpow.pop %v7719
        %v7721 = vmul.f32 %v7469, 1.442695
        %v7722 = vpow.pop %v7721
        %v7723 = vmul.f32 %v7470, 1.442695
        %v7724 = vpow.pop %v7723
        %v7725 = vmul.f32 %v7471, 1.442695
        %v7726 = vpow.pop %v7725
        %v7727 = vmul.f32 %v7472, 1.442695
        %v7728 = vpow.pop %v7727
        %v7729 = vsel %vm1976, %v7090, 0.0
        %7730 = vadd.xlane.f32.xlu0 %v7729
        %v7731 = vpop.xlane.xlu0 %7730
        %v7732 = vsel %vm1976, %v7092, 0.0
        %7733 = vadd.xlane.f32.xlu0 %v7732
        %v7734 = vpop.xlane.xlu0 %7733
        %v7735 = vsel %vm1976, %v7094, 0.0
        %7736 = vadd.xlane.f32.xlu0 %v7735
        %v7737 = vpop.xlane.xlu0 %7736
        %v7738 = vsel %vm1976, %v7096, 0.0
        %7739 = vadd.xlane.f32.xlu0 %v7738
        %v7740 = vpop.xlane.xlu0 %7739
        %v7741 = vsel %vm1976, %v7098, 0.0
        %7742 = vadd.xlane.f32.xlu0 %v7741
        %v7743 = vpop.xlane.xlu0 %7742
        %v7744 = vsel %vm1976, %v7100, 0.0
        %7745 = vadd.xlane.f32.xlu0 %v7744
        %v7746 = vpop.xlane.xlu0 %7745
        %v7747 = vsel %vm1976, %v7102, 0.0
        %7748 = vadd.xlane.f32.xlu0 %v7747
        %v7749 = vpop.xlane.xlu0 %7748
        %v7750 = vsel %vm1976, %v7104, 0.0
        %7751 = vadd.xlane.f32.xlu0 %v7750
        %v7752 = vpop.xlane.xlu0 %7751
        %v7753 = vsel %vm1976, %v7106, 0.0
        %7754 = vadd.xlane.f32.xlu0 %v7753
        %v7755 = vpop.xlane.xlu0 %7754
        %v7756 = vsel %vm1976, %v7108, 0.0
        %7757 = vadd.xlane.f32.xlu0 %v7756
        %v7758 = vpop.xlane.xlu0 %7757
        %v7759 = vsel %vm1976, %v7110, 0.0
        %7760 = vadd.xlane.f32.xlu0 %v7759
        %v7761 = vpop.xlane.xlu0 %7760
        %v7762 = vsel %vm1976, %v7112, 0.0
        %7763 = vadd.xlane.f32.xlu0 %v7762
        %v7764 = vpop.xlane.xlu0 %7763
        %v7765 = vsel %vm1976, %v7114, 0.0
        %7766 = vadd.xlane.f32.xlu0 %v7765
        %v7767 = vpop.xlane.xlu0 %7766
        %v7768 = vsel %vm1976, %v7116, 0.0
        %7769 = vadd.xlane.f32.xlu0 %v7768
        %v7770 = vpop.xlane.xlu0 %7769
        %v7771 = vsel %vm1976, %v7118, 0.0
        %7772 = vadd.xlane.f32.xlu0 %v7771
        %v7773 = vpop.xlane.xlu0 %7772
        %v7774 = vsel %vm1976, %v7120, 0.0
        %7775 = vadd.xlane.f32.xlu0 %v7774
        %v7776 = vpop.xlane.xlu0 %7775
        %v7777 = vsel %vm1976, %v7122, 0.0
        %7778 = vadd.xlane.f32.xlu0 %v7777
        %v7779 = vpop.xlane.xlu0 %7778
        %v7780 = vsel %vm1976, %v7124, 0.0
        %7781 = vadd.xlane.f32.xlu0 %v7780
        %v7782 = vpop.xlane.xlu0 %7781
        %v7783 = vsel %vm1976, %v7126, 0.0
        %7784 = vadd.xlane.f32.xlu0 %v7783
        %v7785 = vpop.xlane.xlu0 %7784
        %v7786 = vsel %vm1976, %v7128, 0.0
        %7787 = vadd.xlane.f32.xlu0 %v7786
        %v7788 = vpop.xlane.xlu0 %7787
        %v7789 = vsel %vm1976, %v7130, 0.0
        %7790 = vadd.xlane.f32.xlu0 %v7789
        %v7791 = vpop.xlane.xlu0 %7790
        %v7792 = vsel %vm1976, %v7132, 0.0
        %7793 = vadd.xlane.f32.xlu0 %v7792
        %v7794 = vpop.xlane.xlu0 %7793
        %v7795 = vsel %vm1976, %v7134, 0.0
        %7796 = vadd.xlane.f32.xlu0 %v7795
        %v7797 = vpop.xlane.xlu0 %7796
        %v7798 = vsel %vm1976, %v7136, 0.0
        %7799 = vadd.xlane.f32.xlu0 %v7798
        %v7800 = vpop.xlane.xlu0 %7799
        %v7801 = vsel %vm1976, %v7138, 0.0
        %7802 = vadd.xlane.f32.xlu0 %v7801
        %v7803 = vpop.xlane.xlu0 %7802
        %v7804 = vsel %vm1976, %v7140, 0.0
        %7805 = vadd.xlane.f32.xlu0 %v7804
        %v7806 = vpop.xlane.xlu0 %7805
        %v7807 = vsel %vm1976, %v7142, 0.0
        %7808 = vadd.xlane.f32.xlu0 %v7807
        %v7809 = vpop.xlane.xlu0 %7808
        %v7810 = vsel %vm1976, %v7144, 0.0
        %7811 = vadd.xlane.f32.xlu0 %v7810
        %v7812 = vpop.xlane.xlu0 %7811
        %v7813 = vsel %vm1976, %v7146, 0.0
        %7814 = vadd.xlane.f32.xlu0 %v7813
        %v7815 = vpop.xlane.xlu0 %7814
        %v7816 = vsel %vm1976, %v7148, 0.0
        %7817 = vadd.xlane.f32.xlu0 %v7816
        %v7818 = vpop.xlane.xlu0 %7817
        %v7819 = vsel %vm1976, %v7150, 0.0
        %7820 = vadd.xlane.f32.xlu0 %v7819
        %v7821 = vpop.xlane.xlu0 %7820
        %v7822 = vsel %vm1976, %v7152, 0.0
        %7823 = vadd.xlane.f32.xlu0 %v7822
        %v7824 = vpop.xlane.xlu0 %7823
        %v7825 = vsel %vm1976, %v7154, 0.0
        %7826 = vadd.xlane.f32.xlu0 %v7825
        %v7827 = vpop.xlane.xlu0 %7826
        %v7828 = vsel %vm1976, %v7156, 0.0
        %7829 = vadd.xlane.f32.xlu0 %v7828
        %v7830 = vpop.xlane.xlu0 %7829
        %v7831 = vsel %vm1976, %v7158, 0.0
        %7832 = vadd.xlane.f32.xlu0 %v7831
        %v7833 = vpop.xlane.xlu0 %7832
        %v7834 = vsel %vm1976, %v7160, 0.0
        %7835 = vadd.xlane.f32.xlu0 %v7834
        %v7836 = vpop.xlane.xlu0 %7835
        %v7837 = vsel %vm1976, %v7162, 0.0
        %7838 = vadd.xlane.f32.xlu0 %v7837
        %v7839 = vpop.xlane.xlu0 %7838
        %v7840 = vsel %vm1976, %v7164, 0.0
        %7841 = vadd.xlane.f32.xlu0 %v7840
        %v7842 = vpop.xlane.xlu0 %7841
        %v7843 = vsel %vm1976, %v7166, 0.0
        %7844 = vadd.xlane.f32.xlu0 %v7843
        %v7845 = vpop.xlane.xlu0 %7844
        %v7846 = vsel %vm1976, %v7168, 0.0
        %7847 = vadd.xlane.f32.xlu0 %v7846
        %v7848 = vpop.xlane.xlu0 %7847
        %v7849 = vsel %vm1976, %v7170, 0.0
        %7850 = vadd.xlane.f32.xlu0 %v7849
        %v7851 = vpop.xlane.xlu0 %7850
        %v7852 = vsel %vm1976, %v7172, 0.0
        %7853 = vadd.xlane.f32.xlu0 %v7852
        %v7854 = vpop.xlane.xlu0 %7853
        %v7855 = vsel %vm1976, %v7174, 0.0
        %7856 = vadd.xlane.f32.xlu0 %v7855
        %v7857 = vpop.xlane.xlu0 %7856
        %v7858 = vsel %vm1976, %v7176, 0.0
        %7859 = vadd.xlane.f32.xlu0 %v7858
        %v7860 = vpop.xlane.xlu0 %7859
        %v7861 = vsel %vm1976, %v7178, 0.0
        %7862 = vadd.xlane.f32.xlu0 %v7861
        %v7863 = vpop.xlane.xlu0 %7862
        %v7864 = vsel %vm1976, %v7180, 0.0
        %7865 = vadd.xlane.f32.xlu0 %v7864
        %v7866 = vpop.xlane.xlu0 %7865
        %v7867 = vsel %vm1976, %v7182, 0.0
        %7868 = vadd.xlane.f32.xlu0 %v7867
        %v7869 = vpop.xlane.xlu0 %7868
        %v7870 = vsel %vm1976, %v7184, 0.0
        %7871 = vadd.xlane.f32.xlu0 %v7870
        %v7872 = vpop.xlane.xlu0 %7871
        %v7873 = vsel %vm1976, %v7186, 0.0
        %7874 = vadd.xlane.f32.xlu0 %v7873
        %v7875 = vpop.xlane.xlu0 %7874
        %v7876 = vsel %vm1976, %v7188, 0.0
        %7877 = vadd.xlane.f32.xlu0 %v7876
        %v7878 = vpop.xlane.xlu0 %7877
        %v7879 = vsel %vm1976, %v7190, 0.0
        %7880 = vadd.xlane.f32.xlu0 %v7879
        %v7881 = vpop.xlane.xlu0 %7880
        %v7882 = vsel %vm1976, %v7192, 0.0
        %7883 = vadd.xlane.f32.xlu0 %v7882
        %v7884 = vpop.xlane.xlu0 %7883
        %v7885 = vsel %vm1976, %v7194, 0.0
        %7886 = vadd.xlane.f32.xlu0 %v7885
        %v7887 = vpop.xlane.xlu0 %7886
        %v7888 = vsel %vm1976, %v7196, 0.0
        %7889 = vadd.xlane.f32.xlu0 %v7888
        %v7890 = vpop.xlane.xlu0 %7889
        %v7891 = vsel %vm1976, %v7198, 0.0
        %7892 = vadd.xlane.f32.xlu0 %v7891
        %v7893 = vpop.xlane.xlu0 %7892
        %v7894 = vsel %vm1976, %v7200, 0.0
        %7895 = vadd.xlane.f32.xlu0 %v7894
        %v7896 = vpop.xlane.xlu0 %7895
        %v7897 = vsel %vm1976, %v7202, 0.0
        %7898 = vadd.xlane.f32.xlu0 %v7897
        %v7899 = vpop.xlane.xlu0 %7898
        %v7900 = vsel %vm1976, %v7204, 0.0
        %7901 = vadd.xlane.f32.xlu0 %v7900
        %v7902 = vpop.xlane.xlu0 %7901
        %v7903 = vsel %vm1976, %v7206, 0.0
        %7904 = vadd.xlane.f32.xlu0 %v7903
        %v7905 = vpop.xlane.xlu0 %7904
        %v7906 = vsel %vm1976, %v7208, 0.0
        %7907 = vadd.xlane.f32.xlu0 %v7906
        %v7908 = vpop.xlane.xlu0 %7907
        %v7909 = vsel %vm1976, %v7210, 0.0
        %7910 = vadd.xlane.f32.xlu0 %v7909
        %v7911 = vpop.xlane.xlu0 %7910
        %v7912 = vsel %vm1976, %v7212, 0.0
        %7913 = vadd.xlane.f32.xlu0 %v7912
        %v7914 = vpop.xlane.xlu0 %7913
        %v7915 = vsel %vm1976, %v7214, 0.0
        %7916 = vadd.xlane.f32.xlu0 %v7915
        %v7917 = vpop.xlane.xlu0 %7916
        %v7918 = vsel %vm1976, %v7216, 0.0
        %7919 = vadd.xlane.f32.xlu0 %v7918
        %v7920 = vpop.xlane.xlu0 %7919
        %v7921 = vsel %vm1976, %v7218, 0.0
        %7922 = vadd.xlane.f32.xlu0 %v7921
        %v7923 = vpop.xlane.xlu0 %7922
        %v7924 = vsel %vm1976, %v7220, 0.0
        %7925 = vadd.xlane.f32.xlu0 %v7924
        %v7926 = vpop.xlane.xlu0 %7925
        %v7927 = vsel %vm1976, %v7222, 0.0
        %7928 = vadd.xlane.f32.xlu0 %v7927
        %v7929 = vpop.xlane.xlu0 %7928
        %v7930 = vsel %vm1976, %v7224, 0.0
        %7931 = vadd.xlane.f32.xlu0 %v7930
        %v7932 = vpop.xlane.xlu0 %7931
        %v7933 = vsel %vm1976, %v7226, 0.0
        %7934 = vadd.xlane.f32.xlu0 %v7933
        %v7935 = vpop.xlane.xlu0 %7934
        %v7936 = vsel %vm1976, %v7228, 0.0
        %7937 = vadd.xlane.f32.xlu0 %v7936
        %v7938 = vpop.xlane.xlu0 %7937
        %v7939 = vsel %vm1976, %v7230, 0.0
        %7940 = vadd.xlane.f32.xlu0 %v7939
        %v7941 = vpop.xlane.xlu0 %7940
        %v7942 = vsel %vm1976, %v7232, 0.0
        %7943 = vadd.xlane.f32.xlu0 %v7942
        %v7944 = vpop.xlane.xlu0 %7943
        %v7945 = vsel %vm1976, %v7234, 0.0
        %7946 = vadd.xlane.f32.xlu0 %v7945
        %v7947 = vpop.xlane.xlu0 %7946
        %v7948 = vsel %vm1976, %v7236, 0.0
        %7949 = vadd.xlane.f32.xlu0 %v7948
        %v7950 = vpop.xlane.xlu0 %7949
        %v7951 = vsel %vm1976, %v7238, 0.0
        %7952 = vadd.xlane.f32.xlu0 %v7951
        %v7953 = vpop.xlane.xlu0 %7952
        %v7954 = vsel %vm1976, %v7240, 0.0
        %7955 = vadd.xlane.f32.xlu0 %v7954
        %v7956 = vpop.xlane.xlu0 %7955
        %v7957 = vsel %vm1976, %v7242, 0.0
        %7958 = vadd.xlane.f32.xlu0 %v7957
        %v7959 = vpop.xlane.xlu0 %7958
        %v7960 = vsel %vm1976, %v7244, 0.0
        %7961 = vadd.xlane.f32.xlu0 %v7960
        %v7962 = vpop.xlane.xlu0 %7961
        %v7963 = vsel %vm1976, %v7246, 0.0
        %7964 = vadd.xlane.f32.xlu0 %v7963
        %v7965 = vpop.xlane.xlu0 %7964
        %v7966 = vsel %vm1976, %v7248, 0.0
        %7967 = vadd.xlane.f32.xlu0 %v7966
        %v7968 = vpop.xlane.xlu0 %7967
        %v7969 = vsel %vm1976, %v7250, 0.0
        %7970 = vadd.xlane.f32.xlu0 %v7969
        %v7971 = vpop.xlane.xlu0 %7970
        %v7972 = vsel %vm1976, %v7252, 0.0
        %7973 = vadd.xlane.f32.xlu0 %v7972
        %v7974 = vpop.xlane.xlu0 %7973
        %v7975 = vsel %vm1976, %v7254, 0.0
        %7976 = vadd.xlane.f32.xlu0 %v7975
        %v7977 = vpop.xlane.xlu0 %7976
        %v7978 = vsel %vm1976, %v7256, 0.0
        %7979 = vadd.xlane.f32.xlu0 %v7978
        %v7980 = vpop.xlane.xlu0 %7979
        %v7981 = vsel %vm1976, %v7258, 0.0
        %7982 = vadd.xlane.f32.xlu0 %v7981
        %v7983 = vpop.xlane.xlu0 %7982
        %v7984 = vsel %vm1976, %v7260, 0.0
        %7985 = vadd.xlane.f32.xlu0 %v7984
        %v7986 = vpop.xlane.xlu0 %7985
        %v7987 = vsel %vm1976, %v7262, 0.0
        %7988 = vadd.xlane.f32.xlu0 %v7987
        %v7989 = vpop.xlane.xlu0 %7988
        %v7990 = vsel %vm1976, %v7264, 0.0
        %7991 = vadd.xlane.f32.xlu0 %v7990
        %v7992 = vpop.xlane.xlu0 %7991
        %v7993 = vsel %vm1976, %v7266, 0.0
        %7994 = vadd.xlane.f32.xlu0 %v7993
        %v7995 = vpop.xlane.xlu0 %7994
        %v7996 = vsel %vm1976, %v7268, 0.0
        %7997 = vadd.xlane.f32.xlu0 %v7996
        %v7998 = vpop.xlane.xlu0 %7997
        %v7999 = vsel %vm1976, %v7270, 0.0
        %8000 = vadd.xlane.f32.xlu0 %v7999
        %v8001 = vpop.xlane.xlu0 %8000
        %v8002 = vsel %vm1976, %v7272, 0.0
        %8003 = vadd.xlane.f32.xlu0 %v8002
        %v8004 = vpop.xlane.xlu0 %8003
        %v8005 = vsel %vm1976, %v7274, 0.0
        %8006 = vadd.xlane.f32.xlu0 %v8005
        %v8007 = vpop.xlane.xlu0 %8006
        %v8008 = vsel %vm1976, %v7276, 0.0
        %8009 = vadd.xlane.f32.xlu0 %v8008
        %v8010 = vpop.xlane.xlu0 %8009
        %v8011 = vsel %vm1976, %v7278, 0.0
        %8012 = vadd.xlane.f32.xlu0 %v8011
        %v8013 = vpop.xlane.xlu0 %8012
        %v8014 = vsel %vm1976, %v7280, 0.0
        %8015 = vadd.xlane.f32.xlu0 %v8014
        %v8016 = vpop.xlane.xlu0 %8015
        %v8017 = vsel %vm1976, %v7282, 0.0
        %8018 = vadd.xlane.f32.xlu0 %v8017
        %v8019 = vpop.xlane.xlu0 %8018
        %v8020 = vsel %vm1976, %v7284, 0.0
        %8021 = vadd.xlane.f32.xlu0 %v8020
        %v8022 = vpop.xlane.xlu0 %8021
        %v8023 = vsel %vm1976, %v7286, 0.0
        %8024 = vadd.xlane.f32.xlu0 %v8023
        %v8025 = vpop.xlane.xlu0 %8024
        %v8026 = vsel %vm1976, %v7288, 0.0
        %8027 = vadd.xlane.f32.xlu0 %v8026
        %v8028 = vpop.xlane.xlu0 %8027
        %v8029 = vsel %vm1976, %v7290, 0.0
        %8030 = vadd.xlane.f32.xlu0 %v8029
        %v8031 = vpop.xlane.xlu0 %8030
        %v8032 = vsel %vm1976, %v7292, 0.0
        %8033 = vadd.xlane.f32.xlu0 %v8032
        %v8034 = vpop.xlane.xlu0 %8033
        %v8035 = vsel %vm1976, %v7294, 0.0
        %8036 = vadd.xlane.f32.xlu0 %v8035
        %v8037 = vpop.xlane.xlu0 %8036
        %v8038 = vsel %vm1976, %v7296, 0.0
        %8039 = vadd.xlane.f32.xlu0 %v8038
        %v8040 = vpop.xlane.xlu0 %8039
        %v8041 = vsel %vm1976, %v7298, 0.0
        %8042 = vadd.xlane.f32.xlu0 %v8041
        %v8043 = vpop.xlane.xlu0 %8042
        %v8044 = vsel %vm1976, %v7300, 0.0
        %8045 = vadd.xlane.f32.xlu0 %v8044
        %v8046 = vpop.xlane.xlu0 %8045
        %v8047 = vsel %vm1976, %v7302, 0.0
        %8048 = vadd.xlane.f32.xlu0 %v8047
        %v8049 = vpop.xlane.xlu0 %8048
        %v8050 = vsel %vm1976, %v7304, 0.0
        %8051 = vadd.xlane.f32.xlu0 %v8050
        %v8052 = vpop.xlane.xlu0 %8051
        %v8053 = vsel %vm1976, %v7306, 0.0
        %8054 = vadd.xlane.f32.xlu0 %v8053
        %v8055 = vpop.xlane.xlu0 %8054
        %v8056 = vsel %vm1976, %v7308, 0.0
        %8057 = vadd.xlane.f32.xlu0 %v8056
        %v8058 = vpop.xlane.xlu0 %8057
        %v8059 = vsel %vm1976, %v7310, 0.0
        %8060 = vadd.xlane.f32.xlu0 %v8059
        %v8061 = vpop.xlane.xlu0 %8060
        %v8062 = vsel %vm1976, %v7312, 0.0
        %8063 = vadd.xlane.f32.xlu0 %v8062
        %v8064 = vpop.xlane.xlu0 %8063
        %v8065 = vsel %vm1976, %v7314, 0.0
        %8066 = vadd.xlane.f32.xlu0 %v8065
        %v8067 = vpop.xlane.xlu0 %8066
        %v8068 = vsel %vm1976, %v7316, 0.0
        %8069 = vadd.xlane.f32.xlu0 %v8068
        %v8070 = vpop.xlane.xlu0 %8069
        %v8071 = vsel %vm1976, %v7318, 0.0
        %8072 = vadd.xlane.f32.xlu0 %v8071
        %v8073 = vpop.xlane.xlu0 %8072
        %v8074 = vsel %vm1976, %v7320, 0.0
        %8075 = vadd.xlane.f32.xlu0 %v8074
        %v8076 = vpop.xlane.xlu0 %8075
        %v8077 = vsel %vm1976, %v7322, 0.0
        %8078 = vadd.xlane.f32.xlu0 %v8077
        %v8079 = vpop.xlane.xlu0 %8078
        %v8080 = vsel %vm1976, %v7324, 0.0
        %8081 = vadd.xlane.f32.xlu0 %v8080
        %v8082 = vpop.xlane.xlu0 %8081
        %v8083 = vsel %vm1976, %v7326, 0.0
        %8084 = vadd.xlane.f32.xlu0 %v8083
        %v8085 = vpop.xlane.xlu0 %8084
        %v8086 = vsel %vm1976, %v7328, 0.0
        %8087 = vadd.xlane.f32.xlu0 %v8086
        %v8088 = vpop.xlane.xlu0 %8087
        %v8089 = vsel %vm1976, %v7330, 0.0
        %8090 = vadd.xlane.f32.xlu0 %v8089
        %v8091 = vpop.xlane.xlu0 %8090
        %v8092 = vsel %vm1976, %v7332, 0.0
        %8093 = vadd.xlane.f32.xlu0 %v8092
        %v8094 = vpop.xlane.xlu0 %8093
        %v8095 = vsel %vm1976, %v7334, 0.0
        %8096 = vadd.xlane.f32.xlu0 %v8095
        %v8097 = vpop.xlane.xlu0 %8096
        %v8098 = vsel %vm1976, %v7336, 0.0
        %8099 = vadd.xlane.f32.xlu0 %v8098
        %v8100 = vpop.xlane.xlu0 %8099
        %v8101 = vsel %vm1976, %v7338, 0.0
        %8102 = vadd.xlane.f32.xlu0 %v8101
        %v8103 = vpop.xlane.xlu0 %8102
        %v8104 = vsel %vm1976, %v7340, 0.0
        %8105 = vadd.xlane.f32.xlu0 %v8104
        %v8106 = vpop.xlane.xlu0 %8105
        %v8107 = vsel %vm1976, %v7342, 0.0
        %8108 = vadd.xlane.f32.xlu0 %v8107
        %v8109 = vpop.xlane.xlu0 %8108
        %v8110 = vsel %vm1976, %v7344, 0.0
        %8111 = vadd.xlane.f32.xlu0 %v8110
        %v8112 = vpop.xlane.xlu0 %8111
        %v8113 = vsel %vm1976, %v7474, 0.0
        %8114 = vadd.xlane.f32.xlu0 %v8113
        %v8115 = vpop.xlane.xlu0 %8114
        %v8116 = vsel %vm1976, %v7476, 0.0
        %8117 = vadd.xlane.f32.xlu0 %v8116
        %v8118 = vpop.xlane.xlu0 %8117
        %v8119 = vsel %vm1976, %v7478, 0.0
        %8120 = vadd.xlane.f32.xlu0 %v8119
        %v8121 = vpop.xlane.xlu0 %8120
        %v8122 = vsel %vm1976, %v7480, 0.0
        %8123 = vadd.xlane.f32.xlu0 %v8122
        %v8124 = vpop.xlane.xlu0 %8123
        %v8125 = vsel %vm1976, %v7482, 0.0
        %8126 = vadd.xlane.f32.xlu0 %v8125
        %v8127 = vpop.xlane.xlu0 %8126
        %v8128 = vsel %vm1976, %v7484, 0.0
        %8129 = vadd.xlane.f32.xlu0 %v8128
        %v8130 = vpop.xlane.xlu0 %8129
        %v8131 = vsel %vm1976, %v7486, 0.0
        %8132 = vadd.xlane.f32.xlu0 %v8131
        %v8133 = vpop.xlane.xlu0 %8132
        %v8134 = vsel %vm1976, %v7488, 0.0
        %8135 = vadd.xlane.f32.xlu0 %v8134
        %v8136 = vpop.xlane.xlu0 %8135
        %v8137 = vsel %vm1976, %v7490, 0.0
        %8138 = vadd.xlane.f32.xlu0 %v8137
        %v8139 = vpop.xlane.xlu0 %8138
        %v8140 = vsel %vm1976, %v7492, 0.0
        %8141 = vadd.xlane.f32.xlu0 %v8140
        %v8142 = vpop.xlane.xlu0 %8141
        %v8143 = vsel %vm1976, %v7494, 0.0
        %8144 = vadd.xlane.f32.xlu0 %v8143
        %v8145 = vpop.xlane.xlu0 %8144
        %v8146 = vsel %vm1976, %v7496, 0.0
        %8147 = vadd.xlane.f32.xlu0 %v8146
        %v8148 = vpop.xlane.xlu0 %8147
        %v8149 = vsel %vm1976, %v7498, 0.0
        %8150 = vadd.xlane.f32.xlu0 %v8149
        %v8151 = vpop.xlane.xlu0 %8150
        %v8152 = vsel %vm1976, %v7500, 0.0
        %8153 = vadd.xlane.f32.xlu0 %v8152
        %v8154 = vpop.xlane.xlu0 %8153
        %v8155 = vsel %vm1976, %v7502, 0.0
        %8156 = vadd.xlane.f32.xlu0 %v8155
        %v8157 = vpop.xlane.xlu0 %8156
        %v8158 = vsel %vm1976, %v7504, 0.0
        %8159 = vadd.xlane.f32.xlu0 %v8158
        %v8160 = vpop.xlane.xlu0 %8159
        %v8161 = vsel %vm1976, %v7506, 0.0
        %8162 = vadd.xlane.f32.xlu0 %v8161
        %v8163 = vpop.xlane.xlu0 %8162
        %v8164 = vsel %vm1976, %v7508, 0.0
        %8165 = vadd.xlane.f32.xlu0 %v8164
        %v8166 = vpop.xlane.xlu0 %8165
        %v8167 = vsel %vm1976, %v7510, 0.0
        %8168 = vadd.xlane.f32.xlu0 %v8167
        %v8169 = vpop.xlane.xlu0 %8168
        %v8170 = vsel %vm1976, %v7512, 0.0
        %8171 = vadd.xlane.f32.xlu0 %v8170
        %v8172 = vpop.xlane.xlu0 %8171
        %v8173 = vsel %vm1976, %v7514, 0.0
        %8174 = vadd.xlane.f32.xlu0 %v8173
        %v8175 = vpop.xlane.xlu0 %8174
        %v8176 = vsel %vm1976, %v7516, 0.0
        %8177 = vadd.xlane.f32.xlu0 %v8176
        %v8178 = vpop.xlane.xlu0 %8177
        %v8179 = vsel %vm1976, %v7518, 0.0
        %8180 = vadd.xlane.f32.xlu0 %v8179
        %v8181 = vpop.xlane.xlu0 %8180
        %v8182 = vsel %vm1976, %v7520, 0.0
        %8183 = vadd.xlane.f32.xlu0 %v8182
        %v8184 = vpop.xlane.xlu0 %8183
        %v8185 = vsel %vm1976, %v7522, 0.0
        %8186 = vadd.xlane.f32.xlu0 %v8185
        %v8187 = vpop.xlane.xlu0 %8186
        %v8188 = vsel %vm1976, %v7524, 0.0
        %8189 = vadd.xlane.f32.xlu0 %v8188
        %v8190 = vpop.xlane.xlu0 %8189
        %v8191 = vsel %vm1976, %v7526, 0.0
        %8192 = vadd.xlane.f32.xlu0 %v8191
        %v8193 = vpop.xlane.xlu0 %8192
        %v8194 = vsel %vm1976, %v7528, 0.0
        %8195 = vadd.xlane.f32.xlu0 %v8194
        %v8196 = vpop.xlane.xlu0 %8195
        %v8197 = vsel %vm1976, %v7530, 0.0
        %8198 = vadd.xlane.f32.xlu0 %v8197
        %v8199 = vpop.xlane.xlu0 %8198
        %v8200 = vsel %vm1976, %v7532, 0.0
        %8201 = vadd.xlane.f32.xlu0 %v8200
        %v8202 = vpop.xlane.xlu0 %8201
        %v8203 = vsel %vm1976, %v7534, 0.0
        %8204 = vadd.xlane.f32.xlu0 %v8203
        %v8205 = vpop.xlane.xlu0 %8204
        %v8206 = vsel %vm1976, %v7536, 0.0
        %8207 = vadd.xlane.f32.xlu0 %v8206
        %v8208 = vpop.xlane.xlu0 %8207
        %v8209 = vsel %vm1976, %v7538, 0.0
        %8210 = vadd.xlane.f32.xlu0 %v8209
        %v8211 = vpop.xlane.xlu0 %8210
        %v8212 = vsel %vm1976, %v7540, 0.0
        %8213 = vadd.xlane.f32.xlu0 %v8212
        %v8214 = vpop.xlane.xlu0 %8213
        %v8215 = vsel %vm1976, %v7542, 0.0
        %8216 = vadd.xlane.f32.xlu0 %v8215
        %v8217 = vpop.xlane.xlu0 %8216
        %v8218 = vsel %vm1976, %v7544, 0.0
        %8219 = vadd.xlane.f32.xlu0 %v8218
        %v8220 = vpop.xlane.xlu0 %8219
        %v8221 = vsel %vm1976, %v7546, 0.0
        %8222 = vadd.xlane.f32.xlu0 %v8221
        %v8223 = vpop.xlane.xlu0 %8222
        %v8224 = vsel %vm1976, %v7548, 0.0
        %8225 = vadd.xlane.f32.xlu0 %v8224
        %v8226 = vpop.xlane.xlu0 %8225
        %v8227 = vsel %vm1976, %v7550, 0.0
        %8228 = vadd.xlane.f32.xlu0 %v8227
        %v8229 = vpop.xlane.xlu0 %8228
        %v8230 = vsel %vm1976, %v7552, 0.0
        %8231 = vadd.xlane.f32.xlu0 %v8230
        %v8232 = vpop.xlane.xlu0 %8231
        %v8233 = vsel %vm1976, %v7554, 0.0
        %8234 = vadd.xlane.f32.xlu0 %v8233
        %v8235 = vpop.xlane.xlu0 %8234
        %v8236 = vsel %vm1976, %v7556, 0.0
        %8237 = vadd.xlane.f32.xlu0 %v8236
        %v8238 = vpop.xlane.xlu0 %8237
        %v8239 = vsel %vm1976, %v7558, 0.0
        %8240 = vadd.xlane.f32.xlu0 %v8239
        %v8241 = vpop.xlane.xlu0 %8240
        %v8242 = vsel %vm1976, %v7560, 0.0
        %8243 = vadd.xlane.f32.xlu0 %v8242
        %v8244 = vpop.xlane.xlu0 %8243
        %v8245 = vsel %vm1976, %v7562, 0.0
        %8246 = vadd.xlane.f32.xlu0 %v8245
        %v8247 = vpop.xlane.xlu0 %8246
        %v8248 = vsel %vm1976, %v7564, 0.0
        %8249 = vadd.xlane.f32.xlu0 %v8248
        %v8250 = vpop.xlane.xlu0 %8249
        %v8251 = vsel %vm1976, %v7566, 0.0
        %8252 = vadd.xlane.f32.xlu0 %v8251
        %v8253 = vpop.xlane.xlu0 %8252
        %v8254 = vsel %vm1976, %v7568, 0.0
        %8255 = vadd.xlane.f32.xlu0 %v8254
        %v8256 = vpop.xlane.xlu0 %8255
        %v8257 = vsel %vm1976, %v7570, 0.0
        %8258 = vadd.xlane.f32.xlu0 %v8257
        %v8259 = vpop.xlane.xlu0 %8258
        %v8260 = vsel %vm1976, %v7572, 0.0
        %8261 = vadd.xlane.f32.xlu0 %v8260
        %v8262 = vpop.xlane.xlu0 %8261
        %v8263 = vsel %vm1976, %v7574, 0.0
        %8264 = vadd.xlane.f32.xlu0 %v8263
        %v8265 = vpop.xlane.xlu0 %8264
        %v8266 = vsel %vm1976, %v7576, 0.0
        %8267 = vadd.xlane.f32.xlu0 %v8266
        %v8268 = vpop.xlane.xlu0 %8267
        %v8269 = vsel %vm1976, %v7578, 0.0
        %8270 = vadd.xlane.f32.xlu0 %v8269
        %v8271 = vpop.xlane.xlu0 %8270
        %v8272 = vsel %vm1976, %v7580, 0.0
        %8273 = vadd.xlane.f32.xlu0 %v8272
        %v8274 = vpop.xlane.xlu0 %8273
        %v8275 = vsel %vm1976, %v7582, 0.0
        %8276 = vadd.xlane.f32.xlu0 %v8275
        %v8277 = vpop.xlane.xlu0 %8276
        %v8278 = vsel %vm1976, %v7584, 0.0
        %8279 = vadd.xlane.f32.xlu0 %v8278
        %v8280 = vpop.xlane.xlu0 %8279
        %v8281 = vsel %vm1976, %v7586, 0.0
        %8282 = vadd.xlane.f32.xlu0 %v8281
        %v8283 = vpop.xlane.xlu0 %8282
        %v8284 = vsel %vm1976, %v7588, 0.0
        %8285 = vadd.xlane.f32.xlu0 %v8284
        %v8286 = vpop.xlane.xlu0 %8285
        %v8287 = vsel %vm1976, %v7590, 0.0
        %8288 = vadd.xlane.f32.xlu0 %v8287
        %v8289 = vpop.xlane.xlu0 %8288
        %v8290 = vsel %vm1976, %v7592, 0.0
        %8291 = vadd.xlane.f32.xlu0 %v8290
        %v8292 = vpop.xlane.xlu0 %8291
        %v8293 = vsel %vm1976, %v7594, 0.0
        %8294 = vadd.xlane.f32.xlu0 %v8293
        %v8295 = vpop.xlane.xlu0 %8294
        %v8296 = vsel %vm1976, %v7596, 0.0
        %8297 = vadd.xlane.f32.xlu0 %v8296
        %v8298 = vpop.xlane.xlu0 %8297
        %v8299 = vsel %vm1976, %v7598, 0.0
        %8300 = vadd.xlane.f32.xlu0 %v8299
        %v8301 = vpop.xlane.xlu0 %8300
        %v8302 = vsel %vm1976, %v7600, 0.0
        %8303 = vadd.xlane.f32.xlu0 %v8302
        %v8304 = vpop.xlane.xlu0 %8303
        %v8305 = vsel %vm1976, %v7602, 0.0
        %8306 = vadd.xlane.f32.xlu0 %v8305
        %v8307 = vpop.xlane.xlu0 %8306
        %v8308 = vsel %vm1976, %v7604, 0.0
        %8309 = vadd.xlane.f32.xlu0 %v8308
        %v8310 = vpop.xlane.xlu0 %8309
        %v8311 = vsel %vm1976, %v7606, 0.0
        %8312 = vadd.xlane.f32.xlu0 %v8311
        %v8313 = vpop.xlane.xlu0 %8312
        %v8314 = vsel %vm1976, %v7608, 0.0
        %8315 = vadd.xlane.f32.xlu0 %v8314
        %v8316 = vpop.xlane.xlu0 %8315
        %v8317 = vsel %vm1976, %v7610, 0.0
        %8318 = vadd.xlane.f32.xlu0 %v8317
        %v8319 = vpop.xlane.xlu0 %8318
        %v8320 = vsel %vm1976, %v7612, 0.0
        %8321 = vadd.xlane.f32.xlu0 %v8320
        %v8322 = vpop.xlane.xlu0 %8321
        %v8323 = vsel %vm1976, %v7614, 0.0
        %8324 = vadd.xlane.f32.xlu0 %v8323
        %v8325 = vpop.xlane.xlu0 %8324
        %v8326 = vsel %vm1976, %v7616, 0.0
        %8327 = vadd.xlane.f32.xlu0 %v8326
        %v8328 = vpop.xlane.xlu0 %8327
        %v8329 = vsel %vm1976, %v7618, 0.0
        %8330 = vadd.xlane.f32.xlu0 %v8329
        %v8331 = vpop.xlane.xlu0 %8330
        %v8332 = vsel %vm1976, %v7620, 0.0
        %8333 = vadd.xlane.f32.xlu0 %v8332
        %v8334 = vpop.xlane.xlu0 %8333
        %v8335 = vsel %vm1976, %v7622, 0.0
        %8336 = vadd.xlane.f32.xlu0 %v8335
        %v8337 = vpop.xlane.xlu0 %8336
        %v8338 = vsel %vm1976, %v7624, 0.0
        %8339 = vadd.xlane.f32.xlu0 %v8338
        %v8340 = vpop.xlane.xlu0 %8339
        %v8341 = vsel %vm1976, %v7626, 0.0
        %8342 = vadd.xlane.f32.xlu0 %v8341
        %v8343 = vpop.xlane.xlu0 %8342
        %v8344 = vsel %vm1976, %v7628, 0.0
        %8345 = vadd.xlane.f32.xlu0 %v8344
        %v8346 = vpop.xlane.xlu0 %8345
        %v8347 = vsel %vm1976, %v7630, 0.0
        %8348 = vadd.xlane.f32.xlu0 %v8347
        %v8349 = vpop.xlane.xlu0 %8348
        %v8350 = vsel %vm1976, %v7632, 0.0
        %8351 = vadd.xlane.f32.xlu0 %v8350
        %v8352 = vpop.xlane.xlu0 %8351
        %v8353 = vsel %vm1976, %v7634, 0.0
        %8354 = vadd.xlane.f32.xlu0 %v8353
        %v8355 = vpop.xlane.xlu0 %8354
        %v8356 = vsel %vm1976, %v7636, 0.0
        %8357 = vadd.xlane.f32.xlu0 %v8356
        %v8358 = vpop.xlane.xlu0 %8357
        %v8359 = vsel %vm1976, %v7638, 0.0
        %8360 = vadd.xlane.f32.xlu0 %v8359
        %v8361 = vpop.xlane.xlu0 %8360
        %v8362 = vsel %vm1976, %v7640, 0.0
        %8363 = vadd.xlane.f32.xlu0 %v8362
        %v8364 = vpop.xlane.xlu0 %8363
        %v8365 = vsel %vm1976, %v7642, 0.0
        %8366 = vadd.xlane.f32.xlu0 %v8365
        %v8367 = vpop.xlane.xlu0 %8366
        %v8368 = vsel %vm1976, %v7644, 0.0
        %8369 = vadd.xlane.f32.xlu0 %v8368
        %v8370 = vpop.xlane.xlu0 %8369
        %v8371 = vsel %vm1976, %v7646, 0.0
        %8372 = vadd.xlane.f32.xlu0 %v8371
        %v8373 = vpop.xlane.xlu0 %8372
        %v8374 = vsel %vm1976, %v7648, 0.0
        %8375 = vadd.xlane.f32.xlu0 %v8374
        %v8376 = vpop.xlane.xlu0 %8375
        %v8377 = vsel %vm1976, %v7650, 0.0
        %8378 = vadd.xlane.f32.xlu0 %v8377
        %v8379 = vpop.xlane.xlu0 %8378
        %v8380 = vsel %vm1976, %v7652, 0.0
        %8381 = vadd.xlane.f32.xlu0 %v8380
        %v8382 = vpop.xlane.xlu0 %8381
        %v8383 = vsel %vm1976, %v7654, 0.0
        %8384 = vadd.xlane.f32.xlu0 %v8383
        %v8385 = vpop.xlane.xlu0 %8384
        %v8386 = vsel %vm1976, %v7656, 0.0
        %8387 = vadd.xlane.f32.xlu0 %v8386
        %v8388 = vpop.xlane.xlu0 %8387
        %v8389 = vsel %vm1976, %v7658, 0.0
        %8390 = vadd.xlane.f32.xlu0 %v8389
        %v8391 = vpop.xlane.xlu0 %8390
        %v8392 = vsel %vm1976, %v7660, 0.0
        %8393 = vadd.xlane.f32.xlu0 %v8392
        %v8394 = vpop.xlane.xlu0 %8393
        %v8395 = vsel %vm1976, %v7662, 0.0
        %8396 = vadd.xlane.f32.xlu0 %v8395
        %v8397 = vpop.xlane.xlu0 %8396
        %v8398 = vsel %vm1976, %v7664, 0.0
        %8399 = vadd.xlane.f32.xlu0 %v8398
        %v8400 = vpop.xlane.xlu0 %8399
        %v8401 = vsel %vm1976, %v7666, 0.0
        %8402 = vadd.xlane.f32.xlu0 %v8401
        %v8403 = vpop.xlane.xlu0 %8402
        %v8404 = vsel %vm1976, %v7668, 0.0
        %8405 = vadd.xlane.f32.xlu0 %v8404
        %v8406 = vpop.xlane.xlu0 %8405
        %v8407 = vsel %vm1976, %v7670, 0.0
        %8408 = vadd.xlane.f32.xlu0 %v8407
        %v8409 = vpop.xlane.xlu0 %8408
        %v8410 = vsel %vm1976, %v7672, 0.0
        %8411 = vadd.xlane.f32.xlu0 %v8410
        %v8412 = vpop.xlane.xlu0 %8411
        %v8413 = vsel %vm1976, %v7674, 0.0
        %8414 = vadd.xlane.f32.xlu0 %v8413
        %v8415 = vpop.xlane.xlu0 %8414
        %v8416 = vsel %vm1976, %v7676, 0.0
        %8417 = vadd.xlane.f32.xlu0 %v8416
        %v8418 = vpop.xlane.xlu0 %8417
        %v8419 = vsel %vm1976, %v7678, 0.0
        %8420 = vadd.xlane.f32.xlu0 %v8419
        %v8421 = vpop.xlane.xlu0 %8420
        %v8422 = vsel %vm1976, %v7680, 0.0
        %8423 = vadd.xlane.f32.xlu0 %v8422
        %v8424 = vpop.xlane.xlu0 %8423
        %v8425 = vsel %vm1976, %v7682, 0.0
        %8426 = vadd.xlane.f32.xlu0 %v8425
        %v8427 = vpop.xlane.xlu0 %8426
        %v8428 = vsel %vm1976, %v7684, 0.0
        %8429 = vadd.xlane.f32.xlu0 %v8428
        %v8430 = vpop.xlane.xlu0 %8429
        %v8431 = vsel %vm1976, %v7686, 0.0
        %8432 = vadd.xlane.f32.xlu0 %v8431
        %v8433 = vpop.xlane.xlu0 %8432
        %v8434 = vsel %vm1976, %v7688, 0.0
        %8435 = vadd.xlane.f32.xlu0 %v8434
        %v8436 = vpop.xlane.xlu0 %8435
        %v8437 = vsel %vm1976, %v7690, 0.0
        %8438 = vadd.xlane.f32.xlu0 %v8437
        %v8439 = vpop.xlane.xlu0 %8438
        %v8440 = vsel %vm1976, %v7692, 0.0
        %8441 = vadd.xlane.f32.xlu0 %v8440
        %v8442 = vpop.xlane.xlu0 %8441
        %v8443 = vsel %vm1976, %v7694, 0.0
        %8444 = vadd.xlane.f32.xlu0 %v8443
        %v8445 = vpop.xlane.xlu0 %8444
        %v8446 = vsel %vm1976, %v7696, 0.0
        %8447 = vadd.xlane.f32.xlu0 %v8446
        %v8448 = vpop.xlane.xlu0 %8447
        %v8449 = vsel %vm1976, %v7698, 0.0
        %8450 = vadd.xlane.f32.xlu0 %v8449
        %v8451 = vpop.xlane.xlu0 %8450
        %v8452 = vsel %vm1976, %v7700, 0.0
        %8453 = vadd.xlane.f32.xlu0 %v8452
        %v8454 = vpop.xlane.xlu0 %8453
        %v8455 = vsel %vm1976, %v7702, 0.0
        %8456 = vadd.xlane.f32.xlu0 %v8455
        %v8457 = vpop.xlane.xlu0 %8456
        %v8458 = vsel %vm1976, %v7704, 0.0
        %8459 = vadd.xlane.f32.xlu0 %v8458
        %v8460 = vpop.xlane.xlu0 %8459
        %v8461 = vsel %vm1976, %v7706, 0.0
        %8462 = vadd.xlane.f32.xlu0 %v8461
        %v8463 = vpop.xlane.xlu0 %8462
        %v8464 = vsel %vm1976, %v7708, 0.0
        %8465 = vadd.xlane.f32.xlu0 %v8464
        %v8466 = vpop.xlane.xlu0 %8465
        %v8467 = vsel %vm1976, %v7710, 0.0
        %8468 = vadd.xlane.f32.xlu0 %v8467
        %v8469 = vpop.xlane.xlu0 %8468
        %v8470 = vsel %vm1976, %v7712, 0.0
        %8471 = vadd.xlane.f32.xlu0 %v8470
        %v8472 = vpop.xlane.xlu0 %8471
        %v8473 = vsel %vm1976, %v7714, 0.0
        %8474 = vadd.xlane.f32.xlu0 %v8473
        %v8475 = vpop.xlane.xlu0 %8474
        %v8476 = vsel %vm1976, %v7716, 0.0
        %8477 = vadd.xlane.f32.xlu0 %v8476
        %v8478 = vpop.xlane.xlu0 %8477
        %v8479 = vsel %vm1976, %v7718, 0.0
        %8480 = vadd.xlane.f32.xlu0 %v8479
        %v8481 = vpop.xlane.xlu0 %8480
        %v8482 = vsel %vm1976, %v7720, 0.0
        %8483 = vadd.xlane.f32.xlu0 %v8482
        %v8484 = vpop.xlane.xlu0 %8483
        %v8485 = vsel %vm1976, %v7722, 0.0
        %8486 = vadd.xlane.f32.xlu0 %v8485
        %v8487 = vpop.xlane.xlu0 %8486
        %v8488 = vsel %vm1976, %v7724, 0.0
        %8489 = vadd.xlane.f32.xlu0 %v8488
        %v8490 = vpop.xlane.xlu0 %8489
        %v8491 = vsel %vm1976, %v7726, 0.0
        %8492 = vadd.xlane.f32.xlu0 %v8491
        %v8493 = vpop.xlane.xlu0 %8492
        %v8494 = vsel %vm1976, %v7728, 0.0
        %8495 = vadd.xlane.f32.xlu0 %v8494
        %v8496 = vpop.xlane.xlu0 %8495
        %v8497 = vadd.f32 %v7731, %v8115
        %v8498 = vadd.f32 %v7734, %v8118
        %v8499 = vadd.f32 %v7737, %v8121
        %v8500 = vadd.f32 %v7740, %v8124
        %v8501 = vadd.f32 %v7743, %v8127
        %v8502 = vadd.f32 %v7746, %v8130
        %v8503 = vadd.f32 %v7749, %v8133
        %v8504 = vadd.f32 %v7752, %v8136
        %v8505 = vadd.f32 %v7755, %v8139
        %v8506 = vadd.f32 %v7758, %v8142
        %v8507 = vadd.f32 %v7761, %v8145
        %v8508 = vadd.f32 %v7764, %v8148
        %v8509 = vadd.f32 %v7767, %v8151
        %v8510 = vadd.f32 %v7770, %v8154
        %v8511 = vadd.f32 %v7773, %v8157
        %v8512 = vadd.f32 %v7776, %v8160
        %v8513 = vadd.f32 %v7779, %v8163
        %v8514 = vadd.f32 %v7782, %v8166
        %v8515 = vadd.f32 %v7785, %v8169
        %v8516 = vadd.f32 %v7788, %v8172
        %v8517 = vadd.f32 %v7791, %v8175
        %v8518 = vadd.f32 %v7794, %v8178
        %v8519 = vadd.f32 %v7797, %v8181
        %v8520 = vadd.f32 %v7800, %v8184
        %v8521 = vadd.f32 %v7803, %v8187
        %v8522 = vadd.f32 %v7806, %v8190
        %v8523 = vadd.f32 %v7809, %v8193
        %v8524 = vadd.f32 %v7812, %v8196
        %v8525 = vadd.f32 %v7815, %v8199
        %v8526 = vadd.f32 %v7818, %v8202
        %v8527 = vadd.f32 %v7821, %v8205
        %v8528 = vadd.f32 %v7824, %v8208
        %v8529 = vadd.f32 %v7827, %v8211
        %v8530 = vadd.f32 %v7830, %v8214
        %v8531 = vadd.f32 %v7833, %v8217
        %v8532 = vadd.f32 %v7836, %v8220
        %v8533 = vadd.f32 %v7839, %v8223
        %v8534 = vadd.f32 %v7842, %v8226
        %v8535 = vadd.f32 %v7845, %v8229
        %v8536 = vadd.f32 %v7848, %v8232
        %v8537 = vadd.f32 %v7851, %v8235
        %v8538 = vadd.f32 %v7854, %v8238
        %v8539 = vadd.f32 %v7857, %v8241
        %v8540 = vadd.f32 %v7860, %v8244
        %v8541 = vadd.f32 %v7863, %v8247
        %v8542 = vadd.f32 %v7866, %v8250
        %v8543 = vadd.f32 %v7869, %v8253
        %v8544 = vadd.f32 %v7872, %v8256
        %v8545 = vadd.f32 %v7875, %v8259
        %v8546 = vadd.f32 %v7878, %v8262
        %v8547 = vadd.f32 %v7881, %v8265
        %v8548 = vadd.f32 %v7884, %v8268
        %v8549 = vadd.f32 %v7887, %v8271
        %v8550 = vadd.f32 %v7890, %v8274
        %v8551 = vadd.f32 %v7893, %v8277
        %v8552 = vadd.f32 %v7896, %v8280
        %v8553 = vadd.f32 %v7899, %v8283
        %v8554 = vadd.f32 %v7902, %v8286
        %v8555 = vadd.f32 %v7905, %v8289
        %v8556 = vadd.f32 %v7908, %v8292
        %v8557 = vadd.f32 %v7911, %v8295
        %v8558 = vadd.f32 %v7914, %v8298
        %v8559 = vadd.f32 %v7917, %v8301
        %v8560 = vadd.f32 %v7920, %v8304
        %v8561 = vadd.f32 %v7923, %v8307
        %v8562 = vadd.f32 %v7926, %v8310
        %v8563 = vadd.f32 %v7929, %v8313
        %v8564 = vadd.f32 %v7932, %v8316
        %v8565 = vadd.f32 %v7935, %v8319
        %v8566 = vadd.f32 %v7938, %v8322
        %v8567 = vadd.f32 %v7941, %v8325
        %v8568 = vadd.f32 %v7944, %v8328
        %v8569 = vadd.f32 %v7947, %v8331
        %v8570 = vadd.f32 %v7950, %v8334
        %v8571 = vadd.f32 %v7953, %v8337
        %v8572 = vadd.f32 %v7956, %v8340
        %v8573 = vadd.f32 %v7959, %v8343
        %v8574 = vadd.f32 %v7962, %v8346
        %v8575 = vadd.f32 %v7965, %v8349
        %v8576 = vadd.f32 %v7968, %v8352
        %v8577 = vadd.f32 %v7971, %v8355
        %v8578 = vadd.f32 %v7974, %v8358
        %v8579 = vadd.f32 %v7977, %v8361
        %v8580 = vadd.f32 %v7980, %v8364
        %v8581 = vadd.f32 %v7983, %v8367
        %v8582 = vadd.f32 %v7986, %v8370
        %v8583 = vadd.f32 %v7989, %v8373
        %v8584 = vadd.f32 %v7992, %v8376
        %v8585 = vadd.f32 %v7995, %v8379
        %v8586 = vadd.f32 %v7998, %v8382
        %v8587 = vadd.f32 %v8001, %v8385
        %v8588 = vadd.f32 %v8004, %v8388
        %v8589 = vadd.f32 %v8007, %v8391
        %v8590 = vadd.f32 %v8010, %v8394
        %v8591 = vadd.f32 %v8013, %v8397
        %v8592 = vadd.f32 %v8016, %v8400
        %v8593 = vadd.f32 %v8019, %v8403
        %v8594 = vadd.f32 %v8022, %v8406
        %v8595 = vadd.f32 %v8025, %v8409
        %v8596 = vadd.f32 %v8028, %v8412
        %v8597 = vadd.f32 %v8031, %v8415
        %v8598 = vadd.f32 %v8034, %v8418
        %v8599 = vadd.f32 %v8037, %v8421
        %v8600 = vadd.f32 %v8040, %v8424
        %v8601 = vadd.f32 %v8043, %v8427
        %v8602 = vadd.f32 %v8046, %v8430
        %v8603 = vadd.f32 %v8049, %v8433
        %v8604 = vadd.f32 %v8052, %v8436
        %v8605 = vadd.f32 %v8055, %v8439
        %v8606 = vadd.f32 %v8058, %v8442
        %v8607 = vadd.f32 %v8061, %v8445
        %v8608 = vadd.f32 %v8064, %v8448
        %v8609 = vadd.f32 %v8067, %v8451
        %v8610 = vadd.f32 %v8070, %v8454
        %v8611 = vadd.f32 %v8073, %v8457
        %v8612 = vadd.f32 %v8076, %v8460
        %v8613 = vadd.f32 %v8079, %v8463
        %v8614 = vadd.f32 %v8082, %v8466
        %v8615 = vadd.f32 %v8085, %v8469
        %v8616 = vadd.f32 %v8088, %v8472
        %v8617 = vadd.f32 %v8091, %v8475
        %v8618 = vadd.f32 %v8094, %v8478
        %v8619 = vadd.f32 %v8097, %v8481
        %v8620 = vadd.f32 %v8100, %v8484
        %v8621 = vadd.f32 %v8103, %v8487
        %v8622 = vadd.f32 %v8106, %v8490
        %v8623 = vadd.f32 %v8109, %v8493
        %v8624 = vadd.f32 %v8112, %v8496
        %v8625 = vrcp.pop %v8497
        %v8626 = vrcp.pop %v8498
        %v8627 = vrcp.pop %v8499
        %v8628 = vrcp.pop %v8500
        %v8629 = vrcp.pop %v8501
        %v8630 = vrcp.pop %v8502
        %v8631 = vrcp.pop %v8503
        %v8632 = vrcp.pop %v8504
        %v8633 = vrcp.pop %v8505
        %v8634 = vrcp.pop %v8506
        %v8635 = vrcp.pop %v8507
        %v8636 = vrcp.pop %v8508
        %v8637 = vrcp.pop %v8509
        %v8638 = vrcp.pop %v8510
        %v8639 = vrcp.pop %v8511
        %v8640 = vrcp.pop %v8512
        %v8641 = vrcp.pop %v8513
        %v8642 = vrcp.pop %v8514
        %v8643 = vrcp.pop %v8515
        %v8644 = vrcp.pop %v8516
        %v8645 = vrcp.pop %v8517
        %v8646 = vrcp.pop %v8518
        %v8647 = vrcp.pop %v8519
        %v8648 = vrcp.pop %v8520
        %v8649 = vrcp.pop %v8521
        %v8650 = vrcp.pop %v8522
        %v8651 = vrcp.pop %v8523
        %v8652 = vrcp.pop %v8524
        %v8653 = vrcp.pop %v8525
        %v8654 = vrcp.pop %v8526
        %v8655 = vrcp.pop %v8527
        %v8656 = vrcp.pop %v8528
        %v8657 = vrcp.pop %v8529
        %v8658 = vrcp.pop %v8530
        %v8659 = vrcp.pop %v8531
        %v8660 = vrcp.pop %v8532
        %v8661 = vrcp.pop %v8533
        %v8662 = vrcp.pop %v8534
        %v8663 = vrcp.pop %v8535
        %v8664 = vrcp.pop %v8536
        %v8665 = vrcp.pop %v8537
        %v8666 = vrcp.pop %v8538
        %v8667 = vrcp.pop %v8539
        %v8668 = vrcp.pop %v8540
        %v8669 = vrcp.pop %v8541
        %v8670 = vrcp.pop %v8542
        %v8671 = vrcp.pop %v8543
        %v8672 = vrcp.pop %v8544
        %v8673 = vrcp.pop %v8545
        %v8674 = vrcp.pop %v8546
        %v8675 = vrcp.pop %v8547
        %v8676 = vrcp.pop %v8548
        %v8677 = vrcp.pop %v8549
        %v8678 = vrcp.pop %v8550
        %v8679 = vrcp.pop %v8551
        %v8680 = vrcp.pop %v8552
        %v8681 = vrcp.pop %v8553
        %v8682 = vrcp.pop %v8554
        %v8683 = vrcp.pop %v8555
        %v8684 = vrcp.pop %v8556
        %v8685 = vrcp.pop %v8557
        %v8686 = vrcp.pop %v8558
        %v8687 = vrcp.pop %v8559
        %v8688 = vrcp.pop %v8560
        %v8689 = vrcp.pop %v8561
        %v8690 = vrcp.pop %v8562
        %v8691 = vrcp.pop %v8563
        %v8692 = vrcp.pop %v8564
        %v8693 = vrcp.pop %v8565
        %v8694 = vrcp.pop %v8566
        %v8695 = vrcp.pop %v8567
        %v8696 = vrcp.pop %v8568
        %v8697 = vrcp.pop %v8569
        %v8698 = vrcp.pop %v8570
        %v8699 = vrcp.pop %v8571
        %v8700 = vrcp.pop %v8572
        %v8701 = vrcp.pop %v8573
        %v8702 = vrcp.pop %v8574
        %v8703 = vrcp.pop %v8575
        %v8704 = vrcp.pop %v8576
        %v8705 = vrcp.pop %v8577
        %v8706 = vrcp.pop %v8578
        %v8707 = vrcp.pop %v8579
        %v8708 = vrcp.pop %v8580
        %v8709 = vrcp.pop %v8581
        %v8710 = vrcp.pop %v8582
        %v8711 = vrcp.pop %v8583
        %v8712 = vrcp.pop %v8584
        %v8713 = vrcp.pop %v8585
        %v8714 = vrcp.pop %v8586
        %v8715 = vrcp.pop %v8587
        %v8716 = vrcp.pop %v8588
        %v8717 = vrcp.pop %v8589
        %v8718 = vrcp.pop %v8590
        %v8719 = vrcp.pop %v8591
        %v8720 = vrcp.pop %v8592
        %v8721 = vrcp.pop %v8593
        %v8722 = vrcp.pop %v8594
        %v8723 = vrcp.pop %v8595
        %v8724 = vrcp.pop %v8596
        %v8725 = vrcp.pop %v8597
        %v8726 = vrcp.pop %v8598
        %v8727 = vrcp.pop %v8599
        %v8728 = vrcp.pop %v8600
        %v8729 = vrcp.pop %v8601
        %v8730 = vrcp.pop %v8602
        %v8731 = vrcp.pop %v8603
        %v8732 = vrcp.pop %v8604
        %v8733 = vrcp.pop %v8605
        %v8734 = vrcp.pop %v8606
        %v8735 = vrcp.pop %v8607
        %v8736 = vrcp.pop %v8608
        %v8737 = vrcp.pop %v8609
        %v8738 = vrcp.pop %v8610
        %v8739 = vrcp.pop %v8611
        %v8740 = vrcp.pop %v8612
        %v8741 = vrcp.pop %v8613
        %v8742 = vrcp.pop %v8614
        %v8743 = vrcp.pop %v8615
        %v8744 = vrcp.pop %v8616
        %v8745 = vrcp.pop %v8617
        %v8746 = vrcp.pop %v8618
        %v8747 = vrcp.pop %v8619
        %v8748 = vrcp.pop %v8620
        %v8749 = vrcp.pop %v8621
        %v8750 = vrcp.pop %v8622
        %v8751 = vrcp.pop %v8623
        %v8752 = vrcp.pop %v8624
        %v8753 = vmul.f32 %v7090, %v8625
        %v8754 = vmul.f32 %v7092, %v8626
        %v8755 = vmul.f32 %v7094, %v8627
        %v8756 = vmul.f32 %v7096, %v8628
        %v8757 = vmul.f32 %v7098, %v8629
        %v8758 = vmul.f32 %v7100, %v8630
        %v8759 = vmul.f32 %v7102, %v8631
        %v8760 = vmul.f32 %v7104, %v8632
        %v8761 = vmul.f32 %v7106, %v8633
        %v8762 = vmul.f32 %v7108, %v8634
        %v8763 = vmul.f32 %v7110, %v8635
        %v8764 = vmul.f32 %v7112, %v8636
        %v8765 = vmul.f32 %v7114, %v8637
        %v8766 = vmul.f32 %v7116, %v8638
        %v8767 = vmul.f32 %v7118, %v8639
        %v8768 = vmul.f32 %v7120, %v8640
        %v8769 = vmul.f32 %v7122, %v8641
        %v8770 = vmul.f32 %v7124, %v8642
        %v8771 = vmul.f32 %v7126, %v8643
        %v8772 = vmul.f32 %v7128, %v8644
        %v8773 = vmul.f32 %v7130, %v8645
        %v8774 = vmul.f32 %v7132, %v8646
        %v8775 = vmul.f32 %v7134, %v8647
        %v8776 = vmul.f32 %v7136, %v8648
        %v8777 = vmul.f32 %v7138, %v8649
        %v8778 = vmul.f32 %v7140, %v8650
        %v8779 = vmul.f32 %v7142, %v8651
        %v8780 = vmul.f32 %v7144, %v8652
        %v8781 = vmul.f32 %v7146, %v8653
        %v8782 = vmul.f32 %v7148, %v8654
        %v8783 = vmul.f32 %v7150, %v8655
        %v8784 = vmul.f32 %v7152, %v8656
        %v8785 = vmul.f32 %v7154, %v8657
        %v8786 = vmul.f32 %v7156, %v8658
        %v8787 = vmul.f32 %v7158, %v8659
        %v8788 = vmul.f32 %v7160, %v8660
        %v8789 = vmul.f32 %v7162, %v8661
        %v8790 = vmul.f32 %v7164, %v8662
        %v8791 = vmul.f32 %v7166, %v8663
        %v8792 = vmul.f32 %v7168, %v8664
        %v8793 = vmul.f32 %v7170, %v8665
        %v8794 = vmul.f32 %v7172, %v8666
        %v8795 = vmul.f32 %v7174, %v8667
        %v8796 = vmul.f32 %v7176, %v8668
        %v8797 = vmul.f32 %v7178, %v8669
        %v8798 = vmul.f32 %v7180, %v8670
        %v8799 = vmul.f32 %v7182, %v8671
        %v8800 = vmul.f32 %v7184, %v8672
        %v8801 = vmul.f32 %v7186, %v8673
        %v8802 = vmul.f32 %v7188, %v8674
        %v8803 = vmul.f32 %v7190, %v8675
        %v8804 = vmul.f32 %v7192, %v8676
        %v8805 = vmul.f32 %v7194, %v8677
        %v8806 = vmul.f32 %v7196, %v8678
        %v8807 = vmul.f32 %v7198, %v8679
        %v8808 = vmul.f32 %v7200, %v8680
        %v8809 = vmul.f32 %v7202, %v8681
        %v8810 = vmul.f32 %v7204, %v8682
        %v8811 = vmul.f32 %v7206, %v8683
        %v8812 = vmul.f32 %v7208, %v8684
        %v8813 = vmul.f32 %v7210, %v8685
        %v8814 = vmul.f32 %v7212, %v8686
        %v8815 = vmul.f32 %v7214, %v8687
        %v8816 = vmul.f32 %v7216, %v8688
        %v8817 = vmul.f32 %v7218, %v8689
        %v8818 = vmul.f32 %v7220, %v8690
        %v8819 = vmul.f32 %v7222, %v8691
        %v8820 = vmul.f32 %v7224, %v8692
        %v8821 = vmul.f32 %v7226, %v8693
        %v8822 = vmul.f32 %v7228, %v8694
        %v8823 = vmul.f32 %v7230, %v8695
        %v8824 = vmul.f32 %v7232, %v8696
        %v8825 = vmul.f32 %v7234, %v8697
        %v8826 = vmul.f32 %v7236, %v8698
        %v8827 = vmul.f32 %v7238, %v8699
        %v8828 = vmul.f32 %v7240, %v8700
        %v8829 = vmul.f32 %v7242, %v8701
        %v8830 = vmul.f32 %v7244, %v8702
        %v8831 = vmul.f32 %v7246, %v8703
        %v8832 = vmul.f32 %v7248, %v8704
        %v8833 = vmul.f32 %v7250, %v8705
        %v8834 = vmul.f32 %v7252, %v8706
        %v8835 = vmul.f32 %v7254, %v8707
        %v8836 = vmul.f32 %v7256, %v8708
        %v8837 = vmul.f32 %v7258, %v8709
        %v8838 = vmul.f32 %v7260, %v8710
        %v8839 = vmul.f32 %v7262, %v8711
        %v8840 = vmul.f32 %v7264, %v8712
        %v8841 = vmul.f32 %v7266, %v8713
        %v8842 = vmul.f32 %v7268, %v8714
        %v8843 = vmul.f32 %v7270, %v8715
        %v8844 = vmul.f32 %v7272, %v8716
        %v8845 = vmul.f32 %v7274, %v8717
        %v8846 = vmul.f32 %v7276, %v8718
        %v8847 = vmul.f32 %v7278, %v8719
        %v8848 = vmul.f32 %v7280, %v8720
        %v8849 = vmul.f32 %v7282, %v8721
        %v8850 = vmul.f32 %v7284, %v8722
        %v8851 = vmul.f32 %v7286, %v8723
        %v8852 = vmul.f32 %v7288, %v8724
        %v8853 = vmul.f32 %v7290, %v8725
        %v8854 = vmul.f32 %v7292, %v8726
        %v8855 = vmul.f32 %v7294, %v8727
        %v8856 = vmul.f32 %v7296, %v8728
        %v8857 = vmul.f32 %v7298, %v8729
        %v8858 = vmul.f32 %v7300, %v8730
        %v8859 = vmul.f32 %v7302, %v8731
        %v8860 = vmul.f32 %v7304, %v8732
        %v8861 = vmul.f32 %v7306, %v8733
        %v8862 = vmul.f32 %v7308, %v8734
        %v8863 = vmul.f32 %v7310, %v8735
        %v8864 = vmul.f32 %v7312, %v8736
        %v8865 = vmul.f32 %v7314, %v8737
        %v8866 = vmul.f32 %v7316, %v8738
        %v8867 = vmul.f32 %v7318, %v8739
        %v8868 = vmul.f32 %v7320, %v8740
        %v8869 = vmul.f32 %v7322, %v8741
        %v8870 = vmul.f32 %v7324, %v8742
        %v8871 = vmul.f32 %v7326, %v8743
        %v8872 = vmul.f32 %v7328, %v8744
        %v8873 = vmul.f32 %v7330, %v8745
        %v8874 = vmul.f32 %v7332, %v8746
        %v8875 = vmul.f32 %v7334, %v8747
        %v8876 = vmul.f32 %v7336, %v8748
        %v8877 = vmul.f32 %v7338, %v8749
        %v8878 = vmul.f32 %v7340, %v8750
        %v8879 = vmul.f32 %v7342, %v8751
        %v8880 = vmul.f32 %v7344, %v8752
        %v8881 = vpack.c.bf16 %v8754, %v8753
        %v8882 = vpack.c.bf16 %v8756, %v8755
        %v8883 = vpack.c.bf16 %v8758, %v8757
        %v8884 = vpack.c.bf16 %v8760, %v8759
        %v8885 = vpack.c.bf16 %v8762, %v8761
        %v8886 = vpack.c.bf16 %v8764, %v8763
        %v8887 = vpack.c.bf16 %v8766, %v8765
        %v8888 = vpack.c.bf16 %v8768, %v8767
        %v8889 = vpack.c.bf16 %v8770, %v8769
        %v8890 = vpack.c.bf16 %v8772, %v8771
        %v8891 = vpack.c.bf16 %v8774, %v8773
        %v8892 = vpack.c.bf16 %v8776, %v8775
        %v8893 = vpack.c.bf16 %v8778, %v8777
        %v8894 = vpack.c.bf16 %v8780, %v8779
        %v8895 = vpack.c.bf16 %v8782, %v8781
        %v8896 = vpack.c.bf16 %v8784, %v8783
        %v8897 = vpack.c.bf16 %v8786, %v8785
        %v8898 = vpack.c.bf16 %v8788, %v8787
        %v8899 = vpack.c.bf16 %v8790, %v8789
        %v8900 = vpack.c.bf16 %v8792, %v8791
        %v8901 = vpack.c.bf16 %v8794, %v8793
        %v8902 = vpack.c.bf16 %v8796, %v8795
        %v8903 = vpack.c.bf16 %v8798, %v8797
        %v8904 = vpack.c.bf16 %v8800, %v8799
        %v8905 = vpack.c.bf16 %v8802, %v8801
        %v8906 = vpack.c.bf16 %v8804, %v8803
        %v8907 = vpack.c.bf16 %v8806, %v8805
        %v8908 = vpack.c.bf16 %v8808, %v8807
        %v8909 = vpack.c.bf16 %v8810, %v8809
        %v8910 = vpack.c.bf16 %v8812, %v8811
        %v8911 = vpack.c.bf16 %v8814, %v8813
        %v8912 = vpack.c.bf16 %v8816, %v8815
        %v8913 = vpack.c.bf16 %v8818, %v8817
        %v8914 = vpack.c.bf16 %v8820, %v8819
        %v8915 = vpack.c.bf16 %v8822, %v8821
        %v8916 = vpack.c.bf16 %v8824, %v8823
        %v8917 = vpack.c.bf16 %v8826, %v8825
        %v8918 = vpack.c.bf16 %v8828, %v8827
        %v8919 = vpack.c.bf16 %v8830, %v8829
        %v8920 = vpack.c.bf16 %v8832, %v8831
        %v8921 = vpack.c.bf16 %v8834, %v8833
        %v8922 = vpack.c.bf16 %v8836, %v8835
        %v8923 = vpack.c.bf16 %v8838, %v8837
        %v8924 = vpack.c.bf16 %v8840, %v8839
        %v8925 = vpack.c.bf16 %v8842, %v8841
        %v8926 = vpack.c.bf16 %v8844, %v8843
        %v8927 = vpack.c.bf16 %v8846, %v8845
        %v8928 = vpack.c.bf16 %v8848, %v8847
        %v8929 = vpack.c.bf16 %v8850, %v8849
        %v8930 = vpack.c.bf16 %v8852, %v8851
        %v8931 = vpack.c.bf16 %v8854, %v8853
        %v8932 = vpack.c.bf16 %v8856, %v8855
        %v8933 = vpack.c.bf16 %v8858, %v8857
        %v8934 = vpack.c.bf16 %v8860, %v8859
        %v8935 = vpack.c.bf16 %v8862, %v8861
        %v8936 = vpack.c.bf16 %v8864, %v8863
        %v8937 = vpack.c.bf16 %v8866, %v8865
        %v8938 = vpack.c.bf16 %v8868, %v8867
        %v8939 = vpack.c.bf16 %v8870, %v8869
        %v8940 = vpack.c.bf16 %v8872, %v8871
        %v8941 = vpack.c.bf16 %v8874, %v8873
        %v8942 = vpack.c.bf16 %v8876, %v8875
        %v8943 = vpack.c.bf16 %v8878, %v8877
        %v8944 = vpack.c.bf16 %v8880, %v8879
        %v8945 = vmul.f32 %v7474, %v8625
        %v8946 = vmul.f32 %v7476, %v8626
        %v8947 = vmul.f32 %v7478, %v8627
        %v8948 = vmul.f32 %v7480, %v8628
        %v8949 = vmul.f32 %v7482, %v8629
        %v8950 = vmul.f32 %v7484, %v8630
        %v8951 = vmul.f32 %v7486, %v8631
        %v8952 = vmul.f32 %v7488, %v8632
        %v8953 = vmul.f32 %v7490, %v8633
        %v8954 = vmul.f32 %v7492, %v8634
        %v8955 = vmul.f32 %v7494, %v8635
        %v8956 = vmul.f32 %v7496, %v8636
        %v8957 = vmul.f32 %v7498, %v8637
        %v8958 = vmul.f32 %v7500, %v8638
        %v8959 = vmul.f32 %v7502, %v8639
        %v8960 = vmul.f32 %v7504, %v8640
        %v8961 = vmul.f32 %v7506, %v8641
        %v8962 = vmul.f32 %v7508, %v8642
        %v8963 = vmul.f32 %v7510, %v8643
        %v8964 = vmul.f32 %v7512, %v8644
        %v8965 = vmul.f32 %v7514, %v8645
        %v8966 = vmul.f32 %v7516, %v8646
        %v8967 = vmul.f32 %v7518, %v8647
        %v8968 = vmul.f32 %v7520, %v8648
        %v8969 = vmul.f32 %v7522, %v8649
        %v8970 = vmul.f32 %v7524, %v8650
        %v8971 = vmul.f32 %v7526, %v8651
        %v8972 = vmul.f32 %v7528, %v8652
        %v8973 = vmul.f32 %v7530, %v8653
        %v8974 = vmul.f32 %v7532, %v8654
        %v8975 = vmul.f32 %v7534, %v8655
        %v8976 = vmul.f32 %v7536, %v8656
        %v8977 = vmul.f32 %v7538, %v8657
        %v8978 = vmul.f32 %v7540, %v8658
        %v8979 = vmul.f32 %v7542, %v8659
        %v8980 = vmul.f32 %v7544, %v8660
        %v8981 = vmul.f32 %v7546, %v8661
        %v8982 = vmul.f32 %v7548, %v8662
        %v8983 = vmul.f32 %v7550, %v8663
        %v8984 = vmul.f32 %v7552, %v8664
        %v8985 = vmul.f32 %v7554, %v8665
        %v8986 = vmul.f32 %v7556, %v8666
        %v8987 = vmul.f32 %v7558, %v8667
        %v8988 = vmul.f32 %v7560, %v8668
        %v8989 = vmul.f32 %v7562, %v8669
        %v8990 = vmul.f32 %v7564, %v8670
        %v8991 = vmul.f32 %v7566, %v8671
        %v8992 = vmul.f32 %v7568, %v8672
        %v8993 = vmul.f32 %v7570, %v8673
        %v8994 = vmul.f32 %v7572, %v8674
        %v8995 = vmul.f32 %v7574, %v8675
        %v8996 = vmul.f32 %v7576, %v8676
        %v8997 = vmul.f32 %v7578, %v8677
        %v8998 = vmul.f32 %v7580, %v8678
        %v8999 = vmul.f32 %v7582, %v8679
        %v9000 = vmul.f32 %v7584, %v8680
        %v9001 = vmul.f32 %v7586, %v8681
        %v9002 = vmul.f32 %v7588, %v8682
        %v9003 = vmul.f32 %v7590, %v8683
        %v9004 = vmul.f32 %v7592, %v8684
        %v9005 = vmul.f32 %v7594, %v8685
        %v9006 = vmul.f32 %v7596, %v8686
        %v9007 = vmul.f32 %v7598, %v8687
        %v9008 = vmul.f32 %v7600, %v8688
        %v9009 = vmul.f32 %v7602, %v8689
        %v9010 = vmul.f32 %v7604, %v8690
        %v9011 = vmul.f32 %v7606, %v8691
        %v9012 = vmul.f32 %v7608, %v8692
        %v9013 = vmul.f32 %v7610, %v8693
        %v9014 = vmul.f32 %v7612, %v8694
        %v9015 = vmul.f32 %v7614, %v8695
        %v9016 = vmul.f32 %v7616, %v8696
        %v9017 = vmul.f32 %v7618, %v8697
        %v9018 = vmul.f32 %v7620, %v8698
        %v9019 = vmul.f32 %v7622, %v8699
        %v9020 = vmul.f32 %v7624, %v8700
        %v9021 = vmul.f32 %v7626, %v8701
        %v9022 = vmul.f32 %v7628, %v8702
        %v9023 = vmul.f32 %v7630, %v8703
        %v9024 = vmul.f32 %v7632, %v8704
        %v9025 = vmul.f32 %v7634, %v8705
        %v9026 = vmul.f32 %v7636, %v8706
        %v9027 = vmul.f32 %v7638, %v8707
        %v9028 = vmul.f32 %v7640, %v8708
        %v9029 = vmul.f32 %v7642, %v8709
        %v9030 = vmul.f32 %v7644, %v8710
        %v9031 = vmul.f32 %v7646, %v8711
        %v9032 = vmul.f32 %v7648, %v8712
        %v9033 = vmul.f32 %v7650, %v8713
        %v9034 = vmul.f32 %v7652, %v8714
        %v9035 = vmul.f32 %v7654, %v8715
        %v9036 = vmul.f32 %v7656, %v8716
        %v9037 = vmul.f32 %v7658, %v8717
        %v9038 = vmul.f32 %v7660, %v8718
        %v9039 = vmul.f32 %v7662, %v8719
        %v9040 = vmul.f32 %v7664, %v8720
        %v9041 = vmul.f32 %v7666, %v8721
        %v9042 = vmul.f32 %v7668, %v8722
        %v9043 = vmul.f32 %v7670, %v8723
        %v9044 = vmul.f32 %v7672, %v8724
        %v9045 = vmul.f32 %v7674, %v8725
        %v9046 = vmul.f32 %v7676, %v8726
        %v9047 = vmul.f32 %v7678, %v8727
        %v9048 = vmul.f32 %v7680, %v8728
        %v9049 = vmul.f32 %v7682, %v8729
        %v9050 = vmul.f32 %v7684, %v8730
        %v9051 = vmul.f32 %v7686, %v8731
        %v9052 = vmul.f32 %v7688, %v8732
        %v9053 = vmul.f32 %v7690, %v8733
        %v9054 = vmul.f32 %v7692, %v8734
        %v9055 = vmul.f32 %v7694, %v8735
        %v9056 = vmul.f32 %v7696, %v8736
        %v9057 = vmul.f32 %v7698, %v8737
        %v9058 = vmul.f32 %v7700, %v8738
        %v9059 = vmul.f32 %v7702, %v8739
        %v9060 = vmul.f32 %v7704, %v8740
        %v9061 = vmul.f32 %v7706, %v8741
        %v9062 = vmul.f32 %v7708, %v8742
        %v9063 = vmul.f32 %v7710, %v8743
        %v9064 = vmul.f32 %v7712, %v8744
        %v9065 = vmul.f32 %v7714, %v8745
        %v9066 = vmul.f32 %v7716, %v8746
        %v9067 = vmul.f32 %v7718, %v8747
        %v9068 = vmul.f32 %v7720, %v8748
        %v9069 = vmul.f32 %v7722, %v8749
        %v9070 = vmul.f32 %v7724, %v8750
        %v9071 = vmul.f32 %v7726, %v8751
        %v9072 = vmul.f32 %v7728, %v8752
        %v9073 = vpack.c.bf16 %v8946, %v8945
        %v9074 = vpack.c.bf16 %v8948, %v8947
        %v9075 = vpack.c.bf16 %v8950, %v8949
        %v9076 = vpack.c.bf16 %v8952, %v8951
        %v9077 = vpack.c.bf16 %v8954, %v8953
        %v9078 = vpack.c.bf16 %v8956, %v8955
        %v9079 = vpack.c.bf16 %v8958, %v8957
        %v9080 = vpack.c.bf16 %v8960, %v8959
        %v9081 = vpack.c.bf16 %v8962, %v8961
        %v9082 = vpack.c.bf16 %v8964, %v8963
        %v9083 = vpack.c.bf16 %v8966, %v8965
        %v9084 = vpack.c.bf16 %v8968, %v8967
        %v9085 = vpack.c.bf16 %v8970, %v8969
        %v9086 = vpack.c.bf16 %v8972, %v8971
        %v9087 = vpack.c.bf16 %v8974, %v8973
        %v9088 = vpack.c.bf16 %v8976, %v8975
        %v9089 = vpack.c.bf16 %v8978, %v8977
        %v9090 = vpack.c.bf16 %v8980, %v8979
        %v9091 = vpack.c.bf16 %v8982, %v8981
        %v9092 = vpack.c.bf16 %v8984, %v8983
        %v9093 = vpack.c.bf16 %v8986, %v8985
        %v9094 = vpack.c.bf16 %v8988, %v8987
        %v9095 = vpack.c.bf16 %v8990, %v8989
        %v9096 = vpack.c.bf16 %v8992, %v8991
        %v9097 = vpack.c.bf16 %v8994, %v8993
        %v9098 = vpack.c.bf16 %v8996, %v8995
        %v9099 = vpack.c.bf16 %v8998, %v8997
        %v9100 = vpack.c.bf16 %v9000, %v8999
        %v9101 = vpack.c.bf16 %v9002, %v9001
        %v9102 = vpack.c.bf16 %v9004, %v9003
        %v9103 = vpack.c.bf16 %v9006, %v9005
        %v9104 = vpack.c.bf16 %v9008, %v9007
        %v9105 = vpack.c.bf16 %v9010, %v9009
        %v9106 = vpack.c.bf16 %v9012, %v9011
        %v9107 = vpack.c.bf16 %v9014, %v9013
        %v9108 = vpack.c.bf16 %v9016, %v9015
        %v9109 = vpack.c.bf16 %v9018, %v9017
        %v9110 = vpack.c.bf16 %v9020, %v9019
        %v9111 = vpack.c.bf16 %v9022, %v9021
        %v9112 = vpack.c.bf16 %v9024, %v9023
        %v9113 = vpack.c.bf16 %v9026, %v9025
        %v9114 = vpack.c.bf16 %v9028, %v9027
        %v9115 = vpack.c.bf16 %v9030, %v9029
        %v9116 = vpack.c.bf16 %v9032, %v9031
        %v9117 = vpack.c.bf16 %v9034, %v9033
        %v9118 = vpack.c.bf16 %v9036, %v9035
        %v9119 = vpack.c.bf16 %v9038, %v9037
        %v9120 = vpack.c.bf16 %v9040, %v9039
        %v9121 = vpack.c.bf16 %v9042, %v9041
        %v9122 = vpack.c.bf16 %v9044, %v9043
        %v9123 = vpack.c.bf16 %v9046, %v9045
        %v9124 = vpack.c.bf16 %v9048, %v9047
        %v9125 = vpack.c.bf16 %v9050, %v9049
        %v9126 = vpack.c.bf16 %v9052, %v9051
        %v9127 = vpack.c.bf16 %v9054, %v9053
        %v9128 = vpack.c.bf16 %v9056, %v9055
        %v9129 = vpack.c.bf16 %v9058, %v9057
        %v9130 = vpack.c.bf16 %v9060, %v9059
        %v9131 = vpack.c.bf16 %v9062, %v9061
        %v9132 = vpack.c.bf16 %v9064, %v9063
        %v9133 = vpack.c.bf16 %v9066, %v9065
        %v9134 = vpack.c.bf16 %v9068, %v9067
        %v9135 = vpack.c.bf16 %v9070, %v9069
        %v9136 = vpack.c.bf16 %v9072, %v9071
        %v9138 = vsel %vm1976, %v6057, 0
        %v9141 = vsel %vm1976, %v6058, 0
        %v9144 = vsel %vm1976, %v9073, 0
        %v9147 = vsel %vm1976, %v9074, 0
        %v9150 = vsel %vm1976, %v9075, 0
        %v9153 = vsel %vm1976, %v9076, 0
        %v9156 = vsel %vm1976, %v9077, 0
        %v9159 = vsel %vm1976, %v9078, 0
        %v9162 = vsel %vm1976, %v9079, 0
        %v9165 = vsel %vm1976, %v9080, 0
        %v9168 = vsel %vm1976, %v9081, 0
        %v9171 = vsel %vm1976, %v9082, 0
        %v9174 = vsel %vm1976, %v9083, 0
        %v9177 = vsel %vm1976, %v9084, 0
        %v9180 = vsel %vm1976, %v9085, 0
        %v9183 = vsel %vm1976, %v9086, 0
        %v9186 = vsel %vm1976, %v9087, 0
        %v9189 = vsel %vm1976, %v9088, 0
        %9191 = vmatprep.subr.bf16.mxu0 0
        %9192 = vmatpush1.bf16.xpose.msra.mxu0 %v9144
        %9193 = vmatprep.subr.bf16.mxu0 0
        %9194 = vmatpush1.bf16.xpose.msra.mxu0 %v9147
        %9195 = vmatprep.subr.bf16.mxu0 0
        %9196 = vmatpush1.bf16.xpose.msra.mxu0 %v9150
        %9197 = vmatprep.subr.bf16.mxu0 0
        %9198 = vmatpush1.bf16.xpose.msra.mxu0 %v9153
        %9199 = vmatprep.subr.bf16.mxu0 0
        %9200 = vmatpush1.bf16.xpose.msra.mxu0 %v9156
        %9201 = vmatprep.subr.bf16.mxu0 0
        %9202 = vmatpush1.bf16.xpose.msra.mxu0 %v9159
        %9203 = vmatprep.subr.bf16.mxu0 0
        %9204 = vmatpush1.bf16.xpose.msra.mxu0 %v9162
        %9205 = vmatprep.subr.bf16.mxu0 0
        %9206 = vmatpush1.bf16.xpose.msra.mxu0 %v9165
        %9207 = vmatprep.subr.bf16.mxu0 0
        %9208 = vmatpush1.bf16.xpose.msra.mxu0 %v9168
        %9209 = vmatprep.subr.bf16.mxu0 0
        %9210 = vmatpush1.bf16.xpose.msra.mxu0 %v9171
        %9211 = vmatprep.subr.bf16.mxu0 0
        %9212 = vmatpush1.bf16.xpose.msra.mxu0 %v9174
        %9213 = vmatprep.subr.bf16.mxu0 0
        %9214 = vmatpush1.bf16.xpose.msra.mxu0 %v9177
        %9215 = vmatprep.subr.bf16.mxu0 0
        %9216 = vmatpush1.bf16.xpose.msra.mxu0 %v9180
        %9217 = vmatprep.subr.bf16.mxu0 0
        %9218 = vmatpush1.bf16.xpose.msra.mxu0 %v9183
        %9219 = vmatprep.subr.bf16.mxu0 0
        %9220 = vmatpush1.bf16.xpose.msra.mxu0 %v9186
        %9221 = vmatprep.subr.bf16.mxu0 0
        %9222 = vmatpush1.bf16.xpose.msra.mxu0 %v9189
        %9223 = vmatprep.mubr.bf16.mxu0 0
        %9224 = vmatmul.mubr.bf16.gmra.mrb[0].mxu0 %v9138
        %v9225 = vpop.f32.mrb[0].mxu0
        %v9226 = vadd.f32 0.0, %v9225
        %v9227 = vpop.f32.mrb[0].mxu0
        %v9228 = vadd.f32 0.0, %v9227
        %v9229 = vpop.f32.mrb[0].mxu0
        %v9230 = vadd.f32 0.0, %v9229
        %v9231 = vpop.f32.mrb[0].mxu0
        %v9232 = vadd.f32 0.0, %v9231
        %9233 = vmatprep.mubr.bf16.mxu0 0
        %9234 = vmatmul.mubr.bf16.gmra.mrb[0].mxu0 %v9141
        %v9235 = vpop.f32.mrb[0].mxu0
        %v9236 = vadd.f32 0.0, %v9235
        %v9237 = vpop.f32.mrb[0].mxu0
        %v9238 = vadd.f32 0.0, %v9237
        %v9239 = vpop.f32.mrb[0].mxu0
        %v9240 = vadd.f32 0.0, %v9239
        %v9241 = vpop.f32.mrb[0].mxu0
        %v9242 = vadd.f32 0.0, %v9241
        %9243 = vdwg.mxu0
        %v9245 = vsel %vm1976, %v6059, 0
        %v9248 = vsel %vm1976, %v6060, 0
        %v9251 = vsel %vm1976, %v9089, 0
        %v9254 = vsel %vm1976, %v9090, 0
        %v9257 = vsel %vm1976, %v9091, 0
        %v9260 = vsel %vm1976, %v9092, 0
        %v9263 = vsel %vm1976, %v9093, 0
        %v9266 = vsel %vm1976, %v9094, 0
        %v9269 = vsel %vm1976, %v9095, 0
        %v9272 = vsel %vm1976, %v9096, 0
        %v9275 = vsel %vm1976, %v9097, 0
        %v9278 = vsel %vm1976, %v9098, 0
        %v9281 = vsel %vm1976, %v9099, 0
        %v9284 = vsel %vm1976, %v9100, 0
        %v9287 = vsel %vm1976, %v9101, 0
        %v9290 = vsel %vm1976, %v9102, 0
        %v9293 = vsel %vm1976, %v9103, 0
        %v9296 = vsel %vm1976, %v9104, 0
        %9298 = vmatprep.subr.bf16.mxu0 0
        %9299 = vmatpush1.bf16.xpose.msra.mxu0 %v9251
        %9300 = vmatprep.subr.bf16.mxu0 0
        %9301 = vmatpush1.bf16.xpose.msra.mxu0 %v9254
        %9302 = vmatprep.subr.bf16.mxu0 0
        %9303 = vmatpush1.bf16.xpose.msra.mxu0 %v9257
        %9304 = vmatprep.subr.bf16.mxu0 0
        %9305 = vmatpush1.bf16.xpose.msra.mxu0 %v9260
        %9306 = vmatprep.subr.bf16.mxu0 0
        %9307 = vmatpush1.bf16.xpose.msra.mxu0 %v9263
        %9308 = vmatprep.subr.bf16.mxu0 0
        %9309 = vmatpush1.bf16.xpose.msra.mxu0 %v9266
        %9310 = vmatprep.subr.bf16.mxu0 0
        %9311 = vmatpush1.bf16.xpose.msra.mxu0 %v9269
        %9312 = vmatprep.subr.bf16.mxu0 0
        %9313 = vmatpush1.bf16.xpose.msra.mxu0 %v9272
        %9314 = vmatprep.subr.bf16.mxu0 0
        %9315 = vmatpush1.bf16.xpose.msra.mxu0 %v9275
        %9316 = vmatprep.subr.bf16.mxu0 0
        %9317 = vmatpush1.bf16.xpose.msra.mxu0 %v9278
        %9318 = vmatprep.subr.bf16.mxu0 0
        %9319 = vmatpush1.bf16.xpose.msra.mxu0 %v9281
        %9320 = vmatprep.subr.bf16.mxu0 0
        %9321 = vmatpush1.bf16.xpose.msra.mxu0 %v9284
        %9322 = vmatprep.subr.bf16.mxu0 0
        %9323 = vmatpush1.bf16.xpose.msra.mxu0 %v9287
        %9324 = vmatprep.subr.bf16.mxu0 0
        %9325 = vmatpush1.bf16.xpose.msra.mxu0 %v9290
        %9326 = vmatprep.subr.bf16.mxu0 0
        %9327 = vmatpush1.bf16.xpose.msra.mxu0 %v9293
        %9328 = vmatprep.subr.bf16.mxu0 0
        %9329 = vmatpush1.bf16.xpose.msra.mxu0 %v9296
        %9330 = vmatprep.mubr.bf16.mxu0 0
        %9331 = vmatmul.mubr.bf16.gmra.mrb[0].mxu0 %v9245
        %v9332 = vpop.f32.mrb[0].mxu0
        %v9333 = vadd.f32 0.0, %v9332
        %v9334 = vpop.f32.mrb[0].mxu0
        %v9335 = vadd.f32 0.0, %v9334
        %v9336 = vpop.f32.mrb[0].mxu0
        %v9337 = vadd.f32 0.0, %v9336
        %v9338 = vpop.f32.mrb[0].mxu0
        %v9339 = vadd.f32 0.0, %v9338
        %9340 = vmatprep.mubr.bf16.mxu0 0
        %9341 = vmatmul.mubr.bf16.gmra.mrb[0].mxu0 %v9248
        %v9342 = vpop.f32.mrb[0].mxu0
        %v9343 = vadd.f32 0.0, %v9342
        %v9344 = vpop.f32.mrb[0].mxu0
        %v9345 = vadd.f32 0.0, %v9344
        %v9346 = vpop.f32.mrb[0].mxu0
        %v9347 = vadd.f32 0.0, %v9346
        %v9348 = vpop.f32.mrb[0].mxu0
        %v9349 = vadd.f32 0.0, %v9348
        %9350 = vdwg.mxu0
        %v9352 = vsel %vm1976, %v6061, 0
        %v9355 = vsel %vm1976, %v6062, 0
        %v9358 = vsel %vm1976, %v9105, 0
        %v9361 = vsel %vm1976, %v9106, 0
        %v9364 = vsel %vm1976, %v9107, 0
        %v9367 = vsel %vm1976, %v9108, 0
        %v9370 = vsel %vm1976, %v9109, 0
        %v9373 = vsel %vm1976, %v9110, 0
        %v9376 = vsel %vm1976, %v9111, 0
        %v9379 = vsel %vm1976, %v9112, 0
        %v9382 = vsel %vm1976, %v9113, 0
        %v9385 = vsel %vm1976, %v9114, 0
        %v9388 = vsel %vm1976, %v9115, 0
        %v9391 = vsel %vm1976, %v9116, 0
        %v9394 = vsel %vm1976, %v9117, 0
        %v9397 = vsel %vm1976, %v9118, 0
        %v9400 = vsel %vm1976, %v9119, 0
        %v9403 = vsel %vm1976, %v9120, 0
        %9405 = vmatprep.subr.bf16.mxu0 0
        %9406 = vmatpush1.bf16.xpose.msra.mxu0 %v9358
        %9407 = vmatprep.subr.bf16.mxu0 0
        %9408 = vmatpush1.bf16.xpose.msra.mxu0 %v9361
        %9409 = vmatprep.subr.bf16.mxu0 0
        %9410 = vmatpush1.bf16.xpose.msra.mxu0 %v9364
        %9411 = vmatprep.subr.bf16.mxu0 0
        %9412 = vmatpush1.bf16.xpose.msra.mxu0 %v9367
        %9413 = vmatprep.subr.bf16.mxu0 0
        %9414 = vmatpush1.bf16.xpose.msra.mxu0 %v9370
        %9415 = vmatprep.subr.bf16.mxu0 0
        %9416 = vmatpush1.bf16.xpose.msra.mxu0 %v9373
        %9417 = vmatprep.subr.bf16.mxu0 0
        %9418 = vmatpush1.bf16.xpose.msra.mxu0 %v9376
        %9419 = vmatprep.subr.bf16.mxu0 0
        %9420 = vmatpush1.bf16.xpose.msra.mxu0 %v9379
        %9421 = vmatprep.subr.bf16.mxu0 0
        %9422 = vmatpush1.bf16.xpose.msra.mxu0 %v9382
        %9423 = vmatprep.subr.bf16.mxu0 0
        %9424 = vmatpush1.bf16.xpose.msra.mxu0 %v9385
        %9425 = vmatprep.subr.bf16.mxu0 0
        %9426 = vmatpush1.bf16.xpose.msra.mxu0 %v9388
        %9427 = vmatprep.subr.bf16.mxu0 0
        %9428 = vmatpush1.bf16.xpose.msra.mxu0 %v9391
        %9429 = vmatprep.subr.bf16.mxu0 0
        %9430 = vmatpush1.bf16.xpose.msra.mxu0 %v9394
        %9431 = vmatprep.subr.bf16.mxu0 0
        %9432 = vmatpush1.bf16.xpose.msra.mxu0 %v9397
        %9433 = vmatprep.subr.bf16.mxu0 0
        %9434 = vmatpush1.bf16.xpose.msra.mxu0 %v9400
        %9435 = vmatprep.subr.bf16.mxu0 0
        %9436 = vmatpush1.bf16.xpose.msra.mxu0 %v9403
        %9437 = vmatprep.mubr.bf16.mxu0 0
        %9438 = vmatmul.mubr.bf16.gmra.mrb[0].mxu0 %v9352
        %v9439 = vpop.f32.mrb[0].mxu0
        %v9440 = vadd.f32 0.0, %v9439
        %v9441 = vpop.f32.mrb[0].mxu0
        %v9442 = vadd.f32 0.0, %v9441
        %v9443 = vpop.f32.mrb[0].mxu0
        %v9444 = vadd.f32 0.0, %v9443
        %v9445 = vpop.f32.mrb[0].mxu0
        %v9446 = vadd.f32 0.0, %v9445
        %9447 = vmatprep.mubr.bf16.mxu0 0
        %9448 = vmatmul.mubr.bf16.gmra.mrb[0].mxu0 %v9355
        %v9449 = vpop.f32.mrb[0].mxu0
        %v9450 = vadd.f32 0.0, %v9449
        %v9451 = vpop.f32.mrb[0].mxu0
        %v9452 = vadd.f32 0.0, %v9451
        %v9453 = vpop.f32.mrb[0].mxu0
        %v9454 = vadd.f32 0.0, %v9453
        %v9455 = vpop.f32.mrb[0].mxu0
        %v9456 = vadd.f32 0.0, %v9455
        %9457 = vdwg.mxu0
        %v9459 = vsel %vm1976, %v6063, 0
        %v9462 = vsel %vm1976, %v6064, 0
        %v9465 = vsel %vm1976, %v9121, 0
        %v9468 = vsel %vm1976, %v9122, 0
        %v9471 = vsel %vm1976, %v9123, 0
        %v9474 = vsel %vm1976, %v9124, 0
        %v9477 = vsel %vm1976, %v9125, 0
        %v9480 = vsel %vm1976, %v9126, 0
        %v9483 = vsel %vm1976, %v9127, 0
        %v9486 = vsel %vm1976, %v9128, 0
        %v9489 = vsel %vm1976, %v9129, 0
        %v9492 = vsel %vm1976, %v9130, 0
        %v9495 = vsel %vm1976, %v9131, 0
        %v9498 = vsel %vm1976, %v9132, 0
        %v9501 = vsel %vm1976, %v9133, 0
        %v9504 = vsel %vm1976, %v9134, 0
        %v9507 = vsel %vm1976, %v9135, 0
        %v9510 = vsel %vm1976, %v9136, 0
        %9512 = vmatprep.subr.bf16.mxu0 0
        %9513 = vmatpush1.bf16.xpose.msra.mxu0 %v9465
        %9514 = vmatprep.subr.bf16.mxu0 0
        %9515 = vmatpush1.bf16.xpose.msra.mxu0 %v9468
        %9516 = vmatprep.subr.bf16.mxu0 0
        %9517 = vmatpush1.bf16.xpose.msra.mxu0 %v9471
        %9518 = vmatprep.subr.bf16.mxu0 0
        %9519 = vmatpush1.bf16.xpose.msra.mxu0 %v9474
        %9520 = vmatprep.subr.bf16.mxu0 0
        %9521 = vmatpush1.bf16.xpose.msra.mxu0 %v9477
        %9522 = vmatprep.subr.bf16.mxu0 0
        %9523 = vmatpush1.bf16.xpose.msra.mxu0 %v9480
        %9524 = vmatprep.subr.bf16.mxu0 0
        %9525 = vmatpush1.bf16.xpose.msra.mxu0 %v9483
        %9526 = vmatprep.subr.bf16.mxu0 0
        %9527 = vmatpush1.bf16.xpose.msra.mxu0 %v9486
        %9528 = vmatprep.subr.bf16.mxu0 0
        %9529 = vmatpush1.bf16.xpose.msra.mxu0 %v9489
        %9530 = vmatprep.subr.bf16.mxu0 0
        %9531 = vmatpush1.bf16.xpose.msra.mxu0 %v9492
        %9532 = vmatprep.subr.bf16.mxu0 0
        %9533 = vmatpush1.bf16.xpose.msra.mxu0 %v9495
        %9534 = vmatprep.subr.bf16.mxu0 0
        %9535 = vmatpush1.bf16.xpose.msra.mxu0 %v9498
        %9536 = vmatprep.subr.bf16.mxu0 0
        %9537 = vmatpush1.bf16.xpose.msra.mxu0 %v9501
        %9538 = vmatprep.subr.bf16.mxu0 0
        %9539 = vmatpush1.bf16.xpose.msra.mxu0 %v9504
        %9540 = vmatprep.subr.bf16.mxu0 0
        %9541 = vmatpush1.bf16.xpose.msra.mxu0 %v9507
        %9542 = vmatprep.subr.bf16.mxu0 0
        %9543 = vmatpush1.bf16.xpose.msra.mxu0 %v9510
        %9544 = vmatprep.mubr.bf16.mxu0 0
        %9545 = vmatmul.mubr.bf16.gmra.mrb[0].mxu0 %v9459
        %v9546 = vpop.f32.mrb[0].mxu0
        %v9547 = vadd.f32 0.0, %v9546
        %v9548 = vpop.f32.mrb[0].mxu0
        %v9549 = vadd.f32 0.0, %v9548
        %v9550 = vpop.f32.mrb[0].mxu0
        %v9551 = vadd.f32 0.0, %v9550
        %v9552 = vpop.f32.mrb[0].mxu0
        %v9553 = vadd.f32 0.0, %v9552
        %9554 = vmatprep.mubr.bf16.mxu0 0
        %9555 = vmatmul.mubr.bf16.gmra.mrb[0].mxu0 %v9462
        %v9556 = vpop.f32.mrb[0].mxu0
        %v9557 = vadd.f32 0.0, %v9556
        %v9558 = vpop.f32.mrb[0].mxu0
        %v9559 = vadd.f32 0.0, %v9558
        %v9560 = vpop.f32.mrb[0].mxu0
        %v9561 = vadd.f32 0.0, %v9560
        %v9562 = vpop.f32.mrb[0].mxu0
        %v9563 = vadd.f32 0.0, %v9562
        %9564 = vdwg.mxu0
        %v9566 = vsel %vm1976, %v4052, 0
        %v9569 = vsel %vm1976, %v4053, 0
        %v9572 = vsel %vm1976, %v8881, 0
        %v9575 = vsel %vm1976, %v8882, 0
        %v9578 = vsel %vm1976, %v8883, 0
        %v9581 = vsel %vm1976, %v8884, 0
        %v9584 = vsel %vm1976, %v8885, 0
        %v9587 = vsel %vm1976, %v8886, 0
        %v9590 = vsel %vm1976, %v8887, 0
        %v9593 = vsel %vm1976, %v8888, 0
        %v9596 = vsel %vm1976, %v8889, 0
        %v9599 = vsel %vm1976, %v8890, 0
        %v9602 = vsel %vm1976, %v8891, 0
        %v9605 = vsel %vm1976, %v8892, 0
        %v9608 = vsel %vm1976, %v8893, 0
        %v9611 = vsel %vm1976, %v8894, 0
        %v9614 = vsel %vm1976, %v8895, 0
        %v9617 = vsel %vm1976, %v8896, 0
        %9619 = vmatprep.subr.bf16.mxu0 0
        %9620 = vmatpush1.bf16.xpose.msra.mxu0 %v9572
        %9621 = vmatprep.subr.bf16.mxu0 0
        %9622 = vmatpush1.bf16.xpose.msra.mxu0 %v9575
        %9623 = vmatprep.subr.bf16.mxu0 0
        %9624 = vmatpush1.bf16.xpose.msra.mxu0 %v9578
        %9625 = vmatprep.subr.bf16.mxu0 0
        %9626 = vmatpush1.bf16.xpose.msra.mxu0 %v9581
        %9627 = vmatprep.subr.bf16.mxu0 0
        %9628 = vmatpush1.bf16.xpose.msra.mxu0 %v9584
        %9629 = vmatprep.subr.bf16.mxu0 0
        %9630 = vmatpush1.bf16.xpose.msra.mxu0 %v9587
        %9631 = vmatprep.subr.bf16.mxu0 0
        %9632 = vmatpush1.bf16.xpose.msra.mxu0 %v9590
        %9633 = vmatprep.subr.bf16.mxu0 0
        %9634 = vmatpush1.bf16.xpose.msra.mxu0 %v9593
        %9635 = vmatprep.subr.bf16.mxu0 0
        %9636 = vmatpush1.bf16.xpose.msra.mxu0 %v9596
        %9637 = vmatprep.subr.bf16.mxu0 0
        %9638 = vmatpush1.bf16.xpose.msra.mxu0 %v9599
        %9639 = vmatprep.subr.bf16.mxu0 0
        %9640 = vmatpush1.bf16.xpose.msra.mxu0 %v9602
        %9641 = vmatprep.subr.bf16.mxu0 0
        %9642 = vmatpush1.bf16.xpose.msra.mxu0 %v9605
        %9643 = vmatprep.subr.bf16.mxu0 0
        %9644 = vmatpush1.bf16.xpose.msra.mxu0 %v9608
        %9645 = vmatprep.subr.bf16.mxu0 0
        %9646 = vmatpush1.bf16.xpose.msra.mxu0 %v9611
        %9647 = vmatprep.subr.bf16.mxu0 0
        %9648 = vmatpush1.bf16.xpose.msra.mxu0 %v9614
        %9649 = vmatprep.subr.bf16.mxu0 0
        %9650 = vmatpush1.bf16.xpose.msra.mxu0 %v9617
        %9651 = vmatprep.mubr.bf16.mxu0 0
        %9652 = vmatmul.mubr.bf16.gmra.mrb[0].mxu0 %v9566
        %v9653 = vpop.f32.mrb[0].mxu0
        %v9654 = vadd.f32 %v9226, %v9653
        %v9655 = vpop.f32.mrb[0].mxu0
        %v9656 = vadd.f32 %v9228, %v9655
        %v9657 = vpop.f32.mrb[0].mxu0
        %v9658 = vadd.f32 %v9230, %v9657
        %v9659 = vpop.f32.mrb[0].mxu0
        %v9660 = vadd.f32 %v9232, %v9659
        %9661 = vmatprep.mubr.bf16.mxu0 0
        %9662 = vmatmul.mubr.bf16.gmra.mrb[0].mxu0 %v9569
        %v9663 = vpop.f32.mrb[0].mxu0
        %v9664 = vadd.f32 %v9236, %v9663
        %v9665 = vpop.f32.mrb[0].mxu0
        %v9666 = vadd.f32 %v9238, %v9665
        %v9667 = vpop.f32.mrb[0].mxu0
        %v9668 = vadd.f32 %v9240, %v9667
        %v9669 = vpop.f32.mrb[0].mxu0
        %v9670 = vadd.f32 %v9242, %v9669
        %9671 = vdwg.mxu0
        %v9673 = vsel %vm1976, %v4054, 0
        %v9676 = vsel %vm1976, %v4055, 0
        %v9679 = vsel %vm1976, %v8897, 0
        %v9682 = vsel %vm1976, %v8898, 0
        %v9685 = vsel %vm1976, %v8899, 0
        %v9688 = vsel %vm1976, %v8900, 0
        %v9691 = vsel %vm1976, %v8901, 0
        %v9694 = vsel %vm1976, %v8902, 0
        %v9697 = vsel %vm1976, %v8903, 0
        %v9700 = vsel %vm1976, %v8904, 0
        %v9703 = vsel %vm1976, %v8905, 0
        %v9706 = vsel %vm1976, %v8906, 0
        %v9709 = vsel %vm1976, %v8907, 0
        %v9712 = vsel %vm1976, %v8908, 0
        %v9715 = vsel %vm1976, %v8909, 0
        %v9718 = vsel %vm1976, %v8910, 0
        %v9721 = vsel %vm1976, %v8911, 0
        %v9724 = vsel %vm1976, %v8912, 0
        %9726 = vmatprep.subr.bf16.mxu0 0
        %9727 = vmatpush1.bf16.xpose.msra.mxu0 %v9679
        %9728 = vmatprep.subr.bf16.mxu0 0
        %9729 = vmatpush1.bf16.xpose.msra.mxu0 %v9682
        %9730 = vmatprep.subr.bf16.mxu0 0
        %9731 = vmatpush1.bf16.xpose.msra.mxu0 %v9685
        %9732 = vmatprep.subr.bf16.mxu0 0
        %9733 = vmatpush1.bf16.xpose.msra.mxu0 %v9688
        %9734 = vmatprep.subr.bf16.mxu0 0
        %9735 = vmatpush1.bf16.xpose.msra.mxu0 %v9691
        %9736 = vmatprep.subr.bf16.mxu0 0
        %9737 = vmatpush1.bf16.xpose.msra.mxu0 %v9694
        %9738 = vmatprep.subr.bf16.mxu0 0
        %9739 = vmatpush1.bf16.xpose.msra.mxu0 %v9697
        %9740 = vmatprep.subr.bf16.mxu0 0
        %9741 = vmatpush1.bf16.xpose.msra.mxu0 %v9700
        %9742 = vmatprep.subr.bf16.mxu0 0
        %9743 = vmatpush1.bf16.xpose.msra.mxu0 %v9703
        %9744 = vmatprep.subr.bf16.mxu0 0
        %9745 = vmatpush1.bf16.xpose.msra.mxu0 %v9706
        %9746 = vmatprep.subr.bf16.mxu0 0
        %9747 = vmatpush1.bf16.xpose.msra.mxu0 %v9709
        %9748 = vmatprep.subr.bf16.mxu0 0
        %9749 = vmatpush1.bf16.xpose.msra.mxu0 %v9712
        %9750 = vmatprep.subr.bf16.mxu0 0
        %9751 = vmatpush1.bf16.xpose.msra.mxu0 %v9715
        %9752 = vmatprep.subr.bf16.mxu0 0
        %9753 = vmatpush1.bf16.xpose.msra.mxu0 %v9718
        %9754 = vmatprep.subr.bf16.mxu0 0
        %9755 = vmatpush1.bf16.xpose.msra.mxu0 %v9721
        %9756 = vmatprep.subr.bf16.mxu0 0
        %9757 = vmatpush1.bf16.xpose.msra.mxu0 %v9724
        %9758 = vmatprep.mubr.bf16.mxu0 0
        %9759 = vmatmul.mubr.bf16.gmra.mrb[0].mxu0 %v9673
        %v9760 = vpop.f32.mrb[0].mxu0
        %v9761 = vadd.f32 %v9333, %v9760
        %v9762 = vpop.f32.mrb[0].mxu0
        %v9763 = vadd.f32 %v9335, %v9762
        %v9764 = vpop.f32.mrb[0].mxu0
        %v9765 = vadd.f32 %v9337, %v9764
        %v9766 = vpop.f32.mrb[0].mxu0
        %v9767 = vadd.f32 %v9339, %v9766
        %9768 = vmatprep.mubr.bf16.mxu0 0
        %9769 = vmatmul.mubr.bf16.gmra.mrb[0].mxu0 %v9676
        %v9770 = vpop.f32.mrb[0].mxu0
        %v9771 = vadd.f32 %v9343, %v9770
        %v9772 = vpop.f32.mrb[0].mxu0
        %v9773 = vadd.f32 %v9345, %v9772
        %v9774 = vpop.f32.mrb[0].mxu0
        %v9775 = vadd.f32 %v9347, %v9774
        %v9776 = vpop.f32.mrb[0].mxu0
        %v9777 = vadd.f32 %v9349, %v9776
        %9778 = vdwg.mxu0
        %v9780 = vsel %vm1976, %v4056, 0
        %v9783 = vsel %vm1976, %v4057, 0
        %v9786 = vsel %vm1976, %v8913, 0
        %v9789 = vsel %vm1976, %v8914, 0
        %v9792 = vsel %vm1976, %v8915, 0
        %v9795 = vsel %vm1976, %v8916, 0
        %v9798 = vsel %vm1976, %v8917, 0
        %v9801 = vsel %vm1976, %v8918, 0
        %v9804 = vsel %vm1976, %v8919, 0
        %v9807 = vsel %vm1976, %v8920, 0
        %v9810 = vsel %vm1976, %v8921, 0
        %v9813 = vsel %vm1976, %v8922, 0
        %v9816 = vsel %vm1976, %v8923, 0
        %v9819 = vsel %vm1976, %v8924, 0
        %v9822 = vsel %vm1976, %v8925, 0
        %v9825 = vsel %vm1976, %v8926, 0
        %v9828 = vsel %vm1976, %v8927, 0
        %v9831 = vsel %vm1976, %v8928, 0
        %9833 = vmatprep.subr.bf16.mxu0 0
        %9834 = vmatpush1.bf16.xpose.msra.mxu0 %v9786
        %9835 = vmatprep.subr.bf16.mxu0 0
        %9836 = vmatpush1.bf16.xpose.msra.mxu0 %v9789
        %9837 = vmatprep.subr.bf16.mxu0 0
        %9838 = vmatpush1.bf16.xpose.msra.mxu0 %v9792
        %9839 = vmatprep.subr.bf16.mxu0 0
        %9840 = vmatpush1.bf16.xpose.msra.mxu0 %v9795
        %9841 = vmatprep.subr.bf16.mxu0 0
        %9842 = vmatpush1.bf16.xpose.msra.mxu0 %v9798
        %9843 = vmatprep.subr.bf16.mxu0 0
        %9844 = vmatpush1.bf16.xpose.msra.mxu0 %v9801
        %9845 = vmatprep.subr.bf16.mxu0 0
        %9846 = vmatpush1.bf16.xpose.msra.mxu0 %v9804
        %9847 = vmatprep.subr.bf16.mxu0 0
        %9848 = vmatpush1.bf16.xpose.msra.mxu0 %v9807
        %9849 = vmatprep.subr.bf16.mxu0 0
        %9850 = vmatpush1.bf16.xpose.msra.mxu0 %v9810
        %9851 = vmatprep.subr.bf16.mxu0 0
        %9852 = vmatpush1.bf16.xpose.msra.mxu0 %v9813
        %9853 = vmatprep.subr.bf16.mxu0 0
        %9854 = vmatpush1.bf16.xpose.msra.mxu0 %v9816
        %9855 = vmatprep.subr.bf16.mxu0 0
        %9856 = vmatpush1.bf16.xpose.msra.mxu0 %v9819
        %9857 = vmatprep.subr.bf16.mxu0 0
        %9858 = vmatpush1.bf16.xpose.msra.mxu0 %v9822
        %9859 = vmatprep.subr.bf16.mxu0 0
        %9860 = vmatpush1.bf16.xpose.msra.mxu0 %v9825
        %9861 = vmatprep.subr.bf16.mxu0 0
        %9862 = vmatpush1.bf16.xpose.msra.mxu0 %v9828
        %9863 = vmatprep.subr.bf16.mxu0 0
        %9864 = vmatpush1.bf16.xpose.msra.mxu0 %v9831
        %9865 = vmatprep.mubr.bf16.mxu0 0
        %9866 = vmatmul.mubr.bf16.gmra.mrb[0].mxu0 %v9780
        %v9867 = vpop.f32.mrb[0].mxu0
        %v9868 = vadd.f32 %v9440, %v9867
        %v9869 = vpop.f32.mrb[0].mxu0
        %v9870 = vadd.f32 %v9442, %v9869
        %v9871 = vpop.f32.mrb[0].mxu0
        %v9872 = vadd.f32 %v9444, %v9871
        %v9873 = vpop.f32.mrb[0].mxu0
        %v9874 = vadd.f32 %v9446, %v9873
        %9875 = vmatprep.mubr.bf16.mxu0 0
        %9876 = vmatmul.mubr.bf16.gmra.mrb[0].mxu0 %v9783
        %v9877 = vpop.f32.mrb[0].mxu0
        %v9878 = vadd.f32 %v9450, %v9877
        %v9879 = vpop.f32.mrb[0].mxu0
        %v9880 = vadd.f32 %v9452, %v9879
        %v9881 = vpop.f32.mrb[0].mxu0
        %v9882 = vadd.f32 %v9454, %v9881
        %v9883 = vpop.f32.mrb[0].mxu0
        %v9884 = vadd.f32 %v9456, %v9883
        %9885 = vdwg.mxu0
        %v9887 = vsel %vm1976, %v4058, 0
        %v9890 = vsel %vm1976, %v4059, 0
        %v9893 = vsel %vm1976, %v8929, 0
        %v9896 = vsel %vm1976, %v8930, 0
        %v9899 = vsel %vm1976, %v8931, 0
        %v9902 = vsel %vm1976, %v8932, 0
        %v9905 = vsel %vm1976, %v8933, 0
        %v9908 = vsel %vm1976, %v8934, 0
        %v9911 = vsel %vm1976, %v8935, 0
        %v9914 = vsel %vm1976, %v8936, 0
        %v9917 = vsel %vm1976, %v8937, 0
        %v9920 = vsel %vm1976, %v8938, 0
        %v9923 = vsel %vm1976, %v8939, 0
        %v9926 = vsel %vm1976, %v8940, 0
        %v9929 = vsel %vm1976, %v8941, 0
        %v9932 = vsel %vm1976, %v8942, 0
        %v9935 = vsel %vm1976, %v8943, 0
        %v9938 = vsel %vm1976, %v8944, 0
        %9940 = vmatprep.subr.bf16.mxu0 0
        %9941 = vmatpush1.bf16.xpose.msra.mxu0 %v9893
        %9942 = vmatprep.subr.bf16.mxu0 0
        %9943 = vmatpush1.bf16.xpose.msra.mxu0 %v9896
        %9944 = vmatprep.subr.bf16.mxu0 0
        %9945 = vmatpush1.bf16.xpose.msra.mxu0 %v9899
        %9946 = vmatprep.subr.bf16.mxu0 0
        %9947 = vmatpush1.bf16.xpose.msra.mxu0 %v9902
        %9948 = vmatprep.subr.bf16.mxu0 0
        %9949 = vmatpush1.bf16.xpose.msra.mxu0 %v9905
        %9950 = vmatprep.subr.bf16.mxu0 0
        %9951 = vmatpush1.bf16.xpose.msra.mxu0 %v9908
        %9952 = vmatprep.subr.bf16.mxu0 0
        %9953 = vmatpush1.bf16.xpose.msra.mxu0 %v9911
        %9954 = vmatprep.subr.bf16.mxu0 0
        %9955 = vmatpush1.bf16.xpose.msra.mxu0 %v9914
        %9956 = vmatprep.subr.bf16.mxu0 0
        %9957 = vmatpush1.bf16.xpose.msra.mxu0 %v9917
        %9958 = vmatprep.subr.bf16.mxu0 0
        %9959 = vmatpush1.bf16.xpose.msra.mxu0 %v9920
        %9960 = vmatprep.subr.bf16.mxu0 0
        %9961 = vmatpush1.bf16.xpose.msra.mxu0 %v9923
        %9962 = vmatprep.subr.bf16.mxu0 0
        %9963 = vmatpush1.bf16.xpose.msra.mxu0 %v9926
        %9964 = vmatprep.subr.bf16.mxu0 0
        %9965 = vmatpush1.bf16.xpose.msra.mxu0 %v9929
        %9966 = vmatprep.subr.bf16.mxu0 0
        %9967 = vmatpush1.bf16.xpose.msra.mxu0 %v9932
        %9968 = vmatprep.subr.bf16.mxu0 0
        %9969 = vmatpush1.bf16.xpose.msra.mxu0 %v9935
        %9970 = vmatprep.subr.bf16.mxu0 0
        %9971 = vmatpush1.bf16.xpose.msra.mxu0 %v9938
        %9972 = vmatprep.mubr.bf16.mxu0 0
        %9973 = vmatmul.mubr.bf16.gmra.mrb[0].mxu0 %v9887
        %v9974 = vpop.f32.mrb[0].mxu0
        %v9975 = vadd.f32 %v9547, %v9974
        %v9976 = vpop.f32.mrb[0].mxu0
        %v9977 = vadd.f32 %v9549, %v9976
        %v9978 = vpop.f32.mrb[0].mxu0
        %v9979 = vadd.f32 %v9551, %v9978
        %v9980 = vpop.f32.mrb[0].mxu0
        %v9981 = vadd.f32 %v9553, %v9980
        %9982 = vmatprep.mubr.bf16.mxu0 0
        %9983 = vmatmul.mubr.bf16.gmra.mrb[0].mxu0 %v9890
        %v9984 = vpop.f32.mrb[0].mxu0
        %v9985 = vadd.f32 %v9557, %v9984
        %v9986 = vpop.f32.mrb[0].mxu0
        %v9987 = vadd.f32 %v9559, %v9986
        %v9988 = vpop.f32.mrb[0].mxu0
        %v9989 = vadd.f32 %v9561, %v9988
        %v9990 = vpop.f32.mrb[0].mxu0
        %v9991 = vadd.f32 %v9563, %v9990
        %9992 = vdwg.mxu0
        %v9993 = vpack.c.bf16 %v9658, %v9654
        %v9994 = vpack.c.bf16 %v9660, %v9656
        %v9995 = vpack.c.bf16 %v9668, %v9664
        %v9996 = vpack.c.bf16 %v9670, %v9666
        %v9997 = vpack.c.bf16 %v9765, %v9761
        %v9998 = vpack.c.bf16 %v9767, %v9763
        %v9999 = vpack.c.bf16 %v9775, %v9771
        %v10000 = vpack.c.bf16 %v9777, %v9773
        %v10001 = vpack.c.bf16 %v9872, %v9868
        %v10002 = vpack.c.bf16 %v9874, %v9870
        %v10003 = vpack.c.bf16 %v9882, %v9878
        %v10004 = vpack.c.bf16 %v9884, %v9880
        %v10005 = vpack.c.bf16 %v9979, %v9975
        %v10006 = vpack.c.bf16 %v9981, %v9977
        %v10007 = vpack.c.bf16 %v9989, %v9985
        %v10008 = vpack.c.bf16 %v9991, %v9987
        %v10009 = vld [vmem:[%s17] sm:$0xf]
        %v10010 = vld [vmem:[%s17 + $0x4] sm:$0xf]
        %v10011 = vld [vmem:[%s17 + $0x8] sm:$0xf]
        %v10012 = vld [vmem:[%s17 + $0xc] sm:$0xf]
        %v10013 = vld [vmem:[%s17 + $0x10] sm:$0xf]
        %v10014 = vld [vmem:[%s17 + $0x14] sm:$0xf]
        %v10015 = vld [vmem:[%s17 + $0x18] sm:$0xf]
        %v10016 = vld [vmem:[%s17 + $0x1c] sm:$0xf]
        %v10017 = vld [vmem:[%s17 + $0x20] sm:$0xf]
        %v10018 = vld [vmem:[%s17 + $0x24] sm:$0xf]
        %v10019 = vld [vmem:[%s17 + $0x28] sm:$0xf]
        %v10020 = vld [vmem:[%s17 + $0x2c] sm:$0xf]
        %v10021 = vld [vmem:[%s17 + $0x30] sm:$0xf]
        %v10022 = vld [vmem:[%s17 + $0x34] sm:$0xf]
        %v10023 = vld [vmem:[%s17 + $0x38] sm:$0xf]
        %v10024 = vld [vmem:[%s17 + $0x3c] sm:$0xf]
        %v10025 = vld [vmem:[%s17 + $0x40] sm:$0xf]
        %v10026 = vld [vmem:[%s17 + $0x44] sm:$0xf]
        %v10027 = vld [vmem:[%s17 + $0x48] sm:$0xf]
        %v10028 = vld [vmem:[%s17 + $0x4c] sm:$0xf]
        %v10029 = vld [vmem:[%s17 + $0x50] sm:$0xf]
        %v10030 = vld [vmem:[%s17 + $0x54] sm:$0xf]
        %v10031 = vld [vmem:[%s17 + $0x58] sm:$0xf]
        %v10032 = vld [vmem:[%s17 + $0x5c] sm:$0xf]
        %v10033 = vld [vmem:[%s17 + $0x60] sm:$0xf]
        %v10034 = vld [vmem:[%s17 + $0x64] sm:$0xf]
        %v10035 = vld [vmem:[%s17 + $0x68] sm:$0xf]
        %v10036 = vld [vmem:[%s17 + $0x6c] sm:$0xf]
        %v10037 = vld [vmem:[%s17 + $0x70] sm:$0xf]
        %v10038 = vld [vmem:[%s17 + $0x74] sm:$0xf]
        %v10039 = vld [vmem:[%s17 + $0x78] sm:$0xf]
        %v10040 = vld [vmem:[%s17 + $0x7c] sm:$0xf]
        %v10041 = vld [vmem:[%s17 + $0x80] sm:$0xf]
        %v10042 = vld [vmem:[%s17 + $0x84] sm:$0xf]
        %v10043 = vld [vmem:[%s17 + $0x88] sm:$0xf]
        %v10044 = vld [vmem:[%s17 + $0x8c] sm:$0xf]
        %v10045 = vld [vmem:[%s17 + $0x90] sm:$0xf]
        %v10046 = vld [vmem:[%s17 + $0x94] sm:$0xf]
        %v10047 = vld [vmem:[%s17 + $0x98] sm:$0xf]
        %v10048 = vld [vmem:[%s17 + $0x9c] sm:$0xf]
        %v10049 = vld [vmem:[%s17 + $0xa0] sm:$0xf]
        %v10050 = vld [vmem:[%s17 + $0xa4] sm:$0xf]
        %v10051 = vld [vmem:[%s17 + $0xa8] sm:$0xf]
        %v10052 = vld [vmem:[%s17 + $0xac] sm:$0xf]
        %v10053 = vld [vmem:[%s17 + $0xb0] sm:$0xf]
        %v10054 = vld [vmem:[%s17 + $0xb4] sm:$0xf]
        %v10055 = vld [vmem:[%s17 + $0xb8] sm:$0xf]
        %v10056 = vld [vmem:[%s17 + $0xbc] sm:$0xf]
        %v10057 = vld [vmem:[%s17 + $0xc0] sm:$0xf]
        %v10058 = vld [vmem:[%s17 + $0xc4] sm:$0xf]
        %v10059 = vld [vmem:[%s17 + $0xc8] sm:$0xf]
        %v10060 = vld [vmem:[%s17 + $0xcc] sm:$0xf]
        %v10061 = vld [vmem:[%s17 + $0xd0] sm:$0xf]
        %v10062 = vld [vmem:[%s17 + $0xd4] sm:$0xf]
        %v10063 = vld [vmem:[%s17 + $0xd8] sm:$0xf]
        %v10064 = vld [vmem:[%s17 + $0xdc] sm:$0xf]
        %v10065 = vld [vmem:[%s17 + $0xe0] sm:$0xf]
        %v10066 = vld [vmem:[%s17 + $0xe4] sm:$0xf]
        %v10067 = vld [vmem:[%s17 + $0xe8] sm:$0xf]
        %v10068 = vld [vmem:[%s17 + $0xec] sm:$0xf]
        %v10069 = vld [vmem:[%s17 + $0xf0] sm:$0xf]
        %v10070 = vld [vmem:[%s17 + $0xf4] sm:$0xf]
        %v10071 = vld [vmem:[%s17 + $0xf8] sm:$0xf]
        %v10072 = vld [vmem:[%s17 + $0xfc] sm:$0xf]
        %v10089 = vunpack.c.l.b16 %v10009
        %v10090 = vunpack.c.l.b16 %v10010
        %v10091 = vunpack.c.l.b16 %v10011
        %v10092 = vunpack.c.l.b16 %v10012
        %v10093 = vunpack.c.l.b16 %v10013
        %v10094 = vunpack.c.l.b16 %v10014
        %v10095 = vunpack.c.l.b16 %v10015
        %v10096 = vunpack.c.l.b16 %v10016
        %v10097 = vunpack.c.l.b16 %v10017
        %v10098 = vunpack.c.l.b16 %v10018
        %v10099 = vunpack.c.l.b16 %v10019
        %v10100 = vunpack.c.l.b16 %v10020
        %v10101 = vunpack.c.l.b16 %v10021
        %v10102 = vunpack.c.l.b16 %v10022
        %v10103 = vunpack.c.l.b16 %v10023
        %v10104 = vunpack.c.l.b16 %v10024
        %v10105 = vpack.c.b16 %v10090, %v10089
        %v10106 = vpack.c.b16 %v10092, %v10091
        %v10107 = vpack.c.b16 %v10094, %v10093
        %v10108 = vpack.c.b16 %v10096, %v10095
        %v10109 = vpack.c.b16 %v10098, %v10097
        %v10110 = vpack.c.b16 %v10100, %v10099
        %v10111 = vpack.c.b16 %v10102, %v10101
        %v10112 = vpack.c.b16 %v10104, %v10103
        %v10114 = vsel %vm2568, %v10105, 0
        %v10117 = vsel %vm2568, %v10106, 0
        %v10120 = vsel %vm2568, %v10107, 0
        %v10123 = vsel %vm2568, %v10108, 0
        %v10126 = vsel %vm2568, %v10109, 0
        %v10129 = vsel %vm2568, %v10110, 0
        %v10132 = vsel %vm2568, %v10111, 0
        %v10135 = vsel %vm2568, %v10112, 0
        %10137 = vmatprep.subr.bf16.mxu0 %v9994
        %10138 = vmatpush1.bf16.msra.mxu0 %v9993
        %10139 = vmatprep.subr.bf16.mxu0 %v9996
        %10140 = vmatpush1.bf16.msra.mxu0 %v9995
        %10141 = vmatprep.subr.bf16.mxu0 0
        %10142 = vmatpush1.bf16.msra.mxu0 0
        %10143 = vmatprep.subr.bf16.mxu0 0
        %10144 = vmatpush1.bf16.msra.mxu0 0
        %10145 = vmatprep.subr.bf16.mxu0 0
        %10146 = vmatpush1.bf16.msra.mxu0 0
        %10147 = vmatprep.subr.bf16.mxu0 0
        %10148 = vmatpush1.bf16.msra.mxu0 0
        %10149 = vmatprep.subr.bf16.mxu0 0
        %10150 = vmatpush1.bf16.msra.mxu0 0
        %10151 = vmatprep.subr.bf16.mxu0 0
        %10152 = vmatpush1.bf16.msra.mxu0 0
        %10153 = vmatprep.subr.bf16.mxu0 0
        %10154 = vmatpush1.bf16.msra.mxu0 0
        %10155 = vmatprep.subr.bf16.mxu0 0
        %10156 = vmatpush1.bf16.msra.mxu0 0
        %10157 = vmatprep.subr.bf16.mxu0 0
        %10158 = vmatpush1.bf16.msra.mxu0 0
        %10159 = vmatprep.subr.bf16.mxu0 0
        %10160 = vmatpush1.bf16.msra.mxu0 0
        %10161 = vmatprep.subr.bf16.mxu0 0
        %10162 = vmatpush1.bf16.msra.mxu0 0
        %10163 = vmatprep.subr.bf16.mxu0 0
        %10164 = vmatpush1.bf16.msra.mxu0 0
        %10165 = vmatprep.subr.bf16.mxu0 0
        %10166 = vmatpush1.bf16.msra.mxu0 0
        %10167 = vmatprep.subr.bf16.mxu0 0
        %10168 = vmatpush1.bf16.msra.mxu0 0
        %10169 = vmatprep.mubr.bf16.mxu0 0
        %10170 = vmatmul.mubr.bf16.gmra.mrb[0].mxu0 %v10114
        %v10171 = vpop.f32.mrb[0].mxu0
        %v10172 = vadd.f32 0.0, %v10171
        %v10173 = vpop.f32.mrb[0].mxu0
        %v10174 = vadd.f32 0.0, %v10173
        %v10175 = vpop.f32.mrb[0].mxu0
        %v10176 = vadd.f32 0.0, %v10175
        %v10177 = vpop.f32.mrb[0].mxu0
        %v10178 = vadd.f32 0.0, %v10177
        %10179 = vmatprep.mubr.bf16.mxu0 0
        %10180 = vmatmul.mubr.bf16.gmra.mrb[0].mxu0 %v10117
        %v10181 = vpop.f32.mrb[0].mxu0
        %v10182 = vadd.f32 0.0, %v10181
        %v10183 = vpop.f32.mrb[0].mxu0
        %v10184 = vadd.f32 0.0, %v10183
        %v10185 = vpop.f32.mrb[0].mxu0
        %v10186 = vadd.f32 0.0, %v10185
        %v10187 = vpop.f32.mrb[0].mxu0
        %v10188 = vadd.f32 0.0, %v10187
        %10189 = vmatprep.mubr.bf16.mxu0 0
        %10190 = vmatmul.mubr.bf16.gmra.mrb[0].mxu0 %v10120
        %v10191 = vpop.f32.mrb[0].mxu0
        %v10192 = vadd.f32 0.0, %v10191
        %v10193 = vpop.f32.mrb[0].mxu0
        %v10194 = vadd.f32 0.0, %v10193
        %v10195 = vpop.f32.mrb[0].mxu0
        %v10196 = vadd.f32 0.0, %v10195
        %v10197 = vpop.f32.mrb[0].mxu0
        %v10198 = vadd.f32 0.0, %v10197
        %10199 = vmatprep.mubr.bf16.mxu0 0
        %10200 = vmatmul.mubr.bf16.gmra.mrb[0].mxu0 %v10123
        %v10201 = vpop.f32.mrb[0].mxu0
        %v10202 = vadd.f32 0.0, %v10201
        %v10203 = vpop.f32.mrb[0].mxu0
        %v10204 = vadd.f32 0.0, %v10203
        %v10205 = vpop.f32.mrb[0].mxu0
        %v10206 = vadd.f32 0.0, %v10205
        %v10207 = vpop.f32.mrb[0].mxu0
        %v10208 = vadd.f32 0.0, %v10207
        %10209 = vmatprep.mubr.bf16.mxu0 0
        %10210 = vmatmul.mubr.bf16.gmra.mrb[0].mxu0 %v10126
        %v10211 = vpop.f32.mrb[0].mxu0
        %v10212 = vadd.f32 0.0, %v10211
        %v10213 = vpop.f32.mrb[0].mxu0
        %v10214 = vadd.f32 0.0, %v10213
        %v10215 = vpop.f32.mrb[0].mxu0
        %v10216 = vadd.f32 0.0, %v10215
        %v10217 = vpop.f32.mrb[0].mxu0
        %v10218 = vadd.f32 0.0, %v10217
        %10219 = vmatprep.mubr.bf16.mxu0 0
        %10220 = vmatmul.mubr.bf16.gmra.mrb[0].mxu0 %v10129
        %v10221 = vpop.f32.mrb[0].mxu0
        %v10222 = vadd.f32 0.0, %v10221
        %v10223 = vpop.f32.mrb[0].mxu0
        %v10224 = vadd.f32 0.0, %v10223
        %v10225 = vpop.f32.mrb[0].mxu0
        %v10226 = vadd.f32 0.0, %v10225
        %v10227 = vpop.f32.mrb[0].mxu0
        %v10228 = vadd.f32 0.0, %v10227
        %10229 = vmatprep.mubr.bf16.mxu0 0
        %10230 = vmatmul.mubr.bf16.gmra.mrb[0].mxu0 %v10132
        %v10231 = vpop.f32.mrb[0].mxu0
        %v10232 = vadd.f32 0.0, %v10231
        %v10233 = vpop.f32.mrb[0].mxu0
        %v10234 = vadd.f32 0.0, %v10233
        %v10235 = vpop.f32.mrb[0].mxu0
        %v10236 = vadd.f32 0.0, %v10235
        %v10237 = vpop.f32.mrb[0].mxu0
        %v10238 = vadd.f32 0.0, %v10237
        %10239 = vmatprep.mubr.bf16.mxu0 0
        %10240 = vmatmul.mubr.bf16.gmra.mrb[0].mxu0 %v10135
        %v10241 = vpop.f32.mrb[0].mxu0
        %v10242 = vadd.f32 0.0, %v10241
        %v10243 = vpop.f32.mrb[0].mxu0
        %v10244 = vadd.f32 0.0, %v10243
        %v10245 = vpop.f32.mrb[0].mxu0
        %v10246 = vadd.f32 0.0, %v10245
        %v10247 = vpop.f32.mrb[0].mxu0
        %v10248 = vadd.f32 0.0, %v10247
        %10249 = vdwg.mxu0
        %v10266 = vunpack.c.l.b16 %v10025
        %v10267 = vunpack.c.l.b16 %v10026
        %v10268 = vunpack.c.l.b16 %v10027
        %v10269 = vunpack.c.l.b16 %v10028
        %v10270 = vunpack.c.l.b16 %v10029
        %v10271 = vunpack.c.l.b16 %v10030
        %v10272 = vunpack.c.l.b16 %v10031
        %v10273 = vunpack.c.l.b16 %v10032
        %v10274 = vunpack.c.l.b16 %v10033
        %v10275 = vunpack.c.l.b16 %v10034
        %v10276 = vunpack.c.l.b16 %v10035
        %v10277 = vunpack.c.l.b16 %v10036
        %v10278 = vunpack.c.l.b16 %v10037
        %v10279 = vunpack.c.l.b16 %v10038
        %v10280 = vunpack.c.l.b16 %v10039
        %v10281 = vunpack.c.l.b16 %v10040
        %v10282 = vpack.c.b16 %v10267, %v10266
        %v10283 = vpack.c.b16 %v10269, %v10268
        %v10284 = vpack.c.b16 %v10271, %v10270
        %v10285 = vpack.c.b16 %v10273, %v10272
        %v10286 = vpack.c.b16 %v10275, %v10274
        %v10287 = vpack.c.b16 %v10277, %v10276
        %v10288 = vpack.c.b16 %v10279, %v10278
        %v10289 = vpack.c.b16 %v10281, %v10280
        %v10291 = vsel %vm2568, %v10282, 0
        %v10294 = vsel %vm2568, %v10283, 0
        %v10297 = vsel %vm2568, %v10284, 0
        %v10300 = vsel %vm2568, %v10285, 0
        %v10303 = vsel %vm2568, %v10286, 0
        %v10306 = vsel %vm2568, %v10287, 0
        %v10309 = vsel %vm2568, %v10288, 0
        %v10312 = vsel %vm2568, %v10289, 0
        %10314 = vmatprep.subr.bf16.mxu0 %v9998
        %10315 = vmatpush1.bf16.msra.mxu0 %v9997
        %10316 = vmatprep.subr.bf16.mxu0 %v10000
        %10317 = vmatpush1.bf16.msra.mxu0 %v9999
        %10318 = vmatprep.subr.bf16.mxu0 0
        %10319 = vmatpush1.bf16.msra.mxu0 0
        %10320 = vmatprep.subr.bf16.mxu0 0
        %10321 = vmatpush1.bf16.msra.mxu0 0
        %10322 = vmatprep.subr.bf16.mxu0 0
        %10323 = vmatpush1.bf16.msra.mxu0 0
        %10324 = vmatprep.subr.bf16.mxu0 0
        %10325 = vmatpush1.bf16.msra.mxu0 0
        %10326 = vmatprep.subr.bf16.mxu0 0
        %10327 = vmatpush1.bf16.msra.mxu0 0
        %10328 = vmatprep.subr.bf16.mxu0 0
        %10329 = vmatpush1.bf16.msra.mxu0 0
        %10330 = vmatprep.subr.bf16.mxu0 0
        %10331 = vmatpush1.bf16.msra.mxu0 0
        %10332 = vmatprep.subr.bf16.mxu0 0
        %10333 = vmatpush1.bf16.msra.mxu0 0
        %10334 = vmatprep.subr.bf16.mxu0 0
        %10335 = vmatpush1.bf16.msra.mxu0 0
        %10336 = vmatprep.subr.bf16.mxu0 0
        %10337 = vmatpush1.bf16.msra.mxu0 0
        %10338 = vmatprep.subr.bf16.mxu0 0
        %10339 = vmatpush1.bf16.msra.mxu0 0
        %10340 = vmatprep.subr.bf16.mxu0 0
        %10341 = vmatpush1.bf16.msra.mxu0 0
        %10342 = vmatprep.subr.bf16.mxu0 0
        %10343 = vmatpush1.bf16.msra.mxu0 0
        %10344 = vmatprep.subr.bf16.mxu0 0
        %10345 = vmatpush1.bf16.msra.mxu0 0
        %10346 = vmatprep.mubr.bf16.mxu0 0
        %10347 = vmatmul.mubr.bf16.gmra.mrb[0].mxu0 %v10291
        %v10348 = vpop.f32.mrb[0].mxu0
        %v10349 = vadd.f32 0.0, %v10348
        %v10350 = vpop.f32.mrb[0].mxu0
        %v10351 = vadd.f32 0.0, %v10350
        %v10352 = vpop.f32.mrb[0].mxu0
        %v10353 = vadd.f32 0.0, %v10352
        %v10354 = vpop.f32.mrb[0].mxu0
        %v10355 = vadd.f32 0.0, %v10354
        %10356 = vmatprep.mubr.bf16.mxu0 0
        %10357 = vmatmul.mubr.bf16.gmra.mrb[0].mxu0 %v10294
        %v10358 = vpop.f32.mrb[0].mxu0
        %v10359 = vadd.f32 0.0, %v10358
        %v10360 = vpop.f32.mrb[0].mxu0
        %v10361 = vadd.f32 0.0, %v10360
        %v10362 = vpop.f32.mrb[0].mxu0
        %v10363 = vadd.f32 0.0, %v10362
        %v10364 = vpop.f32.mrb[0].mxu0
        %v10365 = vadd.f32 0.0, %v10364
        %10366 = vmatprep.mubr.bf16.mxu0 0
        %10367 = vmatmul.mubr.bf16.gmra.mrb[0].mxu0 %v10297
        %v10368 = vpop.f32.mrb[0].mxu0
        %v10369 = vadd.f32 0.0, %v10368
        %v10370 = vpop.f32.mrb[0].mxu0
        %v10371 = vadd.f32 0.0, %v10370
        %v10372 = vpop.f32.mrb[0].mxu0
        %v10373 = vadd.f32 0.0, %v10372
        %v10374 = vpop.f32.mrb[0].mxu0
        %v10375 = vadd.f32 0.0, %v10374
        %10376 = vmatprep.mubr.bf16.mxu0 0
        %10377 = vmatmul.mubr.bf16.gmra.mrb[0].mxu0 %v10300
        %v10378 = vpop.f32.mrb[0].mxu0
        %v10379 = vadd.f32 0.0, %v10378
        %v10380 = vpop.f32.mrb[0].mxu0
        %v10381 = vadd.f32 0.0, %v10380
        %v10382 = vpop.f32.mrb[0].mxu0
        %v10383 = vadd.f32 0.0, %v10382
        %v10384 = vpop.f32.mrb[0].mxu0
        %v10385 = vadd.f32 0.0, %v10384
        %10386 = vmatprep.mubr.bf16.mxu0 0
        %10387 = vmatmul.mubr.bf16.gmra.mrb[0].mxu0 %v10303
        %v10388 = vpop.f32.mrb[0].mxu0
        %v10389 = vadd.f32 0.0, %v10388
        %v10390 = vpop.f32.mrb[0].mxu0
        %v10391 = vadd.f32 0.0, %v10390
        %v10392 = vpop.f32.mrb[0].mxu0
        %v10393 = vadd.f32 0.0, %v10392
        %v10394 = vpop.f32.mrb[0].mxu0
        %v10395 = vadd.f32 0.0, %v10394
        %10396 = vmatprep.mubr.bf16.mxu0 0
        %10397 = vmatmul.mubr.bf16.gmra.mrb[0].mxu0 %v10306
        %v10398 = vpop.f32.mrb[0].mxu0
        %v10399 = vadd.f32 0.0, %v10398
        %v10400 = vpop.f32.mrb[0].mxu0
        %v10401 = vadd.f32 0.0, %v10400
        %v10402 = vpop.f32.mrb[0].mxu0
        %v10403 = vadd.f32 0.0, %v10402
        %v10404 = vpop.f32.mrb[0].mxu0
        %v10405 = vadd.f32 0.0, %v10404
        %10406 = vmatprep.mubr.bf16.mxu0 0
        %10407 = vmatmul.mubr.bf16.gmra.mrb[0].mxu0 %v10309
        %v10408 = vpop.f32.mrb[0].mxu0
        %v10409 = vadd.f32 0.0, %v10408
        %v10410 = vpop.f32.mrb[0].mxu0
        %v10411 = vadd.f32 0.0, %v10410
        %v10412 = vpop.f32.mrb[0].mxu0
        %v10413 = vadd.f32 0.0, %v10412
        %v10414 = vpop.f32.mrb[0].mxu0
        %v10415 = vadd.f32 0.0, %v10414
        %10416 = vmatprep.mubr.bf16.mxu0 0
        %10417 = vmatmul.mubr.bf16.gmra.mrb[0].mxu0 %v10312
        %v10418 = vpop.f32.mrb[0].mxu0
        %v10419 = vadd.f32 0.0, %v10418
        %v10420 = vpop.f32.mrb[0].mxu0
        %v10421 = vadd.f32 0.0, %v10420
        %v10422 = vpop.f32.mrb[0].mxu0
        %v10423 = vadd.f32 0.0, %v10422
        %v10424 = vpop.f32.mrb[0].mxu0
        %v10425 = vadd.f32 0.0, %v10424
        %10426 = vdwg.mxu0
        %v10443 = vunpack.c.l.b16 %v10041
        %v10444 = vunpack.c.l.b16 %v10042
        %v10445 = vunpack.c.l.b16 %v10043
        %v10446 = vunpack.c.l.b16 %v10044
        %v10447 = vunpack.c.l.b16 %v10045
        %v10448 = vunpack.c.l.b16 %v10046
        %v10449 = vunpack.c.l.b16 %v10047
        %v10450 = vunpack.c.l.b16 %v10048
        %v10451 = vunpack.c.l.b16 %v10049
        %v10452 = vunpack.c.l.b16 %v10050
        %v10453 = vunpack.c.l.b16 %v10051
        %v10454 = vunpack.c.l.b16 %v10052
        %v10455 = vunpack.c.l.b16 %v10053
        %v10456 = vunpack.c.l.b16 %v10054
        %v10457 = vunpack.c.l.b16 %v10055
        %v10458 = vunpack.c.l.b16 %v10056
        %v10459 = vpack.c.b16 %v10444, %v10443
        %v10460 = vpack.c.b16 %v10446, %v10445
        %v10461 = vpack.c.b16 %v10448, %v10447
        %v10462 = vpack.c.b16 %v10450, %v10449
        %v10463 = vpack.c.b16 %v10452, %v10451
        %v10464 = vpack.c.b16 %v10454, %v10453
        %v10465 = vpack.c.b16 %v10456, %v10455
        %v10466 = vpack.c.b16 %v10458, %v10457
        %v10468 = vsel %vm2568, %v10459, 0
        %v10471 = vsel %vm2568, %v10460, 0
        %v10474 = vsel %vm2568, %v10461, 0
        %v10477 = vsel %vm2568, %v10462, 0
        %v10480 = vsel %vm2568, %v10463, 0
        %v10483 = vsel %vm2568, %v10464, 0
        %v10486 = vsel %vm2568, %v10465, 0
        %v10489 = vsel %vm2568, %v10466, 0
        %10491 = vmatprep.subr.bf16.mxu0 %v10002
        %10492 = vmatpush1.bf16.msra.mxu0 %v10001
        %10493 = vmatprep.subr.bf16.mxu0 %v10004
        %10494 = vmatpush1.bf16.msra.mxu0 %v10003
        %10495 = vmatprep.subr.bf16.mxu0 0
        %10496 = vmatpush1.bf16.msra.mxu0 0
        %10497 = vmatprep.subr.bf16.mxu0 0
        %10498 = vmatpush1.bf16.msra.mxu0 0
        %10499 = vmatprep.subr.bf16.mxu0 0
        %10500 = vmatpush1.bf16.msra.mxu0 0
        %10501 = vmatprep.subr.bf16.mxu0 0
        %10502 = vmatpush1.bf16.msra.mxu0 0
        %10503 = vmatprep.subr.bf16.mxu0 0
        %10504 = vmatpush1.bf16.msra.mxu0 0
        %10505 = vmatprep.subr.bf16.mxu0 0
        %10506 = vmatpush1.bf16.msra.mxu0 0
        %10507 = vmatprep.subr.bf16.mxu0 0
        %10508 = vmatpush1.bf16.msra.mxu0 0
        %10509 = vmatprep.subr.bf16.mxu0 0
        %10510 = vmatpush1.bf16.msra.mxu0 0
        %10511 = vmatprep.subr.bf16.mxu0 0
        %10512 = vmatpush1.bf16.msra.mxu0 0
        %10513 = vmatprep.subr.bf16.mxu0 0
        %10514 = vmatpush1.bf16.msra.mxu0 0
        %10515 = vmatprep.subr.bf16.mxu0 0
        %10516 = vmatpush1.bf16.msra.mxu0 0
        %10517 = vmatprep.subr.bf16.mxu0 0
        %10518 = vmatpush1.bf16.msra.mxu0 0
        %10519 = vmatprep.subr.bf16.mxu0 0
        %10520 = vmatpush1.bf16.msra.mxu0 0
        %10521 = vmatprep.subr.bf16.mxu0 0
        %10522 = vmatpush1.bf16.msra.mxu0 0
        %10523 = vmatprep.mubr.bf16.mxu0 0
        %10524 = vmatmul.mubr.bf16.gmra.mrb[0].mxu0 %v10468
        %v10525 = vpop.f32.mrb[0].mxu0
        %v10526 = vadd.f32 0.0, %v10525
        %v10527 = vpop.f32.mrb[0].mxu0
        %v10528 = vadd.f32 0.0, %v10527
        %v10529 = vpop.f32.mrb[0].mxu0
        %v10530 = vadd.f32 0.0, %v10529
        %v10531 = vpop.f32.mrb[0].mxu0
        %v10532 = vadd.f32 0.0, %v10531
        %10533 = vmatprep.mubr.bf16.mxu0 0
        %10534 = vmatmul.mubr.bf16.gmra.mrb[0].mxu0 %v10471
        %v10535 = vpop.f32.mrb[0].mxu0
        %v10536 = vadd.f32 0.0, %v10535
        %v10537 = vpop.f32.mrb[0].mxu0
        %v10538 = vadd.f32 0.0, %v10537
        %v10539 = vpop.f32.mrb[0].mxu0
        %v10540 = vadd.f32 0.0, %v10539
        %v10541 = vpop.f32.mrb[0].mxu0
        %v10542 = vadd.f32 0.0, %v10541
        %10543 = vmatprep.mubr.bf16.mxu0 0
        %10544 = vmatmul.mubr.bf16.gmra.mrb[0].mxu0 %v10474
        %v10545 = vpop.f32.mrb[0].mxu0
        %v10546 = vadd.f32 0.0, %v10545
        %v10547 = vpop.f32.mrb[0].mxu0
        %v10548 = vadd.f32 0.0, %v10547
        %v10549 = vpop.f32.mrb[0].mxu0
        %v10550 = vadd.f32 0.0, %v10549
        %v10551 = vpop.f32.mrb[0].mxu0
        %v10552 = vadd.f32 0.0, %v10551
        %10553 = vmatprep.mubr.bf16.mxu0 0
        %10554 = vmatmul.mubr.bf16.gmra.mrb[0].mxu0 %v10477
        %v10555 = vpop.f32.mrb[0].mxu0
        %v10556 = vadd.f32 0.0, %v10555
        %v10557 = vpop.f32.mrb[0].mxu0
        %v10558 = vadd.f32 0.0, %v10557
        %v10559 = vpop.f32.mrb[0].mxu0
        %v10560 = vadd.f32 0.0, %v10559
        %v10561 = vpop.f32.mrb[0].mxu0
        %v10562 = vadd.f32 0.0, %v10561
        %10563 = vmatprep.mubr.bf16.mxu0 0
        %10564 = vmatmul.mubr.bf16.gmra.mrb[0].mxu0 %v10480
        %v10565 = vpop.f32.mrb[0].mxu0
        %v10566 = vadd.f32 0.0, %v10565
        %v10567 = vpop.f32.mrb[0].mxu0
        %v10568 = vadd.f32 0.0, %v10567
        %v10569 = vpop.f32.mrb[0].mxu0
        %v10570 = vadd.f32 0.0, %v10569
        %v10571 = vpop.f32.mrb[0].mxu0
        %v10572 = vadd.f32 0.0, %v10571
        %10573 = vmatprep.mubr.bf16.mxu0 0
        %10574 = vmatmul.mubr.bf16.gmra.mrb[0].mxu0 %v10483
        %v10575 = vpop.f32.mrb[0].mxu0
        %v10576 = vadd.f32 0.0, %v10575
        %v10577 = vpop.f32.mrb[0].mxu0
        %v10578 = vadd.f32 0.0, %v10577
        %v10579 = vpop.f32.mrb[0].mxu0
        %v10580 = vadd.f32 0.0, %v10579
        %v10581 = vpop.f32.mrb[0].mxu0
        %v10582 = vadd.f32 0.0, %v10581
        %10583 = vmatprep.mubr.bf16.mxu0 0
        %10584 = vmatmul.mubr.bf16.gmra.mrb[0].mxu0 %v10486
        %v10585 = vpop.f32.mrb[0].mxu0
        %v10586 = vadd.f32 0.0, %v10585
        %v10587 = vpop.f32.mrb[0].mxu0
        %v10588 = vadd.f32 0.0, %v10587
        %v10589 = vpop.f32.mrb[0].mxu0
        %v10590 = vadd.f32 0.0, %v10589
        %v10591 = vpop.f32.mrb[0].mxu0
        %v10592 = vadd.f32 0.0, %v10591
        %10593 = vmatprep.mubr.bf16.mxu0 0
        %10594 = vmatmul.mubr.bf16.gmra.mrb[0].mxu0 %v10489
        %v10595 = vpop.f32.mrb[0].mxu0
        %v10596 = vadd.f32 0.0, %v10595
        %v10597 = vpop.f32.mrb[0].mxu0
        %v10598 = vadd.f32 0.0, %v10597
        %v10599 = vpop.f32.mrb[0].mxu0
        %v10600 = vadd.f32 0.0, %v10599
        %v10601 = vpop.f32.mrb[0].mxu0
        %v10602 = vadd.f32 0.0, %v10601
        %10603 = vdwg.mxu0
        %v10620 = vunpack.c.l.b16 %v10057
        %v10621 = vunpack.c.l.b16 %v10058
        %v10622 = vunpack.c.l.b16 %v10059
        %v10623 = vunpack.c.l.b16 %v10060
        %v10624 = vunpack.c.l.b16 %v10061
        %v10625 = vunpack.c.l.b16 %v10062
        %v10626 = vunpack.c.l.b16 %v10063
        %v10627 = vunpack.c.l.b16 %v10064
        %v10628 = vunpack.c.l.b16 %v10065
        %v10629 = vunpack.c.l.b16 %v10066
        %v10630 = vunpack.c.l.b16 %v10067
        %v10631 = vunpack.c.l.b16 %v10068
        %v10632 = vunpack.c.l.b16 %v10069
        %v10633 = vunpack.c.l.b16 %v10070
        %v10634 = vunpack.c.l.b16 %v10071
        %v10635 = vunpack.c.l.b16 %v10072
        %v10636 = vpack.c.b16 %v10621, %v10620
        %v10637 = vpack.c.b16 %v10623, %v10622
        %v10638 = vpack.c.b16 %v10625, %v10624
        %v10639 = vpack.c.b16 %v10627, %v10626
        %v10640 = vpack.c.b16 %v10629, %v10628
        %v10641 = vpack.c.b16 %v10631, %v10630
        %v10642 = vpack.c.b16 %v10633, %v10632
        %v10643 = vpack.c.b16 %v10635, %v10634
        %v10645 = vsel %vm2568, %v10636, 0
        %v10648 = vsel %vm2568, %v10637, 0
        %v10651 = vsel %vm2568, %v10638, 0
        %v10654 = vsel %vm2568, %v10639, 0
        %v10657 = vsel %vm2568, %v10640, 0
        %v10660 = vsel %vm2568, %v10641, 0
        %v10663 = vsel %vm2568, %v10642, 0
        %v10666 = vsel %vm2568, %v10643, 0
        %10668 = vmatprep.subr.bf16.mxu0 %v10006
        %10669 = vmatpush1.bf16.msra.mxu0 %v10005
        %10670 = vmatprep.subr.bf16.mxu0 %v10008
        %10671 = vmatpush1.bf16.msra.mxu0 %v10007
        %10672 = vmatprep.subr.bf16.mxu0 0
        %10673 = vmatpush1.bf16.msra.mxu0 0
        %10674 = vmatprep.subr.bf16.mxu0 0
        %10675 = vmatpush1.bf16.msra.mxu0 0
        %10676 = vmatprep.subr.bf16.mxu0 0
        %10677 = vmatpush1.bf16.msra.mxu0 0
        %10678 = vmatprep.subr.bf16.mxu0 0
        %10679 = vmatpush1.bf16.msra.mxu0 0
        %10680 = vmatprep.subr.bf16.mxu0 0
        %10681 = vmatpush1.bf16.msra.mxu0 0
        %10682 = vmatprep.subr.bf16.mxu0 0
        %10683 = vmatpush1.bf16.msra.mxu0 0
        %10684 = vmatprep.subr.bf16.mxu0 0
        %10685 = vmatpush1.bf16.msra.mxu0 0
        %10686 = vmatprep.subr.bf16.mxu0 0
        %10687 = vmatpush1.bf16.msra.mxu0 0
        %10688 = vmatprep.subr.bf16.mxu0 0
        %10689 = vmatpush1.bf16.msra.mxu0 0
        %10690 = vmatprep.subr.bf16.mxu0 0
        %10691 = vmatpush1.bf16.msra.mxu0 0
        %10692 = vmatprep.subr.bf16.mxu0 0
        %10693 = vmatpush1.bf16.msra.mxu0 0
        %10694 = vmatprep.subr.bf16.mxu0 0
        %10695 = vmatpush1.bf16.msra.mxu0 0
        %10696 = vmatprep.subr.bf16.mxu0 0
        %10697 = vmatpush1.bf16.msra.mxu0 0
        %10698 = vmatprep.subr.bf16.mxu0 0
        %10699 = vmatpush1.bf16.msra.mxu0 0
        %10700 = vmatprep.mubr.bf16.mxu0 0
        %10701 = vmatmul.mubr.bf16.gmra.mrb[0].mxu0 %v10645
        %v10702 = vpop.f32.mrb[0].mxu0
        %v10703 = vadd.f32 0.0, %v10702
        %v10704 = vpop.f32.mrb[0].mxu0
        %v10705 = vadd.f32 0.0, %v10704
        %v10706 = vpop.f32.mrb[0].mxu0
        %v10707 = vadd.f32 0.0, %v10706
        %v10708 = vpop.f32.mrb[0].mxu0
        %v10709 = vadd.f32 0.0, %v10708
        %10710 = vmatprep.mubr.bf16.mxu0 0
        %10711 = vmatmul.mubr.bf16.gmra.mrb[0].mxu0 %v10648
        %v10712 = vpop.f32.mrb[0].mxu0
        %v10713 = vadd.f32 0.0, %v10712
        %v10714 = vpop.f32.mrb[0].mxu0
        %v10715 = vadd.f32 0.0, %v10714
        %v10716 = vpop.f32.mrb[0].mxu0
        %v10717 = vadd.f32 0.0, %v10716
        %v10718 = vpop.f32.mrb[0].mxu0
        %v10719 = vadd.f32 0.0, %v10718
        %10720 = vmatprep.mubr.bf16.mxu0 0
        %10721 = vmatmul.mubr.bf16.gmra.mrb[0].mxu0 %v10651
        %v10722 = vpop.f32.mrb[0].mxu0
        %v10723 = vadd.f32 0.0, %v10722
        %v10724 = vpop.f32.mrb[0].mxu0
        %v10725 = vadd.f32 0.0, %v10724
        %v10726 = vpop.f32.mrb[0].mxu0
        %v10727 = vadd.f32 0.0, %v10726
        %v10728 = vpop.f32.mrb[0].mxu0
        %v10729 = vadd.f32 0.0, %v10728
        %10730 = vmatprep.mubr.bf16.mxu0 0
        %10731 = vmatmul.mubr.bf16.gmra.mrb[0].mxu0 %v10654
        %v10732 = vpop.f32.mrb[0].mxu0
        %v10733 = vadd.f32 0.0, %v10732
        %v10734 = vpop.f32.mrb[0].mxu0
        %v10735 = vadd.f32 0.0, %v10734
        %v10736 = vpop.f32.mrb[0].mxu0
        %v10737 = vadd.f32 0.0, %v10736
        %v10738 = vpop.f32.mrb[0].mxu0
        %v10739 = vadd.f32 0.0, %v10738
        %10740 = vmatprep.mubr.bf16.mxu0 0
        %10741 = vmatmul.mubr.bf16.gmra.mrb[0].mxu0 %v10657
        %v10742 = vpop.f32.mrb[0].mxu0
        %v10743 = vadd.f32 0.0, %v10742
        %v10744 = vpop.f32.mrb[0].mxu0
        %v10745 = vadd.f32 0.0, %v10744
        %v10746 = vpop.f32.mrb[0].mxu0
        %v10747 = vadd.f32 0.0, %v10746
        %v10748 = vpop.f32.mrb[0].mxu0
        %v10749 = vadd.f32 0.0, %v10748
        %10750 = vmatprep.mubr.bf16.mxu0 0
        %10751 = vmatmul.mubr.bf16.gmra.mrb[0].mxu0 %v10660
        %v10752 = vpop.f32.mrb[0].mxu0
        %v10753 = vadd.f32 0.0, %v10752
        %v10754 = vpop.f32.mrb[0].mxu0
        %v10755 = vadd.f32 0.0, %v10754
        %v10756 = vpop.f32.mrb[0].mxu0
        %v10757 = vadd.f32 0.0, %v10756
        %v10758 = vpop.f32.mrb[0].mxu0
        %v10759 = vadd.f32 0.0, %v10758
        %10760 = vmatprep.mubr.bf16.mxu0 0
        %10761 = vmatmul.mubr.bf16.gmra.mrb[0].mxu0 %v10663
        %v10762 = vpop.f32.mrb[0].mxu0
        %v10763 = vadd.f32 0.0, %v10762
        %v10764 = vpop.f32.mrb[0].mxu0
        %v10765 = vadd.f32 0.0, %v10764
        %v10766 = vpop.f32.mrb[0].mxu0
        %v10767 = vadd.f32 0.0, %v10766
        %v10768 = vpop.f32.mrb[0].mxu0
        %v10769 = vadd.f32 0.0, %v10768
        %10770 = vmatprep.mubr.bf16.mxu0 0
        %10771 = vmatmul.mubr.bf16.gmra.mrb[0].mxu0 %v10666
        %v10772 = vpop.f32.mrb[0].mxu0
        %v10773 = vadd.f32 0.0, %v10772
        %v10774 = vpop.f32.mrb[0].mxu0
        %v10775 = vadd.f32 0.0, %v10774
        %v10776 = vpop.f32.mrb[0].mxu0
        %v10777 = vadd.f32 0.0, %v10776
        %v10778 = vpop.f32.mrb[0].mxu0
        %v10779 = vadd.f32 0.0, %v10778
        %10780 = vdwg.mxu0
        %v10781 = vadd.f32 %v10172, %v10349
        %v10782 = vadd.f32 %v10781, %v10526
        %v10783 = vadd.f32 %v10782, %v10703
        %v10784 = vadd.f32 %v10174, %v10351
        %v10785 = vadd.f32 %v10784, %v10528
        %v10786 = vadd.f32 %v10785, %v10705
        %v10787 = vadd.f32 %v10176, %v10353
        %v10788 = vadd.f32 %v10787, %v10530
        %v10789 = vadd.f32 %v10788, %v10707
        %v10790 = vadd.f32 %v10178, %v10355
        %v10791 = vadd.f32 %v10790, %v10532
        %v10792 = vadd.f32 %v10791, %v10709
        %v10793 = vadd.f32 %v10182, %v10359
        %v10794 = vadd.f32 %v10793, %v10536
        %v10795 = vadd.f32 %v10794, %v10713
        %v10796 = vadd.f32 %v10184, %v10361
        %v10797 = vadd.f32 %v10796, %v10538
        %v10798 = vadd.f32 %v10797, %v10715
        %v10799 = vadd.f32 %v10186, %v10363
        %v10800 = vadd.f32 %v10799, %v10540
        %v10801 = vadd.f32 %v10800, %v10717
        %v10802 = vadd.f32 %v10188, %v10365
        %v10803 = vadd.f32 %v10802, %v10542
        %v10804 = vadd.f32 %v10803, %v10719
        %v10805 = vadd.f32 %v10192, %v10369
        %v10806 = vadd.f32 %v10805, %v10546
        %v10807 = vadd.f32 %v10806, %v10723
        %v10808 = vadd.f32 %v10194, %v10371
        %v10809 = vadd.f32 %v10808, %v10548
        %v10810 = vadd.f32 %v10809, %v10725
        %v10811 = vadd.f32 %v10196, %v10373
        %v10812 = vadd.f32 %v10811, %v10550
        %v10813 = vadd.f32 %v10812, %v10727
        %v10814 = vadd.f32 %v10198, %v10375
        %v10815 = vadd.f32 %v10814, %v10552
        %v10816 = vadd.f32 %v10815, %v10729
        %v10817 = vadd.f32 %v10202, %v10379
        %v10818 = vadd.f32 %v10817, %v10556
        %v10819 = vadd.f32 %v10818, %v10733
        %v10820 = vadd.f32 %v10204, %v10381
        %v10821 = vadd.f32 %v10820, %v10558
        %v10822 = vadd.f32 %v10821, %v10735
        %v10823 = vadd.f32 %v10206, %v10383
        %v10824 = vadd.f32 %v10823, %v10560
        %v10825 = vadd.f32 %v10824, %v10737
        %v10826 = vadd.f32 %v10208, %v10385
        %v10827 = vadd.f32 %v10826, %v10562
        %v10828 = vadd.f32 %v10827, %v10739
        %v10829 = vadd.f32 %v10212, %v10389
        %v10830 = vadd.f32 %v10829, %v10566
        %v10831 = vadd.f32 %v10830, %v10743
        %v10832 = vadd.f32 %v10214, %v10391
        %v10833 = vadd.f32 %v10832, %v10568
        %v10834 = vadd.f32 %v10833, %v10745
        %v10835 = vadd.f32 %v10216, %v10393
        %v10836 = vadd.f32 %v10835, %v10570
        %v10837 = vadd.f32 %v10836, %v10747
        %v10838 = vadd.f32 %v10218, %v10395
        %v10839 = vadd.f32 %v10838, %v10572
        %v10840 = vadd.f32 %v10839, %v10749
        %v10841 = vadd.f32 %v10222, %v10399
        %v10842 = vadd.f32 %v10841, %v10576
        %v10843 = vadd.f32 %v10842, %v10753
        %v10844 = vadd.f32 %v10224, %v10401
        %v10845 = vadd.f32 %v10844, %v10578
        %v10846 = vadd.f32 %v10845, %v10755
        %v10847 = vadd.f32 %v10226, %v10403
        %v10848 = vadd.f32 %v10847, %v10580
        %v10849 = vadd.f32 %v10848, %v10757
        %v10850 = vadd.f32 %v10228, %v10405
        %v10851 = vadd.f32 %v10850, %v10582
        %v10852 = vadd.f32 %v10851, %v10759
        %v10853 = vadd.f32 %v10232, %v10409
        %v10854 = vadd.f32 %v10853, %v10586
        %v10855 = vadd.f32 %v10854, %v10763
        %v10856 = vadd.f32 %v10234, %v10411
        %v10857 = vadd.f32 %v10856, %v10588
        %v10858 = vadd.f32 %v10857, %v10765
        %v10859 = vadd.f32 %v10236, %v10413
        %v10860 = vadd.f32 %v10859, %v10590
        %v10861 = vadd.f32 %v10860, %v10767
        %v10862 = vadd.f32 %v10238, %v10415
        %v10863 = vadd.f32 %v10862, %v10592
        %v10864 = vadd.f32 %v10863, %v10769
        %v10865 = vadd.f32 %v10242, %v10419
        %v10866 = vadd.f32 %v10865, %v10596
        %v10867 = vadd.f32 %v10866, %v10773
        %v10868 = vadd.f32 %v10244, %v10421
        %v10869 = vadd.f32 %v10868, %v10598
        %v10870 = vadd.f32 %v10869, %v10775
        %v10871 = vadd.f32 %v10246, %v10423
        %v10872 = vadd.f32 %v10871, %v10600
        %v10873 = vadd.f32 %v10872, %v10777
        %v10874 = vadd.f32 %v10248, %v10425
        %v10875 = vadd.f32 %v10874, %v10602
        %v10876 = vadd.f32 %v10875, %v10779
        %v10877 = vld [vmem:[%s18] sm:$0xff]
        %v10878 = vld [vmem:[%s18 + $0x8] sm:$0xff]
        %v10879 = vld [vmem:[%s18 + $0x10] sm:$0xff]
        %v10880 = vld [vmem:[%s18 + $0x18] sm:$0xff]
        %v10881 = vld [vmem:[%s18 + $0x20] sm:$0xff]
        %v10882 = vld [vmem:[%s18 + $0x28] sm:$0xff]
        %v10883 = vld [vmem:[%s18 + $0x30] sm:$0xff]
        %v10884 = vld [vmem:[%s18 + $0x38] sm:$0xff]
        %v10885 = vld [vmem:[%s18 + $0x40] sm:$0xff]
        %v10886 = vld [vmem:[%s18 + $0x48] sm:$0xff]
        %v10887 = vld [vmem:[%s18 + $0x50] sm:$0xff]
        %v10888 = vld [vmem:[%s18 + $0x58] sm:$0xff]
        %v10889 = vld [vmem:[%s18 + $0x60] sm:$0xff]
        %v10890 = vld [vmem:[%s18 + $0x68] sm:$0xff]
        %v10891 = vld [vmem:[%s18 + $0x70] sm:$0xff]
        %v10892 = vld [vmem:[%s18 + $0x78] sm:$0xff]
        %10894 = vset.pattern.permute.xlu0 0
        %10895 = vperm.xlu0 %10894, %v10877
        %v10896 = vpop.permute.xlu0 %10895
        %10899 = vset.pattern.permute.xlu0 0
        %10900 = vperm.xlu0 %10899, %v10878
        %v10901 = vpop.permute.xlu0 %10900
        %10904 = vset.pattern.permute.xlu0 0
        %10905 = vperm.xlu0 %10904, %v10879
        %v10906 = vpop.permute.xlu0 %10905
        %10909 = vset.pattern.permute.xlu0 0
        %10910 = vperm.xlu0 %10909, %v10880
        %v10911 = vpop.permute.xlu0 %10910
        %10914 = vset.pattern.permute.xlu0 0
        %10915 = vperm.xlu0 %10914, %v10881
        %v10916 = vpop.permute.xlu0 %10915
        %10919 = vset.pattern.permute.xlu0 0
        %10920 = vperm.xlu0 %10919, %v10882
        %v10921 = vpop.permute.xlu0 %10920
        %10924 = vset.pattern.permute.xlu0 0
        %10925 = vperm.xlu0 %10924, %v10883
        %v10926 = vpop.permute.xlu0 %10925
        %10929 = vset.pattern.permute.xlu0 0
        %10930 = vperm.xlu0 %10929, %v10884
        %v10931 = vpop.permute.xlu0 %10930
        %10934 = vset.pattern.permute.xlu0 0
        %10935 = vperm.xlu0 %10934, %v10885
        %v10936 = vpop.permute.xlu0 %10935
        %10939 = vset.pattern.permute.xlu0 0
        %10940 = vperm.xlu0 %10939, %v10886
        %v10941 = vpop.permute.xlu0 %10940
        %10944 = vset.pattern.permute.xlu0 0
        %10945 = vperm.xlu0 %10944, %v10887
        %v10946 = vpop.permute.xlu0 %10945
        %10949 = vset.pattern.permute.xlu0 0
        %10950 = vperm.xlu0 %10949, %v10888
        %v10951 = vpop.permute.xlu0 %10950
        %10954 = vset.pattern.permute.xlu0 0
        %10955 = vperm.xlu0 %10954, %v10889
        %v10956 = vpop.permute.xlu0 %10955
        %10959 = vset.pattern.permute.xlu0 0
        %10960 = vperm.xlu0 %10959, %v10890
        %v10961 = vpop.permute.xlu0 %10960
        %10964 = vset.pattern.permute.xlu0 0
        %10965 = vperm.xlu0 %10964, %v10891
        %v10966 = vpop.permute.xlu0 %10965
        %10969 = vset.pattern.permute.xlu0 0
        %10970 = vperm.xlu0 %10969, %v10892
        %v10971 = vpop.permute.xlu0 %10970
        %v10973 = vadd.f32 %v10783, %v10896
        %v10974 = vadd.f32 %v10786, %v10896
        %v10975 = vadd.f32 %v10789, %v10901
        %v10976 = vadd.f32 %v10792, %v10901
        %v10977 = vadd.f32 %v10795, %v10906
        %v10978 = vadd.f32 %v10798, %v10906
        %v10979 = vadd.f32 %v10801, %v10911
        %v10980 = vadd.f32 %v10804, %v10911
        %v10981 = vadd.f32 %v10807, %v10916
        %v10982 = vadd.f32 %v10810, %v10916
        %v10983 = vadd.f32 %v10813, %v10921
        %v10984 = vadd.f32 %v10816, %v10921
        %v10985 = vadd.f32 %v10819, %v10926
        %v10986 = vadd.f32 %v10822, %v10926
        %v10987 = vadd.f32 %v10825, %v10931
        %v10988 = vadd.f32 %v10828, %v10931
        %v10989 = vadd.f32 %v10831, %v10936
        %v10990 = vadd.f32 %v10834, %v10936
        %v10991 = vadd.f32 %v10837, %v10941
        %v10992 = vadd.f32 %v10840, %v10941
        %v10993 = vadd.f32 %v10843, %v10946
        %v10994 = vadd.f32 %v10846, %v10946
        %v10995 = vadd.f32 %v10849, %v10951
        %v10996 = vadd.f32 %v10852, %v10951
        %v10997 = vadd.f32 %v10855, %v10956
        %v10998 = vadd.f32 %v10858, %v10956
        %v10999 = vadd.f32 %v10861, %v10961
        %v11000 = vadd.f32 %v10864, %v10961
        %v11001 = vadd.f32 %v10867, %v10966
        %v11002 = vadd.f32 %v10870, %v10966
        %v11003 = vadd.f32 %v10873, %v10971
        %v11004 = vadd.f32 %v10876, %v10971
        %v11005 = vld [vmem:[%s660] sm:$0xff]
        %v11006 = vld [vmem:[%s660 + $0x8] sm:$0xff]
        %v11007 = vld [vmem:[%s660 + $0x10] sm:$0xff]
        %v11008 = vld [vmem:[%s660 + $0x18] sm:$0xff]
        %v11009 = vld [vmem:[%s660 + $0x20] sm:$0xff]
        %v11010 = vld [vmem:[%s660 + $0x28] sm:$0xff]
        %v11011 = vld [vmem:[%s660 + $0x30] sm:$0xff]
        %v11012 = vld [vmem:[%s660 + $0x38] sm:$0xff]
        %v11013 = vld [vmem:[%s660 + $0x40] sm:$0xff]
        %v11014 = vld [vmem:[%s660 + $0x48] sm:$0xff]
        %v11015 = vld [vmem:[%s660 + $0x50] sm:$0xff]
        %v11016 = vld [vmem:[%s660 + $0x58] sm:$0xff]
        %v11017 = vld [vmem:[%s660 + $0x60] sm:$0xff]
        %v11018 = vld [vmem:[%s660 + $0x68] sm:$0xff]
        %v11019 = vld [vmem:[%s660 + $0x70] sm:$0xff]
        %v11020 = vld [vmem:[%s660 + $0x78] sm:$0xff]
        %v11021 = vunpack.c.l.bf16 %v11005
        %v11022 = vunpack.c.h.bf16 %v11005
        %v11023 = vunpack.c.l.bf16 %v11006
        %v11024 = vunpack.c.h.bf16 %v11006
        %v11025 = vunpack.c.l.bf16 %v11007
        %v11026 = vunpack.c.h.bf16 %v11007
        %v11027 = vunpack.c.l.bf16 %v11008
        %v11028 = vunpack.c.h.bf16 %v11008
        %v11029 = vunpack.c.l.bf16 %v11009
        %v11030 = vunpack.c.h.bf16 %v11009
        %v11031 = vunpack.c.l.bf16 %v11010
        %v11032 = vunpack.c.h.bf16 %v11010
        %v11033 = vunpack.c.l.bf16 %v11011
        %v11034 = vunpack.c.h.bf16 %v11011
        %v11035 = vunpack.c.l.bf16 %v11012
        %v11036 = vunpack.c.h.bf16 %v11012
        %v11037 = vunpack.c.l.bf16 %v11013
        %v11038 = vunpack.c.h.bf16 %v11013
        %v11039 = vunpack.c.l.bf16 %v11014
        %v11040 = vunpack.c.h.bf16 %v11014
        %v11041 = vunpack.c.l.bf16 %v11015
        %v11042 = vunpack.c.h.bf16 %v11015
        %v11043 = vunpack.c.l.bf16 %v11016
        %v11044 = vunpack.c.h.bf16 %v11016
        %v11045 = vunpack.c.l.bf16 %v11017
        %v11046 = vunpack.c.h.bf16 %v11017
        %v11047 = vunpack.c.l.bf16 %v11018
        %v11048 = vunpack.c.h.bf16 %v11018
        %v11049 = vunpack.c.l.bf16 %v11019
        %v11050 = vunpack.c.h.bf16 %v11019
        %v11051 = vunpack.c.l.bf16 %v11020
        %v11052 = vunpack.c.h.bf16 %v11020
        %v11053 = vld [vmem:[%s665] sm:$0xff]
        %v11054 = vld [vmem:[%s665 + $0x8] sm:$0xff]
        %v11055 = vld [vmem:[%s665 + $0x10] sm:$0xff]
        %v11056 = vld [vmem:[%s665 + $0x18] sm:$0xff]
        %v11057 = vld [vmem:[%s665 + $0x20] sm:$0xff]
        %v11058 = vld [vmem:[%s665 + $0x28] sm:$0xff]
        %v11059 = vld [vmem:[%s665 + $0x30] sm:$0xff]
        %v11060 = vld [vmem:[%s665 + $0x38] sm:$0xff]
        %v11061 = vld [vmem:[%s665 + $0x40] sm:$0xff]
        %v11062 = vld [vmem:[%s665 + $0x48] sm:$0xff]
        %v11063 = vld [vmem:[%s665 + $0x50] sm:$0xff]
        %v11064 = vld [vmem:[%s665 + $0x58] sm:$0xff]
        %v11065 = vld [vmem:[%s665 + $0x60] sm:$0xff]
        %v11066 = vld [vmem:[%s665 + $0x68] sm:$0xff]
        %v11067 = vld [vmem:[%s665 + $0x70] sm:$0xff]
        %v11068 = vld [vmem:[%s665 + $0x78] sm:$0xff]
        %v11069 = vunpack.c.l.bf16 %v11053
        %v11070 = vunpack.c.h.bf16 %v11053
        %v11071 = vunpack.c.l.bf16 %v11054
        %v11072 = vunpack.c.h.bf16 %v11054
        %v11073 = vunpack.c.l.bf16 %v11055
        %v11074 = vunpack.c.h.bf16 %v11055
        %v11075 = vunpack.c.l.bf16 %v11056
        %v11076 = vunpack.c.h.bf16 %v11056
        %v11077 = vunpack.c.l.bf16 %v11057
        %v11078 = vunpack.c.h.bf16 %v11057
        %v11079 = vunpack.c.l.bf16 %v11058
        %v11080 = vunpack.c.h.bf16 %v11058
        %v11081 = vunpack.c.l.bf16 %v11059
        %v11082 = vunpack.c.h.bf16 %v11059
        %v11083 = vunpack.c.l.bf16 %v11060
        %v11084 = vunpack.c.h.bf16 %v11060
        %v11085 = vunpack.c.l.bf16 %v11061
        %v11086 = vunpack.c.h.bf16 %v11061
        %v11087 = vunpack.c.l.bf16 %v11062
        %v11088 = vunpack.c.h.bf16 %v11062
        %v11089 = vunpack.c.l.bf16 %v11063
        %v11090 = vunpack.c.h.bf16 %v11063
        %v11091 = vunpack.c.l.bf16 %v11064
        %v11092 = vunpack.c.h.bf16 %v11064
        %v11093 = vunpack.c.l.bf16 %v11065
        %v11094 = vunpack.c.h.bf16 %v11065
        %v11095 = vunpack.c.l.bf16 %v11066
        %v11096 = vunpack.c.h.bf16 %v11066
        %v11097 = vunpack.c.l.bf16 %v11067
        %v11098 = vunpack.c.h.bf16 %v11067
        %v11099 = vunpack.c.l.bf16 %v11068
        %v11100 = vunpack.c.h.bf16 %v11068
        %v11101 = vadd.f32 %v11021, %v11069
        %v11102 = vadd.f32 %v11022, %v11070
        %v11103 = vadd.f32 %v11023, %v11071
        %v11104 = vadd.f32 %v11024, %v11072
        %v11105 = vadd.f32 %v11025, %v11073
        %v11106 = vadd.f32 %v11026, %v11074
        %v11107 = vadd.f32 %v11027, %v11075
        %v11108 = vadd.f32 %v11028, %v11076
        %v11109 = vadd.f32 %v11029, %v11077
        %v11110 = vadd.f32 %v11030, %v11078
        %v11111 = vadd.f32 %v11031, %v11079
        %v11112 = vadd.f32 %v11032, %v11080
        %v11113 = vadd.f32 %v11033, %v11081
        %v11114 = vadd.f32 %v11034, %v11082
        %v11115 = vadd.f32 %v11035, %v11083
        %v11116 = vadd.f32 %v11036, %v11084
        %v11117 = vadd.f32 %v11037, %v11085
        %v11118 = vadd.f32 %v11038, %v11086
        %v11119 = vadd.f32 %v11039, %v11087
        %v11120 = vadd.f32 %v11040, %v11088
        %v11121 = vadd.f32 %v11041, %v11089
        %v11122 = vadd.f32 %v11042, %v11090
        %v11123 = vadd.f32 %v11043, %v11091
        %v11124 = vadd.f32 %v11044, %v11092
        %v11125 = vadd.f32 %v11045, %v11093
        %v11126 = vadd.f32 %v11046, %v11094
        %v11127 = vadd.f32 %v11047, %v11095
        %v11128 = vadd.f32 %v11048, %v11096
        %v11129 = vadd.f32 %v11049, %v11097
        %v11130 = vadd.f32 %v11050, %v11098
        %v11131 = vadd.f32 %v11051, %v11099
        %v11132 = vadd.f32 %v11052, %v11100
        %v11133 = vadd.f32 %v11101, %v10973
        %v11134 = vadd.f32 %v11102, %v10974
        %v11135 = vadd.f32 %v11103, %v10975
        %v11136 = vadd.f32 %v11104, %v10976
        %v11137 = vadd.f32 %v11105, %v10977
        %v11138 = vadd.f32 %v11106, %v10978
        %v11139 = vadd.f32 %v11107, %v10979
        %v11140 = vadd.f32 %v11108, %v10980
        %v11141 = vadd.f32 %v11109, %v10981
        %v11142 = vadd.f32 %v11110, %v10982
        %v11143 = vadd.f32 %v11111, %v10983
        %v11144 = vadd.f32 %v11112, %v10984
        %v11145 = vadd.f32 %v11113, %v10985
        %v11146 = vadd.f32 %v11114, %v10986
        %v11147 = vadd.f32 %v11115, %v10987
        %v11148 = vadd.f32 %v11116, %v10988
        %v11149 = vadd.f32 %v11117, %v10989
        %v11150 = vadd.f32 %v11118, %v10990
        %v11151 = vadd.f32 %v11119, %v10991
        %v11152 = vadd.f32 %v11120, %v10992
        %v11153 = vadd.f32 %v11121, %v10993
        %v11154 = vadd.f32 %v11122, %v10994
        %v11155 = vadd.f32 %v11123, %v10995
        %v11156 = vadd.f32 %v11124, %v10996
        %v11157 = vadd.f32 %v11125, %v10997
        %v11158 = vadd.f32 %v11126, %v10998
        %v11159 = vadd.f32 %v11127, %v10999
        %v11160 = vadd.f32 %v11128, %v11000
        %v11161 = vadd.f32 %v11129, %v11001
        %v11162 = vadd.f32 %v11130, %v11002
        %v11163 = vadd.f32 %v11131, %v11003
        %v11164 = vadd.f32 %v11132, %v11004
        %11165 = vst [vmem:[%s655] sm:$0xff] %v11133
        %11166 = vst [vmem:[%s655 + $0x8] sm:$0xff] %v11134
        %11167 = vst [vmem:[%s655 + $0x10] sm:$0xff] %v11135
        %11168 = vst [vmem:[%s655 + $0x18] sm:$0xff] %v11136
        %11169 = vst [vmem:[%s655 + $0x20] sm:$0xff] %v11137
        %11170 = vst [vmem:[%s655 + $0x28] sm:$0xff] %v11138
        %11171 = vst [vmem:[%s655 + $0x30] sm:$0xff] %v11139
        %11172 = vst [vmem:[%s655 + $0x38] sm:$0xff] %v11140
        %11173 = vst [vmem:[%s655 + $0x40] sm:$0xff] %v11141
        %11174 = vst [vmem:[%s655 + $0x48] sm:$0xff] %v11142
        %11175 = vst [vmem:[%s655 + $0x50] sm:$0xff] %v11143
        %11176 = vst [vmem:[%s655 + $0x58] sm:$0xff] %v11144
        %11177 = vst [vmem:[%s655 + $0x60] sm:$0xff] %v11145
        %11178 = vst [vmem:[%s655 + $0x68] sm:$0xff] %v11146
        %11179 = vst [vmem:[%s655 + $0x70] sm:$0xff] %v11147
        %11180 = vst [vmem:[%s655 + $0x78] sm:$0xff] %v11148
        %11181 = vst [vmem:[%s655 + $0x80] sm:$0xff] %v11149
        %11182 = vst [vmem:[%s655 + $0x88] sm:$0xff] %v11150
        %11183 = vst [vmem:[%s655 + $0x90] sm:$0xff] %v11151
        %11184 = vst [vmem:[%s655 + $0x98] sm:$0xff] %v11152
        %11185 = vst [vmem:[%s655 + $0xa0] sm:$0xff] %v11153
        %11186 = vst [vmem:[%s655 + $0xa8] sm:$0xff] %v11154
        %11187 = vst [vmem:[%s655 + $0xb0] sm:$0xff] %v11155
        %11188 = vst [vmem:[%s655 + $0xb8] sm:$0xff] %v11156
        %11189 = vst [vmem:[%s655 + $0xc0] sm:$0xff] %v11157
        %11190 = vst [vmem:[%s655 + $0xc8] sm:$0xff] %v11158
        %11191 = vst [vmem:[%s655 + $0xd0] sm:$0xff] %v11159
        %11192 = vst [vmem:[%s655 + $0xd8] sm:$0xff] %v11160
        %11193 = vst [vmem:[%s655 + $0xe0] sm:$0xff] %v11161
        %11194 = vst [vmem:[%s655 + $0xe8] sm:$0xff] %v11162
        %11195 = vst [vmem:[%s655 + $0xf0] sm:$0xff] %v11163
        %11196 = vst [vmem:[%s655 + $0xf8] sm:$0xff] %v11164
        %s11197 = sand.u32 %s465, 1
        %s11198 = scalar_lea.sflag [#allocation3], %s11197
        %s11199 = sand.u32 %s465, 1
        %s11200 = smul.addr %s11199, 256
        %s11201 = scalar_lea.vmem [#allocation2], %s11200
        // Predicated region
        $region97: #{tpu_custom_call.1} parent=95 // pred_check
          %p11202 = pneg %p475
        $region98: #{tpu_custom_call.1} parent=95 // pred_check_branch
          %11204 = sbr.rel (%p11202) target = $region100
        $region99: #{tpu_custom_call.1} parent=95 // pred_region
          %s11206 = ssub.s32 4096, 4096
          %11207 = vsyncadd %s11198, %s11206
          %s11208 = smul.addr %s33, 32
          %s11209 = smul.addr %s11208, 128
          %s11210 = scalar_lea.hbm %s19, %s11209
          %s11211 = sshll.u32 %s11201, 4
          %s11212 = int_to_ptr.vmem [resolvable:$true] %s11211
          %11217 = dma.vmem_to_hbm [thread:$0]  %s11212, 4096, %s11210, %s11198, 256, 256, 16
        $region100: #{tpu_custom_call.1} parent=95 // pred_fallthru
          _
      $region96: #{tpu_custom_call.1} parent=5 // pred_fallthru
        _
      %p11218 = scmp.le.s32.totalorder 2, %s28
      // Predicated region
      $region101: #{tpu_custom_call.1} parent=5 // pred_check
        %p11219 = pneg %p11218
      $region102: #{tpu_custom_call.1} parent=5 // pred_check_branch
        %11221 = sbr.rel (%p11219) target = $region104
      $region103: #{tpu_custom_call.1} parent=5 // pred_region
        %s11222 = ssub.s32 %s28, 2
        // Predicated region
        $region105: #{tpu_custom_call.1} parent=103 // pred_check
          %p11223 = pneg %p481
        $region106: #{tpu_custom_call.1} parent=103 // pred_check_branch
          %11225 = sbr.rel (%p11223) target = $region108
        $region107: #{tpu_custom_call.1} parent=103 // pred_region
          %s11226 = sand.u32 %s466, 1
          %s11227 = scalar_lea.sflag [#allocation3], %s11226
          %s11228 = sand.u32 %s466, 1
          %s11229 = smul.addr %s11228, 256
          %s11230 = scalar_lea.vmem [#allocation2], %s11229
          %11231 = dma.done %s11227, 4096
        $region108: #{tpu_custom_call.1} parent=103 // pred_fallthru
          _
      $region104: #{tpu_custom_call.1} parent=5 // pred_fallthru
        _
    $region6: #{tpu_custom_call.1} parent=1 // loop_footer
      %s32 = sadd.s32 1, %s28
    $region7: #{tpu_custom_call.1} parent=1 // loop_footer_branch
      %27 = sbr.rel target = $region3
    $region8: #{tpu_custom_call.1} parent=1 // loop_exit
      _
    %11232 = vsyncpa [#allocation3], 1
    %s11233 = scalar_lea.sflag [#allocation3], 1
    %11234 = vsyncpa %s11233, 1

</llo_original>
